<compile_context>
chip_gen: v6e
topology: v6e:2x2x1
jax: 0.10.0
libtpu: 0.0.40
codegen_flags: <defaults>
</compile_context>

<pallas_src>
import functools

import jax
import jax.numpy as jnp
from jax.experimental import pallas as pl
from jax.experimental.pallas import tpu as pltpu

HIDDEN = 256
NUM_LAYERS = 2

_VMEM = pl.BlockSpec(memory_space=pltpu.MemorySpace.VMEM)


def _bf16(x):
    return x.astype(jnp.bfloat16)


def _lstm_cell(gates, c_prev, H):
    """PyTorch-ordered (i, f, g, o) LSTM cell; all elementwise math in f32."""
    i = jax.nn.sigmoid(gates[:, 0 * H:1 * H])
    f = jax.nn.sigmoid(gates[:, 1 * H:2 * H])
    g = jnp.tanh(gates[:, 2 * H:3 * H])
    o = jax.nn.sigmoid(gates[:, 3 * H:4 * H])
    c = f * c_prev + i * g
    h = o * jnp.tanh(c)
    return h, c


def _cell_t0(gates, H):
    """LSTM cell at t=0 with zero initial (h, c): forget-gate term vanishes."""
    i = jax.nn.sigmoid(gates[:, 0 * H:1 * H])
    g = jnp.tanh(gates[:, 2 * H:3 * H])
    o = jax.nn.sigmoid(gates[:, 3 * H:4 * H])
    return o * jnp.tanh(i * g)


# -----------------------------------------------------------------------------
# One fused kernel: lstm1 (2 layers over the sequence) + lstm2 (T=1) + MLP head
# -----------------------------------------------------------------------------
def _fused_forward_kernel(
    # lstm1 (2-layer unidirectional LSTM over the T-step sequence)
    x_ref,      # (T*BP, I)  f32   time-major, sublane-padded input slab
    wih1_ref,   # (I,  4H)   bf16  layer-0 input weights (transposed)
    b1_ref,     # (1,  4H)   f32   layer-0 bias (b_ih + b_hh)
    whh1_ref,   # (H,  4H)   bf16  layer-0 recurrent weights (transposed)
    wih2_ref,   # (H,  4H)   bf16  layer-1 input weights (transposed)
    b2_ref,     # (1,  4H)   f32   layer-1 bias
    whh2_ref,   # (H,  4H)   bf16  layer-1 recurrent weights (transposed)
    # lstm2 (sequence length 1, zero init state -> recurrent weights unused)
    wiA_ref,    # (2H, 4H)   bf16
    bA_ref,     # (1,  4H)   f32
    wiB_ref,    # (H,  4H)   bf16
    bB_ref,     # (1,  4H)   f32
    # fc head
    w1_ref,     # (2H, 256)  bf16
    bf1_ref,    # (1,  256)  f32
    w2_ref,     # (256, 128) bf16
    bf2_ref,    # (1,  128)  f32
    w3_ref,     # (128, C)   bf16
    bf3_ref,    # (1,  C)    f32
    # output
    o_ref,      # (B, C)     f32
    # scratch
    h1_slab,    # (T*BP, H)  f32   all layer-0 hidden states (two-pass scheme)
    *, T, B, BP, H,
):
    f32 = jnp.float32

    # Keep padded rows finite/deterministic (they are never consumed).
    h1_slab[...] = jnp.zeros(h1_slab.shape, f32)

    # lstm1 layer 0 input projection: ONE batched (T*BP, I) x (I, 4H) matmul.
    gx1 = jnp.dot(_bf16(x_ref[...]), wih1_ref[...],
                  preferred_element_type=f32) + b1_ref[...]

    # ---- Pass 1: layer-0 recurrence; only h1 @ whh1 is on the serial path.
    whh1 = whh1_ref[...]
    h1 = jnp.zeros((B, H), f32)
    c1 = jnp.zeros((B, H), f32)
    for t in range(T):                      # T is static & small -> unrolled
        r = t * BP                          # tile-aligned row offset
        g = gx1[r:r + B, :] + jnp.dot(_bf16(h1), whh1,
                                      preferred_element_type=f32)
        h1, c1 = _lstm_cell(g, c1, H)
        h1_slab[r:r + B, :] = h1

    # ---- Pass 2: layer-1 input projection batched over ALL T steps
    # (one weight push with M = T*BP instead of T pushes with M = B).
    gx2 = jnp.dot(_bf16(h1_slab[...]), wih2_ref[...],
                  preferred_element_type=f32) + b2_ref[...]

    # ---- Pass 3: layer-1 recurrence; only h2 @ whh2 is on the serial path.
    whh2 = whh2_ref[...]
    h2 = jnp.zeros((B, H), f32)
    c2 = jnp.zeros((B, H), f32)
    for t in range(T):
        r = t * BP
        g = gx2[r:r + B, :] + jnp.dot(_bf16(h2), whh2,
                                      preferred_element_type=f32)
        h2, c2 = _lstm_cell(g, c2, H)

    # h1 / h2 now hold the final hidden states of lstm1 layers 0 / 1, i.e.
    # PyTorch's h_n1.permute(1,0,2).reshape(B, 2H) split into halves.

    # ---- lstm2: length-1 sequence, zero initial state -> recurrent weights
    # and forget gate drop out exactly.  Split-weight dots avoid a lane-dim
    # concatenate of [h1 ; h2].
    wA = wiA_ref[...]
    gA = (jnp.dot(_bf16(h1), wA[:H, :], preferred_element_type=f32)
          + jnp.dot(_bf16(h2), wA[H:, :], preferred_element_type=f32)
          + bA_ref[...])
    hA = _cell_t0(gA, H)
    gB = (jnp.dot(_bf16(hA), wiB_ref[...], preferred_element_type=f32)
          + bB_ref[...])
    hB = _cell_t0(gB, H)

    # ---- fc1 -> relu -> fc2 -> relu -> fc3 on [hA ; hB].
    # TODO(synk): dropout_fc1 / dropout_fc2 are identity (eval / inference).
    w1 = w1_ref[...]
    z1 = (jnp.dot(_bf16(hA), w1[:H, :], preferred_element_type=f32)
          + jnp.dot(_bf16(hB), w1[H:, :], preferred_element_type=f32)
          + bf1_ref[...])
    z1 = jnp.maximum(z1, 0.0)
    z2 = jnp.dot(_bf16(z1), w2_ref[...], preferred_element_type=f32) + bf2_ref[...]
    z2 = jnp.maximum(z2, 0.0)
    o_ref[...] = (jnp.dot(_bf16(z2), w3_ref[...], preferred_element_type=f32)
                  + bf3_ref[...])


# -----------------------------------------------------------------------------
# Wrapper: matches lstm.forward(data) with data.x of shape (B, T, F)
# -----------------------------------------------------------------------------
def lstm_model_forward(x, params):
    """x: (B, T, F) (or (B, F), treated as T=1).  Returns (B, num_classes)."""
    if x.ndim == 2:
        x = x[:, None, :]
    x = x.astype(jnp.float32)
    B, T, I = x.shape
    BP = -(-B // 8) * 8          # sublane-padded batch -> aligned slab rows

    (wih1, whh1, b1), (wih2, whh2, b2) = params["lstm1"]
    (wiA, _whhA, bA), (wiB, _whhB, bB) = params["lstm2"]
    (w1, bf1), (w2, bf2), (w3, bf3) = params["fc1"], params["fc2"], params["fc3"]
    H = whh1.shape[0]
    C = w3.shape[1]

    # Time-major, sublane-padded input slab (cheap XLA prep): lets the kernel
    # batch the layer-0 input projection and slice aligned per-step rows.
    x_tb = jnp.transpose(x, (1, 0, 2))                                # (T, B, I)
    x_pad = jnp.zeros((T, BP, I), jnp.float32).at[:, :B, :].set(x_tb)
    x_pad = x_pad.reshape(T * BP, I)

    kernel = functools.partial(_fused_forward_kernel, T=T, B=B, BP=BP, H=H)
    return pl.pallas_call(
        kernel,
        out_shape=jax.ShapeDtypeStruct((B, C), jnp.float32),
        in_specs=[_VMEM] * 17,
        out_specs=_VMEM,
        scratch_shapes=[pltpu.VMEM((T * BP, H), jnp.float32)],
    )(x_pad, wih1, b1, whh1, wih2, b2, whh2,
      wiA, bA, wiB, bB, w1, bf1, w2, bf2, w3, bf3)


# -----------------------------------------------------------------------------
# Parameter construction (deterministic, PyTorch-style uniform init).
# Matmul weights are stored bf16 (kernel-ready); biases stay f32.
# -----------------------------------------------------------------------------
def _uniform(key, shape, bound):
    return jax.random.uniform(key, shape, jnp.float32, -bound, bound)


def make_lstm_params(key, input_size, hidden_size, num_layers):
    """Per layer: (w_ih^T bf16, w_hh^T bf16, (b_ih + b_hh) f32 (1, 4H))."""
    bound = 1.0 / float(hidden_size) ** 0.5
    params = []
    in_sz = input_size
    for _ in range(num_layers):
        key, k1, k2, k3, k4 = jax.random.split(key, 5)
        w_ih = _uniform(k1, (4 * hidden_size, in_sz), bound)      # PyTorch shape
        w_hh = _uniform(k2, (4 * hidden_size, hidden_size), bound)
        b_ih = _uniform(k3, (4 * hidden_size,), bound)
        b_hh = _uniform(k4, (4 * hidden_size,), bound)
        params.append((w_ih.T.astype(jnp.bfloat16),
                       w_hh.T.astype(jnp.bfloat16),
                       (b_ih + b_hh).reshape(1, -1)))
        in_sz = hidden_size
    return params, key


def make_linear_params(key, in_f, out_f):
    bound = 1.0 / float(in_f) ** 0.5
    key, k1, k2 = jax.random.split(key, 3)
    w = _uniform(k1, (out_f, in_f), bound)                        # PyTorch shape
    b = _uniform(k2, (out_f,), bound)
    return (w.T.astype(jnp.bfloat16), b.reshape(1, -1)), key


if __name__ == "__main__":
    num_node_features = 16
    num_classes = 4
    batch = 2
    seq = 8

    key = jax.random.PRNGKey(0)
    key, kx = jax.random.split(key)
    x = jax.random.normal(kx, (batch, seq, num_node_features), jnp.float32)

    lstm1_params, key = make_lstm_params(key, num_node_features, HIDDEN, NUM_LAYERS)
    lstm2_params, key = make_lstm_params(key, HIDDEN * 2, HIDDEN, NUM_LAYERS)
    fc1, key = make_linear_params(key, HIDDEN * 2, 256)
    fc2, key = make_linear_params(key, 256, 128)
    fc3, key = make_linear_params(key, 128, num_classes)

    params = {
        "lstm1": lstm1_params,
        "lstm2": lstm2_params,
        "fc1": fc1,
        "fc2": fc2,
        "fc3": fc3,
    }

    out = jax.jit(functools.partial(lstm_model_forward, params=params))(x)
    jax.block_until_ready(out)
    assert out.shape == (batch, num_classes), out.shape
    assert bool(jnp.all(jnp.isfinite(out)))
    print("KERNEL_OK")
</pallas_src>

<mosaic_0001>
module attributes {stable_mosaic.version = 11 : i64} {
  func.func @_fused_forward_kernel(%arg0: memref<64x16xf32, #tpu.memory_space<vmem>>, %arg1: memref<16x1024xbf16, #tpu.memory_space<vmem>>, %arg2: memref<1x1024xf32, #tpu.memory_space<vmem>>, %arg3: memref<256x1024xbf16, #tpu.memory_space<vmem>>, %arg4: memref<256x1024xbf16, #tpu.memory_space<vmem>>, %arg5: memref<1x1024xf32, #tpu.memory_space<vmem>>, %arg6: memref<256x1024xbf16, #tpu.memory_space<vmem>>, %arg7: memref<512x1024xbf16, #tpu.memory_space<vmem>>, %arg8: memref<1x1024xf32, #tpu.memory_space<vmem>>, %arg9: memref<256x1024xbf16, #tpu.memory_space<vmem>>, %arg10: memref<1x1024xf32, #tpu.memory_space<vmem>>, %arg11: memref<512x256xbf16, #tpu.memory_space<vmem>>, %arg12: memref<1x256xf32, #tpu.memory_space<vmem>>, %arg13: memref<256x128xbf16, #tpu.memory_space<vmem>>, %arg14: memref<1x128xf32, #tpu.memory_space<vmem>>, %arg15: memref<128x4xbf16, #tpu.memory_space<vmem>>, %arg16: memref<1x4xf32, #tpu.memory_space<vmem>>, %arg17: memref<2x4xf32, #tpu.memory_space<vmem>>, %arg18: memref<64x256xf32, #tpu.memory_space<vmem>>) attributes {dimension_semantics = [], scalar_prefetch = 0 : i64, scratch_operands = 1 : i64, tpu.core_type = #tpu.core_type<tc>} {
    %cst = arith.constant 0.000000e+00 : f32
    %0 = vector.broadcast %cst : f32 to vector<64x256xf32>
    %c0 = arith.constant 0 : index
    %c0_0 = arith.constant 0 : index
    %1 = vector.load %arg18[%c0, %c0_0] : memref<64x256xf32, #tpu.memory_space<vmem>>, vector<64x256xf32>
    tpu.vector_store %arg18[%c0, %c0_0], %0 {strides = array<i32>} : memref<64x256xf32, #tpu.memory_space<vmem>>, vector<64x256xf32>,
    %c0_1 = arith.constant 0 : index
    %c0_2 = arith.constant 0 : index
    %2 = vector.load %arg0[%c0_1, %c0_2] : memref<64x16xf32, #tpu.memory_space<vmem>>, vector<64x16xf32>
    %3 = arith.truncf %2 : vector<64x16xf32> to vector<64x16xbf16>
    %c0_3 = arith.constant 0 : index
    %c0_4 = arith.constant 0 : index
    %4 = vector.load %arg1[%c0_3, %c0_4] : memref<16x1024xbf16, #tpu.memory_space<vmem>>, vector<16x1024xbf16>
    %cst_5 = arith.constant dense<0.000000e+00> : vector<64x1024xf32>
    %5 = tpu.matmul %3, %4, %cst_5 {dimension_numbers = #tpu.dot_dimension_numbers<[1], [0], [0], [1], [0, 0, 1, 1], [], []>} : vector<64x16xbf16>, vector<16x1024xbf16>, vector<64x1024xf32> -> vector<64x1024xf32>
    %c0_6 = arith.constant 0 : index
    %c0_7 = arith.constant 0 : index
    %6 = vector.load %arg2[%c0_6, %c0_7] : memref<1x1024xf32, #tpu.memory_space<vmem>>, vector<1x1024xf32>
    %7 = vector.broadcast %6 : vector<1x1024xf32> to vector<64x1024xf32>
    %8 = arith.addf %5, %7 : vector<64x1024xf32>
    %c0_8 = arith.constant 0 : index
    %c0_9 = arith.constant 0 : index
    %9 = vector.load %arg3[%c0_8, %c0_9] : memref<256x1024xbf16, #tpu.memory_space<vmem>>, vector<256x1024xbf16>
    %cst_10 = arith.constant 0.000000e+00 : f32
    %10 = vector.broadcast %cst_10 : f32 to vector<2x256xf32>
    %cst_11 = arith.constant 0.000000e+00 : f32
    %11 = vector.broadcast %cst_11 : f32 to vector<2x256xf32>
    %12 = vector.extract_strided_slice %8 {offsets = [0, 0], sizes = [2, 1024], strides = [1, 1]} : vector<64x1024xf32> to vector<2x1024xf32>
    %13 = arith.truncf %10 : vector<2x256xf32> to vector<2x256xbf16>
    %cst_12 = arith.constant dense<0.000000e+00> : vector<2x1024xf32>
    %14 = tpu.matmul %13, %9, %cst_12 {dimension_numbers = #tpu.dot_dimension_numbers<[1], [0], [0], [1], [0, 0, 1, 1], [], []>} : vector<2x256xbf16>, vector<256x1024xbf16>, vector<2x1024xf32> -> vector<2x1024xf32>
    %15 = arith.addf %12, %14 : vector<2x1024xf32>
    %16 = vector.extract_strided_slice %15 {offsets = [0, 0], sizes = [2, 256], strides = [1, 1]} : vector<2x1024xf32> to vector<2x256xf32>
    %17 = arith.negf %16 : vector<2x256xf32>
    %18 = math.exp %17 : vector<2x256xf32>
    %cst_13 = arith.constant 1.000000e+00 : f32
    %19 = vector.broadcast %cst_13 : f32 to vector<2x256xf32>
    %20 = arith.addf %19, %18 : vector<2x256xf32>
    %21 = arith.divf %19, %20 : vector<2x256xf32>
    %22 = vector.extract_strided_slice %15 {offsets = [0, 256], sizes = [2, 256], strides = [1, 1]} : vector<2x1024xf32> to vector<2x256xf32>
    %23 = arith.negf %22 : vector<2x256xf32>
    %24 = math.exp %23 : vector<2x256xf32>
    %cst_14 = arith.constant 1.000000e+00 : f32
    %25 = vector.broadcast %cst_14 : f32 to vector<2x256xf32>
    %26 = arith.addf %25, %24 : vector<2x256xf32>
    %27 = arith.divf %25, %26 : vector<2x256xf32>
    %28 = vector.extract_strided_slice %15 {offsets = [0, 512], sizes = [2, 256], strides = [1, 1]} : vector<2x1024xf32> to vector<2x256xf32>
    %29 = math.tanh %28 : vector<2x256xf32>
    %30 = vector.extract_strided_slice %15 {offsets = [0, 768], sizes = [2, 256], strides = [1, 1]} : vector<2x1024xf32> to vector<2x256xf32>
    %31 = arith.negf %30 : vector<2x256xf32>
    %32 = math.exp %31 : vector<2x256xf32>
    %cst_15 = arith.constant 1.000000e+00 : f32
    %33 = vector.broadcast %cst_15 : f32 to vector<2x256xf32>
    %34 = arith.addf %33, %32 : vector<2x256xf32>
    %35 = arith.divf %33, %34 : vector<2x256xf32>
    %36 = arith.mulf %27, %11 : vector<2x256xf32>
    %37 = arith.mulf %21, %29 : vector<2x256xf32>
    %38 = arith.addf %36, %37 : vector<2x256xf32>
    %39 = math.tanh %38 : vector<2x256xf32>
    %40 = arith.mulf %35, %39 : vector<2x256xf32>
    %c0_16 = arith.constant 0 : index
    %c0_17 = arith.constant 0 : index
    %41 = vector.load %arg18[%c0_16, %c0_17] : memref<64x256xf32, #tpu.memory_space<vmem>>, vector<2x256xf32>
    tpu.vector_store %arg18[%c0_16, %c0_17], %40 {strides = array<i32>} : memref<64x256xf32, #tpu.memory_space<vmem>>, vector<2x256xf32>,
    %42 = vector.extract_strided_slice %8 {offsets = [8, 0], sizes = [2, 1024], strides = [1, 1]} : vector<64x1024xf32> to vector<2x1024xf32>
    %43 = arith.truncf %40 : vector<2x256xf32> to vector<2x256xbf16>
    %cst_18 = arith.constant dense<0.000000e+00> : vector<2x1024xf32>
    %44 = tpu.matmul %43, %9, %cst_18 {dimension_numbers = #tpu.dot_dimension_numbers<[1], [0], [0], [1], [0, 0, 1, 1], [], []>} : vector<2x256xbf16>, vector<256x1024xbf16>, vector<2x1024xf32> -> vector<2x1024xf32>
    %45 = arith.addf %42, %44 : vector<2x1024xf32>
    %46 = vector.extract_strided_slice %45 {offsets = [0, 0], sizes = [2, 256], strides = [1, 1]} : vector<2x1024xf32> to vector<2x256xf32>
    %47 = arith.negf %46 : vector<2x256xf32>
    %48 = math.exp %47 : vector<2x256xf32>
    %cst_19 = arith.constant 1.000000e+00 : f32
    %49 = vector.broadcast %cst_19 : f32 to vector<2x256xf32>
    %50 = arith.addf %49, %48 : vector<2x256xf32>
    %51 = arith.divf %49, %50 : vector<2x256xf32>
    %52 = vector.extract_strided_slice %45 {offsets = [0, 256], sizes = [2, 256], strides = [1, 1]} : vector<2x1024xf32> to vector<2x256xf32>
    %53 = arith.negf %52 : vector<2x256xf32>
    %54 = math.exp %53 : vector<2x256xf32>
    %cst_20 = arith.constant 1.000000e+00 : f32
    %55 = vector.broadcast %cst_20 : f32 to vector<2x256xf32>
    %56 = arith.addf %55, %54 : vector<2x256xf32>
    %57 = arith.divf %55, %56 : vector<2x256xf32>
    %58 = vector.extract_strided_slice %45 {offsets = [0, 512], sizes = [2, 256], strides = [1, 1]} : vector<2x1024xf32> to vector<2x256xf32>
    %59 = math.tanh %58 : vector<2x256xf32>
    %60 = vector.extract_strided_slice %45 {offsets = [0, 768], sizes = [2, 256], strides = [1, 1]} : vector<2x1024xf32> to vector<2x256xf32>
    %61 = arith.negf %60 : vector<2x256xf32>
    %62 = math.exp %61 : vector<2x256xf32>
    %cst_21 = arith.constant 1.000000e+00 : f32
    %63 = vector.broadcast %cst_21 : f32 to vector<2x256xf32>
    %64 = arith.addf %63, %62 : vector<2x256xf32>
    %65 = arith.divf %63, %64 : vector<2x256xf32>
    %66 = arith.mulf %57, %38 : vector<2x256xf32>
    %67 = arith.mulf %51, %59 : vector<2x256xf32>
    %68 = arith.addf %66, %67 : vector<2x256xf32>
    %69 = math.tanh %68 : vector<2x256xf32>
    %70 = arith.mulf %65, %69 : vector<2x256xf32>
    %c8 = arith.constant 8 : index
    %c0_22 = arith.constant 0 : index
    %71 = vector.load %arg18[%c8, %c0_22] : memref<64x256xf32, #tpu.memory_space<vmem>>, vector<2x256xf32>
    tpu.vector_store %arg18[%c8, %c0_22], %70 {strides = array<i32>} : memref<64x256xf32, #tpu.memory_space<vmem>>, vector<2x256xf32>,
    %72 = vector.extract_strided_slice %8 {offsets = [16, 0], sizes = [2, 1024], strides = [1, 1]} : vector<64x1024xf32> to vector<2x1024xf32>
    %73 = arith.truncf %70 : vector<2x256xf32> to vector<2x256xbf16>
    %cst_23 = arith.constant dense<0.000000e+00> : vector<2x1024xf32>
    %74 = tpu.matmul %73, %9, %cst_23 {dimension_numbers = #tpu.dot_dimension_numbers<[1], [0], [0], [1], [0, 0, 1, 1], [], []>} : vector<2x256xbf16>, vector<256x1024xbf16>, vector<2x1024xf32> -> vector<2x1024xf32>
    %75 = arith.addf %72, %74 : vector<2x1024xf32>
    %76 = vector.extract_strided_slice %75 {offsets = [0, 0], sizes = [2, 256], strides = [1, 1]} : vector<2x1024xf32> to vector<2x256xf32>
    %77 = arith.negf %76 : vector<2x256xf32>
    %78 = math.exp %77 : vector<2x256xf32>
    %cst_24 = arith.constant 1.000000e+00 : f32
    %79 = vector.broadcast %cst_24 : f32 to vector<2x256xf32>
    %80 = arith.addf %79, %78 : vector<2x256xf32>
    %81 = arith.divf %79, %80 : vector<2x256xf32>
    %82 = vector.extract_strided_slice %75 {offsets = [0, 256], sizes = [2, 256], strides = [1, 1]} : vector<2x1024xf32> to vector<2x256xf32>
    %83 = arith.negf %82 : vector<2x256xf32>
    %84 = math.exp %83 : vector<2x256xf32>
    %cst_25 = arith.constant 1.000000e+00 : f32
    %85 = vector.broadcast %cst_25 : f32 to vector<2x256xf32>
    %86 = arith.addf %85, %84 : vector<2x256xf32>
    %87 = arith.divf %85, %86 : vector<2x256xf32>
    %88 = vector.extract_strided_slice %75 {offsets = [0, 512], sizes = [2, 256], strides = [1, 1]} : vector<2x1024xf32> to vector<2x256xf32>
    %89 = math.tanh %88 : vector<2x256xf32>
    %90 = vector.extract_strided_slice %75 {offsets = [0, 768], sizes = [2, 256], strides = [1, 1]} : vector<2x1024xf32> to vector<2x256xf32>
    %91 = arith.negf %90 : vector<2x256xf32>
    %92 = math.exp %91 : vector<2x256xf32>
    %cst_26 = arith.constant 1.000000e+00 : f32
    %93 = vector.broadcast %cst_26 : f32 to vector<2x256xf32>
    %94 = arith.addf %93, %92 : vector<2x256xf32>
    %95 = arith.divf %93, %94 : vector<2x256xf32>
    %96 = arith.mulf %87, %68 : vector<2x256xf32>
    %97 = arith.mulf %81, %89 : vector<2x256xf32>
    %98 = arith.addf %96, %97 : vector<2x256xf32>
    %99 = math.tanh %98 : vector<2x256xf32>
    %100 = arith.mulf %95, %99 : vector<2x256xf32>
    %c16 = arith.constant 16 : index
    %c0_27 = arith.constant 0 : index
    %101 = vector.load %arg18[%c16, %c0_27] : memref<64x256xf32, #tpu.memory_space<vmem>>, vector<2x256xf32>
    tpu.vector_store %arg18[%c16, %c0_27], %100 {strides = array<i32>} : memref<64x256xf32, #tpu.memory_space<vmem>>, vector<2x256xf32>,
    %102 = vector.extract_strided_slice %8 {offsets = [24, 0], sizes = [2, 1024], strides = [1, 1]} : vector<64x1024xf32> to vector<2x1024xf32>
    %103 = arith.truncf %100 : vector<2x256xf32> to vector<2x256xbf16>
    %cst_28 = arith.constant dense<0.000000e+00> : vector<2x1024xf32>
    %104 = tpu.matmul %103, %9, %cst_28 {dimension_numbers = #tpu.dot_dimension_numbers<[1], [0], [0], [1], [0, 0, 1, 1], [], []>} : vector<2x256xbf16>, vector<256x1024xbf16>, vector<2x1024xf32> -> vector<2x1024xf32>
    %105 = arith.addf %102, %104 : vector<2x1024xf32>
    %106 = vector.extract_strided_slice %105 {offsets = [0, 0], sizes = [2, 256], strides = [1, 1]} : vector<2x1024xf32> to vector<2x256xf32>
    %107 = arith.negf %106 : vector<2x256xf32>
    %108 = math.exp %107 : vector<2x256xf32>
    %cst_29 = arith.constant 1.000000e+00 : f32
    %109 = vector.broadcast %cst_29 : f32 to vector<2x256xf32>
    %110 = arith.addf %109, %108 : vector<2x256xf32>
    %111 = arith.divf %109, %110 : vector<2x256xf32>
    %112 = vector.extract_strided_slice %105 {offsets = [0, 256], sizes = [2, 256], strides = [1, 1]} : vector<2x1024xf32> to vector<2x256xf32>
    %113 = arith.negf %112 : vector<2x256xf32>
    %114 = math.exp %113 : vector<2x256xf32>
    %cst_30 = arith.constant 1.000000e+00 : f32
    %115 = vector.broadcast %cst_30 : f32 to vector<2x256xf32>
    %116 = arith.addf %115, %114 : vector<2x256xf32>
    %117 = arith.divf %115, %116 : vector<2x256xf32>
    %118 = vector.extract_strided_slice %105 {offsets = [0, 512], sizes = [2, 256], strides = [1, 1]} : vector<2x1024xf32> to vector<2x256xf32>
    %119 = math.tanh %118 : vector<2x256xf32>
    %120 = vector.extract_strided_slice %105 {offsets = [0, 768], sizes = [2, 256], strides = [1, 1]} : vector<2x1024xf32> to vector<2x256xf32>
    %121 = arith.negf %120 : vector<2x256xf32>
    %122 = math.exp %121 : vector<2x256xf32>
    %cst_31 = arith.constant 1.000000e+00 : f32
    %123 = vector.broadcast %cst_31 : f32 to vector<2x256xf32>
    %124 = arith.addf %123, %122 : vector<2x256xf32>
    %125 = arith.divf %123, %124 : vector<2x256xf32>
    %126 = arith.mulf %117, %98 : vector<2x256xf32>
    %127 = arith.mulf %111, %119 : vector<2x256xf32>
    %128 = arith.addf %126, %127 : vector<2x256xf32>
    %129 = math.tanh %128 : vector<2x256xf32>
    %130 = arith.mulf %125, %129 : vector<2x256xf32>
    %c24 = arith.constant 24 : index
    %c0_32 = arith.constant 0 : index
    %131 = vector.load %arg18[%c24, %c0_32] : memref<64x256xf32, #tpu.memory_space<vmem>>, vector<2x256xf32>
    tpu.vector_store %arg18[%c24, %c0_32], %130 {strides = array<i32>} : memref<64x256xf32, #tpu.memory_space<vmem>>, vector<2x256xf32>,
    %132 = vector.extract_strided_slice %8 {offsets = [32, 0], sizes = [2, 1024], strides = [1, 1]} : vector<64x1024xf32> to vector<2x1024xf32>
    %133 = arith.truncf %130 : vector<2x256xf32> to vector<2x256xbf16>
    %cst_33 = arith.constant dense<0.000000e+00> : vector<2x1024xf32>
    %134 = tpu.matmul %133, %9, %cst_33 {dimension_numbers = #tpu.dot_dimension_numbers<[1], [0], [0], [1], [0, 0, 1, 1], [], []>} : vector<2x256xbf16>, vector<256x1024xbf16>, vector<2x1024xf32> -> vector<2x1024xf32>
    %135 = arith.addf %132, %134 : vector<2x1024xf32>
    %136 = vector.extract_strided_slice %135 {offsets = [0, 0], sizes = [2, 256], strides = [1, 1]} : vector<2x1024xf32> to vector<2x256xf32>
    %137 = arith.negf %136 : vector<2x256xf32>
    %138 = math.exp %137 : vector<2x256xf32>
    %cst_34 = arith.constant 1.000000e+00 : f32
    %139 = vector.broadcast %cst_34 : f32 to vector<2x256xf32>
    %140 = arith.addf %139, %138 : vector<2x256xf32>
    %141 = arith.divf %139, %140 : vector<2x256xf32>
    %142 = vector.extract_strided_slice %135 {offsets = [0, 256], sizes = [2, 256], strides = [1, 1]} : vector<2x1024xf32> to vector<2x256xf32>
    %143 = arith.negf %142 : vector<2x256xf32>
    %144 = math.exp %143 : vector<2x256xf32>
    %cst_35 = arith.constant 1.000000e+00 : f32
    %145 = vector.broadcast %cst_35 : f32 to vector<2x256xf32>
    %146 = arith.addf %145, %144 : vector<2x256xf32>
    %147 = arith.divf %145, %146 : vector<2x256xf32>
    %148 = vector.extract_strided_slice %135 {offsets = [0, 512], sizes = [2, 256], strides = [1, 1]} : vector<2x1024xf32> to vector<2x256xf32>
    %149 = math.tanh %148 : vector<2x256xf32>
    %150 = vector.extract_strided_slice %135 {offsets = [0, 768], sizes = [2, 256], strides = [1, 1]} : vector<2x1024xf32> to vector<2x256xf32>
    %151 = arith.negf %150 : vector<2x256xf32>
    %152 = math.exp %151 : vector<2x256xf32>
    %cst_36 = arith.constant 1.000000e+00 : f32
    %153 = vector.broadcast %cst_36 : f32 to vector<2x256xf32>
    %154 = arith.addf %153, %152 : vector<2x256xf32>
    %155 = arith.divf %153, %154 : vector<2x256xf32>
    %156 = arith.mulf %147, %128 : vector<2x256xf32>
    %157 = arith.mulf %141, %149 : vector<2x256xf32>
    %158 = arith.addf %156, %157 : vector<2x256xf32>
    %159 = math.tanh %158 : vector<2x256xf32>
    %160 = arith.mulf %155, %159 : vector<2x256xf32>
    %c32 = arith.constant 32 : index
    %c0_37 = arith.constant 0 : index
    %161 = vector.load %arg18[%c32, %c0_37] : memref<64x256xf32, #tpu.memory_space<vmem>>, vector<2x256xf32>
    tpu.vector_store %arg18[%c32, %c0_37], %160 {strides = array<i32>} : memref<64x256xf32, #tpu.memory_space<vmem>>, vector<2x256xf32>,
    %162 = vector.extract_strided_slice %8 {offsets = [40, 0], sizes = [2, 1024], strides = [1, 1]} : vector<64x1024xf32> to vector<2x1024xf32>
    %163 = arith.truncf %160 : vector<2x256xf32> to vector<2x256xbf16>
    %cst_38 = arith.constant dense<0.000000e+00> : vector<2x1024xf32>
    %164 = tpu.matmul %163, %9, %cst_38 {dimension_numbers = #tpu.dot_dimension_numbers<[1], [0], [0], [1], [0, 0, 1, 1], [], []>} : vector<2x256xbf16>, vector<256x1024xbf16>, vector<2x1024xf32> -> vector<2x1024xf32>
    %165 = arith.addf %162, %164 : vector<2x1024xf32>
    %166 = vector.extract_strided_slice %165 {offsets = [0, 0], sizes = [2, 256], strides = [1, 1]} : vector<2x1024xf32> to vector<2x256xf32>
    %167 = arith.negf %166 : vector<2x256xf32>
    %168 = math.exp %167 : vector<2x256xf32>
    %cst_39 = arith.constant 1.000000e+00 : f32
    %169 = vector.broadcast %cst_39 : f32 to vector<2x256xf32>
    %170 = arith.addf %169, %168 : vector<2x256xf32>
    %171 = arith.divf %169, %170 : vector<2x256xf32>
    %172 = vector.extract_strided_slice %165 {offsets = [0, 256], sizes = [2, 256], strides = [1, 1]} : vector<2x1024xf32> to vector<2x256xf32>
    %173 = arith.negf %172 : vector<2x256xf32>
    %174 = math.exp %173 : vector<2x256xf32>
    %cst_40 = arith.constant 1.000000e+00 : f32
    %175 = vector.broadcast %cst_40 : f32 to vector<2x256xf32>
    %176 = arith.addf %175, %174 : vector<2x256xf32>
    %177 = arith.divf %175, %176 : vector<2x256xf32>
    %178 = vector.extract_strided_slice %165 {offsets = [0, 512], sizes = [2, 256], strides = [1, 1]} : vector<2x1024xf32> to vector<2x256xf32>
    %179 = math.tanh %178 : vector<2x256xf32>
    %180 = vector.extract_strided_slice %165 {offsets = [0, 768], sizes = [2, 256], strides = [1, 1]} : vector<2x1024xf32> to vector<2x256xf32>
    %181 = arith.negf %180 : vector<2x256xf32>
    %182 = math.exp %181 : vector<2x256xf32>
    %cst_41 = arith.constant 1.000000e+00 : f32
    %183 = vector.broadcast %cst_41 : f32 to vector<2x256xf32>
    %184 = arith.addf %183, %182 : vector<2x256xf32>
    %185 = arith.divf %183, %184 : vector<2x256xf32>
    %186 = arith.mulf %177, %158 : vector<2x256xf32>
    %187 = arith.mulf %171, %179 : vector<2x256xf32>
    %188 = arith.addf %186, %187 : vector<2x256xf32>
    %189 = math.tanh %188 : vector<2x256xf32>
    %190 = arith.mulf %185, %189 : vector<2x256xf32>
    %c40 = arith.constant 40 : index
    %c0_42 = arith.constant 0 : index
    %191 = vector.load %arg18[%c40, %c0_42] : memref<64x256xf32, #tpu.memory_space<vmem>>, vector<2x256xf32>
    tpu.vector_store %arg18[%c40, %c0_42], %190 {strides = array<i32>} : memref<64x256xf32, #tpu.memory_space<vmem>>, vector<2x256xf32>,
    %192 = vector.extract_strided_slice %8 {offsets = [48, 0], sizes = [2, 1024], strides = [1, 1]} : vector<64x1024xf32> to vector<2x1024xf32>
    %193 = arith.truncf %190 : vector<2x256xf32> to vector<2x256xbf16>
    %cst_43 = arith.constant dense<0.000000e+00> : vector<2x1024xf32>
    %194 = tpu.matmul %193, %9, %cst_43 {dimension_numbers = #tpu.dot_dimension_numbers<[1], [0], [0], [1], [0, 0, 1, 1], [], []>} : vector<2x256xbf16>, vector<256x1024xbf16>, vector<2x1024xf32> -> vector<2x1024xf32>
    %195 = arith.addf %192, %194 : vector<2x1024xf32>
    %196 = vector.extract_strided_slice %195 {offsets = [0, 0], sizes = [2, 256], strides = [1, 1]} : vector<2x1024xf32> to vector<2x256xf32>
    %197 = arith.negf %196 : vector<2x256xf32>
    %198 = math.exp %197 : vector<2x256xf32>
    %cst_44 = arith.constant 1.000000e+00 : f32
    %199 = vector.broadcast %cst_44 : f32 to vector<2x256xf32>
    %200 = arith.addf %199, %198 : vector<2x256xf32>
    %201 = arith.divf %199, %200 : vector<2x256xf32>
    %202 = vector.extract_strided_slice %195 {offsets = [0, 256], sizes = [2, 256], strides = [1, 1]} : vector<2x1024xf32> to vector<2x256xf32>
    %203 = arith.negf %202 : vector<2x256xf32>
    %204 = math.exp %203 : vector<2x256xf32>
    %cst_45 = arith.constant 1.000000e+00 : f32
    %205 = vector.broadcast %cst_45 : f32 to vector<2x256xf32>
    %206 = arith.addf %205, %204 : vector<2x256xf32>
    %207 = arith.divf %205, %206 : vector<2x256xf32>
    %208 = vector.extract_strided_slice %195 {offsets = [0, 512], sizes = [2, 256], strides = [1, 1]} : vector<2x1024xf32> to vector<2x256xf32>
    %209 = math.tanh %208 : vector<2x256xf32>
    %210 = vector.extract_strided_slice %195 {offsets = [0, 768], sizes = [2, 256], strides = [1, 1]} : vector<2x1024xf32> to vector<2x256xf32>
    %211 = arith.negf %210 : vector<2x256xf32>
    %212 = math.exp %211 : vector<2x256xf32>
    %cst_46 = arith.constant 1.000000e+00 : f32
    %213 = vector.broadcast %cst_46 : f32 to vector<2x256xf32>
    %214 = arith.addf %213, %212 : vector<2x256xf32>
    %215 = arith.divf %213, %214 : vector<2x256xf32>
    %216 = arith.mulf %207, %188 : vector<2x256xf32>
    %217 = arith.mulf %201, %209 : vector<2x256xf32>
    %218 = arith.addf %216, %217 : vector<2x256xf32>
    %219 = math.tanh %218 : vector<2x256xf32>
    %220 = arith.mulf %215, %219 : vector<2x256xf32>
    %c48 = arith.constant 48 : index
    %c0_47 = arith.constant 0 : index
    %221 = vector.load %arg18[%c48, %c0_47] : memref<64x256xf32, #tpu.memory_space<vmem>>, vector<2x256xf32>
    tpu.vector_store %arg18[%c48, %c0_47], %220 {strides = array<i32>} : memref<64x256xf32, #tpu.memory_space<vmem>>, vector<2x256xf32>,
    %222 = vector.extract_strided_slice %8 {offsets = [56, 0], sizes = [2, 1024], strides = [1, 1]} : vector<64x1024xf32> to vector<2x1024xf32>
    %223 = arith.truncf %220 : vector<2x256xf32> to vector<2x256xbf16>
    %cst_48 = arith.constant dense<0.000000e+00> : vector<2x1024xf32>
    %224 = tpu.matmul %223, %9, %cst_48 {dimension_numbers = #tpu.dot_dimension_numbers<[1], [0], [0], [1], [0, 0, 1, 1], [], []>} : vector<2x256xbf16>, vector<256x1024xbf16>, vector<2x1024xf32> -> vector<2x1024xf32>
    %225 = arith.addf %222, %224 : vector<2x1024xf32>
    %226 = vector.extract_strided_slice %225 {offsets = [0, 0], sizes = [2, 256], strides = [1, 1]} : vector<2x1024xf32> to vector<2x256xf32>
    %227 = arith.negf %226 : vector<2x256xf32>
    %228 = math.exp %227 : vector<2x256xf32>
    %cst_49 = arith.constant 1.000000e+00 : f32
    %229 = vector.broadcast %cst_49 : f32 to vector<2x256xf32>
    %230 = arith.addf %229, %228 : vector<2x256xf32>
    %231 = arith.divf %229, %230 : vector<2x256xf32>
    %232 = vector.extract_strided_slice %225 {offsets = [0, 256], sizes = [2, 256], strides = [1, 1]} : vector<2x1024xf32> to vector<2x256xf32>
    %233 = arith.negf %232 : vector<2x256xf32>
    %234 = math.exp %233 : vector<2x256xf32>
    %cst_50 = arith.constant 1.000000e+00 : f32
    %235 = vector.broadcast %cst_50 : f32 to vector<2x256xf32>
    %236 = arith.addf %235, %234 : vector<2x256xf32>
    %237 = arith.divf %235, %236 : vector<2x256xf32>
    %238 = vector.extract_strided_slice %225 {offsets = [0, 512], sizes = [2, 256], strides = [1, 1]} : vector<2x1024xf32> to vector<2x256xf32>
    %239 = math.tanh %238 : vector<2x256xf32>
    %240 = vector.extract_strided_slice %225 {offsets = [0, 768], sizes = [2, 256], strides = [1, 1]} : vector<2x1024xf32> to vector<2x256xf32>
    %241 = arith.negf %240 : vector<2x256xf32>
    %242 = math.exp %241 : vector<2x256xf32>
    %cst_51 = arith.constant 1.000000e+00 : f32
    %243 = vector.broadcast %cst_51 : f32 to vector<2x256xf32>
    %244 = arith.addf %243, %242 : vector<2x256xf32>
    %245 = arith.divf %243, %244 : vector<2x256xf32>
    %246 = arith.mulf %237, %218 : vector<2x256xf32>
    %247 = arith.mulf %231, %239 : vector<2x256xf32>
    %248 = arith.addf %246, %247 : vector<2x256xf32>
    %249 = math.tanh %248 : vector<2x256xf32>
    %250 = arith.mulf %245, %249 : vector<2x256xf32>
    %c56 = arith.constant 56 : index
    %c0_52 = arith.constant 0 : index
    %251 = vector.load %arg18[%c56, %c0_52] : memref<64x256xf32, #tpu.memory_space<vmem>>, vector<2x256xf32>
    tpu.vector_store %arg18[%c56, %c0_52], %250 {strides = array<i32>} : memref<64x256xf32, #tpu.memory_space<vmem>>, vector<2x256xf32>,
    %c0_53 = arith.constant 0 : index
    %c0_54 = arith.constant 0 : index
    %252 = vector.load %arg18[%c0_53, %c0_54] : memref<64x256xf32, #tpu.memory_space<vmem>>, vector<64x256xf32>
    %253 = arith.truncf %252 : vector<64x256xf32> to vector<64x256xbf16>
    %c0_55 = arith.constant 0 : index
    %c0_56 = arith.constant 0 : index
    %254 = vector.load %arg4[%c0_55, %c0_56] : memref<256x1024xbf16, #tpu.memory_space<vmem>>, vector<256x1024xbf16>
    %cst_57 = arith.constant dense<0.000000e+00> : vector<64x1024xf32>
    %255 = tpu.matmul %253, %254, %cst_57 {dimension_numbers = #tpu.dot_dimension_numbers<[1], [0], [0], [1], [0, 0, 1, 1], [], []>} : vector<64x256xbf16>, vector<256x1024xbf16>, vector<64x1024xf32> -> vector<64x1024xf32>
    %c0_58 = arith.constant 0 : index
    %c0_59 = arith.constant 0 : index
    %256 = vector.load %arg5[%c0_58, %c0_59] : memref<1x1024xf32, #tpu.memory_space<vmem>>, vector<1x1024xf32>
    %257 = vector.broadcast %256 : vector<1x1024xf32> to vector<64x1024xf32>
    %258 = arith.addf %255, %257 : vector<64x1024xf32>
    %c0_60 = arith.constant 0 : index
    %c0_61 = arith.constant 0 : index
    %259 = vector.load %arg6[%c0_60, %c0_61] : memref<256x1024xbf16, #tpu.memory_space<vmem>>, vector<256x1024xbf16>
    %cst_62 = arith.constant 0.000000e+00 : f32
    %260 = vector.broadcast %cst_62 : f32 to vector<2x256xf32>
    %cst_63 = arith.constant 0.000000e+00 : f32
    %261 = vector.broadcast %cst_63 : f32 to vector<2x256xf32>
    %262 = vector.extract_strided_slice %258 {offsets = [0, 0], sizes = [2, 1024], strides = [1, 1]} : vector<64x1024xf32> to vector<2x1024xf32>
    %263 = arith.truncf %260 : vector<2x256xf32> to vector<2x256xbf16>
    %cst_64 = arith.constant dense<0.000000e+00> : vector<2x1024xf32>
    %264 = tpu.matmul %263, %259, %cst_64 {dimension_numbers = #tpu.dot_dimension_numbers<[1], [0], [0], [1], [0, 0, 1, 1], [], []>} : vector<2x256xbf16>, vector<256x1024xbf16>, vector<2x1024xf32> -> vector<2x1024xf32>
    %265 = arith.addf %262, %264 : vector<2x1024xf32>
    %266 = vector.extract_strided_slice %265 {offsets = [0, 0], sizes = [2, 256], strides = [1, 1]} : vector<2x1024xf32> to vector<2x256xf32>
    %267 = arith.negf %266 : vector<2x256xf32>
    %268 = math.exp %267 : vector<2x256xf32>
    %cst_65 = arith.constant 1.000000e+00 : f32
    %269 = vector.broadcast %cst_65 : f32 to vector<2x256xf32>
    %270 = arith.addf %269, %268 : vector<2x256xf32>
    %271 = arith.divf %269, %270 : vector<2x256xf32>
    %272 = vector.extract_strided_slice %265 {offsets = [0, 256], sizes = [2, 256], strides = [1, 1]} : vector<2x1024xf32> to vector<2x256xf32>
    %273 = arith.negf %272 : vector<2x256xf32>
    %274 = math.exp %273 : vector<2x256xf32>
    %cst_66 = arith.constant 1.000000e+00 : f32
    %275 = vector.broadcast %cst_66 : f32 to vector<2x256xf32>
    %276 = arith.addf %275, %274 : vector<2x256xf32>
    %277 = arith.divf %275, %276 : vector<2x256xf32>
    %278 = vector.extract_strided_slice %265 {offsets = [0, 512], sizes = [2, 256], strides = [1, 1]} : vector<2x1024xf32> to vector<2x256xf32>
    %279 = math.tanh %278 : vector<2x256xf32>
    %280 = vector.extract_strided_slice %265 {offsets = [0, 768], sizes = [2, 256], strides = [1, 1]} : vector<2x1024xf32> to vector<2x256xf32>
    %281 = arith.negf %280 : vector<2x256xf32>
    %282 = math.exp %281 : vector<2x256xf32>
    %cst_67 = arith.constant 1.000000e+00 : f32
    %283 = vector.broadcast %cst_67 : f32 to vector<2x256xf32>
    %284 = arith.addf %283, %282 : vector<2x256xf32>
    %285 = arith.divf %283, %284 : vector<2x256xf32>
    %286 = arith.mulf %277, %261 : vector<2x256xf32>
    %287 = arith.mulf %271, %279 : vector<2x256xf32>
    %288 = arith.addf %286, %287 : vector<2x256xf32>
    %289 = math.tanh %288 : vector<2x256xf32>
    %290 = arith.mulf %285, %289 : vector<2x256xf32>
    %291 = vector.extract_strided_slice %258 {offsets = [8, 0], sizes = [2, 1024], strides = [1, 1]} : vector<64x1024xf32> to vector<2x1024xf32>
    %292 = arith.truncf %290 : vector<2x256xf32> to vector<2x256xbf16>
    %cst_68 = arith.constant dense<0.000000e+00> : vector<2x1024xf32>
    %293 = tpu.matmul %292, %259, %cst_68 {dimension_numbers = #tpu.dot_dimension_numbers<[1], [0], [0], [1], [0, 0, 1, 1], [], []>} : vector<2x256xbf16>, vector<256x1024xbf16>, vector<2x1024xf32> -> vector<2x1024xf32>
    %294 = arith.addf %291, %293 : vector<2x1024xf32>
    %295 = vector.extract_strided_slice %294 {offsets = [0, 0], sizes = [2, 256], strides = [1, 1]} : vector<2x1024xf32> to vector<2x256xf32>
    %296 = arith.negf %295 : vector<2x256xf32>
    %297 = math.exp %296 : vector<2x256xf32>
    %cst_69 = arith.constant 1.000000e+00 : f32
    %298 = vector.broadcast %cst_69 : f32 to vector<2x256xf32>
    %299 = arith.addf %298, %297 : vector<2x256xf32>
    %300 = arith.divf %298, %299 : vector<2x256xf32>
    %301 = vector.extract_strided_slice %294 {offsets = [0, 256], sizes = [2, 256], strides = [1, 1]} : vector<2x1024xf32> to vector<2x256xf32>
    %302 = arith.negf %301 : vector<2x256xf32>
    %303 = math.exp %302 : vector<2x256xf32>
    %cst_70 = arith.constant 1.000000e+00 : f32
    %304 = vector.broadcast %cst_70 : f32 to vector<2x256xf32>
    %305 = arith.addf %304, %303 : vector<2x256xf32>
    %306 = arith.divf %304, %305 : vector<2x256xf32>
    %307 = vector.extract_strided_slice %294 {offsets = [0, 512], sizes = [2, 256], strides = [1, 1]} : vector<2x1024xf32> to vector<2x256xf32>
    %308 = math.tanh %307 : vector<2x256xf32>
    %309 = vector.extract_strided_slice %294 {offsets = [0, 768], sizes = [2, 256], strides = [1, 1]} : vector<2x1024xf32> to vector<2x256xf32>
    %310 = arith.negf %309 : vector<2x256xf32>
    %311 = math.exp %310 : vector<2x256xf32>
    %cst_71 = arith.constant 1.000000e+00 : f32
    %312 = vector.broadcast %cst_71 : f32 to vector<2x256xf32>
    %313 = arith.addf %312, %311 : vector<2x256xf32>
    %314 = arith.divf %312, %313 : vector<2x256xf32>
    %315 = arith.mulf %306, %288 : vector<2x256xf32>
    %316 = arith.mulf %300, %308 : vector<2x256xf32>
    %317 = arith.addf %315, %316 : vector<2x256xf32>
    %318 = math.tanh %317 : vector<2x256xf32>
    %319 = arith.mulf %314, %318 : vector<2x256xf32>
    %320 = vector.extract_strided_slice %258 {offsets = [16, 0], sizes = [2, 1024], strides = [1, 1]} : vector<64x1024xf32> to vector<2x1024xf32>
    %321 = arith.truncf %319 : vector<2x256xf32> to vector<2x256xbf16>
    %cst_72 = arith.constant dense<0.000000e+00> : vector<2x1024xf32>
    %322 = tpu.matmul %321, %259, %cst_72 {dimension_numbers = #tpu.dot_dimension_numbers<[1], [0], [0], [1], [0, 0, 1, 1], [], []>} : vector<2x256xbf16>, vector<256x1024xbf16>, vector<2x1024xf32> -> vector<2x1024xf32>
    %323 = arith.addf %320, %322 : vector<2x1024xf32>
    %324 = vector.extract_strided_slice %323 {offsets = [0, 0], sizes = [2, 256], strides = [1, 1]} : vector<2x1024xf32> to vector<2x256xf32>
    %325 = arith.negf %324 : vector<2x256xf32>
    %326 = math.exp %325 : vector<2x256xf32>
    %cst_73 = arith.constant 1.000000e+00 : f32
    %327 = vector.broadcast %cst_73 : f32 to vector<2x256xf32>
    %328 = arith.addf %327, %326 : vector<2x256xf32>
    %329 = arith.divf %327, %328 : vector<2x256xf32>
    %330 = vector.extract_strided_slice %323 {offsets = [0, 256], sizes = [2, 256], strides = [1, 1]} : vector<2x1024xf32> to vector<2x256xf32>
    %331 = arith.negf %330 : vector<2x256xf32>
    %332 = math.exp %331 : vector<2x256xf32>
    %cst_74 = arith.constant 1.000000e+00 : f32
    %333 = vector.broadcast %cst_74 : f32 to vector<2x256xf32>
    %334 = arith.addf %333, %332 : vector<2x256xf32>
    %335 = arith.divf %333, %334 : vector<2x256xf32>
    %336 = vector.extract_strided_slice %323 {offsets = [0, 512], sizes = [2, 256], strides = [1, 1]} : vector<2x1024xf32> to vector<2x256xf32>
    %337 = math.tanh %336 : vector<2x256xf32>
    %338 = vector.extract_strided_slice %323 {offsets = [0, 768], sizes = [2, 256], strides = [1, 1]} : vector<2x1024xf32> to vector<2x256xf32>
    %339 = arith.negf %338 : vector<2x256xf32>
    %340 = math.exp %339 : vector<2x256xf32>
    %cst_75 = arith.constant 1.000000e+00 : f32
    %341 = vector.broadcast %cst_75 : f32 to vector<2x256xf32>
    %342 = arith.addf %341, %340 : vector<2x256xf32>
    %343 = arith.divf %341, %342 : vector<2x256xf32>
    %344 = arith.mulf %335, %317 : vector<2x256xf32>
    %345 = arith.mulf %329, %337 : vector<2x256xf32>
    %346 = arith.addf %344, %345 : vector<2x256xf32>
    %347 = math.tanh %346 : vector<2x256xf32>
    %348 = arith.mulf %343, %347 : vector<2x256xf32>
    %349 = vector.extract_strided_slice %258 {offsets = [24, 0], sizes = [2, 1024], strides = [1, 1]} : vector<64x1024xf32> to vector<2x1024xf32>
    %350 = arith.truncf %348 : vector<2x256xf32> to vector<2x256xbf16>
    %cst_76 = arith.constant dense<0.000000e+00> : vector<2x1024xf32>
    %351 = tpu.matmul %350, %259, %cst_76 {dimension_numbers = #tpu.dot_dimension_numbers<[1], [0], [0], [1], [0, 0, 1, 1], [], []>} : vector<2x256xbf16>, vector<256x1024xbf16>, vector<2x1024xf32> -> vector<2x1024xf32>
    %352 = arith.addf %349, %351 : vector<2x1024xf32>
    %353 = vector.extract_strided_slice %352 {offsets = [0, 0], sizes = [2, 256], strides = [1, 1]} : vector<2x1024xf32> to vector<2x256xf32>
    %354 = arith.negf %353 : vector<2x256xf32>
    %355 = math.exp %354 : vector<2x256xf32>
    %cst_77 = arith.constant 1.000000e+00 : f32
    %356 = vector.broadcast %cst_77 : f32 to vector<2x256xf32>
    %357 = arith.addf %356, %355 : vector<2x256xf32>
    %358 = arith.divf %356, %357 : vector<2x256xf32>
    %359 = vector.extract_strided_slice %352 {offsets = [0, 256], sizes = [2, 256], strides = [1, 1]} : vector<2x1024xf32> to vector<2x256xf32>
    %360 = arith.negf %359 : vector<2x256xf32>
    %361 = math.exp %360 : vector<2x256xf32>
    %cst_78 = arith.constant 1.000000e+00 : f32
    %362 = vector.broadcast %cst_78 : f32 to vector<2x256xf32>
    %363 = arith.addf %362, %361 : vector<2x256xf32>
    %364 = arith.divf %362, %363 : vector<2x256xf32>
    %365 = vector.extract_strided_slice %352 {offsets = [0, 512], sizes = [2, 256], strides = [1, 1]} : vector<2x1024xf32> to vector<2x256xf32>
    %366 = math.tanh %365 : vector<2x256xf32>
    %367 = vector.extract_strided_slice %352 {offsets = [0, 768], sizes = [2, 256], strides = [1, 1]} : vector<2x1024xf32> to vector<2x256xf32>
    %368 = arith.negf %367 : vector<2x256xf32>
    %369 = math.exp %368 : vector<2x256xf32>
    %cst_79 = arith.constant 1.000000e+00 : f32
    %370 = vector.broadcast %cst_79 : f32 to vector<2x256xf32>
    %371 = arith.addf %370, %369 : vector<2x256xf32>
    %372 = arith.divf %370, %371 : vector<2x256xf32>
    %373 = arith.mulf %364, %346 : vector<2x256xf32>
    %374 = arith.mulf %358, %366 : vector<2x256xf32>
    %375 = arith.addf %373, %374 : vector<2x256xf32>
    %376 = math.tanh %375 : vector<2x256xf32>
    %377 = arith.mulf %372, %376 : vector<2x256xf32>
    %378 = vector.extract_strided_slice %258 {offsets = [32, 0], sizes = [2, 1024], strides = [1, 1]} : vector<64x1024xf32> to vector<2x1024xf32>
    %379 = arith.truncf %377 : vector<2x256xf32> to vector<2x256xbf16>
    %cst_80 = arith.constant dense<0.000000e+00> : vector<2x1024xf32>
    %380 = tpu.matmul %379, %259, %cst_80 {dimension_numbers = #tpu.dot_dimension_numbers<[1], [0], [0], [1], [0, 0, 1, 1], [], []>} : vector<2x256xbf16>, vector<256x1024xbf16>, vector<2x1024xf32> -> vector<2x1024xf32>
    %381 = arith.addf %378, %380 : vector<2x1024xf32>
    %382 = vector.extract_strided_slice %381 {offsets = [0, 0], sizes = [2, 256], strides = [1, 1]} : vector<2x1024xf32> to vector<2x256xf32>
    %383 = arith.negf %382 : vector<2x256xf32>
    %384 = math.exp %383 : vector<2x256xf32>
    %cst_81 = arith.constant 1.000000e+00 : f32
    %385 = vector.broadcast %cst_81 : f32 to vector<2x256xf32>
    %386 = arith.addf %385, %384 : vector<2x256xf32>
    %387 = arith.divf %385, %386 : vector<2x256xf32>
    %388 = vector.extract_strided_slice %381 {offsets = [0, 256], sizes = [2, 256], strides = [1, 1]} : vector<2x1024xf32> to vector<2x256xf32>
    %389 = arith.negf %388 : vector<2x256xf32>
    %390 = math.exp %389 : vector<2x256xf32>
    %cst_82 = arith.constant 1.000000e+00 : f32
    %391 = vector.broadcast %cst_82 : f32 to vector<2x256xf32>
    %392 = arith.addf %391, %390 : vector<2x256xf32>
    %393 = arith.divf %391, %392 : vector<2x256xf32>
    %394 = vector.extract_strided_slice %381 {offsets = [0, 512], sizes = [2, 256], strides = [1, 1]} : vector<2x1024xf32> to vector<2x256xf32>
    %395 = math.tanh %394 : vector<2x256xf32>
    %396 = vector.extract_strided_slice %381 {offsets = [0, 768], sizes = [2, 256], strides = [1, 1]} : vector<2x1024xf32> to vector<2x256xf32>
    %397 = arith.negf %396 : vector<2x256xf32>
    %398 = math.exp %397 : vector<2x256xf32>
    %cst_83 = arith.constant 1.000000e+00 : f32
    %399 = vector.broadcast %cst_83 : f32 to vector<2x256xf32>
    %400 = arith.addf %399, %398 : vector<2x256xf32>
    %401 = arith.divf %399, %400 : vector<2x256xf32>
    %402 = arith.mulf %393, %375 : vector<2x256xf32>
    %403 = arith.mulf %387, %395 : vector<2x256xf32>
    %404 = arith.addf %402, %403 : vector<2x256xf32>
    %405 = math.tanh %404 : vector<2x256xf32>
    %406 = arith.mulf %401, %405 : vector<2x256xf32>
    %407 = vector.extract_strided_slice %258 {offsets = [40, 0], sizes = [2, 1024], strides = [1, 1]} : vector<64x1024xf32> to vector<2x1024xf32>
    %408 = arith.truncf %406 : vector<2x256xf32> to vector<2x256xbf16>
    %cst_84 = arith.constant dense<0.000000e+00> : vector<2x1024xf32>
    %409 = tpu.matmul %408, %259, %cst_84 {dimension_numbers = #tpu.dot_dimension_numbers<[1], [0], [0], [1], [0, 0, 1, 1], [], []>} : vector<2x256xbf16>, vector<256x1024xbf16>, vector<2x1024xf32> -> vector<2x1024xf32>
    %410 = arith.addf %407, %409 : vector<2x1024xf32>
    %411 = vector.extract_strided_slice %410 {offsets = [0, 0], sizes = [2, 256], strides = [1, 1]} : vector<2x1024xf32> to vector<2x256xf32>
    %412 = arith.negf %411 : vector<2x256xf32>
    %413 = math.exp %412 : vector<2x256xf32>
    %cst_85 = arith.constant 1.000000e+00 : f32
    %414 = vector.broadcast %cst_85 : f32 to vector<2x256xf32>
    %415 = arith.addf %414, %413 : vector<2x256xf32>
    %416 = arith.divf %414, %415 : vector<2x256xf32>
    %417 = vector.extract_strided_slice %410 {offsets = [0, 256], sizes = [2, 256], strides = [1, 1]} : vector<2x1024xf32> to vector<2x256xf32>
    %418 = arith.negf %417 : vector<2x256xf32>
    %419 = math.exp %418 : vector<2x256xf32>
    %cst_86 = arith.constant 1.000000e+00 : f32
    %420 = vector.broadcast %cst_86 : f32 to vector<2x256xf32>
    %421 = arith.addf %420, %419 : vector<2x256xf32>
    %422 = arith.divf %420, %421 : vector<2x256xf32>
    %423 = vector.extract_strided_slice %410 {offsets = [0, 512], sizes = [2, 256], strides = [1, 1]} : vector<2x1024xf32> to vector<2x256xf32>
    %424 = math.tanh %423 : vector<2x256xf32>
    %425 = vector.extract_strided_slice %410 {offsets = [0, 768], sizes = [2, 256], strides = [1, 1]} : vector<2x1024xf32> to vector<2x256xf32>
    %426 = arith.negf %425 : vector<2x256xf32>
    %427 = math.exp %426 : vector<2x256xf32>
    %cst_87 = arith.constant 1.000000e+00 : f32
    %428 = vector.broadcast %cst_87 : f32 to vector<2x256xf32>
    %429 = arith.addf %428, %427 : vector<2x256xf32>
    %430 = arith.divf %428, %429 : vector<2x256xf32>
    %431 = arith.mulf %422, %404 : vector<2x256xf32>
    %432 = arith.mulf %416, %424 : vector<2x256xf32>
    %433 = arith.addf %431, %432 : vector<2x256xf32>
    %434 = math.tanh %433 : vector<2x256xf32>
    %435 = arith.mulf %430, %434 : vector<2x256xf32>
    %436 = vector.extract_strided_slice %258 {offsets = [48, 0], sizes = [2, 1024], strides = [1, 1]} : vector<64x1024xf32> to vector<2x1024xf32>
    %437 = arith.truncf %435 : vector<2x256xf32> to vector<2x256xbf16>
    %cst_88 = arith.constant dense<0.000000e+00> : vector<2x1024xf32>
    %438 = tpu.matmul %437, %259, %cst_88 {dimension_numbers = #tpu.dot_dimension_numbers<[1], [0], [0], [1], [0, 0, 1, 1], [], []>} : vector<2x256xbf16>, vector<256x1024xbf16>, vector<2x1024xf32> -> vector<2x1024xf32>
    %439 = arith.addf %436, %438 : vector<2x1024xf32>
    %440 = vector.extract_strided_slice %439 {offsets = [0, 0], sizes = [2, 256], strides = [1, 1]} : vector<2x1024xf32> to vector<2x256xf32>
    %441 = arith.negf %440 : vector<2x256xf32>
    %442 = math.exp %441 : vector<2x256xf32>
    %cst_89 = arith.constant 1.000000e+00 : f32
    %443 = vector.broadcast %cst_89 : f32 to vector<2x256xf32>
    %444 = arith.addf %443, %442 : vector<2x256xf32>
    %445 = arith.divf %443, %444 : vector<2x256xf32>
    %446 = vector.extract_strided_slice %439 {offsets = [0, 256], sizes = [2, 256], strides = [1, 1]} : vector<2x1024xf32> to vector<2x256xf32>
    %447 = arith.negf %446 : vector<2x256xf32>
    %448 = math.exp %447 : vector<2x256xf32>
    %cst_90 = arith.constant 1.000000e+00 : f32
    %449 = vector.broadcast %cst_90 : f32 to vector<2x256xf32>
    %450 = arith.addf %449, %448 : vector<2x256xf32>
    %451 = arith.divf %449, %450 : vector<2x256xf32>
    %452 = vector.extract_strided_slice %439 {offsets = [0, 512], sizes = [2, 256], strides = [1, 1]} : vector<2x1024xf32> to vector<2x256xf32>
    %453 = math.tanh %452 : vector<2x256xf32>
    %454 = vector.extract_strided_slice %439 {offsets = [0, 768], sizes = [2, 256], strides = [1, 1]} : vector<2x1024xf32> to vector<2x256xf32>
    %455 = arith.negf %454 : vector<2x256xf32>
    %456 = math.exp %455 : vector<2x256xf32>
    %cst_91 = arith.constant 1.000000e+00 : f32
    %457 = vector.broadcast %cst_91 : f32 to vector<2x256xf32>
    %458 = arith.addf %457, %456 : vector<2x256xf32>
    %459 = arith.divf %457, %458 : vector<2x256xf32>
    %460 = arith.mulf %451, %433 : vector<2x256xf32>
    %461 = arith.mulf %445, %453 : vector<2x256xf32>
    %462 = arith.addf %460, %461 : vector<2x256xf32>
    %463 = math.tanh %462 : vector<2x256xf32>
    %464 = arith.mulf %459, %463 : vector<2x256xf32>
    %465 = vector.extract_strided_slice %258 {offsets = [56, 0], sizes = [2, 1024], strides = [1, 1]} : vector<64x1024xf32> to vector<2x1024xf32>
    %466 = arith.truncf %464 : vector<2x256xf32> to vector<2x256xbf16>
    %cst_92 = arith.constant dense<0.000000e+00> : vector<2x1024xf32>
    %467 = tpu.matmul %466, %259, %cst_92 {dimension_numbers = #tpu.dot_dimension_numbers<[1], [0], [0], [1], [0, 0, 1, 1], [], []>} : vector<2x256xbf16>, vector<256x1024xbf16>, vector<2x1024xf32> -> vector<2x1024xf32>
    %468 = arith.addf %465, %467 : vector<2x1024xf32>
    %469 = vector.extract_strided_slice %468 {offsets = [0, 0], sizes = [2, 256], strides = [1, 1]} : vector<2x1024xf32> to vector<2x256xf32>
    %470 = arith.negf %469 : vector<2x256xf32>
    %471 = math.exp %470 : vector<2x256xf32>
    %cst_93 = arith.constant 1.000000e+00 : f32
    %472 = vector.broadcast %cst_93 : f32 to vector<2x256xf32>
    %473 = arith.addf %472, %471 : vector<2x256xf32>
    %474 = arith.divf %472, %473 : vector<2x256xf32>
    %475 = vector.extract_strided_slice %468 {offsets = [0, 256], sizes = [2, 256], strides = [1, 1]} : vector<2x1024xf32> to vector<2x256xf32>
    %476 = arith.negf %475 : vector<2x256xf32>
    %477 = math.exp %476 : vector<2x256xf32>
    %cst_94 = arith.constant 1.000000e+00 : f32
    %478 = vector.broadcast %cst_94 : f32 to vector<2x256xf32>
    %479 = arith.addf %478, %477 : vector<2x256xf32>
    %480 = arith.divf %478, %479 : vector<2x256xf32>
    %481 = vector.extract_strided_slice %468 {offsets = [0, 512], sizes = [2, 256], strides = [1, 1]} : vector<2x1024xf32> to vector<2x256xf32>
    %482 = math.tanh %481 : vector<2x256xf32>
    %483 = vector.extract_strided_slice %468 {offsets = [0, 768], sizes = [2, 256], strides = [1, 1]} : vector<2x1024xf32> to vector<2x256xf32>
    %484 = arith.negf %483 : vector<2x256xf32>
    %485 = math.exp %484 : vector<2x256xf32>
    %cst_95 = arith.constant 1.000000e+00 : f32
    %486 = vector.broadcast %cst_95 : f32 to vector<2x256xf32>
    %487 = arith.addf %486, %485 : vector<2x256xf32>
    %488 = arith.divf %486, %487 : vector<2x256xf32>
    %489 = arith.mulf %480, %462 : vector<2x256xf32>
    %490 = arith.mulf %474, %482 : vector<2x256xf32>
    %491 = arith.addf %489, %490 : vector<2x256xf32>
    %492 = math.tanh %491 : vector<2x256xf32>
    %493 = arith.mulf %488, %492 : vector<2x256xf32>
    %c0_96 = arith.constant 0 : index
    %c0_97 = arith.constant 0 : index
    %494 = vector.load %arg7[%c0_96, %c0_97] : memref<512x1024xbf16, #tpu.memory_space<vmem>>, vector<512x1024xbf16>
    %495 = arith.truncf %250 : vector<2x256xf32> to vector<2x256xbf16>
    %496 = vector.extract_strided_slice %494 {offsets = [0, 0], sizes = [256, 1024], strides = [1, 1]} : vector<512x1024xbf16> to vector<256x1024xbf16>
    %cst_98 = arith.constant dense<0.000000e+00> : vector<2x1024xf32>
    %497 = tpu.matmul %495, %496, %cst_98 {dimension_numbers = #tpu.dot_dimension_numbers<[1], [0], [0], [1], [0, 0, 1, 1], [], []>} : vector<2x256xbf16>, vector<256x1024xbf16>, vector<2x1024xf32> -> vector<2x1024xf32>
    %498 = arith.truncf %493 : vector<2x256xf32> to vector<2x256xbf16>
    %499 = vector.extract_strided_slice %494 {offsets = [256, 0], sizes = [256, 1024], strides = [1, 1]} : vector<512x1024xbf16> to vector<256x1024xbf16>
    %cst_99 = arith.constant dense<0.000000e+00> : vector<2x1024xf32>
    %500 = tpu.matmul %498, %499, %cst_99 {dimension_numbers = #tpu.dot_dimension_numbers<[1], [0], [0], [1], [0, 0, 1, 1], [], []>} : vector<2x256xbf16>, vector<256x1024xbf16>, vector<2x1024xf32> -> vector<2x1024xf32>
    %501 = arith.addf %497, %500 : vector<2x1024xf32>
    %c0_100 = arith.constant 0 : index
    %c0_101 = arith.constant 0 : index
    %502 = vector.load %arg8[%c0_100, %c0_101] : memref<1x1024xf32, #tpu.memory_space<vmem>>, vector<1x1024xf32>
    %503 = vector.broadcast %502 : vector<1x1024xf32> to vector<2x1024xf32>
    %504 = arith.addf %501, %503 : vector<2x1024xf32>
    %505 = vector.extract_strided_slice %504 {offsets = [0, 0], sizes = [2, 256], strides = [1, 1]} : vector<2x1024xf32> to vector<2x256xf32>
    %506 = arith.negf %505 : vector<2x256xf32>
    %507 = math.exp %506 : vector<2x256xf32>
    %cst_102 = arith.constant 1.000000e+00 : f32
    %508 = vector.broadcast %cst_102 : f32 to vector<2x256xf32>
    %509 = arith.addf %508, %507 : vector<2x256xf32>
    %510 = arith.divf %508, %509 : vector<2x256xf32>
    %511 = vector.extract_strided_slice %504 {offsets = [0, 512], sizes = [2, 256], strides = [1, 1]} : vector<2x1024xf32> to vector<2x256xf32>
    %512 = math.tanh %511 : vector<2x256xf32>
    %513 = vector.extract_strided_slice %504 {offsets = [0, 768], sizes = [2, 256], strides = [1, 1]} : vector<2x1024xf32> to vector<2x256xf32>
    %514 = arith.negf %513 : vector<2x256xf32>
    %515 = math.exp %514 : vector<2x256xf32>
    %cst_103 = arith.constant 1.000000e+00 : f32
    %516 = vector.broadcast %cst_103 : f32 to vector<2x256xf32>
    %517 = arith.addf %516, %515 : vector<2x256xf32>
    %518 = arith.divf %516, %517 : vector<2x256xf32>
    %519 = arith.mulf %510, %512 : vector<2x256xf32>
    %520 = math.tanh %519 : vector<2x256xf32>
    %521 = arith.mulf %518, %520 : vector<2x256xf32>
    %522 = arith.truncf %521 : vector<2x256xf32> to vector<2x256xbf16>
    %c0_104 = arith.constant 0 : index
    %c0_105 = arith.constant 0 : index
    %523 = vector.load %arg9[%c0_104, %c0_105] : memref<256x1024xbf16, #tpu.memory_space<vmem>>, vector<256x1024xbf16>
    %cst_106 = arith.constant dense<0.000000e+00> : vector<2x1024xf32>
    %524 = tpu.matmul %522, %523, %cst_106 {dimension_numbers = #tpu.dot_dimension_numbers<[1], [0], [0], [1], [0, 0, 1, 1], [], []>} : vector<2x256xbf16>, vector<256x1024xbf16>, vector<2x1024xf32> -> vector<2x1024xf32>
    %c0_107 = arith.constant 0 : index
    %c0_108 = arith.constant 0 : index
    %525 = vector.load %arg10[%c0_107, %c0_108] : memref<1x1024xf32, #tpu.memory_space<vmem>>, vector<1x1024xf32>
    %526 = vector.broadcast %525 : vector<1x1024xf32> to vector<2x1024xf32>
    %527 = arith.addf %524, %526 : vector<2x1024xf32>
    %528 = vector.extract_strided_slice %527 {offsets = [0, 0], sizes = [2, 256], strides = [1, 1]} : vector<2x1024xf32> to vector<2x256xf32>
    %529 = arith.negf %528 : vector<2x256xf32>
    %530 = math.exp %529 : vector<2x256xf32>
    %cst_109 = arith.constant 1.000000e+00 : f32
    %531 = vector.broadcast %cst_109 : f32 to vector<2x256xf32>
    %532 = arith.addf %531, %530 : vector<2x256xf32>
    %533 = arith.divf %531, %532 : vector<2x256xf32>
    %534 = vector.extract_strided_slice %527 {offsets = [0, 512], sizes = [2, 256], strides = [1, 1]} : vector<2x1024xf32> to vector<2x256xf32>
    %535 = math.tanh %534 : vector<2x256xf32>
    %536 = vector.extract_strided_slice %527 {offsets = [0, 768], sizes = [2, 256], strides = [1, 1]} : vector<2x1024xf32> to vector<2x256xf32>
    %537 = arith.negf %536 : vector<2x256xf32>
    %538 = math.exp %537 : vector<2x256xf32>
    %cst_110 = arith.constant 1.000000e+00 : f32
    %539 = vector.broadcast %cst_110 : f32 to vector<2x256xf32>
    %540 = arith.addf %539, %538 : vector<2x256xf32>
    %541 = arith.divf %539, %540 : vector<2x256xf32>
    %542 = arith.mulf %533, %535 : vector<2x256xf32>
    %543 = math.tanh %542 : vector<2x256xf32>
    %544 = arith.mulf %541, %543 : vector<2x256xf32>
    %c0_111 = arith.constant 0 : index
    %c0_112 = arith.constant 0 : index
    %545 = vector.load %arg11[%c0_111, %c0_112] : memref<512x256xbf16, #tpu.memory_space<vmem>>, vector<512x256xbf16>
    %546 = arith.truncf %521 : vector<2x256xf32> to vector<2x256xbf16>
    %547 = vector.extract_strided_slice %545 {offsets = [0, 0], sizes = [256, 256], strides = [1, 1]} : vector<512x256xbf16> to vector<256x256xbf16>
    %cst_113 = arith.constant dense<0.000000e+00> : vector<2x256xf32>
    %548 = tpu.matmul %546, %547, %cst_113 {dimension_numbers = #tpu.dot_dimension_numbers<[1], [0], [0], [1], [0, 0, 1, 1], [], []>} : vector<2x256xbf16>, vector<256x256xbf16>, vector<2x256xf32> -> vector<2x256xf32>
    %549 = arith.truncf %544 : vector<2x256xf32> to vector<2x256xbf16>
    %550 = vector.extract_strided_slice %545 {offsets = [256, 0], sizes = [256, 256], strides = [1, 1]} : vector<512x256xbf16> to vector<256x256xbf16>
    %cst_114 = arith.constant dense<0.000000e+00> : vector<2x256xf32>
    %551 = tpu.matmul %549, %550, %cst_114 {dimension_numbers = #tpu.dot_dimension_numbers<[1], [0], [0], [1], [0, 0, 1, 1], [], []>} : vector<2x256xbf16>, vector<256x256xbf16>, vector<2x256xf32> -> vector<2x256xf32>
    %552 = arith.addf %548, %551 : vector<2x256xf32>
    %c0_115 = arith.constant 0 : index
    %c0_116 = arith.constant 0 : index
    %553 = vector.load %arg12[%c0_115, %c0_116] : memref<1x256xf32, #tpu.memory_space<vmem>>, vector<1x256xf32>
    %554 = vector.broadcast %553 : vector<1x256xf32> to vector<2x256xf32>
    %555 = arith.addf %552, %554 : vector<2x256xf32>
    %cst_117 = arith.constant 0.000000e+00 : f32
    %556 = vector.broadcast %cst_117 : f32 to vector<2x256xf32>
    %557 = arith.maximumf %555, %556 : vector<2x256xf32>
    %558 = arith.truncf %557 : vector<2x256xf32> to vector<2x256xbf16>
    %c0_118 = arith.constant 0 : index
    %c0_119 = arith.constant 0 : index
    %559 = vector.load %arg13[%c0_118, %c0_119] : memref<256x128xbf16, #tpu.memory_space<vmem>>, vector<256x128xbf16>
    %cst_120 = arith.constant dense<0.000000e+00> : vector<2x128xf32>
    %560 = tpu.matmul %558, %559, %cst_120 {dimension_numbers = #tpu.dot_dimension_numbers<[1], [0], [0], [1], [0, 0, 1, 1], [], []>} : vector<2x256xbf16>, vector<256x128xbf16>, vector<2x128xf32> -> vector<2x128xf32>
    %c0_121 = arith.constant 0 : index
    %c0_122 = arith.constant 0 : index
    %561 = vector.load %arg14[%c0_121, %c0_122] : memref<1x128xf32, #tpu.memory_space<vmem>>, vector<1x128xf32>
    %562 = vector.broadcast %561 : vector<1x128xf32> to vector<2x128xf32>
    %563 = arith.addf %560, %562 : vector<2x128xf32>
    %cst_123 = arith.constant 0.000000e+00 : f32
    %564 = vector.broadcast %cst_123 : f32 to vector<2x128xf32>
    %565 = arith.maximumf %563, %564 : vector<2x128xf32>
    %566 = arith.truncf %565 : vector<2x128xf32> to vector<2x128xbf16>
    %c0_124 = arith.constant 0 : index
    %c0_125 = arith.constant 0 : index
    %567 = vector.load %arg15[%c0_124, %c0_125] : memref<128x4xbf16, #tpu.memory_space<vmem>>, vector<128x4xbf16>
    %cst_126 = arith.constant dense<0.000000e+00> : vector<2x4xf32>
    %568 = tpu.matmul %566, %567, %cst_126 {dimension_numbers = #tpu.dot_dimension_numbers<[1], [0], [0], [1], [0, 0, 1, 1], [], []>} : vector<2x128xbf16>, vector<128x4xbf16>, vector<2x4xf32> -> vector<2x4xf32>
    %c0_127 = arith.constant 0 : index
    %c0_128 = arith.constant 0 : index
    %569 = vector.load %arg16[%c0_127, %c0_128] : memref<1x4xf32, #tpu.memory_space<vmem>>, vector<1x4xf32>
    %570 = vector.broadcast %569 : vector<1x4xf32> to vector<2x4xf32>
    %571 = arith.addf %568, %570 : vector<2x4xf32>
    %c0_129 = arith.constant 0 : index
    %c0_130 = arith.constant 0 : index
    %572 = vector.load %arg17[%c0_129, %c0_130] : memref<2x4xf32, #tpu.memory_space<vmem>>, vector<2x4xf32>
    tpu.vector_store %arg17[%c0_129, %c0_130], %571 {strides = array<i32>} : memref<2x4xf32, #tpu.memory_space<vmem>>, vector<2x4xf32>,
    return
  }
}

</mosaic_0001>

<llo_original>
// kernel: lstm_model_forward.1
$region0: #{lstm_model_forward.1}
  #allocation0 [shape = 'u32[]', space=smem, size = 0x4, offset = 0x4, fixed_abs, tag = 'smem constant byte address 0x4 - core index']
  #allocation1 [shape = 'u32[144,128]{1,0:T(1,128)}', space=vmem, size = 0x12000, scoped, tag = 'internal scratch']
  #allocation2 [shape = 'f32[64,256]{1,0:T(8,128)}', space=vmem, size = 0x10000, scoped, tag = 'scratch operand']
  %s0 = inlined_call_operand.vmem [shape: f32[64,16], index: 0, kind: input, shape index: {}]
  %s1 = inlined_call_operand.hbm [shape: bf16[16,1024], index: 1, kind: input, shape index: {}]
  %s2 = inlined_call_operand.hbm [shape: f32[1,1024], index: 2, kind: input, shape index: {}]
  %s3 = inlined_call_operand.hbm [shape: bf16[256,1024], index: 3, kind: input, shape index: {}]
  %s4 = inlined_call_operand.hbm [shape: bf16[256,1024], index: 4, kind: input, shape index: {}]
  %s5 = inlined_call_operand.hbm [shape: f32[1,1024], index: 5, kind: input, shape index: {}]
  %s6 = inlined_call_operand.hbm [shape: bf16[256,1024], index: 6, kind: input, shape index: {}]
  %s7 = inlined_call_operand.hbm [shape: bf16[512,1024], index: 7, kind: input, shape index: {}]
  %s8 = inlined_call_operand.hbm [shape: f32[1,1024], index: 8, kind: input, shape index: {}]
  %s9 = inlined_call_operand.hbm [shape: bf16[256,1024], index: 9, kind: input, shape index: {}]
  %s10 = inlined_call_operand.vmem [shape: f32[1,1024], index: 10, kind: input, shape index: {}]
  %s11 = inlined_call_operand.hbm [shape: bf16[512,256], index: 11, kind: input, shape index: {}]
  %s12 = inlined_call_operand.hbm [shape: f32[1,256], index: 12, kind: input, shape index: {}]
  %s13 = inlined_call_operand.vmem [shape: bf16[256,128], index: 13, kind: input, shape index: {}]
  %s14 = inlined_call_operand.vmem [shape: f32[1,128], index: 14, kind: input, shape index: {}]
  %s15 = inlined_call_operand.hbm [shape: bf16[128,4], index: 15, kind: input, shape index: {}]
  %s16 = inlined_call_operand.vmem [shape: f32[1,4], index: 16, kind: input, shape index: {}]
  %s17 = inlined_call_operand.hbm [shape: f32[2,4], index: 17, kind: output, shape index: {}]
  %s18 = sld [smem:[#allocation0]]
  $region126: #{lstm_model_forward.1} parent=0
    _
  %s20 = ssub.s32 1, %s18
  %s21 = scalar_select 0, %s20, %s18
  $region1: #{lstm_model_forward.1} parent=0
    #allocation3 [shape = 'u8[32768]{0}', space=vmem, size = 0x8000, scoped, tag = 'input window, operand 1, single buffered']
    #allocation4 [shape = 's32[1]{0}', space=sflag, size = 0x4, scoped, tag = 'scoped memory for lstm_model_forward.1']
    #allocation5 [shape = 's32[1]{0}', space=sflag, size = 0x4, scoped, tag = 'scoped memory for lstm_model_forward.1']
    #allocation6 [shape = 'u8[4096]{0}', space=vmem, size = 0x1000, scoped, tag = 'input window, operand 2, single buffered']
    #allocation7 [shape = 's32[1]{0}', space=sflag, size = 0x4, scoped, tag = 'scoped memory for lstm_model_forward.1']
    #allocation8 [shape = 'u8[524288]{0}', space=vmem, size = 0x80000, scoped, tag = 'input window, operand 3, single buffered']
    #allocation9 [shape = 'u8[524288]{0}', space=vmem, size = 0x80000, scoped, tag = 'input window, operand 4, single buffered']
    #allocation10 [shape = 's32[1]{0}', space=sflag, size = 0x4, scoped, tag = 'scoped memory for lstm_model_forward.1']
    #allocation11 [shape = 'u8[4096]{0}', space=vmem, size = 0x1000, scoped, tag = 'input window, operand 5, single buffered']
    #allocation12 [shape = 'u8[524288]{0}', space=vmem, size = 0x80000, scoped, tag = 'input window, operand 6, single buffered']
    #allocation13 [shape = 's32[1]{0}', space=sflag, size = 0x4, scoped, tag = 'scoped memory for lstm_model_forward.1']
    #allocation14 [shape = 'u8[1048576]{0}', space=vmem, size = 0x100000, scoped, tag = 'input window, operand 7, single buffered']
    #allocation15 [shape = 'u8[4096]{0}', space=vmem, size = 0x1000, scoped, tag = 'input window, operand 8, single buffered']
    #allocation16 [shape = 's32[1]{0}', space=sflag, size = 0x4, scoped, tag = 'scoped memory for lstm_model_forward.1']
    #allocation17 [shape = 'u8[524288]{0}', space=vmem, size = 0x80000, scoped, tag = 'input window, operand 9, single buffered']
    #allocation18 [shape = 'u8[262144]{0}', space=vmem, size = 0x40000, scoped, tag = 'input window, operand 11, single buffered']
    #allocation19 [shape = 's32[1]{0}', space=sflag, size = 0x4, scoped, tag = 'scoped memory for lstm_model_forward.1']
    #allocation20 [shape = 'u8[1024]{0}', space=vmem, size = 0x400, scoped, tag = 'input window, operand 12, single buffered']
    #allocation21 [shape = 'u8[32768]{0}', space=vmem, size = 0x8000, scoped, tag = 'input window, operand 15, single buffered']
    #allocation22 [shape = 's32[1]{0}', space=sflag, size = 0x4, scoped, tag = 'scoped memory for lstm_model_forward.1']
    #allocation23 [shape = 'u8[1024]{0}', space=vmem, size = 0x400, scoped, tag = 'output window, operand 0, single buffered']
    %22 = vsyncpa [#allocation4], 0
    %23 = vsyncpa [#allocation7], 0
    %24 = vsyncpa [#allocation10], 0
    %25 = vsyncpa [#allocation13], 0
    %26 = vsyncpa [#allocation16], 0
    %27 = vsyncpa [#allocation19], 0
    %28 = vsyncpa [#allocation22], 0
    %29 = vsyncpa [#allocation5], 0
    // Predicated region
    $region2: #{lstm_model_forward.1} parent=1 // pred_check
      _
    $region3: #{lstm_model_forward.1} parent=1 // pred_check_branch
      %31 = sbr.rel (0) target = $region5
    $region4: #{lstm_model_forward.1} parent=1 // pred_region
      _
    $region5: #{lstm_model_forward.1} parent=1 // pred_fallthru
      _
    // Predicated region
    $region6: #{lstm_model_forward.1} parent=1 // pred_check
      _
    $region7: #{lstm_model_forward.1} parent=1 // pred_check_branch
      %33 = sbr.rel (0) target = $region9
    $region8: #{lstm_model_forward.1} parent=1 // pred_region
      %s35 = ssub.s32 1024, 1024
      %36 = vsyncadd [#allocation4], %s35
      %s37 = sshll.u32 [#allocation3], 4
      %s38 = int_to_ptr.vmem [resolvable:$true] %s37
      %43 = dma.hbm_to_vmem [thread:$0]  %s1, 1024, %s38, [#allocation4], 512, 512, 32
    $region9: #{lstm_model_forward.1} parent=1 // pred_fallthru
      _
    // Predicated region
    $region10: #{lstm_model_forward.1} parent=1 // pred_check
      _
    $region11: #{lstm_model_forward.1} parent=1 // pred_check_branch
      %45 = sbr.rel (0) target = $region13
    $region12: #{lstm_model_forward.1} parent=1 // pred_region
      %s47 = ssub.s32 128, 128
      %48 = vsyncadd [#allocation7], %s47
      %s50 = sshll.u32 [#allocation6], 4
      %s51 = int_to_ptr.vmem [resolvable:$true] %s50
      %53 = dma.hbm_to_vmem [thread:$0]  %s2, 128, %s51, [#allocation7]
    $region13: #{lstm_model_forward.1} parent=1 // pred_fallthru
      _
    // Predicated region
    $region14: #{lstm_model_forward.1} parent=1 // pred_check
      _
    $region15: #{lstm_model_forward.1} parent=1 // pred_check_branch
      %55 = sbr.rel (0) target = $region17
    $region16: #{lstm_model_forward.1} parent=1 // pred_region
      %s57 = ssub.s32 16384, 16384
      %58 = vsyncadd [#allocation7], %s57
      %s59 = sshll.u32 [#allocation8], 4
      %s60 = int_to_ptr.vmem [resolvable:$true] %s59
      %65 = dma.hbm_to_vmem [thread:$0]  %s3, 16384, %s60, [#allocation7], 512, 512, 32
    $region17: #{lstm_model_forward.1} parent=1 // pred_fallthru
      _
    // Predicated region
    $region18: #{lstm_model_forward.1} parent=1 // pred_check
      _
    $region19: #{lstm_model_forward.1} parent=1 // pred_check_branch
      %67 = sbr.rel (0) target = $region21
    $region20: #{lstm_model_forward.1} parent=1 // pred_region
      %s69 = ssub.s32 16384, 16384
      %70 = vsyncadd [#allocation10], %s69
      %s71 = sshll.u32 [#allocation9], 4
      %s72 = int_to_ptr.vmem [resolvable:$true] %s71
      %77 = dma.hbm_to_vmem [thread:$0]  %s4, 16384, %s72, [#allocation10], 512, 512, 32
    $region21: #{lstm_model_forward.1} parent=1 // pred_fallthru
      _
    // Predicated region
    $region22: #{lstm_model_forward.1} parent=1 // pred_check
      _
    $region23: #{lstm_model_forward.1} parent=1 // pred_check_branch
      %79 = sbr.rel (0) target = $region25
    $region24: #{lstm_model_forward.1} parent=1 // pred_region
      %s81 = ssub.s32 128, 128
      %82 = vsyncadd [#allocation10], %s81
      %s84 = sshll.u32 [#allocation11], 4
      %s85 = int_to_ptr.vmem [resolvable:$true] %s84
      %87 = dma.hbm_to_vmem [thread:$0]  %s5, 128, %s85, [#allocation10]
    $region25: #{lstm_model_forward.1} parent=1 // pred_fallthru
      _
    // Predicated region
    $region26: #{lstm_model_forward.1} parent=1 // pred_check
      _
    $region27: #{lstm_model_forward.1} parent=1 // pred_check_branch
      %89 = sbr.rel (0) target = $region29
    $region28: #{lstm_model_forward.1} parent=1 // pred_region
      %s91 = ssub.s32 16384, 16384
      %92 = vsyncadd [#allocation13], %s91
      %s93 = sshll.u32 [#allocation12], 4
      %s94 = int_to_ptr.vmem [resolvable:$true] %s93
      %99 = dma.hbm_to_vmem [thread:$0]  %s6, 16384, %s94, [#allocation13], 512, 512, 32
    $region29: #{lstm_model_forward.1} parent=1 // pred_fallthru
      _
    // Predicated region
    $region30: #{lstm_model_forward.1} parent=1 // pred_check
      _
    $region31: #{lstm_model_forward.1} parent=1 // pred_check_branch
      %101 = sbr.rel (0) target = $region33
    $region32: #{lstm_model_forward.1} parent=1 // pred_region
      %s103 = ssub.s32 32768, 32768
      %104 = vsyncadd [#allocation13], %s103
      %s105 = sshll.u32 [#allocation14], 4
      %s106 = int_to_ptr.vmem [resolvable:$true] %s105
      %111 = dma.hbm_to_vmem [thread:$0]  %s7, 32768, %s106, [#allocation13], 512, 512, 32
    $region33: #{lstm_model_forward.1} parent=1 // pred_fallthru
      _
    // Predicated region
    $region34: #{lstm_model_forward.1} parent=1 // pred_check
      _
    $region35: #{lstm_model_forward.1} parent=1 // pred_check_branch
      %113 = sbr.rel (0) target = $region37
    $region36: #{lstm_model_forward.1} parent=1 // pred_region
      %s115 = ssub.s32 128, 128
      %116 = vsyncadd [#allocation16], %s115
      %s118 = sshll.u32 [#allocation15], 4
      %s119 = int_to_ptr.vmem [resolvable:$true] %s118
      %121 = dma.hbm_to_vmem [thread:$0]  %s8, 128, %s119, [#allocation16]
    $region37: #{lstm_model_forward.1} parent=1 // pred_fallthru
      _
    // Predicated region
    $region38: #{lstm_model_forward.1} parent=1 // pred_check
      _
    $region39: #{lstm_model_forward.1} parent=1 // pred_check_branch
      %123 = sbr.rel (0) target = $region41
    $region40: #{lstm_model_forward.1} parent=1 // pred_region
      %s125 = ssub.s32 16384, 16384
      %126 = vsyncadd [#allocation16], %s125
      %s127 = sshll.u32 [#allocation17], 4
      %s128 = int_to_ptr.vmem [resolvable:$true] %s127
      %133 = dma.hbm_to_vmem [thread:$0]  %s9, 16384, %s128, [#allocation16], 512, 512, 32
    $region41: #{lstm_model_forward.1} parent=1 // pred_fallthru
      _
    // Predicated region
    $region42: #{lstm_model_forward.1} parent=1 // pred_check
      _
    $region43: #{lstm_model_forward.1} parent=1 // pred_check_branch
      %135 = sbr.rel (0) target = $region45
    $region44: #{lstm_model_forward.1} parent=1 // pred_region
      _
    $region45: #{lstm_model_forward.1} parent=1 // pred_fallthru
      _
    // Predicated region
    $region46: #{lstm_model_forward.1} parent=1 // pred_check
      _
    $region47: #{lstm_model_forward.1} parent=1 // pred_check_branch
      %137 = sbr.rel (0) target = $region49
    $region48: #{lstm_model_forward.1} parent=1 // pred_region
      %s139 = ssub.s32 8192, 8192
      %140 = vsyncadd [#allocation19], %s139
      %s141 = sshll.u32 [#allocation18], 4
      %s142 = int_to_ptr.vmem [resolvable:$true] %s141
      %147 = dma.hbm_to_vmem [thread:$0]  %s11, 8192, %s142, [#allocation19], 128, 128, 8
    $region49: #{lstm_model_forward.1} parent=1 // pred_fallthru
      _
    // Predicated region
    $region50: #{lstm_model_forward.1} parent=1 // pred_check
      _
    $region51: #{lstm_model_forward.1} parent=1 // pred_check_branch
      %149 = sbr.rel (0) target = $region53
    $region52: #{lstm_model_forward.1} parent=1 // pred_region
      %s151 = ssub.s32 32, 32
      %152 = vsyncadd [#allocation19], %s151
      %s154 = sshll.u32 [#allocation20], 4
      %s155 = int_to_ptr.vmem [resolvable:$true] %s154
      %157 = dma.hbm_to_vmem [thread:$0]  %s12, 32, %s155, [#allocation19]
    $region53: #{lstm_model_forward.1} parent=1 // pred_fallthru
      _
    // Predicated region
    $region54: #{lstm_model_forward.1} parent=1 // pred_check
      _
    $region55: #{lstm_model_forward.1} parent=1 // pred_check_branch
      %159 = sbr.rel (0) target = $region57
    $region56: #{lstm_model_forward.1} parent=1 // pred_region
      _
    $region57: #{lstm_model_forward.1} parent=1 // pred_fallthru
      _
    // Predicated region
    $region58: #{lstm_model_forward.1} parent=1 // pred_check
      _
    $region59: #{lstm_model_forward.1} parent=1 // pred_check_branch
      %161 = sbr.rel (0) target = $region61
    $region60: #{lstm_model_forward.1} parent=1 // pred_region
      _
    $region61: #{lstm_model_forward.1} parent=1 // pred_fallthru
      _
    // Predicated region
    $region62: #{lstm_model_forward.1} parent=1 // pred_check
      _
    $region63: #{lstm_model_forward.1} parent=1 // pred_check_branch
      %163 = sbr.rel (0) target = $region65
    $region64: #{lstm_model_forward.1} parent=1 // pred_region
      %s165 = ssub.s32 1024, 1024
      %166 = vsyncadd [#allocation22], %s165
      %s167 = sshll.u32 [#allocation21], 4
      %s168 = int_to_ptr.vmem [resolvable:$true] %s167
      %173 = dma.hbm_to_vmem [thread:$0]  %s15, 1024, %s168, [#allocation22], 64, 64, 4
    $region65: #{lstm_model_forward.1} parent=1 // pred_fallthru
      _
    // Predicated region
    $region66: #{lstm_model_forward.1} parent=1 // pred_check
      _
    $region67: #{lstm_model_forward.1} parent=1 // pred_check_branch
      %175 = sbr.rel (0) target = $region69
    $region68: #{lstm_model_forward.1} parent=1 // pred_region
      _
    $region69: #{lstm_model_forward.1} parent=1 // pred_fallthru
      _
    // Predicated region
    $region70: #{lstm_model_forward.1} parent=1 // pred_check
      _
    $region71: #{lstm_model_forward.1} parent=1 // pred_check_branch
      %177 = sbr.rel (0) target = $region73
    $region72: #{lstm_model_forward.1} parent=1 // pred_region
      %178 = dma.done [#allocation4], 1024
    $region73: #{lstm_model_forward.1} parent=1 // pred_fallthru
      _
    // Predicated region
    $region74: #{lstm_model_forward.1} parent=1 // pred_check
      _
    $region75: #{lstm_model_forward.1} parent=1 // pred_check_branch
      %180 = sbr.rel (0) target = $region77
    $region76: #{lstm_model_forward.1} parent=1 // pred_region
      %181 = dma.done [#allocation7], 128
    $region77: #{lstm_model_forward.1} parent=1 // pred_fallthru
      _
    // Predicated region
    $region78: #{lstm_model_forward.1} parent=1 // pred_check
      _
    $region79: #{lstm_model_forward.1} parent=1 // pred_check_branch
      %183 = sbr.rel (0) target = $region81
    $region80: #{lstm_model_forward.1} parent=1 // pred_region
      %184 = dma.done [#allocation7], 16384
    $region81: #{lstm_model_forward.1} parent=1 // pred_fallthru
      _
    // Predicated region
    $region82: #{lstm_model_forward.1} parent=1 // pred_check
      _
    $region83: #{lstm_model_forward.1} parent=1 // pred_check_branch
      %186 = sbr.rel (0) target = $region85
    $region84: #{lstm_model_forward.1} parent=1 // pred_region
      %187 = dma.done [#allocation10], 16384
    $region85: #{lstm_model_forward.1} parent=1 // pred_fallthru
      _
    // Predicated region
    $region86: #{lstm_model_forward.1} parent=1 // pred_check
      _
    $region87: #{lstm_model_forward.1} parent=1 // pred_check_branch
      %189 = sbr.rel (0) target = $region89
    $region88: #{lstm_model_forward.1} parent=1 // pred_region
      %190 = dma.done [#allocation10], 128
    $region89: #{lstm_model_forward.1} parent=1 // pred_fallthru
      _
    // Predicated region
    $region90: #{lstm_model_forward.1} parent=1 // pred_check
      _
    $region91: #{lstm_model_forward.1} parent=1 // pred_check_branch
      %192 = sbr.rel (0) target = $region93
    $region92: #{lstm_model_forward.1} parent=1 // pred_region
      %193 = dma.done [#allocation13], 16384
    $region93: #{lstm_model_forward.1} parent=1 // pred_fallthru
      _
    // Predicated region
    $region94: #{lstm_model_forward.1} parent=1 // pred_check
      _
    $region95: #{lstm_model_forward.1} parent=1 // pred_check_branch
      %195 = sbr.rel (0) target = $region97
    $region96: #{lstm_model_forward.1} parent=1 // pred_region
      %196 = dma.done [#allocation13], 32768
    $region97: #{lstm_model_forward.1} parent=1 // pred_fallthru
      _
    // Predicated region
    $region98: #{lstm_model_forward.1} parent=1 // pred_check
      _
    $region99: #{lstm_model_forward.1} parent=1 // pred_check_branch
      %198 = sbr.rel (0) target = $region101
    $region100: #{lstm_model_forward.1} parent=1 // pred_region
      %199 = dma.done [#allocation16], 128
    $region101: #{lstm_model_forward.1} parent=1 // pred_fallthru
      _
    // Predicated region
    $region102: #{lstm_model_forward.1} parent=1 // pred_check
      _
    $region103: #{lstm_model_forward.1} parent=1 // pred_check_branch
      %201 = sbr.rel (0) target = $region105
    $region104: #{lstm_model_forward.1} parent=1 // pred_region
      %202 = dma.done [#allocation16], 16384
    $region105: #{lstm_model_forward.1} parent=1 // pred_fallthru
      _
    // Predicated region
    $region106: #{lstm_model_forward.1} parent=1 // pred_check
      _
    $region107: #{lstm_model_forward.1} parent=1 // pred_check_branch
      %204 = sbr.rel (0) target = $region109
    $region108: #{lstm_model_forward.1} parent=1 // pred_region
      %205 = dma.done [#allocation19], 8192
    $region109: #{lstm_model_forward.1} parent=1 // pred_fallthru
      _
    // Predicated region
    $region110: #{lstm_model_forward.1} parent=1 // pred_check
      _
    $region111: #{lstm_model_forward.1} parent=1 // pred_check_branch
      %207 = sbr.rel (0) target = $region113
    $region112: #{lstm_model_forward.1} parent=1 // pred_region
      %208 = dma.done [#allocation19], 32
    $region113: #{lstm_model_forward.1} parent=1 // pred_fallthru
      _
    // Predicated region
    $region114: #{lstm_model_forward.1} parent=1 // pred_check
      _
    $region115: #{lstm_model_forward.1} parent=1 // pred_check_branch
      %210 = sbr.rel (0) target = $region117
    $region116: #{lstm_model_forward.1} parent=1 // pred_region
      %211 = dma.done [#allocation22], 1024
    $region117: #{lstm_model_forward.1} parent=1 // pred_fallthru
      _
    %213 = vst [vmem:[#allocation2] sm:$0xff] 0.0
    %214 = vst [vmem:[#allocation2 + $0x8] sm:$0xff] 0.0
    %215 = vst [vmem:[#allocation2 + $0x10] sm:$0xff] 0.0
    %216 = vst [vmem:[#allocation2 + $0x18] sm:$0xff] 0.0
    %217 = vst [vmem:[#allocation2 + $0x20] sm:$0xff] 0.0
    %218 = vst [vmem:[#allocation2 + $0x28] sm:$0xff] 0.0
    %219 = vst [vmem:[#allocation2 + $0x30] sm:$0xff] 0.0
    %220 = vst [vmem:[#allocation2 + $0x38] sm:$0xff] 0.0
    %221 = vst [vmem:[#allocation2 + $0x40] sm:$0xff] 0.0
    %222 = vst [vmem:[#allocation2 + $0x48] sm:$0xff] 0.0
    %223 = vst [vmem:[#allocation2 + $0x50] sm:$0xff] 0.0
    %224 = vst [vmem:[#allocation2 + $0x58] sm:$0xff] 0.0
    %225 = vst [vmem:[#allocation2 + $0x60] sm:$0xff] 0.0
    %226 = vst [vmem:[#allocation2 + $0x68] sm:$0xff] 0.0
    %227 = vst [vmem:[#allocation2 + $0x70] sm:$0xff] 0.0
    %228 = vst [vmem:[#allocation2 + $0x78] sm:$0xff] 0.0
    %v229 = vld [vmem:[%s0] sm:$0xff]
    %v230 = vld [vmem:[%s0 + $0x8] sm:$0xff]
    %v231 = vld [vmem:[%s0 + $0x10] sm:$0xff]
    %v232 = vld [vmem:[%s0 + $0x18] sm:$0xff]
    %v233 = vld [vmem:[%s0 + $0x20] sm:$0xff]
    %v234 = vld [vmem:[%s0 + $0x28] sm:$0xff]
    %v235 = vld [vmem:[%s0 + $0x30] sm:$0xff]
    %v236 = vld [vmem:[%s0 + $0x38] sm:$0xff]
    %v237 = vpack.c.bf16 %v230, %v229
    %v238 = vpack.c.bf16 %v232, %v231
    %v239 = vpack.c.bf16 %v234, %v233
    %v240 = vpack.c.bf16 %v236, %v235
    %v241 = vld [vmem:[#allocation3] sm:$0xff]
    %v242 = vld [vmem:[#allocation3 + $0x8] sm:$0xff]
    %v243 = vld [vmem:[#allocation3 + $0x10] sm:$0xff]
    %v244 = vld [vmem:[#allocation3 + $0x18] sm:$0xff]
    %v245 = vld [vmem:[#allocation3 + $0x20] sm:$0xff]
    %v246 = vld [vmem:[#allocation3 + $0x28] sm:$0xff]
    %v247 = vld [vmem:[#allocation3 + $0x30] sm:$0xff]
    %v248 = vld [vmem:[#allocation3 + $0x38] sm:$0xff]
    %v249 = vld [vmem:[#allocation6] sm:$0xff]
    %v251 = vlaneseq
    %v252 = vshrl.u32 %v251, 7
    %v253 = vsub.s32 0, %v252
    %v254 = vrot.slane %v249, %v253
    %v255 = vlaneseq
    %v256 = vshrl.u32 %v255, 7
    %v257 = vsub.s32 1, %v256
    %v258 = vrot.slane %v249, %v257
    %v259 = vlaneseq
    %v260 = vshrl.u32 %v259, 7
    %v261 = vsub.s32 2, %v260
    %v262 = vrot.slane %v249, %v261
    %v263 = vlaneseq
    %v264 = vshrl.u32 %v263, 7
    %v265 = vsub.s32 3, %v264
    %v266 = vrot.slane %v249, %v265
    %v267 = vlaneseq
    %v268 = vshrl.u32 %v267, 7
    %v269 = vsub.s32 4, %v268
    %v270 = vrot.slane %v249, %v269
    %v271 = vlaneseq
    %v272 = vshrl.u32 %v271, 7
    %v273 = vsub.s32 5, %v272
    %v274 = vrot.slane %v249, %v273
    %v275 = vlaneseq
    %v276 = vshrl.u32 %v275, 7
    %v277 = vsub.s32 6, %v276
    %v278 = vrot.slane %v249, %v277
    %v279 = vlaneseq
    %v280 = vshrl.u32 %v279, 7
    %v281 = vsub.s32 7, %v280
    %v282 = vrot.slane %v249, %v281
    %v299 = vunpack.c.l.b16 %v241
    %v300 = vunpack.c.h.b16 %v241
    %v301 = vunpack.c.l.b16 %v242
    %v302 = vunpack.c.h.b16 %v242
    %v303 = vunpack.c.l.b16 %v243
    %v304 = vunpack.c.h.b16 %v243
    %v305 = vunpack.c.l.b16 %v244
    %v306 = vunpack.c.h.b16 %v244
    %v307 = vunpack.c.l.b16 %v245
    %v308 = vunpack.c.h.b16 %v245
    %v309 = vunpack.c.l.b16 %v246
    %v310 = vunpack.c.h.b16 %v246
    %v311 = vunpack.c.l.b16 %v247
    %v312 = vunpack.c.h.b16 %v247
    %v313 = vunpack.c.l.b16 %v248
    %v314 = vunpack.c.h.b16 %v248
    %v315 = vpack.c.b16 %v307, %v299
    %v316 = vpack.c.b16 %v308, %v300
    %v317 = vpack.c.b16 %v309, %v301
    %v318 = vpack.c.b16 %v310, %v302
    %v319 = vpack.c.b16 %v311, %v303
    %v320 = vpack.c.b16 %v312, %v304
    %v321 = vpack.c.b16 %v313, %v305
    %v322 = vpack.c.b16 %v314, %v306
    %vm331 = vcmask 130048
    %v333 = vsel %vm331, %v237, 0
    %v336 = vsel %vm331, %v238, 0
    %v339 = vsel %vm331, %v239, 0
    %v342 = vsel %vm331, %v240, 0
    %344 = vmatprep.subr.bf16.mxu0 0
    %345 = vmatpush1.bf16.msra.mxu0 0
    %346 = vmatprep.subr.bf16.mxu0 0
    %347 = vmatpush1.bf16.msra.mxu0 0
    %348 = vmatprep.subr.bf16.mxu0 0
    %349 = vmatpush1.bf16.msra.mxu0 0
    %350 = vmatprep.subr.bf16.mxu0 0
    %351 = vmatpush1.bf16.msra.mxu0 0
    %352 = vmatprep.subr.bf16.mxu0 0
    %353 = vmatpush1.bf16.msra.mxu0 0
    %354 = vmatprep.subr.bf16.mxu0 0
    %355 = vmatpush1.bf16.msra.mxu0 0
    %356 = vmatprep.subr.bf16.mxu0 0
    %357 = vmatpush1.bf16.msra.mxu0 0
    %358 = vmatprep.subr.bf16.mxu0 %v316
    %359 = vmatpush1.bf16.msra.mxu0 %v315
    %360 = vmatprep.subr.bf16.mxu0 0
    %361 = vmatpush2.bf16.msra.mxu0 0
    %362 = vmatprep.subr.bf16.mxu0 0
    %363 = vmatpush2.bf16.msra.mxu0 0
    %364 = vmatprep.subr.bf16.mxu0 0
    %365 = vmatpush2.bf16.msra.mxu0 0
    %366 = vmatprep.subr.bf16.mxu0 0
    %367 = vmatpush2.bf16.msra.mxu0 0
    %368 = vmatprep.subr.bf16.mxu0 0
    %369 = vmatpush2.bf16.msra.mxu0 0
    %370 = vmatprep.subr.bf16.mxu0 0
    %371 = vmatpush2.bf16.msra.mxu0 0
    %372 = vmatprep.subr.bf16.mxu0 0
    %373 = vmatpush2.bf16.msra.mxu0 0
    %374 = vmatprep.subr.bf16.mxu0 0
    %375 = vmatpush2.bf16.msra.mxu0 0
    %376 = vmatprep.mubr.bf16.mxu0 0
    %377 = vmatmul.mubr.bf16.gmra.mxu0 %v333
    %v378 = vpop.f32.mrf.mxu0
    %v379 = vadd.f32 %v254, %v378
    %v380 = vpop.f32.mrf.mxu0
    %v381 = vadd.f32 %v258, %v380
    %v382 = vpop.f32.mrf.mxu0
    %v383 = vadd.f32 %v254, %v382
    %v384 = vpop.f32.mrf.mxu0
    %v385 = vadd.f32 %v258, %v384
    %386 = vmatprep.mubr.bf16.mxu0 0
    %387 = vmatmul.mubr.bf16.gmra.mxu0 %v336
    %v388 = vpop.f32.mrf.mxu0
    %v389 = vadd.f32 %v254, %v388
    %v390 = vpop.f32.mrf.mxu0
    %v391 = vadd.f32 %v258, %v390
    %v392 = vpop.f32.mrf.mxu0
    %v393 = vadd.f32 %v254, %v392
    %v394 = vpop.f32.mrf.mxu0
    %v395 = vadd.f32 %v258, %v394
    %396 = vmatprep.mubr.bf16.mxu0 0
    %397 = vmatmul.mubr.bf16.gmra.mxu0 %v339
    %v398 = vpop.f32.mrf.mxu0
    %v399 = vadd.f32 %v254, %v398
    %v400 = vpop.f32.mrf.mxu0
    %v401 = vadd.f32 %v258, %v400
    %v402 = vpop.f32.mrf.mxu0
    %v403 = vadd.f32 %v254, %v402
    %v404 = vpop.f32.mrf.mxu0
    %v405 = vadd.f32 %v258, %v404
    %406 = vmatprep.mubr.bf16.mxu0 0
    %407 = vmatmul.mubr.bf16.gmra.mxu0 %v342
    %v408 = vpop.f32.mrf.mxu0
    %v409 = vadd.f32 %v254, %v408
    %v410 = vpop.f32.mrf.mxu0
    %v411 = vadd.f32 %v258, %v410
    %v412 = vpop.f32.mrf.mxu0
    %v413 = vadd.f32 %v254, %v412
    %v414 = vpop.f32.mrf.mxu0
    %v415 = vadd.f32 %v258, %v414
    %416 = vdwg.mxu0
    %417 = vmatprep.subr.bf16.mxu0 0
    %418 = vmatpush1.bf16.msra.mxu0 0
    %419 = vmatprep.subr.bf16.mxu0 0
    %420 = vmatpush1.bf16.msra.mxu0 0
    %421 = vmatprep.subr.bf16.mxu0 0
    %422 = vmatpush1.bf16.msra.mxu0 0
    %423 = vmatprep.subr.bf16.mxu0 0
    %424 = vmatpush1.bf16.msra.mxu0 0
    %425 = vmatprep.subr.bf16.mxu0 0
    %426 = vmatpush1.bf16.msra.mxu0 0
    %427 = vmatprep.subr.bf16.mxu0 0
    %428 = vmatpush1.bf16.msra.mxu0 0
    %429 = vmatprep.subr.bf16.mxu0 0
    %430 = vmatpush1.bf16.msra.mxu0 0
    %431 = vmatprep.subr.bf16.mxu0 %v318
    %432 = vmatpush1.bf16.msra.mxu0 %v317
    %433 = vmatprep.subr.bf16.mxu0 0
    %434 = vmatpush2.bf16.msra.mxu0 0
    %435 = vmatprep.subr.bf16.mxu0 0
    %436 = vmatpush2.bf16.msra.mxu0 0
    %437 = vmatprep.subr.bf16.mxu0 0
    %438 = vmatpush2.bf16.msra.mxu0 0
    %439 = vmatprep.subr.bf16.mxu0 0
    %440 = vmatpush2.bf16.msra.mxu0 0
    %441 = vmatprep.subr.bf16.mxu0 0
    %442 = vmatpush2.bf16.msra.mxu0 0
    %443 = vmatprep.subr.bf16.mxu0 0
    %444 = vmatpush2.bf16.msra.mxu0 0
    %445 = vmatprep.subr.bf16.mxu0 0
    %446 = vmatpush2.bf16.msra.mxu0 0
    %447 = vmatprep.subr.bf16.mxu0 0
    %448 = vmatpush2.bf16.msra.mxu0 0
    %449 = vmatprep.mubr.bf16.mxu0 0
    %450 = vmatmul.mubr.bf16.gmra.mxu0 %v333
    %v451 = vpop.f32.mrf.mxu0
    %v452 = vadd.f32 %v262, %v451
    %v453 = vpop.f32.mrf.mxu0
    %v454 = vadd.f32 %v266, %v453
    %v455 = vpop.f32.mrf.mxu0
    %v456 = vadd.f32 %v262, %v455
    %v457 = vpop.f32.mrf.mxu0
    %v458 = vadd.f32 %v266, %v457
    %459 = vmatprep.mubr.bf16.mxu0 0
    %460 = vmatmul.mubr.bf16.gmra.mxu0 %v336
    %v461 = vpop.f32.mrf.mxu0
    %v462 = vadd.f32 %v262, %v461
    %v463 = vpop.f32.mrf.mxu0
    %v464 = vadd.f32 %v266, %v463
    %v465 = vpop.f32.mrf.mxu0
    %v466 = vadd.f32 %v262, %v465
    %v467 = vpop.f32.mrf.mxu0
    %v468 = vadd.f32 %v266, %v467
    %469 = vmatprep.mubr.bf16.mxu0 0
    %470 = vmatmul.mubr.bf16.gmra.mxu0 %v339
    %v471 = vpop.f32.mrf.mxu0
    %v472 = vadd.f32 %v262, %v471
    %v473 = vpop.f32.mrf.mxu0
    %v474 = vadd.f32 %v266, %v473
    %v475 = vpop.f32.mrf.mxu0
    %v476 = vadd.f32 %v262, %v475
    %v477 = vpop.f32.mrf.mxu0
    %v478 = vadd.f32 %v266, %v477
    %479 = vmatprep.mubr.bf16.mxu0 0
    %480 = vmatmul.mubr.bf16.gmra.mxu0 %v342
    %v481 = vpop.f32.mrf.mxu0
    %v482 = vadd.f32 %v262, %v481
    %v483 = vpop.f32.mrf.mxu0
    %v484 = vadd.f32 %v266, %v483
    %v485 = vpop.f32.mrf.mxu0
    %v486 = vadd.f32 %v262, %v485
    %v487 = vpop.f32.mrf.mxu0
    %v488 = vadd.f32 %v266, %v487
    %489 = vdwg.mxu0
    %490 = vmatprep.subr.bf16.mxu0 0
    %491 = vmatpush1.bf16.msra.mxu0 0
    %492 = vmatprep.subr.bf16.mxu0 0
    %493 = vmatpush1.bf16.msra.mxu0 0
    %494 = vmatprep.subr.bf16.mxu0 0
    %495 = vmatpush1.bf16.msra.mxu0 0
    %496 = vmatprep.subr.bf16.mxu0 0
    %497 = vmatpush1.bf16.msra.mxu0 0
    %498 = vmatprep.subr.bf16.mxu0 0
    %499 = vmatpush1.bf16.msra.mxu0 0
    %500 = vmatprep.subr.bf16.mxu0 0
    %501 = vmatpush1.bf16.msra.mxu0 0
    %502 = vmatprep.subr.bf16.mxu0 0
    %503 = vmatpush1.bf16.msra.mxu0 0
    %504 = vmatprep.subr.bf16.mxu0 %v320
    %505 = vmatpush1.bf16.msra.mxu0 %v319
    %506 = vmatprep.subr.bf16.mxu0 0
    %507 = vmatpush2.bf16.msra.mxu0 0
    %508 = vmatprep.subr.bf16.mxu0 0
    %509 = vmatpush2.bf16.msra.mxu0 0
    %510 = vmatprep.subr.bf16.mxu0 0
    %511 = vmatpush2.bf16.msra.mxu0 0
    %512 = vmatprep.subr.bf16.mxu0 0
    %513 = vmatpush2.bf16.msra.mxu0 0
    %514 = vmatprep.subr.bf16.mxu0 0
    %515 = vmatpush2.bf16.msra.mxu0 0
    %516 = vmatprep.subr.bf16.mxu0 0
    %517 = vmatpush2.bf16.msra.mxu0 0
    %518 = vmatprep.subr.bf16.mxu0 0
    %519 = vmatpush2.bf16.msra.mxu0 0
    %520 = vmatprep.subr.bf16.mxu0 0
    %521 = vmatpush2.bf16.msra.mxu0 0
    %522 = vmatprep.mubr.bf16.mxu0 0
    %523 = vmatmul.mubr.bf16.gmra.mxu0 %v333
    %v524 = vpop.f32.mrf.mxu0
    %v525 = vadd.f32 %v270, %v524
    %v526 = vpop.f32.mrf.mxu0
    %v527 = vadd.f32 %v274, %v526
    %v528 = vpop.f32.mrf.mxu0
    %v529 = vadd.f32 %v270, %v528
    %v530 = vpop.f32.mrf.mxu0
    %v531 = vadd.f32 %v274, %v530
    %532 = vmatprep.mubr.bf16.mxu0 0
    %533 = vmatmul.mubr.bf16.gmra.mxu0 %v336
    %v534 = vpop.f32.mrf.mxu0
    %v535 = vadd.f32 %v270, %v534
    %v536 = vpop.f32.mrf.mxu0
    %v537 = vadd.f32 %v274, %v536
    %v538 = vpop.f32.mrf.mxu0
    %v539 = vadd.f32 %v270, %v538
    %v540 = vpop.f32.mrf.mxu0
    %v541 = vadd.f32 %v274, %v540
    %542 = vmatprep.mubr.bf16.mxu0 0
    %543 = vmatmul.mubr.bf16.gmra.mxu0 %v339
    %v544 = vpop.f32.mrf.mxu0
    %v545 = vadd.f32 %v270, %v544
    %v546 = vpop.f32.mrf.mxu0
    %v547 = vadd.f32 %v274, %v546
    %v548 = vpop.f32.mrf.mxu0
    %v549 = vadd.f32 %v270, %v548
    %v550 = vpop.f32.mrf.mxu0
    %v551 = vadd.f32 %v274, %v550
    %552 = vmatprep.mubr.bf16.mxu0 0
    %553 = vmatmul.mubr.bf16.gmra.mxu0 %v342
    %v554 = vpop.f32.mrf.mxu0
    %v555 = vadd.f32 %v270, %v554
    %v556 = vpop.f32.mrf.mxu0
    %v557 = vadd.f32 %v274, %v556
    %v558 = vpop.f32.mrf.mxu0
    %v559 = vadd.f32 %v270, %v558
    %v560 = vpop.f32.mrf.mxu0
    %v561 = vadd.f32 %v274, %v560
    %562 = vdwg.mxu0
    %563 = vmatprep.subr.bf16.mxu0 0
    %564 = vmatpush1.bf16.msra.mxu0 0
    %565 = vmatprep.subr.bf16.mxu0 0
    %566 = vmatpush1.bf16.msra.mxu0 0
    %567 = vmatprep.subr.bf16.mxu0 0
    %568 = vmatpush1.bf16.msra.mxu0 0
    %569 = vmatprep.subr.bf16.mxu0 0
    %570 = vmatpush1.bf16.msra.mxu0 0
    %571 = vmatprep.subr.bf16.mxu0 0
    %572 = vmatpush1.bf16.msra.mxu0 0
    %573 = vmatprep.subr.bf16.mxu0 0
    %574 = vmatpush1.bf16.msra.mxu0 0
    %575 = vmatprep.subr.bf16.mxu0 0
    %576 = vmatpush1.bf16.msra.mxu0 0
    %577 = vmatprep.subr.bf16.mxu0 %v322
    %578 = vmatpush1.bf16.msra.mxu0 %v321
    %579 = vmatprep.subr.bf16.mxu0 0
    %580 = vmatpush2.bf16.msra.mxu0 0
    %581 = vmatprep.subr.bf16.mxu0 0
    %582 = vmatpush2.bf16.msra.mxu0 0
    %583 = vmatprep.subr.bf16.mxu0 0
    %584 = vmatpush2.bf16.msra.mxu0 0
    %585 = vmatprep.subr.bf16.mxu0 0
    %586 = vmatpush2.bf16.msra.mxu0 0
    %587 = vmatprep.subr.bf16.mxu0 0
    %588 = vmatpush2.bf16.msra.mxu0 0
    %589 = vmatprep.subr.bf16.mxu0 0
    %590 = vmatpush2.bf16.msra.mxu0 0
    %591 = vmatprep.subr.bf16.mxu0 0
    %592 = vmatpush2.bf16.msra.mxu0 0
    %593 = vmatprep.subr.bf16.mxu0 0
    %594 = vmatpush2.bf16.msra.mxu0 0
    %595 = vmatprep.mubr.bf16.mxu0 0
    %596 = vmatmul.mubr.bf16.gmra.mxu0 %v333
    %v597 = vpop.f32.mrf.mxu0
    %v598 = vadd.f32 %v278, %v597
    %v599 = vpop.f32.mrf.mxu0
    %v600 = vadd.f32 %v282, %v599
    %v601 = vpop.f32.mrf.mxu0
    %v602 = vadd.f32 %v278, %v601
    %v603 = vpop.f32.mrf.mxu0
    %v604 = vadd.f32 %v282, %v603
    %605 = vmatprep.mubr.bf16.mxu0 0
    %606 = vmatmul.mubr.bf16.gmra.mxu0 %v336
    %v607 = vpop.f32.mrf.mxu0
    %v608 = vadd.f32 %v278, %v607
    %v609 = vpop.f32.mrf.mxu0
    %v610 = vadd.f32 %v282, %v609
    %v611 = vpop.f32.mrf.mxu0
    %v612 = vadd.f32 %v278, %v611
    %v613 = vpop.f32.mrf.mxu0
    %v614 = vadd.f32 %v282, %v613
    %615 = vmatprep.mubr.bf16.mxu0 0
    %616 = vmatmul.mubr.bf16.gmra.mxu0 %v339
    %v617 = vpop.f32.mrf.mxu0
    %v618 = vadd.f32 %v278, %v617
    %v619 = vpop.f32.mrf.mxu0
    %v620 = vadd.f32 %v282, %v619
    %v621 = vpop.f32.mrf.mxu0
    %v622 = vadd.f32 %v278, %v621
    %v623 = vpop.f32.mrf.mxu0
    %v624 = vadd.f32 %v282, %v623
    %625 = vmatprep.mubr.bf16.mxu0 0
    %626 = vmatmul.mubr.bf16.gmra.mxu0 %v342
    %v627 = vpop.f32.mrf.mxu0
    %v628 = vadd.f32 %v278, %v627
    %v629 = vpop.f32.mrf.mxu0
    %v630 = vadd.f32 %v282, %v629
    %v631 = vpop.f32.mrf.mxu0
    %v632 = vadd.f32 %v278, %v631
    %v633 = vpop.f32.mrf.mxu0
    %v634 = vadd.f32 %v282, %v633
    %635 = vdwg.mxu0
    %v636 = vld [vmem:[#allocation8] sm:$0xff]
    %v637 = vld [vmem:[#allocation8 + $0x8] sm:$0xff]
    %v638 = vld [vmem:[#allocation8 + $0x10] sm:$0xff]
    %v639 = vld [vmem:[#allocation8 + $0x18] sm:$0xff]
    %v640 = vld [vmem:[#allocation8 + $0x20] sm:$0xff]
    %v641 = vld [vmem:[#allocation8 + $0x28] sm:$0xff]
    %v642 = vld [vmem:[#allocation8 + $0x30] sm:$0xff]
    %v643 = vld [vmem:[#allocation8 + $0x38] sm:$0xff]
    %v644 = vld [vmem:[#allocation8 + $0x40] sm:$0xff]
    %v645 = vld [vmem:[#allocation8 + $0x48] sm:$0xff]
    %v646 = vld [vmem:[#allocation8 + $0x50] sm:$0xff]
    %v647 = vld [vmem:[#allocation8 + $0x58] sm:$0xff]
    %v648 = vld [vmem:[#allocation8 + $0x60] sm:$0xff]
    %v649 = vld [vmem:[#allocation8 + $0x68] sm:$0xff]
    %v650 = vld [vmem:[#allocation8 + $0x70] sm:$0xff]
    %v651 = vld [vmem:[#allocation8 + $0x78] sm:$0xff]
    %v652 = vld [vmem:[#allocation8 + $0x80] sm:$0xff]
    %v653 = vld [vmem:[#allocation8 + $0x88] sm:$0xff]
    %v654 = vld [vmem:[#allocation8 + $0x90] sm:$0xff]
    %v655 = vld [vmem:[#allocation8 + $0x98] sm:$0xff]
    %v656 = vld [vmem:[#allocation8 + $0xa0] sm:$0xff]
    %v657 = vld [vmem:[#allocation8 + $0xa8] sm:$0xff]
    %v658 = vld [vmem:[#allocation8 + $0xb0] sm:$0xff]
    %v659 = vld [vmem:[#allocation8 + $0xb8] sm:$0xff]
    %v660 = vld [vmem:[#allocation8 + $0xc0] sm:$0xff]
    %v661 = vld [vmem:[#allocation8 + $0xc8] sm:$0xff]
    %v662 = vld [vmem:[#allocation8 + $0xd0] sm:$0xff]
    %v663 = vld [vmem:[#allocation8 + $0xd8] sm:$0xff]
    %v664 = vld [vmem:[#allocation8 + $0xe0] sm:$0xff]
    %v665 = vld [vmem:[#allocation8 + $0xe8] sm:$0xff]
    %v666 = vld [vmem:[#allocation8 + $0xf0] sm:$0xff]
    %v667 = vld [vmem:[#allocation8 + $0xf8] sm:$0xff]
    %v668 = vld [vmem:[#allocation8 + $0x100] sm:$0xff]
    %v669 = vld [vmem:[#allocation8 + $0x108] sm:$0xff]
    %v670 = vld [vmem:[#allocation8 + $0x110] sm:$0xff]
    %v671 = vld [vmem:[#allocation8 + $0x118] sm:$0xff]
    %v672 = vld [vmem:[#allocation8 + $0x120] sm:$0xff]
    %v673 = vld [vmem:[#allocation8 + $0x128] sm:$0xff]
    %v674 = vld [vmem:[#allocation8 + $0x130] sm:$0xff]
    %v675 = vld [vmem:[#allocation8 + $0x138] sm:$0xff]
    %v676 = vld [vmem:[#allocation8 + $0x140] sm:$0xff]
    %v677 = vld [vmem:[#allocation8 + $0x148] sm:$0xff]
    %v678 = vld [vmem:[#allocation8 + $0x150] sm:$0xff]
    %v679 = vld [vmem:[#allocation8 + $0x158] sm:$0xff]
    %v680 = vld [vmem:[#allocation8 + $0x160] sm:$0xff]
    %v681 = vld [vmem:[#allocation8 + $0x168] sm:$0xff]
    %v682 = vld [vmem:[#allocation8 + $0x170] sm:$0xff]
    %v683 = vld [vmem:[#allocation8 + $0x178] sm:$0xff]
    %v684 = vld [vmem:[#allocation8 + $0x180] sm:$0xff]
    %v685 = vld [vmem:[#allocation8 + $0x188] sm:$0xff]
    %v686 = vld [vmem:[#allocation8 + $0x190] sm:$0xff]
    %v687 = vld [vmem:[#allocation8 + $0x198] sm:$0xff]
    %v688 = vld [vmem:[#allocation8 + $0x1a0] sm:$0xff]
    %v689 = vld [vmem:[#allocation8 + $0x1a8] sm:$0xff]
    %v690 = vld [vmem:[#allocation8 + $0x1b0] sm:$0xff]
    %v691 = vld [vmem:[#allocation8 + $0x1b8] sm:$0xff]
    %v692 = vld [vmem:[#allocation8 + $0x1c0] sm:$0xff]
    %v693 = vld [vmem:[#allocation8 + $0x1c8] sm:$0xff]
    %v694 = vld [vmem:[#allocation8 + $0x1d0] sm:$0xff]
    %v695 = vld [vmem:[#allocation8 + $0x1d8] sm:$0xff]
    %v696 = vld [vmem:[#allocation8 + $0x1e0] sm:$0xff]
    %v697 = vld [vmem:[#allocation8 + $0x1e8] sm:$0xff]
    %v698 = vld [vmem:[#allocation8 + $0x1f0] sm:$0xff]
    %v699 = vld [vmem:[#allocation8 + $0x1f8] sm:$0xff]
    %v700 = vld [vmem:[#allocation8 + $0x200] sm:$0xff]
    %v701 = vld [vmem:[#allocation8 + $0x208] sm:$0xff]
    %v702 = vld [vmem:[#allocation8 + $0x210] sm:$0xff]
    %v703 = vld [vmem:[#allocation8 + $0x218] sm:$0xff]
    %v704 = vld [vmem:[#allocation8 + $0x220] sm:$0xff]
    %v705 = vld [vmem:[#allocation8 + $0x228] sm:$0xff]
    %v706 = vld [vmem:[#allocation8 + $0x230] sm:$0xff]
    %v707 = vld [vmem:[#allocation8 + $0x238] sm:$0xff]
    %v708 = vld [vmem:[#allocation8 + $0x240] sm:$0xff]
    %v709 = vld [vmem:[#allocation8 + $0x248] sm:$0xff]
    %v710 = vld [vmem:[#allocation8 + $0x250] sm:$0xff]
    %v711 = vld [vmem:[#allocation8 + $0x258] sm:$0xff]
    %v712 = vld [vmem:[#allocation8 + $0x260] sm:$0xff]
    %v713 = vld [vmem:[#allocation8 + $0x268] sm:$0xff]
    %v714 = vld [vmem:[#allocation8 + $0x270] sm:$0xff]
    %v715 = vld [vmem:[#allocation8 + $0x278] sm:$0xff]
    %v716 = vld [vmem:[#allocation8 + $0x280] sm:$0xff]
    %v717 = vld [vmem:[#allocation8 + $0x288] sm:$0xff]
    %v718 = vld [vmem:[#allocation8 + $0x290] sm:$0xff]
    %v719 = vld [vmem:[#allocation8 + $0x298] sm:$0xff]
    %v720 = vld [vmem:[#allocation8 + $0x2a0] sm:$0xff]
    %v721 = vld [vmem:[#allocation8 + $0x2a8] sm:$0xff]
    %v722 = vld [vmem:[#allocation8 + $0x2b0] sm:$0xff]
    %v723 = vld [vmem:[#allocation8 + $0x2b8] sm:$0xff]
    %v724 = vld [vmem:[#allocation8 + $0x2c0] sm:$0xff]
    %v725 = vld [vmem:[#allocation8 + $0x2c8] sm:$0xff]
    %v726 = vld [vmem:[#allocation8 + $0x2d0] sm:$0xff]
    %v727 = vld [vmem:[#allocation8 + $0x2d8] sm:$0xff]
    %v728 = vld [vmem:[#allocation8 + $0x2e0] sm:$0xff]
    %v729 = vld [vmem:[#allocation8 + $0x2e8] sm:$0xff]
    %v730 = vld [vmem:[#allocation8 + $0x2f0] sm:$0xff]
    %v731 = vld [vmem:[#allocation8 + $0x2f8] sm:$0xff]
    %v732 = vld [vmem:[#allocation8 + $0x300] sm:$0xff]
    %v733 = vld [vmem:[#allocation8 + $0x308] sm:$0xff]
    %v734 = vld [vmem:[#allocation8 + $0x310] sm:$0xff]
    %v735 = vld [vmem:[#allocation8 + $0x318] sm:$0xff]
    %v736 = vld [vmem:[#allocation8 + $0x320] sm:$0xff]
    %v737 = vld [vmem:[#allocation8 + $0x328] sm:$0xff]
    %v738 = vld [vmem:[#allocation8 + $0x330] sm:$0xff]
    %v739 = vld [vmem:[#allocation8 + $0x338] sm:$0xff]
    %v740 = vld [vmem:[#allocation8 + $0x340] sm:$0xff]
    %v741 = vld [vmem:[#allocation8 + $0x348] sm:$0xff]
    %v742 = vld [vmem:[#allocation8 + $0x350] sm:$0xff]
    %v743 = vld [vmem:[#allocation8 + $0x358] sm:$0xff]
    %v744 = vld [vmem:[#allocation8 + $0x360] sm:$0xff]
    %v745 = vld [vmem:[#allocation8 + $0x368] sm:$0xff]
    %v746 = vld [vmem:[#allocation8 + $0x370] sm:$0xff]
    %v747 = vld [vmem:[#allocation8 + $0x378] sm:$0xff]
    %v748 = vld [vmem:[#allocation8 + $0x380] sm:$0xff]
    %v749 = vld [vmem:[#allocation8 + $0x388] sm:$0xff]
    %v750 = vld [vmem:[#allocation8 + $0x390] sm:$0xff]
    %v751 = vld [vmem:[#allocation8 + $0x398] sm:$0xff]
    %v752 = vld [vmem:[#allocation8 + $0x3a0] sm:$0xff]
    %v753 = vld [vmem:[#allocation8 + $0x3a8] sm:$0xff]
    %v754 = vld [vmem:[#allocation8 + $0x3b0] sm:$0xff]
    %v755 = vld [vmem:[#allocation8 + $0x3b8] sm:$0xff]
    %v756 = vld [vmem:[#allocation8 + $0x3c0] sm:$0xff]
    %v757 = vld [vmem:[#allocation8 + $0x3c8] sm:$0xff]
    %v758 = vld [vmem:[#allocation8 + $0x3d0] sm:$0xff]
    %v759 = vld [vmem:[#allocation8 + $0x3d8] sm:$0xff]
    %v760 = vld [vmem:[#allocation8 + $0x3e0] sm:$0xff]
    %v761 = vld [vmem:[#allocation8 + $0x3e8] sm:$0xff]
    %v762 = vld [vmem:[#allocation8 + $0x3f0] sm:$0xff]
    %v763 = vld [vmem:[#allocation8 + $0x3f8] sm:$0xff]
    %v892 = vunpack.c.l.b16 %v636
    %v893 = vunpack.c.h.b16 %v636
    %v894 = vunpack.c.l.b16 %v637
    %v895 = vunpack.c.h.b16 %v637
    %v896 = vunpack.c.l.b16 %v638
    %v897 = vunpack.c.h.b16 %v638
    %v898 = vunpack.c.l.b16 %v639
    %v899 = vunpack.c.h.b16 %v639
    %v900 = vunpack.c.l.b16 %v640
    %v901 = vunpack.c.h.b16 %v640
    %v902 = vunpack.c.l.b16 %v641
    %v903 = vunpack.c.h.b16 %v641
    %v904 = vunpack.c.l.b16 %v642
    %v905 = vunpack.c.h.b16 %v642
    %v906 = vunpack.c.l.b16 %v643
    %v907 = vunpack.c.h.b16 %v643
    %v908 = vunpack.c.l.b16 %v644
    %v909 = vunpack.c.h.b16 %v644
    %v910 = vunpack.c.l.b16 %v645
    %v911 = vunpack.c.h.b16 %v645
    %v912 = vunpack.c.l.b16 %v646
    %v913 = vunpack.c.h.b16 %v646
    %v914 = vunpack.c.l.b16 %v647
    %v915 = vunpack.c.h.b16 %v647
    %v916 = vunpack.c.l.b16 %v648
    %v917 = vunpack.c.h.b16 %v648
    %v918 = vunpack.c.l.b16 %v649
    %v919 = vunpack.c.h.b16 %v649
    %v920 = vunpack.c.l.b16 %v650
    %v921 = vunpack.c.h.b16 %v650
    %v922 = vunpack.c.l.b16 %v651
    %v923 = vunpack.c.h.b16 %v651
    %v924 = vunpack.c.l.b16 %v652
    %v925 = vunpack.c.h.b16 %v652
    %v926 = vunpack.c.l.b16 %v653
    %v927 = vunpack.c.h.b16 %v653
    %v928 = vunpack.c.l.b16 %v654
    %v929 = vunpack.c.h.b16 %v654
    %v930 = vunpack.c.l.b16 %v655
    %v931 = vunpack.c.h.b16 %v655
    %v932 = vunpack.c.l.b16 %v656
    %v933 = vunpack.c.h.b16 %v656
    %v934 = vunpack.c.l.b16 %v657
    %v935 = vunpack.c.h.b16 %v657
    %v936 = vunpack.c.l.b16 %v658
    %v937 = vunpack.c.h.b16 %v658
    %v938 = vunpack.c.l.b16 %v659
    %v939 = vunpack.c.h.b16 %v659
    %v940 = vunpack.c.l.b16 %v660
    %v941 = vunpack.c.h.b16 %v660
    %v942 = vunpack.c.l.b16 %v661
    %v943 = vunpack.c.h.b16 %v661
    %v944 = vunpack.c.l.b16 %v662
    %v945 = vunpack.c.h.b16 %v662
    %v946 = vunpack.c.l.b16 %v663
    %v947 = vunpack.c.h.b16 %v663
    %v948 = vunpack.c.l.b16 %v664
    %v949 = vunpack.c.h.b16 %v664
    %v950 = vunpack.c.l.b16 %v665
    %v951 = vunpack.c.h.b16 %v665
    %v952 = vunpack.c.l.b16 %v666
    %v953 = vunpack.c.h.b16 %v666
    %v954 = vunpack.c.l.b16 %v667
    %v955 = vunpack.c.h.b16 %v667
    %v956 = vunpack.c.l.b16 %v668
    %v957 = vunpack.c.h.b16 %v668
    %v958 = vunpack.c.l.b16 %v669
    %v959 = vunpack.c.h.b16 %v669
    %v960 = vunpack.c.l.b16 %v670
    %v961 = vunpack.c.h.b16 %v670
    %v962 = vunpack.c.l.b16 %v671
    %v963 = vunpack.c.h.b16 %v671
    %v964 = vunpack.c.l.b16 %v672
    %v965 = vunpack.c.h.b16 %v672
    %v966 = vunpack.c.l.b16 %v673
    %v967 = vunpack.c.h.b16 %v673
    %v968 = vunpack.c.l.b16 %v674
    %v969 = vunpack.c.h.b16 %v674
    %v970 = vunpack.c.l.b16 %v675
    %v971 = vunpack.c.h.b16 %v675
    %v972 = vunpack.c.l.b16 %v676
    %v973 = vunpack.c.h.b16 %v676
    %v974 = vunpack.c.l.b16 %v677
    %v975 = vunpack.c.h.b16 %v677
    %v976 = vunpack.c.l.b16 %v678
    %v977 = vunpack.c.h.b16 %v678
    %v978 = vunpack.c.l.b16 %v679
    %v979 = vunpack.c.h.b16 %v679
    %v980 = vunpack.c.l.b16 %v680
    %v981 = vunpack.c.h.b16 %v680
    %v982 = vunpack.c.l.b16 %v681
    %v983 = vunpack.c.h.b16 %v681
    %v984 = vunpack.c.l.b16 %v682
    %v985 = vunpack.c.h.b16 %v682
    %v986 = vunpack.c.l.b16 %v683
    %v987 = vunpack.c.h.b16 %v683
    %v988 = vunpack.c.l.b16 %v684
    %v989 = vunpack.c.h.b16 %v684
    %v990 = vunpack.c.l.b16 %v685
    %v991 = vunpack.c.h.b16 %v685
    %v992 = vunpack.c.l.b16 %v686
    %v993 = vunpack.c.h.b16 %v686
    %v994 = vunpack.c.l.b16 %v687
    %v995 = vunpack.c.h.b16 %v687
    %v996 = vunpack.c.l.b16 %v688
    %v997 = vunpack.c.h.b16 %v688
    %v998 = vunpack.c.l.b16 %v689
    %v999 = vunpack.c.h.b16 %v689
    %v1000 = vunpack.c.l.b16 %v690
    %v1001 = vunpack.c.h.b16 %v690
    %v1002 = vunpack.c.l.b16 %v691
    %v1003 = vunpack.c.h.b16 %v691
    %v1004 = vunpack.c.l.b16 %v692
    %v1005 = vunpack.c.h.b16 %v692
    %v1006 = vunpack.c.l.b16 %v693
    %v1007 = vunpack.c.h.b16 %v693
    %v1008 = vunpack.c.l.b16 %v694
    %v1009 = vunpack.c.h.b16 %v694
    %v1010 = vunpack.c.l.b16 %v695
    %v1011 = vunpack.c.h.b16 %v695
    %v1012 = vunpack.c.l.b16 %v696
    %v1013 = vunpack.c.h.b16 %v696
    %v1014 = vunpack.c.l.b16 %v697
    %v1015 = vunpack.c.h.b16 %v697
    %v1016 = vunpack.c.l.b16 %v698
    %v1017 = vunpack.c.h.b16 %v698
    %v1018 = vunpack.c.l.b16 %v699
    %v1019 = vunpack.c.h.b16 %v699
    %v1020 = vunpack.c.l.b16 %v700
    %v1021 = vunpack.c.h.b16 %v700
    %v1022 = vunpack.c.l.b16 %v701
    %v1023 = vunpack.c.h.b16 %v701
    %v1024 = vunpack.c.l.b16 %v702
    %v1025 = vunpack.c.h.b16 %v702
    %v1026 = vunpack.c.l.b16 %v703
    %v1027 = vunpack.c.h.b16 %v703
    %v1028 = vunpack.c.l.b16 %v704
    %v1029 = vunpack.c.h.b16 %v704
    %v1030 = vunpack.c.l.b16 %v705
    %v1031 = vunpack.c.h.b16 %v705
    %v1032 = vunpack.c.l.b16 %v706
    %v1033 = vunpack.c.h.b16 %v706
    %v1034 = vunpack.c.l.b16 %v707
    %v1035 = vunpack.c.h.b16 %v707
    %v1036 = vunpack.c.l.b16 %v708
    %v1037 = vunpack.c.h.b16 %v708
    %v1038 = vunpack.c.l.b16 %v709
    %v1039 = vunpack.c.h.b16 %v709
    %v1040 = vunpack.c.l.b16 %v710
    %v1041 = vunpack.c.h.b16 %v710
    %v1042 = vunpack.c.l.b16 %v711
    %v1043 = vunpack.c.h.b16 %v711
    %v1044 = vunpack.c.l.b16 %v712
    %v1045 = vunpack.c.h.b16 %v712
    %v1046 = vunpack.c.l.b16 %v713
    %v1047 = vunpack.c.h.b16 %v713
    %v1048 = vunpack.c.l.b16 %v714
    %v1049 = vunpack.c.h.b16 %v714
    %v1050 = vunpack.c.l.b16 %v715
    %v1051 = vunpack.c.h.b16 %v715
    %v1052 = vunpack.c.l.b16 %v716
    %v1053 = vunpack.c.h.b16 %v716
    %v1054 = vunpack.c.l.b16 %v717
    %v1055 = vunpack.c.h.b16 %v717
    %v1056 = vunpack.c.l.b16 %v718
    %v1057 = vunpack.c.h.b16 %v718
    %v1058 = vunpack.c.l.b16 %v719
    %v1059 = vunpack.c.h.b16 %v719
    %v1060 = vunpack.c.l.b16 %v720
    %v1061 = vunpack.c.h.b16 %v720
    %v1062 = vunpack.c.l.b16 %v721
    %v1063 = vunpack.c.h.b16 %v721
    %v1064 = vunpack.c.l.b16 %v722
    %v1065 = vunpack.c.h.b16 %v722
    %v1066 = vunpack.c.l.b16 %v723
    %v1067 = vunpack.c.h.b16 %v723
    %v1068 = vunpack.c.l.b16 %v724
    %v1069 = vunpack.c.h.b16 %v724
    %v1070 = vunpack.c.l.b16 %v725
    %v1071 = vunpack.c.h.b16 %v725
    %v1072 = vunpack.c.l.b16 %v726
    %v1073 = vunpack.c.h.b16 %v726
    %v1074 = vunpack.c.l.b16 %v727
    %v1075 = vunpack.c.h.b16 %v727
    %v1076 = vunpack.c.l.b16 %v728
    %v1077 = vunpack.c.h.b16 %v728
    %v1078 = vunpack.c.l.b16 %v729
    %v1079 = vunpack.c.h.b16 %v729
    %v1080 = vunpack.c.l.b16 %v730
    %v1081 = vunpack.c.h.b16 %v730
    %v1082 = vunpack.c.l.b16 %v731
    %v1083 = vunpack.c.h.b16 %v731
    %v1084 = vunpack.c.l.b16 %v732
    %v1085 = vunpack.c.h.b16 %v732
    %v1086 = vunpack.c.l.b16 %v733
    %v1087 = vunpack.c.h.b16 %v733
    %v1088 = vunpack.c.l.b16 %v734
    %v1089 = vunpack.c.h.b16 %v734
    %v1090 = vunpack.c.l.b16 %v735
    %v1091 = vunpack.c.h.b16 %v735
    %v1092 = vunpack.c.l.b16 %v736
    %v1093 = vunpack.c.h.b16 %v736
    %v1094 = vunpack.c.l.b16 %v737
    %v1095 = vunpack.c.h.b16 %v737
    %v1096 = vunpack.c.l.b16 %v738
    %v1097 = vunpack.c.h.b16 %v738
    %v1098 = vunpack.c.l.b16 %v739
    %v1099 = vunpack.c.h.b16 %v739
    %v1100 = vunpack.c.l.b16 %v740
    %v1101 = vunpack.c.h.b16 %v740
    %v1102 = vunpack.c.l.b16 %v741
    %v1103 = vunpack.c.h.b16 %v741
    %v1104 = vunpack.c.l.b16 %v742
    %v1105 = vunpack.c.h.b16 %v742
    %v1106 = vunpack.c.l.b16 %v743
    %v1107 = vunpack.c.h.b16 %v743
    %v1108 = vunpack.c.l.b16 %v744
    %v1109 = vunpack.c.h.b16 %v744
    %v1110 = vunpack.c.l.b16 %v745
    %v1111 = vunpack.c.h.b16 %v745
    %v1112 = vunpack.c.l.b16 %v746
    %v1113 = vunpack.c.h.b16 %v746
    %v1114 = vunpack.c.l.b16 %v747
    %v1115 = vunpack.c.h.b16 %v747
    %v1116 = vunpack.c.l.b16 %v748
    %v1117 = vunpack.c.h.b16 %v748
    %v1118 = vunpack.c.l.b16 %v749
    %v1119 = vunpack.c.h.b16 %v749
    %v1120 = vunpack.c.l.b16 %v750
    %v1121 = vunpack.c.h.b16 %v750
    %v1122 = vunpack.c.l.b16 %v751
    %v1123 = vunpack.c.h.b16 %v751
    %v1124 = vunpack.c.l.b16 %v752
    %v1125 = vunpack.c.h.b16 %v752
    %v1126 = vunpack.c.l.b16 %v753
    %v1127 = vunpack.c.h.b16 %v753
    %v1128 = vunpack.c.l.b16 %v754
    %v1129 = vunpack.c.h.b16 %v754
    %v1130 = vunpack.c.l.b16 %v755
    %v1131 = vunpack.c.h.b16 %v755
    %v1132 = vunpack.c.l.b16 %v756
    %v1133 = vunpack.c.h.b16 %v756
    %v1134 = vunpack.c.l.b16 %v757
    %v1135 = vunpack.c.h.b16 %v757
    %v1136 = vunpack.c.l.b16 %v758
    %v1137 = vunpack.c.h.b16 %v758
    %v1138 = vunpack.c.l.b16 %v759
    %v1139 = vunpack.c.h.b16 %v759
    %v1140 = vunpack.c.l.b16 %v760
    %v1141 = vunpack.c.h.b16 %v760
    %v1142 = vunpack.c.l.b16 %v761
    %v1143 = vunpack.c.h.b16 %v761
    %v1144 = vunpack.c.l.b16 %v762
    %v1145 = vunpack.c.h.b16 %v762
    %v1146 = vunpack.c.l.b16 %v763
    %v1147 = vunpack.c.h.b16 %v763
    %v1148 = vpack.c.b16 %v900, %v892
    %v1149 = vpack.c.b16 %v901, %v893
    %v1150 = vpack.c.b16 %v902, %v894
    %v1151 = vpack.c.b16 %v903, %v895
    %v1152 = vpack.c.b16 %v904, %v896
    %v1153 = vpack.c.b16 %v905, %v897
    %v1154 = vpack.c.b16 %v906, %v898
    %v1155 = vpack.c.b16 %v907, %v899
    %v1156 = vpack.c.b16 %v916, %v908
    %v1157 = vpack.c.b16 %v917, %v909
    %v1158 = vpack.c.b16 %v918, %v910
    %v1159 = vpack.c.b16 %v919, %v911
    %v1160 = vpack.c.b16 %v920, %v912
    %v1161 = vpack.c.b16 %v921, %v913
    %v1162 = vpack.c.b16 %v922, %v914
    %v1163 = vpack.c.b16 %v923, %v915
    %v1164 = vpack.c.b16 %v932, %v924
    %v1165 = vpack.c.b16 %v933, %v925
    %v1166 = vpack.c.b16 %v934, %v926
    %v1167 = vpack.c.b16 %v935, %v927
    %v1168 = vpack.c.b16 %v936, %v928
    %v1169 = vpack.c.b16 %v937, %v929
    %v1170 = vpack.c.b16 %v938, %v930
    %v1171 = vpack.c.b16 %v939, %v931
    %v1172 = vpack.c.b16 %v948, %v940
    %v1173 = vpack.c.b16 %v949, %v941
    %v1174 = vpack.c.b16 %v950, %v942
    %v1175 = vpack.c.b16 %v951, %v943
    %v1176 = vpack.c.b16 %v952, %v944
    %v1177 = vpack.c.b16 %v953, %v945
    %v1178 = vpack.c.b16 %v954, %v946
    %v1179 = vpack.c.b16 %v955, %v947
    %v1180 = vpack.c.b16 %v964, %v956
    %v1181 = vpack.c.b16 %v965, %v957
    %v1182 = vpack.c.b16 %v966, %v958
    %v1183 = vpack.c.b16 %v967, %v959
    %v1184 = vpack.c.b16 %v968, %v960
    %v1185 = vpack.c.b16 %v969, %v961
    %v1186 = vpack.c.b16 %v970, %v962
    %v1187 = vpack.c.b16 %v971, %v963
    %v1188 = vpack.c.b16 %v980, %v972
    %v1189 = vpack.c.b16 %v981, %v973
    %v1190 = vpack.c.b16 %v982, %v974
    %v1191 = vpack.c.b16 %v983, %v975
    %v1192 = vpack.c.b16 %v984, %v976
    %v1193 = vpack.c.b16 %v985, %v977
    %v1194 = vpack.c.b16 %v986, %v978
    %v1195 = vpack.c.b16 %v987, %v979
    %v1196 = vpack.c.b16 %v996, %v988
    %v1197 = vpack.c.b16 %v997, %v989
    %v1198 = vpack.c.b16 %v998, %v990
    %v1199 = vpack.c.b16 %v999, %v991
    %v1200 = vpack.c.b16 %v1000, %v992
    %v1201 = vpack.c.b16 %v1001, %v993
    %v1202 = vpack.c.b16 %v1002, %v994
    %v1203 = vpack.c.b16 %v1003, %v995
    %v1204 = vpack.c.b16 %v1012, %v1004
    %v1205 = vpack.c.b16 %v1013, %v1005
    %v1206 = vpack.c.b16 %v1014, %v1006
    %v1207 = vpack.c.b16 %v1015, %v1007
    %v1208 = vpack.c.b16 %v1016, %v1008
    %v1209 = vpack.c.b16 %v1017, %v1009
    %v1210 = vpack.c.b16 %v1018, %v1010
    %v1211 = vpack.c.b16 %v1019, %v1011
    %v1212 = vpack.c.b16 %v1028, %v1020
    %v1213 = vpack.c.b16 %v1029, %v1021
    %v1214 = vpack.c.b16 %v1030, %v1022
    %v1215 = vpack.c.b16 %v1031, %v1023
    %v1216 = vpack.c.b16 %v1032, %v1024
    %v1217 = vpack.c.b16 %v1033, %v1025
    %v1218 = vpack.c.b16 %v1034, %v1026
    %v1219 = vpack.c.b16 %v1035, %v1027
    %v1220 = vpack.c.b16 %v1044, %v1036
    %v1221 = vpack.c.b16 %v1045, %v1037
    %v1222 = vpack.c.b16 %v1046, %v1038
    %v1223 = vpack.c.b16 %v1047, %v1039
    %v1224 = vpack.c.b16 %v1048, %v1040
    %v1225 = vpack.c.b16 %v1049, %v1041
    %v1226 = vpack.c.b16 %v1050, %v1042
    %v1227 = vpack.c.b16 %v1051, %v1043
    %v1228 = vpack.c.b16 %v1060, %v1052
    %v1229 = vpack.c.b16 %v1061, %v1053
    %v1230 = vpack.c.b16 %v1062, %v1054
    %v1231 = vpack.c.b16 %v1063, %v1055
    %v1232 = vpack.c.b16 %v1064, %v1056
    %v1233 = vpack.c.b16 %v1065, %v1057
    %v1234 = vpack.c.b16 %v1066, %v1058
    %v1235 = vpack.c.b16 %v1067, %v1059
    %v1236 = vpack.c.b16 %v1076, %v1068
    %v1237 = vpack.c.b16 %v1077, %v1069
    %v1238 = vpack.c.b16 %v1078, %v1070
    %v1239 = vpack.c.b16 %v1079, %v1071
    %v1240 = vpack.c.b16 %v1080, %v1072
    %v1241 = vpack.c.b16 %v1081, %v1073
    %v1242 = vpack.c.b16 %v1082, %v1074
    %v1243 = vpack.c.b16 %v1083, %v1075
    %v1244 = vpack.c.b16 %v1092, %v1084
    %v1245 = vpack.c.b16 %v1093, %v1085
    %v1246 = vpack.c.b16 %v1094, %v1086
    %v1247 = vpack.c.b16 %v1095, %v1087
    %v1248 = vpack.c.b16 %v1096, %v1088
    %v1249 = vpack.c.b16 %v1097, %v1089
    %v1250 = vpack.c.b16 %v1098, %v1090
    %v1251 = vpack.c.b16 %v1099, %v1091
    %v1252 = vpack.c.b16 %v1108, %v1100
    %v1253 = vpack.c.b16 %v1109, %v1101
    %v1254 = vpack.c.b16 %v1110, %v1102
    %v1255 = vpack.c.b16 %v1111, %v1103
    %v1256 = vpack.c.b16 %v1112, %v1104
    %v1257 = vpack.c.b16 %v1113, %v1105
    %v1258 = vpack.c.b16 %v1114, %v1106
    %v1259 = vpack.c.b16 %v1115, %v1107
    %v1260 = vpack.c.b16 %v1124, %v1116
    %v1261 = vpack.c.b16 %v1125, %v1117
    %v1262 = vpack.c.b16 %v1126, %v1118
    %v1263 = vpack.c.b16 %v1127, %v1119
    %v1264 = vpack.c.b16 %v1128, %v1120
    %v1265 = vpack.c.b16 %v1129, %v1121
    %v1266 = vpack.c.b16 %v1130, %v1122
    %v1267 = vpack.c.b16 %v1131, %v1123
    %v1268 = vpack.c.b16 %v1140, %v1132
    %v1269 = vpack.c.b16 %v1141, %v1133
    %v1270 = vpack.c.b16 %v1142, %v1134
    %v1271 = vpack.c.b16 %v1143, %v1135
    %v1272 = vpack.c.b16 %v1144, %v1136
    %v1273 = vpack.c.b16 %v1145, %v1137
    %v1274 = vpack.c.b16 %v1146, %v1138
    %v1275 = vpack.c.b16 %v1147, %v1139
    %1404 = vmatprep.subr.bf16.mxu0 %v1205
    %1405 = vmatpush1.bf16.msra.mxu0 %v1204
    %1406 = vmatprep.subr.bf16.mxu0 %v1197
    %1407 = vmatpush1.bf16.msra.mxu0 %v1196
    %1408 = vmatprep.subr.bf16.mxu0 %v1189
    %1409 = vmatpush1.bf16.msra.mxu0 %v1188
    %1410 = vmatprep.subr.bf16.mxu0 %v1181
    %1411 = vmatpush1.bf16.msra.mxu0 %v1180
    %1412 = vmatprep.subr.bf16.mxu0 %v1173
    %1413 = vmatpush1.bf16.msra.mxu0 %v1172
    %1414 = vmatprep.subr.bf16.mxu0 %v1165
    %1415 = vmatpush1.bf16.msra.mxu0 %v1164
    %1416 = vmatprep.subr.bf16.mxu0 %v1157
    %1417 = vmatpush1.bf16.msra.mxu0 %v1156
    %1418 = vmatprep.subr.bf16.mxu0 %v1149
    %1419 = vmatpush1.bf16.msra.mxu0 %v1148
    %1420 = vmatprep.subr.bf16.mxu0 %v1269
    %1421 = vmatpush2.bf16.msra.mxu0 %v1268
    %1422 = vmatprep.subr.bf16.mxu0 %v1261
    %1423 = vmatpush2.bf16.msra.mxu0 %v1260
    %1424 = vmatprep.subr.bf16.mxu0 %v1253
    %1425 = vmatpush2.bf16.msra.mxu0 %v1252
    %1426 = vmatprep.subr.bf16.mxu0 %v1245
    %1427 = vmatpush2.bf16.msra.mxu0 %v1244
    %1428 = vmatprep.subr.bf16.mxu0 %v1237
    %1429 = vmatpush2.bf16.msra.mxu0 %v1236
    %1430 = vmatprep.subr.bf16.mxu0 %v1229
    %1431 = vmatpush2.bf16.msra.mxu0 %v1228
    %1432 = vmatprep.subr.bf16.mxu0 %v1221
    %1433 = vmatpush2.bf16.msra.mxu0 %v1220
    %1434 = vmatprep.subr.bf16.mxu0 %v1213
    %1435 = vmatpush2.bf16.msra.mxu0 %v1212
    %1436 = vmatprep.mubr.bf16.mxu0 0
    %1437 = vmatmul.mubr.bf16.gmra.mxu0 0
    %v1438 = vpop.f32.mrf.mxu0
    %v1439 = vadd.f32 0.0, %v1438
    %v1440 = vpop.f32.mrf.mxu0
    %v1441 = vadd.f32 0.0, %v1440
    %v1442 = vpop.f32.mrf.mxu0
    %v1443 = vpop.f32.mrf.mxu0
    %1444 = vdwg.mxu0
    %1445 = vmatprep.subr.bf16.mxu0 %v1207
    %1446 = vmatpush1.bf16.msra.mxu0 %v1206
    %1447 = vmatprep.subr.bf16.mxu0 %v1199
    %1448 = vmatpush1.bf16.msra.mxu0 %v1198
    %1449 = vmatprep.subr.bf16.mxu0 %v1191
    %1450 = vmatpush1.bf16.msra.mxu0 %v1190
    %1451 = vmatprep.subr.bf16.mxu0 %v1183
    %1452 = vmatpush1.bf16.msra.mxu0 %v1182
    %1453 = vmatprep.subr.bf16.mxu0 %v1175
    %1454 = vmatpush1.bf16.msra.mxu0 %v1174
    %1455 = vmatprep.subr.bf16.mxu0 %v1167
    %1456 = vmatpush1.bf16.msra.mxu0 %v1166
    %1457 = vmatprep.subr.bf16.mxu0 %v1159
    %1458 = vmatpush1.bf16.msra.mxu0 %v1158
    %1459 = vmatprep.subr.bf16.mxu0 %v1151
    %1460 = vmatpush1.bf16.msra.mxu0 %v1150
    %1461 = vmatprep.subr.bf16.mxu0 %v1271
    %1462 = vmatpush2.bf16.msra.mxu0 %v1270
    %1463 = vmatprep.subr.bf16.mxu0 %v1263
    %1464 = vmatpush2.bf16.msra.mxu0 %v1262
    %1465 = vmatprep.subr.bf16.mxu0 %v1255
    %1466 = vmatpush2.bf16.msra.mxu0 %v1254
    %1467 = vmatprep.subr.bf16.mxu0 %v1247
    %1468 = vmatpush2.bf16.msra.mxu0 %v1246
    %1469 = vmatprep.subr.bf16.mxu0 %v1239
    %1470 = vmatpush2.bf16.msra.mxu0 %v1238
    %1471 = vmatprep.subr.bf16.mxu0 %v1231
    %1472 = vmatpush2.bf16.msra.mxu0 %v1230
    %1473 = vmatprep.subr.bf16.mxu0 %v1223
    %1474 = vmatpush2.bf16.msra.mxu0 %v1222
    %1475 = vmatprep.subr.bf16.mxu0 %v1215
    %1476 = vmatpush2.bf16.msra.mxu0 %v1214
    %1477 = vmatprep.mubr.bf16.mxu0 0
    %1478 = vmatmul.mubr.bf16.gmra.mxu0 0
    %v1479 = vpop.f32.mrf.mxu0
    %v1480 = vadd.f32 0.0, %v1479
    %v1481 = vpop.f32.mrf.mxu0
    %v1482 = vadd.f32 0.0, %v1481
    %v1483 = vpop.f32.mrf.mxu0
    %v1484 = vpop.f32.mrf.mxu0
    %1485 = vdwg.mxu0
    %1486 = vmatprep.subr.bf16.mxu0 %v1209
    %1487 = vmatpush1.bf16.msra.mxu0 %v1208
    %1488 = vmatprep.subr.bf16.mxu0 %v1201
    %1489 = vmatpush1.bf16.msra.mxu0 %v1200
    %1490 = vmatprep.subr.bf16.mxu0 %v1193
    %1491 = vmatpush1.bf16.msra.mxu0 %v1192
    %1492 = vmatprep.subr.bf16.mxu0 %v1185
    %1493 = vmatpush1.bf16.msra.mxu0 %v1184
    %1494 = vmatprep.subr.bf16.mxu0 %v1177
    %1495 = vmatpush1.bf16.msra.mxu0 %v1176
    %1496 = vmatprep.subr.bf16.mxu0 %v1169
    %1497 = vmatpush1.bf16.msra.mxu0 %v1168
    %1498 = vmatprep.subr.bf16.mxu0 %v1161
    %1499 = vmatpush1.bf16.msra.mxu0 %v1160
    %1500 = vmatprep.subr.bf16.mxu0 %v1153
    %1501 = vmatpush1.bf16.msra.mxu0 %v1152
    %1502 = vmatprep.subr.bf16.mxu0 %v1273
    %1503 = vmatpush2.bf16.msra.mxu0 %v1272
    %1504 = vmatprep.subr.bf16.mxu0 %v1265
    %1505 = vmatpush2.bf16.msra.mxu0 %v1264
    %1506 = vmatprep.subr.bf16.mxu0 %v1257
    %1507 = vmatpush2.bf16.msra.mxu0 %v1256
    %1508 = vmatprep.subr.bf16.mxu0 %v1249
    %1509 = vmatpush2.bf16.msra.mxu0 %v1248
    %1510 = vmatprep.subr.bf16.mxu0 %v1241
    %1511 = vmatpush2.bf16.msra.mxu0 %v1240
    %1512 = vmatprep.subr.bf16.mxu0 %v1233
    %1513 = vmatpush2.bf16.msra.mxu0 %v1232
    %1514 = vmatprep.subr.bf16.mxu0 %v1225
    %1515 = vmatpush2.bf16.msra.mxu0 %v1224
    %1516 = vmatprep.subr.bf16.mxu0 %v1217
    %1517 = vmatpush2.bf16.msra.mxu0 %v1216
    %1518 = vmatprep.mubr.bf16.mxu0 0
    %1519 = vmatmul.mubr.bf16.gmra.mxu0 0
    %v1520 = vpop.f32.mrf.mxu0
    %v1521 = vadd.f32 0.0, %v1520
    %v1522 = vpop.f32.mrf.mxu0
    %v1523 = vadd.f32 0.0, %v1522
    %v1524 = vpop.f32.mrf.mxu0
    %v1525 = vpop.f32.mrf.mxu0
    %1526 = vdwg.mxu0
    %1527 = vmatprep.subr.bf16.mxu0 %v1211
    %1528 = vmatpush1.bf16.msra.mxu0 %v1210
    %1529 = vmatprep.subr.bf16.mxu0 %v1203
    %1530 = vmatpush1.bf16.msra.mxu0 %v1202
    %1531 = vmatprep.subr.bf16.mxu0 %v1195
    %1532 = vmatpush1.bf16.msra.mxu0 %v1194
    %1533 = vmatprep.subr.bf16.mxu0 %v1187
    %1534 = vmatpush1.bf16.msra.mxu0 %v1186
    %1535 = vmatprep.subr.bf16.mxu0 %v1179
    %1536 = vmatpush1.bf16.msra.mxu0 %v1178
    %1537 = vmatprep.subr.bf16.mxu0 %v1171
    %1538 = vmatpush1.bf16.msra.mxu0 %v1170
    %1539 = vmatprep.subr.bf16.mxu0 %v1163
    %1540 = vmatpush1.bf16.msra.mxu0 %v1162
    %1541 = vmatprep.subr.bf16.mxu0 %v1155
    %1542 = vmatpush1.bf16.msra.mxu0 %v1154
    %1543 = vmatprep.subr.bf16.mxu0 %v1275
    %1544 = vmatpush2.bf16.msra.mxu0 %v1274
    %1545 = vmatprep.subr.bf16.mxu0 %v1267
    %1546 = vmatpush2.bf16.msra.mxu0 %v1266
    %1547 = vmatprep.subr.bf16.mxu0 %v1259
    %1548 = vmatpush2.bf16.msra.mxu0 %v1258
    %1549 = vmatprep.subr.bf16.mxu0 %v1251
    %1550 = vmatpush2.bf16.msra.mxu0 %v1250
    %1551 = vmatprep.subr.bf16.mxu0 %v1243
    %1552 = vmatpush2.bf16.msra.mxu0 %v1242
    %1553 = vmatprep.subr.bf16.mxu0 %v1235
    %1554 = vmatpush2.bf16.msra.mxu0 %v1234
    %1555 = vmatprep.subr.bf16.mxu0 %v1227
    %1556 = vmatpush2.bf16.msra.mxu0 %v1226
    %1557 = vmatprep.subr.bf16.mxu0 %v1219
    %1558 = vmatpush2.bf16.msra.mxu0 %v1218
    %1559 = vmatprep.mubr.bf16.mxu0 0
    %1560 = vmatmul.mubr.bf16.gmra.mxu0 0
    %v1561 = vpop.f32.mrf.mxu0
    %v1562 = vadd.f32 0.0, %v1561
    %v1563 = vpop.f32.mrf.mxu0
    %v1564 = vadd.f32 0.0, %v1563
    %v1565 = vpop.f32.mrf.mxu0
    %v1566 = vpop.f32.mrf.mxu0
    %1567 = vdwg.mxu0
    %v1568 = vadd.f32 %v379, %v1439
    %v1569 = vadd.f32 %v381, %v1441
    %v1570 = vadd.f32 %v452, %v1480
    %v1571 = vadd.f32 %v454, %v1482
    %v1572 = vadd.f32 %v525, %v1521
    %v1573 = vadd.f32 %v527, %v1523
    %v1574 = vadd.f32 %v598, %v1562
    %v1575 = vadd.f32 %v600, %v1564
    %v1576 = vxor.u32 %v1568, 2147483648
    %v1577 = vxor.u32 %v1569, 2147483648
    %v1578 = vmul.f32 %v1576, 1.442695
    %v1579 = vpow.pop %v1578
    %v1580 = vmul.f32 %v1577, 1.442695
    %v1581 = vpow.pop %v1580
    %v1582 = vadd.f32 %v1579, 1.0
    %v1583 = vadd.f32 %v1581, 1.0
    %v1584 = vrcp.pop %v1582
    %v1585 = vmul.f32 1.0, %v1584
    %v1586 = vrcp.pop %v1583
    %v1587 = vmul.f32 1.0, %v1586
    %v1588 = vxor.u32 %v1570, 2147483648
    %v1589 = vxor.u32 %v1571, 2147483648
    %v1590 = vmul.f32 %v1588, 1.442695
    %v1591 = vpow.pop %v1590
    %v1592 = vmul.f32 %v1589, 1.442695
    %v1593 = vpow.pop %v1592
    %v1594 = vadd.f32 %v1591, 1.0
    %v1595 = vadd.f32 %v1593, 1.0
    %v1596 = vrcp.pop %v1594
    %v1597 = vmul.f32 1.0, %v1596
    %v1598 = vrcp.pop %v1595
    %v1599 = vmul.f32 1.0, %v1598
    %v1600 = vtanh.pop %v1572
    %v1601 = vtanh.pop %v1573
    %v1602 = vxor.u32 %v1574, 2147483648
    %v1603 = vxor.u32 %v1575, 2147483648
    %v1604 = vmul.f32 %v1602, 1.442695
    %v1605 = vpow.pop %v1604
    %v1606 = vmul.f32 %v1603, 1.442695
    %v1607 = vpow.pop %v1606
    %v1608 = vadd.f32 %v1605, 1.0
    %v1609 = vadd.f32 %v1607, 1.0
    %v1610 = vrcp.pop %v1608
    %v1611 = vmul.f32 1.0, %v1610
    %v1612 = vrcp.pop %v1609
    %v1613 = vmul.f32 1.0, %v1612
    %v1614 = vmul.f32 %v1597, 0.0
    %v1615 = vmul.f32 %v1599, 0.0
    %v1616 = vmul.f32 %v1585, %v1600
    %v1617 = vmul.f32 %v1587, %v1601
    %v1618 = vadd.f32 %v1614, %v1616
    %v1619 = vadd.f32 %v1615, %v1617
    %v1620 = vtanh.pop %v1618
    %v1621 = vtanh.pop %v1619
    %v1622 = vmul.f32 %v1611, %v1620
    %v1623 = vmul.f32 %v1613, %v1621
    %1624 = vst [vmem:[#allocation2] sm:$0x3] %v1622
    %1625 = vst [vmem:[#allocation2 + $0x8] sm:$0x3] %v1623
    %v1626 = vpack.c.bf16 %v1622, %v1622
    %v1627 = vpack.c.bf16 %v1623, %v1623
    %1628 = vmatprep.subr.bf16.mxu0 %v1205
    %1629 = vmatpush1.bf16.msra.mxu0 %v1204
    %1630 = vmatprep.subr.bf16.mxu0 %v1197
    %1631 = vmatpush1.bf16.msra.mxu0 %v1196
    %1632 = vmatprep.subr.bf16.mxu0 %v1189
    %1633 = vmatpush1.bf16.msra.mxu0 %v1188
    %1634 = vmatprep.subr.bf16.mxu0 %v1181
    %1635 = vmatpush1.bf16.msra.mxu0 %v1180
    %1636 = vmatprep.subr.bf16.mxu0 %v1173
    %1637 = vmatpush1.bf16.msra.mxu0 %v1172
    %1638 = vmatprep.subr.bf16.mxu0 %v1165
    %1639 = vmatpush1.bf16.msra.mxu0 %v1164
    %1640 = vmatprep.subr.bf16.mxu0 %v1157
    %1641 = vmatpush1.bf16.msra.mxu0 %v1156
    %1642 = vmatprep.subr.bf16.mxu0 %v1149
    %1643 = vmatpush1.bf16.msra.mxu0 %v1148
    %1644 = vmatprep.subr.bf16.mxu0 %v1269
    %1645 = vmatpush2.bf16.msra.mxu0 %v1268
    %1646 = vmatprep.subr.bf16.mxu0 %v1261
    %1647 = vmatpush2.bf16.msra.mxu0 %v1260
    %1648 = vmatprep.subr.bf16.mxu0 %v1253
    %1649 = vmatpush2.bf16.msra.mxu0 %v1252
    %1650 = vmatprep.subr.bf16.mxu0 %v1245
    %1651 = vmatpush2.bf16.msra.mxu0 %v1244
    %1652 = vmatprep.subr.bf16.mxu0 %v1237
    %1653 = vmatpush2.bf16.msra.mxu0 %v1236
    %1654 = vmatprep.subr.bf16.mxu0 %v1229
    %1655 = vmatpush2.bf16.msra.mxu0 %v1228
    %1656 = vmatprep.subr.bf16.mxu0 %v1221
    %1657 = vmatpush2.bf16.msra.mxu0 %v1220
    %1658 = vmatprep.subr.bf16.mxu0 %v1213
    %1659 = vmatpush2.bf16.msra.mxu0 %v1212
    %1660 = vmatprep.mubr.bf16.mxu0 %v1627
    %1661 = vmatmul.mubr.bf16.gmra.mxu0 %v1626
    %v1662 = vpop.f32.mrf.mxu0
    %v1663 = vadd.f32 0.0, %v1662
    %v1664 = vpop.f32.mrf.mxu0
    %v1665 = vadd.f32 0.0, %v1664
    %v1666 = vpop.f32.mrf.mxu0
    %v1667 = vpop.f32.mrf.mxu0
    %1668 = vdwg.mxu0
    %1669 = vmatprep.subr.bf16.mxu0 %v1207
    %1670 = vmatpush1.bf16.msra.mxu0 %v1206
    %1671 = vmatprep.subr.bf16.mxu0 %v1199
    %1672 = vmatpush1.bf16.msra.mxu0 %v1198
    %1673 = vmatprep.subr.bf16.mxu0 %v1191
    %1674 = vmatpush1.bf16.msra.mxu0 %v1190
    %1675 = vmatprep.subr.bf16.mxu0 %v1183
    %1676 = vmatpush1.bf16.msra.mxu0 %v1182
    %1677 = vmatprep.subr.bf16.mxu0 %v1175
    %1678 = vmatpush1.bf16.msra.mxu0 %v1174
    %1679 = vmatprep.subr.bf16.mxu0 %v1167
    %1680 = vmatpush1.bf16.msra.mxu0 %v1166
    %1681 = vmatprep.subr.bf16.mxu0 %v1159
    %1682 = vmatpush1.bf16.msra.mxu0 %v1158
    %1683 = vmatprep.subr.bf16.mxu0 %v1151
    %1684 = vmatpush1.bf16.msra.mxu0 %v1150
    %1685 = vmatprep.subr.bf16.mxu0 %v1271
    %1686 = vmatpush2.bf16.msra.mxu0 %v1270
    %1687 = vmatprep.subr.bf16.mxu0 %v1263
    %1688 = vmatpush2.bf16.msra.mxu0 %v1262
    %1689 = vmatprep.subr.bf16.mxu0 %v1255
    %1690 = vmatpush2.bf16.msra.mxu0 %v1254
    %1691 = vmatprep.subr.bf16.mxu0 %v1247
    %1692 = vmatpush2.bf16.msra.mxu0 %v1246
    %1693 = vmatprep.subr.bf16.mxu0 %v1239
    %1694 = vmatpush2.bf16.msra.mxu0 %v1238
    %1695 = vmatprep.subr.bf16.mxu0 %v1231
    %1696 = vmatpush2.bf16.msra.mxu0 %v1230
    %1697 = vmatprep.subr.bf16.mxu0 %v1223
    %1698 = vmatpush2.bf16.msra.mxu0 %v1222
    %1699 = vmatprep.subr.bf16.mxu0 %v1215
    %1700 = vmatpush2.bf16.msra.mxu0 %v1214
    %1701 = vmatprep.mubr.bf16.mxu0 %v1627
    %1702 = vmatmul.mubr.bf16.gmra.mxu0 %v1626
    %v1703 = vpop.f32.mrf.mxu0
    %v1704 = vadd.f32 0.0, %v1703
    %v1705 = vpop.f32.mrf.mxu0
    %v1706 = vadd.f32 0.0, %v1705
    %v1707 = vpop.f32.mrf.mxu0
    %v1708 = vpop.f32.mrf.mxu0
    %1709 = vdwg.mxu0
    %1710 = vmatprep.subr.bf16.mxu0 %v1209
    %1711 = vmatpush1.bf16.msra.mxu0 %v1208
    %1712 = vmatprep.subr.bf16.mxu0 %v1201
    %1713 = vmatpush1.bf16.msra.mxu0 %v1200
    %1714 = vmatprep.subr.bf16.mxu0 %v1193
    %1715 = vmatpush1.bf16.msra.mxu0 %v1192
    %1716 = vmatprep.subr.bf16.mxu0 %v1185
    %1717 = vmatpush1.bf16.msra.mxu0 %v1184
    %1718 = vmatprep.subr.bf16.mxu0 %v1177
    %1719 = vmatpush1.bf16.msra.mxu0 %v1176
    %1720 = vmatprep.subr.bf16.mxu0 %v1169
    %1721 = vmatpush1.bf16.msra.mxu0 %v1168
    %1722 = vmatprep.subr.bf16.mxu0 %v1161
    %1723 = vmatpush1.bf16.msra.mxu0 %v1160
    %1724 = vmatprep.subr.bf16.mxu0 %v1153
    %1725 = vmatpush1.bf16.msra.mxu0 %v1152
    %1726 = vmatprep.subr.bf16.mxu0 %v1273
    %1727 = vmatpush2.bf16.msra.mxu0 %v1272
    %1728 = vmatprep.subr.bf16.mxu0 %v1265
    %1729 = vmatpush2.bf16.msra.mxu0 %v1264
    %1730 = vmatprep.subr.bf16.mxu0 %v1257
    %1731 = vmatpush2.bf16.msra.mxu0 %v1256
    %1732 = vmatprep.subr.bf16.mxu0 %v1249
    %1733 = vmatpush2.bf16.msra.mxu0 %v1248
    %1734 = vmatprep.subr.bf16.mxu0 %v1241
    %1735 = vmatpush2.bf16.msra.mxu0 %v1240
    %1736 = vmatprep.subr.bf16.mxu0 %v1233
    %1737 = vmatpush2.bf16.msra.mxu0 %v1232
    %1738 = vmatprep.subr.bf16.mxu0 %v1225
    %1739 = vmatpush2.bf16.msra.mxu0 %v1224
    %1740 = vmatprep.subr.bf16.mxu0 %v1217
    %1741 = vmatpush2.bf16.msra.mxu0 %v1216
    %1742 = vmatprep.mubr.bf16.mxu0 %v1627
    %1743 = vmatmul.mubr.bf16.gmra.mxu0 %v1626
    %v1744 = vpop.f32.mrf.mxu0
    %v1745 = vadd.f32 0.0, %v1744
    %v1746 = vpop.f32.mrf.mxu0
    %v1747 = vadd.f32 0.0, %v1746
    %v1748 = vpop.f32.mrf.mxu0
    %v1749 = vpop.f32.mrf.mxu0
    %1750 = vdwg.mxu0
    %1751 = vmatprep.subr.bf16.mxu0 %v1211
    %1752 = vmatpush1.bf16.msra.mxu0 %v1210
    %1753 = vmatprep.subr.bf16.mxu0 %v1203
    %1754 = vmatpush1.bf16.msra.mxu0 %v1202
    %1755 = vmatprep.subr.bf16.mxu0 %v1195
    %1756 = vmatpush1.bf16.msra.mxu0 %v1194
    %1757 = vmatprep.subr.bf16.mxu0 %v1187
    %1758 = vmatpush1.bf16.msra.mxu0 %v1186
    %1759 = vmatprep.subr.bf16.mxu0 %v1179
    %1760 = vmatpush1.bf16.msra.mxu0 %v1178
    %1761 = vmatprep.subr.bf16.mxu0 %v1171
    %1762 = vmatpush1.bf16.msra.mxu0 %v1170
    %1763 = vmatprep.subr.bf16.mxu0 %v1163
    %1764 = vmatpush1.bf16.msra.mxu0 %v1162
    %1765 = vmatprep.subr.bf16.mxu0 %v1155
    %1766 = vmatpush1.bf16.msra.mxu0 %v1154
    %1767 = vmatprep.subr.bf16.mxu0 %v1275
    %1768 = vmatpush2.bf16.msra.mxu0 %v1274
    %1769 = vmatprep.subr.bf16.mxu0 %v1267
    %1770 = vmatpush2.bf16.msra.mxu0 %v1266
    %1771 = vmatprep.subr.bf16.mxu0 %v1259
    %1772 = vmatpush2.bf16.msra.mxu0 %v1258
    %1773 = vmatprep.subr.bf16.mxu0 %v1251
    %1774 = vmatpush2.bf16.msra.mxu0 %v1250
    %1775 = vmatprep.subr.bf16.mxu0 %v1243
    %1776 = vmatpush2.bf16.msra.mxu0 %v1242
    %1777 = vmatprep.subr.bf16.mxu0 %v1235
    %1778 = vmatpush2.bf16.msra.mxu0 %v1234
    %1779 = vmatprep.subr.bf16.mxu0 %v1227
    %1780 = vmatpush2.bf16.msra.mxu0 %v1226
    %1781 = vmatprep.subr.bf16.mxu0 %v1219
    %1782 = vmatpush2.bf16.msra.mxu0 %v1218
    %1783 = vmatprep.mubr.bf16.mxu0 %v1627
    %1784 = vmatmul.mubr.bf16.gmra.mxu0 %v1626
    %v1785 = vpop.f32.mrf.mxu0
    %v1786 = vadd.f32 0.0, %v1785
    %v1787 = vpop.f32.mrf.mxu0
    %v1788 = vadd.f32 0.0, %v1787
    %v1789 = vpop.f32.mrf.mxu0
    %v1790 = vpop.f32.mrf.mxu0
    %1791 = vdwg.mxu0
    %v1792 = vadd.f32 %v383, %v1663
    %v1793 = vadd.f32 %v385, %v1665
    %v1794 = vadd.f32 %v456, %v1704
    %v1795 = vadd.f32 %v458, %v1706
    %v1796 = vadd.f32 %v529, %v1745
    %v1797 = vadd.f32 %v531, %v1747
    %v1798 = vadd.f32 %v602, %v1786
    %v1799 = vadd.f32 %v604, %v1788
    %v1800 = vxor.u32 %v1792, 2147483648
    %v1801 = vxor.u32 %v1793, 2147483648
    %v1802 = vmul.f32 %v1800, 1.442695
    %v1803 = vpow.pop %v1802
    %v1804 = vmul.f32 %v1801, 1.442695
    %v1805 = vpow.pop %v1804
    %v1806 = vadd.f32 %v1803, 1.0
    %v1807 = vadd.f32 %v1805, 1.0
    %v1808 = vrcp.pop %v1806
    %v1809 = vmul.f32 1.0, %v1808
    %v1810 = vrcp.pop %v1807
    %v1811 = vmul.f32 1.0, %v1810
    %v1812 = vxor.u32 %v1794, 2147483648
    %v1813 = vxor.u32 %v1795, 2147483648
    %v1814 = vmul.f32 %v1812, 1.442695
    %v1815 = vpow.pop %v1814
    %v1816 = vmul.f32 %v1813, 1.442695
    %v1817 = vpow.pop %v1816
    %v1818 = vadd.f32 %v1815, 1.0
    %v1819 = vadd.f32 %v1817, 1.0
    %v1820 = vrcp.pop %v1818
    %v1821 = vmul.f32 1.0, %v1820
    %v1822 = vrcp.pop %v1819
    %v1823 = vmul.f32 1.0, %v1822
    %v1824 = vtanh.pop %v1796
    %v1825 = vtanh.pop %v1797
    %v1826 = vxor.u32 %v1798, 2147483648
    %v1827 = vxor.u32 %v1799, 2147483648
    %v1828 = vmul.f32 %v1826, 1.442695
    %v1829 = vpow.pop %v1828
    %v1830 = vmul.f32 %v1827, 1.442695
    %v1831 = vpow.pop %v1830
    %v1832 = vadd.f32 %v1829, 1.0
    %v1833 = vadd.f32 %v1831, 1.0
    %v1834 = vrcp.pop %v1832
    %v1835 = vmul.f32 1.0, %v1834
    %v1836 = vrcp.pop %v1833
    %v1837 = vmul.f32 1.0, %v1836
    %v1838 = vmul.f32 %v1821, %v1618
    %v1839 = vmul.f32 %v1823, %v1619
    %v1840 = vmul.f32 %v1809, %v1824
    %v1841 = vmul.f32 %v1811, %v1825
    %v1842 = vadd.f32 %v1838, %v1840
    %v1843 = vadd.f32 %v1839, %v1841
    %v1844 = vtanh.pop %v1842
    %v1845 = vtanh.pop %v1843
    %v1846 = vmul.f32 %v1835, %v1844
    %v1847 = vmul.f32 %v1837, %v1845
    %1848 = vst [vmem:[#allocation2 + $0x10] sm:$0x3] %v1846
    %1849 = vst [vmem:[#allocation2 + $0x18] sm:$0x3] %v1847
    %v1850 = vpack.c.bf16 %v1846, %v1846
    %v1851 = vpack.c.bf16 %v1847, %v1847
    %1852 = vmatprep.subr.bf16.mxu0 %v1205
    %1853 = vmatpush1.bf16.msra.mxu0 %v1204
    %1854 = vmatprep.subr.bf16.mxu0 %v1197
    %1855 = vmatpush1.bf16.msra.mxu0 %v1196
    %1856 = vmatprep.subr.bf16.mxu0 %v1189
    %1857 = vmatpush1.bf16.msra.mxu0 %v1188
    %1858 = vmatprep.subr.bf16.mxu0 %v1181
    %1859 = vmatpush1.bf16.msra.mxu0 %v1180
    %1860 = vmatprep.subr.bf16.mxu0 %v1173
    %1861 = vmatpush1.bf16.msra.mxu0 %v1172
    %1862 = vmatprep.subr.bf16.mxu0 %v1165
    %1863 = vmatpush1.bf16.msra.mxu0 %v1164
    %1864 = vmatprep.subr.bf16.mxu0 %v1157
    %1865 = vmatpush1.bf16.msra.mxu0 %v1156
    %1866 = vmatprep.subr.bf16.mxu0 %v1149
    %1867 = vmatpush1.bf16.msra.mxu0 %v1148
    %1868 = vmatprep.subr.bf16.mxu0 %v1269
    %1869 = vmatpush2.bf16.msra.mxu0 %v1268
    %1870 = vmatprep.subr.bf16.mxu0 %v1261
    %1871 = vmatpush2.bf16.msra.mxu0 %v1260
    %1872 = vmatprep.subr.bf16.mxu0 %v1253
    %1873 = vmatpush2.bf16.msra.mxu0 %v1252
    %1874 = vmatprep.subr.bf16.mxu0 %v1245
    %1875 = vmatpush2.bf16.msra.mxu0 %v1244
    %1876 = vmatprep.subr.bf16.mxu0 %v1237
    %1877 = vmatpush2.bf16.msra.mxu0 %v1236
    %1878 = vmatprep.subr.bf16.mxu0 %v1229
    %1879 = vmatpush2.bf16.msra.mxu0 %v1228
    %1880 = vmatprep.subr.bf16.mxu0 %v1221
    %1881 = vmatpush2.bf16.msra.mxu0 %v1220
    %1882 = vmatprep.subr.bf16.mxu0 %v1213
    %1883 = vmatpush2.bf16.msra.mxu0 %v1212
    %1884 = vmatprep.mubr.bf16.mxu0 %v1851
    %1885 = vmatmul.mubr.bf16.gmra.mxu0 %v1850
    %v1886 = vpop.f32.mrf.mxu0
    %v1887 = vadd.f32 0.0, %v1886
    %v1888 = vpop.f32.mrf.mxu0
    %v1889 = vadd.f32 0.0, %v1888
    %v1890 = vpop.f32.mrf.mxu0
    %v1891 = vpop.f32.mrf.mxu0
    %1892 = vdwg.mxu0
    %1893 = vmatprep.subr.bf16.mxu0 %v1207
    %1894 = vmatpush1.bf16.msra.mxu0 %v1206
    %1895 = vmatprep.subr.bf16.mxu0 %v1199
    %1896 = vmatpush1.bf16.msra.mxu0 %v1198
    %1897 = vmatprep.subr.bf16.mxu0 %v1191
    %1898 = vmatpush1.bf16.msra.mxu0 %v1190
    %1899 = vmatprep.subr.bf16.mxu0 %v1183
    %1900 = vmatpush1.bf16.msra.mxu0 %v1182
    %1901 = vmatprep.subr.bf16.mxu0 %v1175
    %1902 = vmatpush1.bf16.msra.mxu0 %v1174
    %1903 = vmatprep.subr.bf16.mxu0 %v1167
    %1904 = vmatpush1.bf16.msra.mxu0 %v1166
    %1905 = vmatprep.subr.bf16.mxu0 %v1159
    %1906 = vmatpush1.bf16.msra.mxu0 %v1158
    %1907 = vmatprep.subr.bf16.mxu0 %v1151
    %1908 = vmatpush1.bf16.msra.mxu0 %v1150
    %1909 = vmatprep.subr.bf16.mxu0 %v1271
    %1910 = vmatpush2.bf16.msra.mxu0 %v1270
    %1911 = vmatprep.subr.bf16.mxu0 %v1263
    %1912 = vmatpush2.bf16.msra.mxu0 %v1262
    %1913 = vmatprep.subr.bf16.mxu0 %v1255
    %1914 = vmatpush2.bf16.msra.mxu0 %v1254
    %1915 = vmatprep.subr.bf16.mxu0 %v1247
    %1916 = vmatpush2.bf16.msra.mxu0 %v1246
    %1917 = vmatprep.subr.bf16.mxu0 %v1239
    %1918 = vmatpush2.bf16.msra.mxu0 %v1238
    %1919 = vmatprep.subr.bf16.mxu0 %v1231
    %1920 = vmatpush2.bf16.msra.mxu0 %v1230
    %1921 = vmatprep.subr.bf16.mxu0 %v1223
    %1922 = vmatpush2.bf16.msra.mxu0 %v1222
    %1923 = vmatprep.subr.bf16.mxu0 %v1215
    %1924 = vmatpush2.bf16.msra.mxu0 %v1214
    %1925 = vmatprep.mubr.bf16.mxu0 %v1851
    %1926 = vmatmul.mubr.bf16.gmra.mxu0 %v1850
    %v1927 = vpop.f32.mrf.mxu0
    %v1928 = vadd.f32 0.0, %v1927
    %v1929 = vpop.f32.mrf.mxu0
    %v1930 = vadd.f32 0.0, %v1929
    %v1931 = vpop.f32.mrf.mxu0
    %v1932 = vpop.f32.mrf.mxu0
    %1933 = vdwg.mxu0
    %1934 = vmatprep.subr.bf16.mxu0 %v1209
    %1935 = vmatpush1.bf16.msra.mxu0 %v1208
    %1936 = vmatprep.subr.bf16.mxu0 %v1201
    %1937 = vmatpush1.bf16.msra.mxu0 %v1200
    %1938 = vmatprep.subr.bf16.mxu0 %v1193
    %1939 = vmatpush1.bf16.msra.mxu0 %v1192
    %1940 = vmatprep.subr.bf16.mxu0 %v1185
    %1941 = vmatpush1.bf16.msra.mxu0 %v1184
    %1942 = vmatprep.subr.bf16.mxu0 %v1177
    %1943 = vmatpush1.bf16.msra.mxu0 %v1176
    %1944 = vmatprep.subr.bf16.mxu0 %v1169
    %1945 = vmatpush1.bf16.msra.mxu0 %v1168
    %1946 = vmatprep.subr.bf16.mxu0 %v1161
    %1947 = vmatpush1.bf16.msra.mxu0 %v1160
    %1948 = vmatprep.subr.bf16.mxu0 %v1153
    %1949 = vmatpush1.bf16.msra.mxu0 %v1152
    %1950 = vmatprep.subr.bf16.mxu0 %v1273
    %1951 = vmatpush2.bf16.msra.mxu0 %v1272
    %1952 = vmatprep.subr.bf16.mxu0 %v1265
    %1953 = vmatpush2.bf16.msra.mxu0 %v1264
    %1954 = vmatprep.subr.bf16.mxu0 %v1257
    %1955 = vmatpush2.bf16.msra.mxu0 %v1256
    %1956 = vmatprep.subr.bf16.mxu0 %v1249
    %1957 = vmatpush2.bf16.msra.mxu0 %v1248
    %1958 = vmatprep.subr.bf16.mxu0 %v1241
    %1959 = vmatpush2.bf16.msra.mxu0 %v1240
    %1960 = vmatprep.subr.bf16.mxu0 %v1233
    %1961 = vmatpush2.bf16.msra.mxu0 %v1232
    %1962 = vmatprep.subr.bf16.mxu0 %v1225
    %1963 = vmatpush2.bf16.msra.mxu0 %v1224
    %1964 = vmatprep.subr.bf16.mxu0 %v1217
    %1965 = vmatpush2.bf16.msra.mxu0 %v1216
    %1966 = vmatprep.mubr.bf16.mxu0 %v1851
    %1967 = vmatmul.mubr.bf16.gmra.mxu0 %v1850
    %v1968 = vpop.f32.mrf.mxu0
    %v1969 = vadd.f32 0.0, %v1968
    %v1970 = vpop.f32.mrf.mxu0
    %v1971 = vadd.f32 0.0, %v1970
    %v1972 = vpop.f32.mrf.mxu0
    %v1973 = vpop.f32.mrf.mxu0
    %1974 = vdwg.mxu0
    %1975 = vmatprep.subr.bf16.mxu0 %v1211
    %1976 = vmatpush1.bf16.msra.mxu0 %v1210
    %1977 = vmatprep.subr.bf16.mxu0 %v1203
    %1978 = vmatpush1.bf16.msra.mxu0 %v1202
    %1979 = vmatprep.subr.bf16.mxu0 %v1195
    %1980 = vmatpush1.bf16.msra.mxu0 %v1194
    %1981 = vmatprep.subr.bf16.mxu0 %v1187
    %1982 = vmatpush1.bf16.msra.mxu0 %v1186
    %1983 = vmatprep.subr.bf16.mxu0 %v1179
    %1984 = vmatpush1.bf16.msra.mxu0 %v1178
    %1985 = vmatprep.subr.bf16.mxu0 %v1171
    %1986 = vmatpush1.bf16.msra.mxu0 %v1170
    %1987 = vmatprep.subr.bf16.mxu0 %v1163
    %1988 = vmatpush1.bf16.msra.mxu0 %v1162
    %1989 = vmatprep.subr.bf16.mxu0 %v1155
    %1990 = vmatpush1.bf16.msra.mxu0 %v1154
    %1991 = vmatprep.subr.bf16.mxu0 %v1275
    %1992 = vmatpush2.bf16.msra.mxu0 %v1274
    %1993 = vmatprep.subr.bf16.mxu0 %v1267
    %1994 = vmatpush2.bf16.msra.mxu0 %v1266
    %1995 = vmatprep.subr.bf16.mxu0 %v1259
    %1996 = vmatpush2.bf16.msra.mxu0 %v1258
    %1997 = vmatprep.subr.bf16.mxu0 %v1251
    %1998 = vmatpush2.bf16.msra.mxu0 %v1250
    %1999 = vmatprep.subr.bf16.mxu0 %v1243
    %2000 = vmatpush2.bf16.msra.mxu0 %v1242
    %2001 = vmatprep.subr.bf16.mxu0 %v1235
    %2002 = vmatpush2.bf16.msra.mxu0 %v1234
    %2003 = vmatprep.subr.bf16.mxu0 %v1227
    %2004 = vmatpush2.bf16.msra.mxu0 %v1226
    %2005 = vmatprep.subr.bf16.mxu0 %v1219
    %2006 = vmatpush2.bf16.msra.mxu0 %v1218
    %2007 = vmatprep.mubr.bf16.mxu0 %v1851
    %2008 = vmatmul.mubr.bf16.gmra.mxu0 %v1850
    %v2009 = vpop.f32.mrf.mxu0
    %v2010 = vadd.f32 0.0, %v2009
    %v2011 = vpop.f32.mrf.mxu0
    %v2012 = vadd.f32 0.0, %v2011
    %v2013 = vpop.f32.mrf.mxu0
    %v2014 = vpop.f32.mrf.mxu0
    %2015 = vdwg.mxu0
    %v2016 = vadd.f32 %v389, %v1887
    %v2017 = vadd.f32 %v391, %v1889
    %v2018 = vadd.f32 %v462, %v1928
    %v2019 = vadd.f32 %v464, %v1930
    %v2020 = vadd.f32 %v535, %v1969
    %v2021 = vadd.f32 %v537, %v1971
    %v2022 = vadd.f32 %v608, %v2010
    %v2023 = vadd.f32 %v610, %v2012
    %v2024 = vxor.u32 %v2016, 2147483648
    %v2025 = vxor.u32 %v2017, 2147483648
    %v2026 = vmul.f32 %v2024, 1.442695
    %v2027 = vpow.pop %v2026
    %v2028 = vmul.f32 %v2025, 1.442695
    %v2029 = vpow.pop %v2028
    %v2030 = vadd.f32 %v2027, 1.0
    %v2031 = vadd.f32 %v2029, 1.0
    %v2032 = vrcp.pop %v2030
    %v2033 = vmul.f32 1.0, %v2032
    %v2034 = vrcp.pop %v2031
    %v2035 = vmul.f32 1.0, %v2034
    %v2036 = vxor.u32 %v2018, 2147483648
    %v2037 = vxor.u32 %v2019, 2147483648
    %v2038 = vmul.f32 %v2036, 1.442695
    %v2039 = vpow.pop %v2038
    %v2040 = vmul.f32 %v2037, 1.442695
    %v2041 = vpow.pop %v2040
    %v2042 = vadd.f32 %v2039, 1.0
    %v2043 = vadd.f32 %v2041, 1.0
    %v2044 = vrcp.pop %v2042
    %v2045 = vmul.f32 1.0, %v2044
    %v2046 = vrcp.pop %v2043
    %v2047 = vmul.f32 1.0, %v2046
    %v2048 = vtanh.pop %v2020
    %v2049 = vtanh.pop %v2021
    %v2050 = vxor.u32 %v2022, 2147483648
    %v2051 = vxor.u32 %v2023, 2147483648
    %v2052 = vmul.f32 %v2050, 1.442695
    %v2053 = vpow.pop %v2052
    %v2054 = vmul.f32 %v2051, 1.442695
    %v2055 = vpow.pop %v2054
    %v2056 = vadd.f32 %v2053, 1.0
    %v2057 = vadd.f32 %v2055, 1.0
    %v2058 = vrcp.pop %v2056
    %v2059 = vmul.f32 1.0, %v2058
    %v2060 = vrcp.pop %v2057
    %v2061 = vmul.f32 1.0, %v2060
    %v2062 = vmul.f32 %v2045, %v1842
    %v2063 = vmul.f32 %v2047, %v1843
    %v2064 = vmul.f32 %v2033, %v2048
    %v2065 = vmul.f32 %v2035, %v2049
    %v2066 = vadd.f32 %v2062, %v2064
    %v2067 = vadd.f32 %v2063, %v2065
    %v2068 = vtanh.pop %v2066
    %v2069 = vtanh.pop %v2067
    %v2070 = vmul.f32 %v2059, %v2068
    %v2071 = vmul.f32 %v2061, %v2069
    %2072 = vst [vmem:[#allocation2 + $0x20] sm:$0x3] %v2070
    %2073 = vst [vmem:[#allocation2 + $0x28] sm:$0x3] %v2071
    %v2074 = vpack.c.bf16 %v2070, %v2070
    %v2075 = vpack.c.bf16 %v2071, %v2071
    %2076 = vmatprep.subr.bf16.mxu0 %v1205
    %2077 = vmatpush1.bf16.msra.mxu0 %v1204
    %2078 = vmatprep.subr.bf16.mxu0 %v1197
    %2079 = vmatpush1.bf16.msra.mxu0 %v1196
    %2080 = vmatprep.subr.bf16.mxu0 %v1189
    %2081 = vmatpush1.bf16.msra.mxu0 %v1188
    %2082 = vmatprep.subr.bf16.mxu0 %v1181
    %2083 = vmatpush1.bf16.msra.mxu0 %v1180
    %2084 = vmatprep.subr.bf16.mxu0 %v1173
    %2085 = vmatpush1.bf16.msra.mxu0 %v1172
    %2086 = vmatprep.subr.bf16.mxu0 %v1165
    %2087 = vmatpush1.bf16.msra.mxu0 %v1164
    %2088 = vmatprep.subr.bf16.mxu0 %v1157
    %2089 = vmatpush1.bf16.msra.mxu0 %v1156
    %2090 = vmatprep.subr.bf16.mxu0 %v1149
    %2091 = vmatpush1.bf16.msra.mxu0 %v1148
    %2092 = vmatprep.subr.bf16.mxu0 %v1269
    %2093 = vmatpush2.bf16.msra.mxu0 %v1268
    %2094 = vmatprep.subr.bf16.mxu0 %v1261
    %2095 = vmatpush2.bf16.msra.mxu0 %v1260
    %2096 = vmatprep.subr.bf16.mxu0 %v1253
    %2097 = vmatpush2.bf16.msra.mxu0 %v1252
    %2098 = vmatprep.subr.bf16.mxu0 %v1245
    %2099 = vmatpush2.bf16.msra.mxu0 %v1244
    %2100 = vmatprep.subr.bf16.mxu0 %v1237
    %2101 = vmatpush2.bf16.msra.mxu0 %v1236
    %2102 = vmatprep.subr.bf16.mxu0 %v1229
    %2103 = vmatpush2.bf16.msra.mxu0 %v1228
    %2104 = vmatprep.subr.bf16.mxu0 %v1221
    %2105 = vmatpush2.bf16.msra.mxu0 %v1220
    %2106 = vmatprep.subr.bf16.mxu0 %v1213
    %2107 = vmatpush2.bf16.msra.mxu0 %v1212
    %2108 = vmatprep.mubr.bf16.mxu0 %v2075
    %2109 = vmatmul.mubr.bf16.gmra.mxu0 %v2074
    %v2110 = vpop.f32.mrf.mxu0
    %v2111 = vadd.f32 0.0, %v2110
    %v2112 = vpop.f32.mrf.mxu0
    %v2113 = vadd.f32 0.0, %v2112
    %v2114 = vpop.f32.mrf.mxu0
    %v2115 = vpop.f32.mrf.mxu0
    %2116 = vdwg.mxu0
    %2117 = vmatprep.subr.bf16.mxu0 %v1207
    %2118 = vmatpush1.bf16.msra.mxu0 %v1206
    %2119 = vmatprep.subr.bf16.mxu0 %v1199
    %2120 = vmatpush1.bf16.msra.mxu0 %v1198
    %2121 = vmatprep.subr.bf16.mxu0 %v1191
    %2122 = vmatpush1.bf16.msra.mxu0 %v1190
    %2123 = vmatprep.subr.bf16.mxu0 %v1183
    %2124 = vmatpush1.bf16.msra.mxu0 %v1182
    %2125 = vmatprep.subr.bf16.mxu0 %v1175
    %2126 = vmatpush1.bf16.msra.mxu0 %v1174
    %2127 = vmatprep.subr.bf16.mxu0 %v1167
    %2128 = vmatpush1.bf16.msra.mxu0 %v1166
    %2129 = vmatprep.subr.bf16.mxu0 %v1159
    %2130 = vmatpush1.bf16.msra.mxu0 %v1158
    %2131 = vmatprep.subr.bf16.mxu0 %v1151
    %2132 = vmatpush1.bf16.msra.mxu0 %v1150
    %2133 = vmatprep.subr.bf16.mxu0 %v1271
    %2134 = vmatpush2.bf16.msra.mxu0 %v1270
    %2135 = vmatprep.subr.bf16.mxu0 %v1263
    %2136 = vmatpush2.bf16.msra.mxu0 %v1262
    %2137 = vmatprep.subr.bf16.mxu0 %v1255
    %2138 = vmatpush2.bf16.msra.mxu0 %v1254
    %2139 = vmatprep.subr.bf16.mxu0 %v1247
    %2140 = vmatpush2.bf16.msra.mxu0 %v1246
    %2141 = vmatprep.subr.bf16.mxu0 %v1239
    %2142 = vmatpush2.bf16.msra.mxu0 %v1238
    %2143 = vmatprep.subr.bf16.mxu0 %v1231
    %2144 = vmatpush2.bf16.msra.mxu0 %v1230
    %2145 = vmatprep.subr.bf16.mxu0 %v1223
    %2146 = vmatpush2.bf16.msra.mxu0 %v1222
    %2147 = vmatprep.subr.bf16.mxu0 %v1215
    %2148 = vmatpush2.bf16.msra.mxu0 %v1214
    %2149 = vmatprep.mubr.bf16.mxu0 %v2075
    %2150 = vmatmul.mubr.bf16.gmra.mxu0 %v2074
    %v2151 = vpop.f32.mrf.mxu0
    %v2152 = vadd.f32 0.0, %v2151
    %v2153 = vpop.f32.mrf.mxu0
    %v2154 = vadd.f32 0.0, %v2153
    %v2155 = vpop.f32.mrf.mxu0
    %v2156 = vpop.f32.mrf.mxu0
    %2157 = vdwg.mxu0
    %2158 = vmatprep.subr.bf16.mxu0 %v1209
    %2159 = vmatpush1.bf16.msra.mxu0 %v1208
    %2160 = vmatprep.subr.bf16.mxu0 %v1201
    %2161 = vmatpush1.bf16.msra.mxu0 %v1200
    %2162 = vmatprep.subr.bf16.mxu0 %v1193
    %2163 = vmatpush1.bf16.msra.mxu0 %v1192
    %2164 = vmatprep.subr.bf16.mxu0 %v1185
    %2165 = vmatpush1.bf16.msra.mxu0 %v1184
    %2166 = vmatprep.subr.bf16.mxu0 %v1177
    %2167 = vmatpush1.bf16.msra.mxu0 %v1176
    %2168 = vmatprep.subr.bf16.mxu0 %v1169
    %2169 = vmatpush1.bf16.msra.mxu0 %v1168
    %2170 = vmatprep.subr.bf16.mxu0 %v1161
    %2171 = vmatpush1.bf16.msra.mxu0 %v1160
    %2172 = vmatprep.subr.bf16.mxu0 %v1153
    %2173 = vmatpush1.bf16.msra.mxu0 %v1152
    %2174 = vmatprep.subr.bf16.mxu0 %v1273
    %2175 = vmatpush2.bf16.msra.mxu0 %v1272
    %2176 = vmatprep.subr.bf16.mxu0 %v1265
    %2177 = vmatpush2.bf16.msra.mxu0 %v1264
    %2178 = vmatprep.subr.bf16.mxu0 %v1257
    %2179 = vmatpush2.bf16.msra.mxu0 %v1256
    %2180 = vmatprep.subr.bf16.mxu0 %v1249
    %2181 = vmatpush2.bf16.msra.mxu0 %v1248
    %2182 = vmatprep.subr.bf16.mxu0 %v1241
    %2183 = vmatpush2.bf16.msra.mxu0 %v1240
    %2184 = vmatprep.subr.bf16.mxu0 %v1233
    %2185 = vmatpush2.bf16.msra.mxu0 %v1232
    %2186 = vmatprep.subr.bf16.mxu0 %v1225
    %2187 = vmatpush2.bf16.msra.mxu0 %v1224
    %2188 = vmatprep.subr.bf16.mxu0 %v1217
    %2189 = vmatpush2.bf16.msra.mxu0 %v1216
    %2190 = vmatprep.mubr.bf16.mxu0 %v2075
    %2191 = vmatmul.mubr.bf16.gmra.mxu0 %v2074
    %v2192 = vpop.f32.mrf.mxu0
    %v2193 = vadd.f32 0.0, %v2192
    %v2194 = vpop.f32.mrf.mxu0
    %v2195 = vadd.f32 0.0, %v2194
    %v2196 = vpop.f32.mrf.mxu0
    %v2197 = vpop.f32.mrf.mxu0
    %2198 = vdwg.mxu0
    %2199 = vmatprep.subr.bf16.mxu0 %v1211
    %2200 = vmatpush1.bf16.msra.mxu0 %v1210
    %2201 = vmatprep.subr.bf16.mxu0 %v1203
    %2202 = vmatpush1.bf16.msra.mxu0 %v1202
    %2203 = vmatprep.subr.bf16.mxu0 %v1195
    %2204 = vmatpush1.bf16.msra.mxu0 %v1194
    %2205 = vmatprep.subr.bf16.mxu0 %v1187
    %2206 = vmatpush1.bf16.msra.mxu0 %v1186
    %2207 = vmatprep.subr.bf16.mxu0 %v1179
    %2208 = vmatpush1.bf16.msra.mxu0 %v1178
    %2209 = vmatprep.subr.bf16.mxu0 %v1171
    %2210 = vmatpush1.bf16.msra.mxu0 %v1170
    %2211 = vmatprep.subr.bf16.mxu0 %v1163
    %2212 = vmatpush1.bf16.msra.mxu0 %v1162
    %2213 = vmatprep.subr.bf16.mxu0 %v1155
    %2214 = vmatpush1.bf16.msra.mxu0 %v1154
    %2215 = vmatprep.subr.bf16.mxu0 %v1275
    %2216 = vmatpush2.bf16.msra.mxu0 %v1274
    %2217 = vmatprep.subr.bf16.mxu0 %v1267
    %2218 = vmatpush2.bf16.msra.mxu0 %v1266
    %2219 = vmatprep.subr.bf16.mxu0 %v1259
    %2220 = vmatpush2.bf16.msra.mxu0 %v1258
    %2221 = vmatprep.subr.bf16.mxu0 %v1251
    %2222 = vmatpush2.bf16.msra.mxu0 %v1250
    %2223 = vmatprep.subr.bf16.mxu0 %v1243
    %2224 = vmatpush2.bf16.msra.mxu0 %v1242
    %2225 = vmatprep.subr.bf16.mxu0 %v1235
    %2226 = vmatpush2.bf16.msra.mxu0 %v1234
    %2227 = vmatprep.subr.bf16.mxu0 %v1227
    %2228 = vmatpush2.bf16.msra.mxu0 %v1226
    %2229 = vmatprep.subr.bf16.mxu0 %v1219
    %2230 = vmatpush2.bf16.msra.mxu0 %v1218
    %2231 = vmatprep.mubr.bf16.mxu0 %v2075
    %2232 = vmatmul.mubr.bf16.gmra.mxu0 %v2074
    %v2233 = vpop.f32.mrf.mxu0
    %v2234 = vadd.f32 0.0, %v2233
    %v2235 = vpop.f32.mrf.mxu0
    %v2236 = vadd.f32 0.0, %v2235
    %v2237 = vpop.f32.mrf.mxu0
    %v2238 = vpop.f32.mrf.mxu0
    %2239 = vdwg.mxu0
    %v2240 = vadd.f32 %v393, %v2111
    %v2241 = vadd.f32 %v395, %v2113
    %v2242 = vadd.f32 %v466, %v2152
    %v2243 = vadd.f32 %v468, %v2154
    %v2244 = vadd.f32 %v539, %v2193
    %v2245 = vadd.f32 %v541, %v2195
    %v2246 = vadd.f32 %v612, %v2234
    %v2247 = vadd.f32 %v614, %v2236
    %v2248 = vxor.u32 %v2240, 2147483648
    %v2249 = vxor.u32 %v2241, 2147483648
    %v2250 = vmul.f32 %v2248, 1.442695
    %v2251 = vpow.pop %v2250
    %v2252 = vmul.f32 %v2249, 1.442695
    %v2253 = vpow.pop %v2252
    %v2254 = vadd.f32 %v2251, 1.0
    %v2255 = vadd.f32 %v2253, 1.0
    %v2256 = vrcp.pop %v2254
    %v2257 = vmul.f32 1.0, %v2256
    %v2258 = vrcp.pop %v2255
    %v2259 = vmul.f32 1.0, %v2258
    %v2260 = vxor.u32 %v2242, 2147483648
    %v2261 = vxor.u32 %v2243, 2147483648
    %v2262 = vmul.f32 %v2260, 1.442695
    %v2263 = vpow.pop %v2262
    %v2264 = vmul.f32 %v2261, 1.442695
    %v2265 = vpow.pop %v2264
    %v2266 = vadd.f32 %v2263, 1.0
    %v2267 = vadd.f32 %v2265, 1.0
    %v2268 = vrcp.pop %v2266
    %v2269 = vmul.f32 1.0, %v2268
    %v2270 = vrcp.pop %v2267
    %v2271 = vmul.f32 1.0, %v2270
    %v2272 = vtanh.pop %v2244
    %v2273 = vtanh.pop %v2245
    %v2274 = vxor.u32 %v2246, 2147483648
    %v2275 = vxor.u32 %v2247, 2147483648
    %v2276 = vmul.f32 %v2274, 1.442695
    %v2277 = vpow.pop %v2276
    %v2278 = vmul.f32 %v2275, 1.442695
    %v2279 = vpow.pop %v2278
    %v2280 = vadd.f32 %v2277, 1.0
    %v2281 = vadd.f32 %v2279, 1.0
    %v2282 = vrcp.pop %v2280
    %v2283 = vmul.f32 1.0, %v2282
    %v2284 = vrcp.pop %v2281
    %v2285 = vmul.f32 1.0, %v2284
    %v2286 = vmul.f32 %v2269, %v2066
    %v2287 = vmul.f32 %v2271, %v2067
    %v2288 = vmul.f32 %v2257, %v2272
    %v2289 = vmul.f32 %v2259, %v2273
    %v2290 = vadd.f32 %v2286, %v2288
    %v2291 = vadd.f32 %v2287, %v2289
    %v2292 = vtanh.pop %v2290
    %v2293 = vtanh.pop %v2291
    %v2294 = vmul.f32 %v2283, %v2292
    %v2295 = vmul.f32 %v2285, %v2293
    %2296 = vst [vmem:[#allocation2 + $0x30] sm:$0x3] %v2294
    %2297 = vst [vmem:[#allocation2 + $0x38] sm:$0x3] %v2295
    %v2298 = vpack.c.bf16 %v2294, %v2294
    %v2299 = vpack.c.bf16 %v2295, %v2295
    %2300 = vmatprep.subr.bf16.mxu0 %v1205
    %2301 = vmatpush1.bf16.msra.mxu0 %v1204
    %2302 = vmatprep.subr.bf16.mxu0 %v1197
    %2303 = vmatpush1.bf16.msra.mxu0 %v1196
    %2304 = vmatprep.subr.bf16.mxu0 %v1189
    %2305 = vmatpush1.bf16.msra.mxu0 %v1188
    %2306 = vmatprep.subr.bf16.mxu0 %v1181
    %2307 = vmatpush1.bf16.msra.mxu0 %v1180
    %2308 = vmatprep.subr.bf16.mxu0 %v1173
    %2309 = vmatpush1.bf16.msra.mxu0 %v1172
    %2310 = vmatprep.subr.bf16.mxu0 %v1165
    %2311 = vmatpush1.bf16.msra.mxu0 %v1164
    %2312 = vmatprep.subr.bf16.mxu0 %v1157
    %2313 = vmatpush1.bf16.msra.mxu0 %v1156
    %2314 = vmatprep.subr.bf16.mxu0 %v1149
    %2315 = vmatpush1.bf16.msra.mxu0 %v1148
    %2316 = vmatprep.subr.bf16.mxu0 %v1269
    %2317 = vmatpush2.bf16.msra.mxu0 %v1268
    %2318 = vmatprep.subr.bf16.mxu0 %v1261
    %2319 = vmatpush2.bf16.msra.mxu0 %v1260
    %2320 = vmatprep.subr.bf16.mxu0 %v1253
    %2321 = vmatpush2.bf16.msra.mxu0 %v1252
    %2322 = vmatprep.subr.bf16.mxu0 %v1245
    %2323 = vmatpush2.bf16.msra.mxu0 %v1244
    %2324 = vmatprep.subr.bf16.mxu0 %v1237
    %2325 = vmatpush2.bf16.msra.mxu0 %v1236
    %2326 = vmatprep.subr.bf16.mxu0 %v1229
    %2327 = vmatpush2.bf16.msra.mxu0 %v1228
    %2328 = vmatprep.subr.bf16.mxu0 %v1221
    %2329 = vmatpush2.bf16.msra.mxu0 %v1220
    %2330 = vmatprep.subr.bf16.mxu0 %v1213
    %2331 = vmatpush2.bf16.msra.mxu0 %v1212
    %2332 = vmatprep.mubr.bf16.mxu0 %v2299
    %2333 = vmatmul.mubr.bf16.gmra.mxu0 %v2298
    %v2334 = vpop.f32.mrf.mxu0
    %v2335 = vadd.f32 0.0, %v2334
    %v2336 = vpop.f32.mrf.mxu0
    %v2337 = vadd.f32 0.0, %v2336
    %v2338 = vpop.f32.mrf.mxu0
    %v2339 = vpop.f32.mrf.mxu0
    %2340 = vdwg.mxu0
    %2341 = vmatprep.subr.bf16.mxu0 %v1207
    %2342 = vmatpush1.bf16.msra.mxu0 %v1206
    %2343 = vmatprep.subr.bf16.mxu0 %v1199
    %2344 = vmatpush1.bf16.msra.mxu0 %v1198
    %2345 = vmatprep.subr.bf16.mxu0 %v1191
    %2346 = vmatpush1.bf16.msra.mxu0 %v1190
    %2347 = vmatprep.subr.bf16.mxu0 %v1183
    %2348 = vmatpush1.bf16.msra.mxu0 %v1182
    %2349 = vmatprep.subr.bf16.mxu0 %v1175
    %2350 = vmatpush1.bf16.msra.mxu0 %v1174
    %2351 = vmatprep.subr.bf16.mxu0 %v1167
    %2352 = vmatpush1.bf16.msra.mxu0 %v1166
    %2353 = vmatprep.subr.bf16.mxu0 %v1159
    %2354 = vmatpush1.bf16.msra.mxu0 %v1158
    %2355 = vmatprep.subr.bf16.mxu0 %v1151
    %2356 = vmatpush1.bf16.msra.mxu0 %v1150
    %2357 = vmatprep.subr.bf16.mxu0 %v1271
    %2358 = vmatpush2.bf16.msra.mxu0 %v1270
    %2359 = vmatprep.subr.bf16.mxu0 %v1263
    %2360 = vmatpush2.bf16.msra.mxu0 %v1262
    %2361 = vmatprep.subr.bf16.mxu0 %v1255
    %2362 = vmatpush2.bf16.msra.mxu0 %v1254
    %2363 = vmatprep.subr.bf16.mxu0 %v1247
    %2364 = vmatpush2.bf16.msra.mxu0 %v1246
    %2365 = vmatprep.subr.bf16.mxu0 %v1239
    %2366 = vmatpush2.bf16.msra.mxu0 %v1238
    %2367 = vmatprep.subr.bf16.mxu0 %v1231
    %2368 = vmatpush2.bf16.msra.mxu0 %v1230
    %2369 = vmatprep.subr.bf16.mxu0 %v1223
    %2370 = vmatpush2.bf16.msra.mxu0 %v1222
    %2371 = vmatprep.subr.bf16.mxu0 %v1215
    %2372 = vmatpush2.bf16.msra.mxu0 %v1214
    %2373 = vmatprep.mubr.bf16.mxu0 %v2299
    %2374 = vmatmul.mubr.bf16.gmra.mxu0 %v2298
    %v2375 = vpop.f32.mrf.mxu0
    %v2376 = vadd.f32 0.0, %v2375
    %v2377 = vpop.f32.mrf.mxu0
    %v2378 = vadd.f32 0.0, %v2377
    %v2379 = vpop.f32.mrf.mxu0
    %v2380 = vpop.f32.mrf.mxu0
    %2381 = vdwg.mxu0
    %2382 = vmatprep.subr.bf16.mxu0 %v1209
    %2383 = vmatpush1.bf16.msra.mxu0 %v1208
    %2384 = vmatprep.subr.bf16.mxu0 %v1201
    %2385 = vmatpush1.bf16.msra.mxu0 %v1200
    %2386 = vmatprep.subr.bf16.mxu0 %v1193
    %2387 = vmatpush1.bf16.msra.mxu0 %v1192
    %2388 = vmatprep.subr.bf16.mxu0 %v1185
    %2389 = vmatpush1.bf16.msra.mxu0 %v1184
    %2390 = vmatprep.subr.bf16.mxu0 %v1177
    %2391 = vmatpush1.bf16.msra.mxu0 %v1176
    %2392 = vmatprep.subr.bf16.mxu0 %v1169
    %2393 = vmatpush1.bf16.msra.mxu0 %v1168
    %2394 = vmatprep.subr.bf16.mxu0 %v1161
    %2395 = vmatpush1.bf16.msra.mxu0 %v1160
    %2396 = vmatprep.subr.bf16.mxu0 %v1153
    %2397 = vmatpush1.bf16.msra.mxu0 %v1152
    %2398 = vmatprep.subr.bf16.mxu0 %v1273
    %2399 = vmatpush2.bf16.msra.mxu0 %v1272
    %2400 = vmatprep.subr.bf16.mxu0 %v1265
    %2401 = vmatpush2.bf16.msra.mxu0 %v1264
    %2402 = vmatprep.subr.bf16.mxu0 %v1257
    %2403 = vmatpush2.bf16.msra.mxu0 %v1256
    %2404 = vmatprep.subr.bf16.mxu0 %v1249
    %2405 = vmatpush2.bf16.msra.mxu0 %v1248
    %2406 = vmatprep.subr.bf16.mxu0 %v1241
    %2407 = vmatpush2.bf16.msra.mxu0 %v1240
    %2408 = vmatprep.subr.bf16.mxu0 %v1233
    %2409 = vmatpush2.bf16.msra.mxu0 %v1232
    %2410 = vmatprep.subr.bf16.mxu0 %v1225
    %2411 = vmatpush2.bf16.msra.mxu0 %v1224
    %2412 = vmatprep.subr.bf16.mxu0 %v1217
    %2413 = vmatpush2.bf16.msra.mxu0 %v1216
    %2414 = vmatprep.mubr.bf16.mxu0 %v2299
    %2415 = vmatmul.mubr.bf16.gmra.mxu0 %v2298
    %v2416 = vpop.f32.mrf.mxu0
    %v2417 = vadd.f32 0.0, %v2416
    %v2418 = vpop.f32.mrf.mxu0
    %v2419 = vadd.f32 0.0, %v2418
    %v2420 = vpop.f32.mrf.mxu0
    %v2421 = vpop.f32.mrf.mxu0
    %2422 = vdwg.mxu0
    %2423 = vmatprep.subr.bf16.mxu0 %v1211
    %2424 = vmatpush1.bf16.msra.mxu0 %v1210
    %2425 = vmatprep.subr.bf16.mxu0 %v1203
    %2426 = vmatpush1.bf16.msra.mxu0 %v1202
    %2427 = vmatprep.subr.bf16.mxu0 %v1195
    %2428 = vmatpush1.bf16.msra.mxu0 %v1194
    %2429 = vmatprep.subr.bf16.mxu0 %v1187
    %2430 = vmatpush1.bf16.msra.mxu0 %v1186
    %2431 = vmatprep.subr.bf16.mxu0 %v1179
    %2432 = vmatpush1.bf16.msra.mxu0 %v1178
    %2433 = vmatprep.subr.bf16.mxu0 %v1171
    %2434 = vmatpush1.bf16.msra.mxu0 %v1170
    %2435 = vmatprep.subr.bf16.mxu0 %v1163
    %2436 = vmatpush1.bf16.msra.mxu0 %v1162
    %2437 = vmatprep.subr.bf16.mxu0 %v1155
    %2438 = vmatpush1.bf16.msra.mxu0 %v1154
    %2439 = vmatprep.subr.bf16.mxu0 %v1275
    %2440 = vmatpush2.bf16.msra.mxu0 %v1274
    %2441 = vmatprep.subr.bf16.mxu0 %v1267
    %2442 = vmatpush2.bf16.msra.mxu0 %v1266
    %2443 = vmatprep.subr.bf16.mxu0 %v1259
    %2444 = vmatpush2.bf16.msra.mxu0 %v1258
    %2445 = vmatprep.subr.bf16.mxu0 %v1251
    %2446 = vmatpush2.bf16.msra.mxu0 %v1250
    %2447 = vmatprep.subr.bf16.mxu0 %v1243
    %2448 = vmatpush2.bf16.msra.mxu0 %v1242
    %2449 = vmatprep.subr.bf16.mxu0 %v1235
    %2450 = vmatpush2.bf16.msra.mxu0 %v1234
    %2451 = vmatprep.subr.bf16.mxu0 %v1227
    %2452 = vmatpush2.bf16.msra.mxu0 %v1226
    %2453 = vmatprep.subr.bf16.mxu0 %v1219
    %2454 = vmatpush2.bf16.msra.mxu0 %v1218
    %2455 = vmatprep.mubr.bf16.mxu0 %v2299
    %2456 = vmatmul.mubr.bf16.gmra.mxu0 %v2298
    %v2457 = vpop.f32.mrf.mxu0
    %v2458 = vadd.f32 0.0, %v2457
    %v2459 = vpop.f32.mrf.mxu0
    %v2460 = vadd.f32 0.0, %v2459
    %v2461 = vpop.f32.mrf.mxu0
    %v2462 = vpop.f32.mrf.mxu0
    %2463 = vdwg.mxu0
    %v2464 = vadd.f32 %v399, %v2335
    %v2465 = vadd.f32 %v401, %v2337
    %v2466 = vadd.f32 %v472, %v2376
    %v2467 = vadd.f32 %v474, %v2378
    %v2468 = vadd.f32 %v545, %v2417
    %v2469 = vadd.f32 %v547, %v2419
    %v2470 = vadd.f32 %v618, %v2458
    %v2471 = vadd.f32 %v620, %v2460
    %v2472 = vxor.u32 %v2464, 2147483648
    %v2473 = vxor.u32 %v2465, 2147483648
    %v2474 = vmul.f32 %v2472, 1.442695
    %v2475 = vpow.pop %v2474
    %v2476 = vmul.f32 %v2473, 1.442695
    %v2477 = vpow.pop %v2476
    %v2478 = vadd.f32 %v2475, 1.0
    %v2479 = vadd.f32 %v2477, 1.0
    %v2480 = vrcp.pop %v2478
    %v2481 = vmul.f32 1.0, %v2480
    %v2482 = vrcp.pop %v2479
    %v2483 = vmul.f32 1.0, %v2482
    %v2484 = vxor.u32 %v2466, 2147483648
    %v2485 = vxor.u32 %v2467, 2147483648
    %v2486 = vmul.f32 %v2484, 1.442695
    %v2487 = vpow.pop %v2486
    %v2488 = vmul.f32 %v2485, 1.442695
    %v2489 = vpow.pop %v2488
    %v2490 = vadd.f32 %v2487, 1.0
    %v2491 = vadd.f32 %v2489, 1.0
    %v2492 = vrcp.pop %v2490
    %v2493 = vmul.f32 1.0, %v2492
    %v2494 = vrcp.pop %v2491
    %v2495 = vmul.f32 1.0, %v2494
    %v2496 = vtanh.pop %v2468
    %v2497 = vtanh.pop %v2469
    %v2498 = vxor.u32 %v2470, 2147483648
    %v2499 = vxor.u32 %v2471, 2147483648
    %v2500 = vmul.f32 %v2498, 1.442695
    %v2501 = vpow.pop %v2500
    %v2502 = vmul.f32 %v2499, 1.442695
    %v2503 = vpow.pop %v2502
    %v2504 = vadd.f32 %v2501, 1.0
    %v2505 = vadd.f32 %v2503, 1.0
    %v2506 = vrcp.pop %v2504
    %v2507 = vmul.f32 1.0, %v2506
    %v2508 = vrcp.pop %v2505
    %v2509 = vmul.f32 1.0, %v2508
    %v2510 = vmul.f32 %v2493, %v2290
    %v2511 = vmul.f32 %v2495, %v2291
    %v2512 = vmul.f32 %v2481, %v2496
    %v2513 = vmul.f32 %v2483, %v2497
    %v2514 = vadd.f32 %v2510, %v2512
    %v2515 = vadd.f32 %v2511, %v2513
    %v2516 = vtanh.pop %v2514
    %v2517 = vtanh.pop %v2515
    %v2518 = vmul.f32 %v2507, %v2516
    %v2519 = vmul.f32 %v2509, %v2517
    %2520 = vst [vmem:[#allocation2 + $0x40] sm:$0x3] %v2518
    %2521 = vst [vmem:[#allocation2 + $0x48] sm:$0x3] %v2519
    %v2522 = vpack.c.bf16 %v2518, %v2518
    %v2523 = vpack.c.bf16 %v2519, %v2519
    %2524 = vmatprep.subr.bf16.mxu0 %v1205
    %2525 = vmatpush1.bf16.msra.mxu0 %v1204
    %2526 = vmatprep.subr.bf16.mxu0 %v1197
    %2527 = vmatpush1.bf16.msra.mxu0 %v1196
    %2528 = vmatprep.subr.bf16.mxu0 %v1189
    %2529 = vmatpush1.bf16.msra.mxu0 %v1188
    %2530 = vmatprep.subr.bf16.mxu0 %v1181
    %2531 = vmatpush1.bf16.msra.mxu0 %v1180
    %2532 = vmatprep.subr.bf16.mxu0 %v1173
    %2533 = vmatpush1.bf16.msra.mxu0 %v1172
    %2534 = vmatprep.subr.bf16.mxu0 %v1165
    %2535 = vmatpush1.bf16.msra.mxu0 %v1164
    %2536 = vmatprep.subr.bf16.mxu0 %v1157
    %2537 = vmatpush1.bf16.msra.mxu0 %v1156
    %2538 = vmatprep.subr.bf16.mxu0 %v1149
    %2539 = vmatpush1.bf16.msra.mxu0 %v1148
    %2540 = vmatprep.subr.bf16.mxu0 %v1269
    %2541 = vmatpush2.bf16.msra.mxu0 %v1268
    %2542 = vmatprep.subr.bf16.mxu0 %v1261
    %2543 = vmatpush2.bf16.msra.mxu0 %v1260
    %2544 = vmatprep.subr.bf16.mxu0 %v1253
    %2545 = vmatpush2.bf16.msra.mxu0 %v1252
    %2546 = vmatprep.subr.bf16.mxu0 %v1245
    %2547 = vmatpush2.bf16.msra.mxu0 %v1244
    %2548 = vmatprep.subr.bf16.mxu0 %v1237
    %2549 = vmatpush2.bf16.msra.mxu0 %v1236
    %2550 = vmatprep.subr.bf16.mxu0 %v1229
    %2551 = vmatpush2.bf16.msra.mxu0 %v1228
    %2552 = vmatprep.subr.bf16.mxu0 %v1221
    %2553 = vmatpush2.bf16.msra.mxu0 %v1220
    %2554 = vmatprep.subr.bf16.mxu0 %v1213
    %2555 = vmatpush2.bf16.msra.mxu0 %v1212
    %2556 = vmatprep.mubr.bf16.mxu0 %v2523
    %2557 = vmatmul.mubr.bf16.gmra.mxu0 %v2522
    %v2558 = vpop.f32.mrf.mxu0
    %v2559 = vadd.f32 0.0, %v2558
    %v2560 = vpop.f32.mrf.mxu0
    %v2561 = vadd.f32 0.0, %v2560
    %v2562 = vpop.f32.mrf.mxu0
    %v2563 = vpop.f32.mrf.mxu0
    %2564 = vdwg.mxu0
    %2565 = vmatprep.subr.bf16.mxu0 %v1207
    %2566 = vmatpush1.bf16.msra.mxu0 %v1206
    %2567 = vmatprep.subr.bf16.mxu0 %v1199
    %2568 = vmatpush1.bf16.msra.mxu0 %v1198
    %2569 = vmatprep.subr.bf16.mxu0 %v1191
    %2570 = vmatpush1.bf16.msra.mxu0 %v1190
    %2571 = vmatprep.subr.bf16.mxu0 %v1183
    %2572 = vmatpush1.bf16.msra.mxu0 %v1182
    %2573 = vmatprep.subr.bf16.mxu0 %v1175
    %2574 = vmatpush1.bf16.msra.mxu0 %v1174
    %2575 = vmatprep.subr.bf16.mxu0 %v1167
    %2576 = vmatpush1.bf16.msra.mxu0 %v1166
    %2577 = vmatprep.subr.bf16.mxu0 %v1159
    %2578 = vmatpush1.bf16.msra.mxu0 %v1158
    %2579 = vmatprep.subr.bf16.mxu0 %v1151
    %2580 = vmatpush1.bf16.msra.mxu0 %v1150
    %2581 = vmatprep.subr.bf16.mxu0 %v1271
    %2582 = vmatpush2.bf16.msra.mxu0 %v1270
    %2583 = vmatprep.subr.bf16.mxu0 %v1263
    %2584 = vmatpush2.bf16.msra.mxu0 %v1262
    %2585 = vmatprep.subr.bf16.mxu0 %v1255
    %2586 = vmatpush2.bf16.msra.mxu0 %v1254
    %2587 = vmatprep.subr.bf16.mxu0 %v1247
    %2588 = vmatpush2.bf16.msra.mxu0 %v1246
    %2589 = vmatprep.subr.bf16.mxu0 %v1239
    %2590 = vmatpush2.bf16.msra.mxu0 %v1238
    %2591 = vmatprep.subr.bf16.mxu0 %v1231
    %2592 = vmatpush2.bf16.msra.mxu0 %v1230
    %2593 = vmatprep.subr.bf16.mxu0 %v1223
    %2594 = vmatpush2.bf16.msra.mxu0 %v1222
    %2595 = vmatprep.subr.bf16.mxu0 %v1215
    %2596 = vmatpush2.bf16.msra.mxu0 %v1214
    %2597 = vmatprep.mubr.bf16.mxu0 %v2523
    %2598 = vmatmul.mubr.bf16.gmra.mxu0 %v2522
    %v2599 = vpop.f32.mrf.mxu0
    %v2600 = vadd.f32 0.0, %v2599
    %v2601 = vpop.f32.mrf.mxu0
    %v2602 = vadd.f32 0.0, %v2601
    %v2603 = vpop.f32.mrf.mxu0
    %v2604 = vpop.f32.mrf.mxu0
    %2605 = vdwg.mxu0
    %2606 = vmatprep.subr.bf16.mxu0 %v1209
    %2607 = vmatpush1.bf16.msra.mxu0 %v1208
    %2608 = vmatprep.subr.bf16.mxu0 %v1201
    %2609 = vmatpush1.bf16.msra.mxu0 %v1200
    %2610 = vmatprep.subr.bf16.mxu0 %v1193
    %2611 = vmatpush1.bf16.msra.mxu0 %v1192
    %2612 = vmatprep.subr.bf16.mxu0 %v1185
    %2613 = vmatpush1.bf16.msra.mxu0 %v1184
    %2614 = vmatprep.subr.bf16.mxu0 %v1177
    %2615 = vmatpush1.bf16.msra.mxu0 %v1176
    %2616 = vmatprep.subr.bf16.mxu0 %v1169
    %2617 = vmatpush1.bf16.msra.mxu0 %v1168
    %2618 = vmatprep.subr.bf16.mxu0 %v1161
    %2619 = vmatpush1.bf16.msra.mxu0 %v1160
    %2620 = vmatprep.subr.bf16.mxu0 %v1153
    %2621 = vmatpush1.bf16.msra.mxu0 %v1152
    %2622 = vmatprep.subr.bf16.mxu0 %v1273
    %2623 = vmatpush2.bf16.msra.mxu0 %v1272
    %2624 = vmatprep.subr.bf16.mxu0 %v1265
    %2625 = vmatpush2.bf16.msra.mxu0 %v1264
    %2626 = vmatprep.subr.bf16.mxu0 %v1257
    %2627 = vmatpush2.bf16.msra.mxu0 %v1256
    %2628 = vmatprep.subr.bf16.mxu0 %v1249
    %2629 = vmatpush2.bf16.msra.mxu0 %v1248
    %2630 = vmatprep.subr.bf16.mxu0 %v1241
    %2631 = vmatpush2.bf16.msra.mxu0 %v1240
    %2632 = vmatprep.subr.bf16.mxu0 %v1233
    %2633 = vmatpush2.bf16.msra.mxu0 %v1232
    %2634 = vmatprep.subr.bf16.mxu0 %v1225
    %2635 = vmatpush2.bf16.msra.mxu0 %v1224
    %2636 = vmatprep.subr.bf16.mxu0 %v1217
    %2637 = vmatpush2.bf16.msra.mxu0 %v1216
    %2638 = vmatprep.mubr.bf16.mxu0 %v2523
    %2639 = vmatmul.mubr.bf16.gmra.mxu0 %v2522
    %v2640 = vpop.f32.mrf.mxu0
    %v2641 = vadd.f32 0.0, %v2640
    %v2642 = vpop.f32.mrf.mxu0
    %v2643 = vadd.f32 0.0, %v2642
    %v2644 = vpop.f32.mrf.mxu0
    %v2645 = vpop.f32.mrf.mxu0
    %2646 = vdwg.mxu0
    %2647 = vmatprep.subr.bf16.mxu0 %v1211
    %2648 = vmatpush1.bf16.msra.mxu0 %v1210
    %2649 = vmatprep.subr.bf16.mxu0 %v1203
    %2650 = vmatpush1.bf16.msra.mxu0 %v1202
    %2651 = vmatprep.subr.bf16.mxu0 %v1195
    %2652 = vmatpush1.bf16.msra.mxu0 %v1194
    %2653 = vmatprep.subr.bf16.mxu0 %v1187
    %2654 = vmatpush1.bf16.msra.mxu0 %v1186
    %2655 = vmatprep.subr.bf16.mxu0 %v1179
    %2656 = vmatpush1.bf16.msra.mxu0 %v1178
    %2657 = vmatprep.subr.bf16.mxu0 %v1171
    %2658 = vmatpush1.bf16.msra.mxu0 %v1170
    %2659 = vmatprep.subr.bf16.mxu0 %v1163
    %2660 = vmatpush1.bf16.msra.mxu0 %v1162
    %2661 = vmatprep.subr.bf16.mxu0 %v1155
    %2662 = vmatpush1.bf16.msra.mxu0 %v1154
    %2663 = vmatprep.subr.bf16.mxu0 %v1275
    %2664 = vmatpush2.bf16.msra.mxu0 %v1274
    %2665 = vmatprep.subr.bf16.mxu0 %v1267
    %2666 = vmatpush2.bf16.msra.mxu0 %v1266
    %2667 = vmatprep.subr.bf16.mxu0 %v1259
    %2668 = vmatpush2.bf16.msra.mxu0 %v1258
    %2669 = vmatprep.subr.bf16.mxu0 %v1251
    %2670 = vmatpush2.bf16.msra.mxu0 %v1250
    %2671 = vmatprep.subr.bf16.mxu0 %v1243
    %2672 = vmatpush2.bf16.msra.mxu0 %v1242
    %2673 = vmatprep.subr.bf16.mxu0 %v1235
    %2674 = vmatpush2.bf16.msra.mxu0 %v1234
    %2675 = vmatprep.subr.bf16.mxu0 %v1227
    %2676 = vmatpush2.bf16.msra.mxu0 %v1226
    %2677 = vmatprep.subr.bf16.mxu0 %v1219
    %2678 = vmatpush2.bf16.msra.mxu0 %v1218
    %2679 = vmatprep.mubr.bf16.mxu0 %v2523
    %2680 = vmatmul.mubr.bf16.gmra.mxu0 %v2522
    %v2681 = vpop.f32.mrf.mxu0
    %v2682 = vadd.f32 0.0, %v2681
    %v2683 = vpop.f32.mrf.mxu0
    %v2684 = vadd.f32 0.0, %v2683
    %v2685 = vpop.f32.mrf.mxu0
    %v2686 = vpop.f32.mrf.mxu0
    %2687 = vdwg.mxu0
    %v2688 = vadd.f32 %v403, %v2559
    %v2689 = vadd.f32 %v405, %v2561
    %v2690 = vadd.f32 %v476, %v2600
    %v2691 = vadd.f32 %v478, %v2602
    %v2692 = vadd.f32 %v549, %v2641
    %v2693 = vadd.f32 %v551, %v2643
    %v2694 = vadd.f32 %v622, %v2682
    %v2695 = vadd.f32 %v624, %v2684
    %v2696 = vxor.u32 %v2688, 2147483648
    %v2697 = vxor.u32 %v2689, 2147483648
    %v2698 = vmul.f32 %v2696, 1.442695
    %v2699 = vpow.pop %v2698
    %v2700 = vmul.f32 %v2697, 1.442695
    %v2701 = vpow.pop %v2700
    %v2702 = vadd.f32 %v2699, 1.0
    %v2703 = vadd.f32 %v2701, 1.0
    %v2704 = vrcp.pop %v2702
    %v2705 = vmul.f32 1.0, %v2704
    %v2706 = vrcp.pop %v2703
    %v2707 = vmul.f32 1.0, %v2706
    %v2708 = vxor.u32 %v2690, 2147483648
    %v2709 = vxor.u32 %v2691, 2147483648
    %v2710 = vmul.f32 %v2708, 1.442695
    %v2711 = vpow.pop %v2710
    %v2712 = vmul.f32 %v2709, 1.442695
    %v2713 = vpow.pop %v2712
    %v2714 = vadd.f32 %v2711, 1.0
    %v2715 = vadd.f32 %v2713, 1.0
    %v2716 = vrcp.pop %v2714
    %v2717 = vmul.f32 1.0, %v2716
    %v2718 = vrcp.pop %v2715
    %v2719 = vmul.f32 1.0, %v2718
    %v2720 = vtanh.pop %v2692
    %v2721 = vtanh.pop %v2693
    %v2722 = vxor.u32 %v2694, 2147483648
    %v2723 = vxor.u32 %v2695, 2147483648
    %v2724 = vmul.f32 %v2722, 1.442695
    %v2725 = vpow.pop %v2724
    %v2726 = vmul.f32 %v2723, 1.442695
    %v2727 = vpow.pop %v2726
    %v2728 = vadd.f32 %v2725, 1.0
    %v2729 = vadd.f32 %v2727, 1.0
    %v2730 = vrcp.pop %v2728
    %v2731 = vmul.f32 1.0, %v2730
    %v2732 = vrcp.pop %v2729
    %v2733 = vmul.f32 1.0, %v2732
    %v2734 = vmul.f32 %v2717, %v2514
    %v2735 = vmul.f32 %v2719, %v2515
    %v2736 = vmul.f32 %v2705, %v2720
    %v2737 = vmul.f32 %v2707, %v2721
    %v2738 = vadd.f32 %v2734, %v2736
    %v2739 = vadd.f32 %v2735, %v2737
    %v2740 = vtanh.pop %v2738
    %v2741 = vtanh.pop %v2739
    %v2742 = vmul.f32 %v2731, %v2740
    %v2743 = vmul.f32 %v2733, %v2741
    %2744 = vst [vmem:[#allocation2 + $0x50] sm:$0x3] %v2742
    %2745 = vst [vmem:[#allocation2 + $0x58] sm:$0x3] %v2743
    %v2746 = vpack.c.bf16 %v2742, %v2742
    %v2747 = vpack.c.bf16 %v2743, %v2743
    %2748 = vmatprep.subr.bf16.mxu0 %v1205
    %2749 = vmatpush1.bf16.msra.mxu0 %v1204
    %2750 = vmatprep.subr.bf16.mxu0 %v1197
    %2751 = vmatpush1.bf16.msra.mxu0 %v1196
    %2752 = vmatprep.subr.bf16.mxu0 %v1189
    %2753 = vmatpush1.bf16.msra.mxu0 %v1188
    %2754 = vmatprep.subr.bf16.mxu0 %v1181
    %2755 = vmatpush1.bf16.msra.mxu0 %v1180
    %2756 = vmatprep.subr.bf16.mxu0 %v1173
    %2757 = vmatpush1.bf16.msra.mxu0 %v1172
    %2758 = vmatprep.subr.bf16.mxu0 %v1165
    %2759 = vmatpush1.bf16.msra.mxu0 %v1164
    %2760 = vmatprep.subr.bf16.mxu0 %v1157
    %2761 = vmatpush1.bf16.msra.mxu0 %v1156
    %2762 = vmatprep.subr.bf16.mxu0 %v1149
    %2763 = vmatpush1.bf16.msra.mxu0 %v1148
    %2764 = vmatprep.subr.bf16.mxu0 %v1269
    %2765 = vmatpush2.bf16.msra.mxu0 %v1268
    %2766 = vmatprep.subr.bf16.mxu0 %v1261
    %2767 = vmatpush2.bf16.msra.mxu0 %v1260
    %2768 = vmatprep.subr.bf16.mxu0 %v1253
    %2769 = vmatpush2.bf16.msra.mxu0 %v1252
    %2770 = vmatprep.subr.bf16.mxu0 %v1245
    %2771 = vmatpush2.bf16.msra.mxu0 %v1244
    %2772 = vmatprep.subr.bf16.mxu0 %v1237
    %2773 = vmatpush2.bf16.msra.mxu0 %v1236
    %2774 = vmatprep.subr.bf16.mxu0 %v1229
    %2775 = vmatpush2.bf16.msra.mxu0 %v1228
    %2776 = vmatprep.subr.bf16.mxu0 %v1221
    %2777 = vmatpush2.bf16.msra.mxu0 %v1220
    %2778 = vmatprep.subr.bf16.mxu0 %v1213
    %2779 = vmatpush2.bf16.msra.mxu0 %v1212
    %2780 = vmatprep.mubr.bf16.mxu0 %v2747
    %2781 = vmatmul.mubr.bf16.gmra.mxu0 %v2746
    %v2782 = vpop.f32.mrf.mxu0
    %v2783 = vadd.f32 0.0, %v2782
    %v2784 = vpop.f32.mrf.mxu0
    %v2785 = vadd.f32 0.0, %v2784
    %v2786 = vpop.f32.mrf.mxu0
    %v2787 = vpop.f32.mrf.mxu0
    %2788 = vdwg.mxu0
    %2789 = vmatprep.subr.bf16.mxu0 %v1207
    %2790 = vmatpush1.bf16.msra.mxu0 %v1206
    %2791 = vmatprep.subr.bf16.mxu0 %v1199
    %2792 = vmatpush1.bf16.msra.mxu0 %v1198
    %2793 = vmatprep.subr.bf16.mxu0 %v1191
    %2794 = vmatpush1.bf16.msra.mxu0 %v1190
    %2795 = vmatprep.subr.bf16.mxu0 %v1183
    %2796 = vmatpush1.bf16.msra.mxu0 %v1182
    %2797 = vmatprep.subr.bf16.mxu0 %v1175
    %2798 = vmatpush1.bf16.msra.mxu0 %v1174
    %2799 = vmatprep.subr.bf16.mxu0 %v1167
    %2800 = vmatpush1.bf16.msra.mxu0 %v1166
    %2801 = vmatprep.subr.bf16.mxu0 %v1159
    %2802 = vmatpush1.bf16.msra.mxu0 %v1158
    %2803 = vmatprep.subr.bf16.mxu0 %v1151
    %2804 = vmatpush1.bf16.msra.mxu0 %v1150
    %2805 = vmatprep.subr.bf16.mxu0 %v1271
    %2806 = vmatpush2.bf16.msra.mxu0 %v1270
    %2807 = vmatprep.subr.bf16.mxu0 %v1263
    %2808 = vmatpush2.bf16.msra.mxu0 %v1262
    %2809 = vmatprep.subr.bf16.mxu0 %v1255
    %2810 = vmatpush2.bf16.msra.mxu0 %v1254
    %2811 = vmatprep.subr.bf16.mxu0 %v1247
    %2812 = vmatpush2.bf16.msra.mxu0 %v1246
    %2813 = vmatprep.subr.bf16.mxu0 %v1239
    %2814 = vmatpush2.bf16.msra.mxu0 %v1238
    %2815 = vmatprep.subr.bf16.mxu0 %v1231
    %2816 = vmatpush2.bf16.msra.mxu0 %v1230
    %2817 = vmatprep.subr.bf16.mxu0 %v1223
    %2818 = vmatpush2.bf16.msra.mxu0 %v1222
    %2819 = vmatprep.subr.bf16.mxu0 %v1215
    %2820 = vmatpush2.bf16.msra.mxu0 %v1214
    %2821 = vmatprep.mubr.bf16.mxu0 %v2747
    %2822 = vmatmul.mubr.bf16.gmra.mxu0 %v2746
    %v2823 = vpop.f32.mrf.mxu0
    %v2824 = vadd.f32 0.0, %v2823
    %v2825 = vpop.f32.mrf.mxu0
    %v2826 = vadd.f32 0.0, %v2825
    %v2827 = vpop.f32.mrf.mxu0
    %v2828 = vpop.f32.mrf.mxu0
    %2829 = vdwg.mxu0
    %2830 = vmatprep.subr.bf16.mxu0 %v1209
    %2831 = vmatpush1.bf16.msra.mxu0 %v1208
    %2832 = vmatprep.subr.bf16.mxu0 %v1201
    %2833 = vmatpush1.bf16.msra.mxu0 %v1200
    %2834 = vmatprep.subr.bf16.mxu0 %v1193
    %2835 = vmatpush1.bf16.msra.mxu0 %v1192
    %2836 = vmatprep.subr.bf16.mxu0 %v1185
    %2837 = vmatpush1.bf16.msra.mxu0 %v1184
    %2838 = vmatprep.subr.bf16.mxu0 %v1177
    %2839 = vmatpush1.bf16.msra.mxu0 %v1176
    %2840 = vmatprep.subr.bf16.mxu0 %v1169
    %2841 = vmatpush1.bf16.msra.mxu0 %v1168
    %2842 = vmatprep.subr.bf16.mxu0 %v1161
    %2843 = vmatpush1.bf16.msra.mxu0 %v1160
    %2844 = vmatprep.subr.bf16.mxu0 %v1153
    %2845 = vmatpush1.bf16.msra.mxu0 %v1152
    %2846 = vmatprep.subr.bf16.mxu0 %v1273
    %2847 = vmatpush2.bf16.msra.mxu0 %v1272
    %2848 = vmatprep.subr.bf16.mxu0 %v1265
    %2849 = vmatpush2.bf16.msra.mxu0 %v1264
    %2850 = vmatprep.subr.bf16.mxu0 %v1257
    %2851 = vmatpush2.bf16.msra.mxu0 %v1256
    %2852 = vmatprep.subr.bf16.mxu0 %v1249
    %2853 = vmatpush2.bf16.msra.mxu0 %v1248
    %2854 = vmatprep.subr.bf16.mxu0 %v1241
    %2855 = vmatpush2.bf16.msra.mxu0 %v1240
    %2856 = vmatprep.subr.bf16.mxu0 %v1233
    %2857 = vmatpush2.bf16.msra.mxu0 %v1232
    %2858 = vmatprep.subr.bf16.mxu0 %v1225
    %2859 = vmatpush2.bf16.msra.mxu0 %v1224
    %2860 = vmatprep.subr.bf16.mxu0 %v1217
    %2861 = vmatpush2.bf16.msra.mxu0 %v1216
    %2862 = vmatprep.mubr.bf16.mxu0 %v2747
    %2863 = vmatmul.mubr.bf16.gmra.mxu0 %v2746
    %v2864 = vpop.f32.mrf.mxu0
    %v2865 = vadd.f32 0.0, %v2864
    %v2866 = vpop.f32.mrf.mxu0
    %v2867 = vadd.f32 0.0, %v2866
    %v2868 = vpop.f32.mrf.mxu0
    %v2869 = vpop.f32.mrf.mxu0
    %2870 = vdwg.mxu0
    %2871 = vmatprep.subr.bf16.mxu0 %v1211
    %2872 = vmatpush1.bf16.msra.mxu0 %v1210
    %2873 = vmatprep.subr.bf16.mxu0 %v1203
    %2874 = vmatpush1.bf16.msra.mxu0 %v1202
    %2875 = vmatprep.subr.bf16.mxu0 %v1195
    %2876 = vmatpush1.bf16.msra.mxu0 %v1194
    %2877 = vmatprep.subr.bf16.mxu0 %v1187
    %2878 = vmatpush1.bf16.msra.mxu0 %v1186
    %2879 = vmatprep.subr.bf16.mxu0 %v1179
    %2880 = vmatpush1.bf16.msra.mxu0 %v1178
    %2881 = vmatprep.subr.bf16.mxu0 %v1171
    %2882 = vmatpush1.bf16.msra.mxu0 %v1170
    %2883 = vmatprep.subr.bf16.mxu0 %v1163
    %2884 = vmatpush1.bf16.msra.mxu0 %v1162
    %2885 = vmatprep.subr.bf16.mxu0 %v1155
    %2886 = vmatpush1.bf16.msra.mxu0 %v1154
    %2887 = vmatprep.subr.bf16.mxu0 %v1275
    %2888 = vmatpush2.bf16.msra.mxu0 %v1274
    %2889 = vmatprep.subr.bf16.mxu0 %v1267
    %2890 = vmatpush2.bf16.msra.mxu0 %v1266
    %2891 = vmatprep.subr.bf16.mxu0 %v1259
    %2892 = vmatpush2.bf16.msra.mxu0 %v1258
    %2893 = vmatprep.subr.bf16.mxu0 %v1251
    %2894 = vmatpush2.bf16.msra.mxu0 %v1250
    %2895 = vmatprep.subr.bf16.mxu0 %v1243
    %2896 = vmatpush2.bf16.msra.mxu0 %v1242
    %2897 = vmatprep.subr.bf16.mxu0 %v1235
    %2898 = vmatpush2.bf16.msra.mxu0 %v1234
    %2899 = vmatprep.subr.bf16.mxu0 %v1227
    %2900 = vmatpush2.bf16.msra.mxu0 %v1226
    %2901 = vmatprep.subr.bf16.mxu0 %v1219
    %2902 = vmatpush2.bf16.msra.mxu0 %v1218
    %2903 = vmatprep.mubr.bf16.mxu0 %v2747
    %2904 = vmatmul.mubr.bf16.gmra.mxu0 %v2746
    %v2905 = vpop.f32.mrf.mxu0
    %v2906 = vadd.f32 0.0, %v2905
    %v2907 = vpop.f32.mrf.mxu0
    %v2908 = vadd.f32 0.0, %v2907
    %v2909 = vpop.f32.mrf.mxu0
    %v2910 = vpop.f32.mrf.mxu0
    %2911 = vdwg.mxu0
    %v2912 = vadd.f32 %v409, %v2783
    %v2913 = vadd.f32 %v411, %v2785
    %v2914 = vadd.f32 %v482, %v2824
    %v2915 = vadd.f32 %v484, %v2826
    %v2916 = vadd.f32 %v555, %v2865
    %v2917 = vadd.f32 %v557, %v2867
    %v2918 = vadd.f32 %v628, %v2906
    %v2919 = vadd.f32 %v630, %v2908
    %v2920 = vxor.u32 %v2912, 2147483648
    %v2921 = vxor.u32 %v2913, 2147483648
    %v2922 = vmul.f32 %v2920, 1.442695
    %v2923 = vpow.pop %v2922
    %v2924 = vmul.f32 %v2921, 1.442695
    %v2925 = vpow.pop %v2924
    %v2926 = vadd.f32 %v2923, 1.0
    %v2927 = vadd.f32 %v2925, 1.0
    %v2928 = vrcp.pop %v2926
    %v2929 = vmul.f32 1.0, %v2928
    %v2930 = vrcp.pop %v2927
    %v2931 = vmul.f32 1.0, %v2930
    %v2932 = vxor.u32 %v2914, 2147483648
    %v2933 = vxor.u32 %v2915, 2147483648
    %v2934 = vmul.f32 %v2932, 1.442695
    %v2935 = vpow.pop %v2934
    %v2936 = vmul.f32 %v2933, 1.442695
    %v2937 = vpow.pop %v2936
    %v2938 = vadd.f32 %v2935, 1.0
    %v2939 = vadd.f32 %v2937, 1.0
    %v2940 = vrcp.pop %v2938
    %v2941 = vmul.f32 1.0, %v2940
    %v2942 = vrcp.pop %v2939
    %v2943 = vmul.f32 1.0, %v2942
    %v2944 = vtanh.pop %v2916
    %v2945 = vtanh.pop %v2917
    %v2946 = vxor.u32 %v2918, 2147483648
    %v2947 = vxor.u32 %v2919, 2147483648
    %v2948 = vmul.f32 %v2946, 1.442695
    %v2949 = vpow.pop %v2948
    %v2950 = vmul.f32 %v2947, 1.442695
    %v2951 = vpow.pop %v2950
    %v2952 = vadd.f32 %v2949, 1.0
    %v2953 = vadd.f32 %v2951, 1.0
    %v2954 = vrcp.pop %v2952
    %v2955 = vmul.f32 1.0, %v2954
    %v2956 = vrcp.pop %v2953
    %v2957 = vmul.f32 1.0, %v2956
    %v2958 = vmul.f32 %v2941, %v2738
    %v2959 = vmul.f32 %v2943, %v2739
    %v2960 = vmul.f32 %v2929, %v2944
    %v2961 = vmul.f32 %v2931, %v2945
    %v2962 = vadd.f32 %v2958, %v2960
    %v2963 = vadd.f32 %v2959, %v2961
    %v2964 = vtanh.pop %v2962
    %v2965 = vtanh.pop %v2963
    %v2966 = vmul.f32 %v2955, %v2964
    %v2967 = vmul.f32 %v2957, %v2965
    %2968 = vst [vmem:[#allocation2 + $0x60] sm:$0x3] %v2966
    %2969 = vst [vmem:[#allocation2 + $0x68] sm:$0x3] %v2967
    %v2970 = vpack.c.bf16 %v2966, %v2966
    %v2971 = vpack.c.bf16 %v2967, %v2967
    %2972 = vmatprep.subr.bf16.mxu0 %v1205
    %2973 = vmatpush1.bf16.msra.mxu0 %v1204
    %2974 = vmatprep.subr.bf16.mxu0 %v1197
    %2975 = vmatpush1.bf16.msra.mxu0 %v1196
    %2976 = vmatprep.subr.bf16.mxu0 %v1189
    %2977 = vmatpush1.bf16.msra.mxu0 %v1188
    %2978 = vmatprep.subr.bf16.mxu0 %v1181
    %2979 = vmatpush1.bf16.msra.mxu0 %v1180
    %2980 = vmatprep.subr.bf16.mxu0 %v1173
    %2981 = vmatpush1.bf16.msra.mxu0 %v1172
    %2982 = vmatprep.subr.bf16.mxu0 %v1165
    %2983 = vmatpush1.bf16.msra.mxu0 %v1164
    %2984 = vmatprep.subr.bf16.mxu0 %v1157
    %2985 = vmatpush1.bf16.msra.mxu0 %v1156
    %2986 = vmatprep.subr.bf16.mxu0 %v1149
    %2987 = vmatpush1.bf16.msra.mxu0 %v1148
    %2988 = vmatprep.subr.bf16.mxu0 %v1269
    %2989 = vmatpush2.bf16.msra.mxu0 %v1268
    %2990 = vmatprep.subr.bf16.mxu0 %v1261
    %2991 = vmatpush2.bf16.msra.mxu0 %v1260
    %2992 = vmatprep.subr.bf16.mxu0 %v1253
    %2993 = vmatpush2.bf16.msra.mxu0 %v1252
    %2994 = vmatprep.subr.bf16.mxu0 %v1245
    %2995 = vmatpush2.bf16.msra.mxu0 %v1244
    %2996 = vmatprep.subr.bf16.mxu0 %v1237
    %2997 = vmatpush2.bf16.msra.mxu0 %v1236
    %2998 = vmatprep.subr.bf16.mxu0 %v1229
    %2999 = vmatpush2.bf16.msra.mxu0 %v1228
    %3000 = vmatprep.subr.bf16.mxu0 %v1221
    %3001 = vmatpush2.bf16.msra.mxu0 %v1220
    %3002 = vmatprep.subr.bf16.mxu0 %v1213
    %3003 = vmatpush2.bf16.msra.mxu0 %v1212
    %3004 = vmatprep.mubr.bf16.mxu0 %v2971
    %3005 = vmatmul.mubr.bf16.gmra.mxu0 %v2970
    %v3006 = vpop.f32.mrf.mxu0
    %v3007 = vadd.f32 0.0, %v3006
    %v3008 = vpop.f32.mrf.mxu0
    %v3009 = vadd.f32 0.0, %v3008
    %v3010 = vpop.f32.mrf.mxu0
    %v3011 = vpop.f32.mrf.mxu0
    %3012 = vdwg.mxu0
    %3013 = vmatprep.subr.bf16.mxu0 %v1207
    %3014 = vmatpush1.bf16.msra.mxu0 %v1206
    %3015 = vmatprep.subr.bf16.mxu0 %v1199
    %3016 = vmatpush1.bf16.msra.mxu0 %v1198
    %3017 = vmatprep.subr.bf16.mxu0 %v1191
    %3018 = vmatpush1.bf16.msra.mxu0 %v1190
    %3019 = vmatprep.subr.bf16.mxu0 %v1183
    %3020 = vmatpush1.bf16.msra.mxu0 %v1182
    %3021 = vmatprep.subr.bf16.mxu0 %v1175
    %3022 = vmatpush1.bf16.msra.mxu0 %v1174
    %3023 = vmatprep.subr.bf16.mxu0 %v1167
    %3024 = vmatpush1.bf16.msra.mxu0 %v1166
    %3025 = vmatprep.subr.bf16.mxu0 %v1159
    %3026 = vmatpush1.bf16.msra.mxu0 %v1158
    %3027 = vmatprep.subr.bf16.mxu0 %v1151
    %3028 = vmatpush1.bf16.msra.mxu0 %v1150
    %3029 = vmatprep.subr.bf16.mxu0 %v1271
    %3030 = vmatpush2.bf16.msra.mxu0 %v1270
    %3031 = vmatprep.subr.bf16.mxu0 %v1263
    %3032 = vmatpush2.bf16.msra.mxu0 %v1262
    %3033 = vmatprep.subr.bf16.mxu0 %v1255
    %3034 = vmatpush2.bf16.msra.mxu0 %v1254
    %3035 = vmatprep.subr.bf16.mxu0 %v1247
    %3036 = vmatpush2.bf16.msra.mxu0 %v1246
    %3037 = vmatprep.subr.bf16.mxu0 %v1239
    %3038 = vmatpush2.bf16.msra.mxu0 %v1238
    %3039 = vmatprep.subr.bf16.mxu0 %v1231
    %3040 = vmatpush2.bf16.msra.mxu0 %v1230
    %3041 = vmatprep.subr.bf16.mxu0 %v1223
    %3042 = vmatpush2.bf16.msra.mxu0 %v1222
    %3043 = vmatprep.subr.bf16.mxu0 %v1215
    %3044 = vmatpush2.bf16.msra.mxu0 %v1214
    %3045 = vmatprep.mubr.bf16.mxu0 %v2971
    %3046 = vmatmul.mubr.bf16.gmra.mxu0 %v2970
    %v3047 = vpop.f32.mrf.mxu0
    %v3048 = vadd.f32 0.0, %v3047
    %v3049 = vpop.f32.mrf.mxu0
    %v3050 = vadd.f32 0.0, %v3049
    %v3051 = vpop.f32.mrf.mxu0
    %v3052 = vpop.f32.mrf.mxu0
    %3053 = vdwg.mxu0
    %3054 = vmatprep.subr.bf16.mxu0 %v1209
    %3055 = vmatpush1.bf16.msra.mxu0 %v1208
    %3056 = vmatprep.subr.bf16.mxu0 %v1201
    %3057 = vmatpush1.bf16.msra.mxu0 %v1200
    %3058 = vmatprep.subr.bf16.mxu0 %v1193
    %3059 = vmatpush1.bf16.msra.mxu0 %v1192
    %3060 = vmatprep.subr.bf16.mxu0 %v1185
    %3061 = vmatpush1.bf16.msra.mxu0 %v1184
    %3062 = vmatprep.subr.bf16.mxu0 %v1177
    %3063 = vmatpush1.bf16.msra.mxu0 %v1176
    %3064 = vmatprep.subr.bf16.mxu0 %v1169
    %3065 = vmatpush1.bf16.msra.mxu0 %v1168
    %3066 = vmatprep.subr.bf16.mxu0 %v1161
    %3067 = vmatpush1.bf16.msra.mxu0 %v1160
    %3068 = vmatprep.subr.bf16.mxu0 %v1153
    %3069 = vmatpush1.bf16.msra.mxu0 %v1152
    %3070 = vmatprep.subr.bf16.mxu0 %v1273
    %3071 = vmatpush2.bf16.msra.mxu0 %v1272
    %3072 = vmatprep.subr.bf16.mxu0 %v1265
    %3073 = vmatpush2.bf16.msra.mxu0 %v1264
    %3074 = vmatprep.subr.bf16.mxu0 %v1257
    %3075 = vmatpush2.bf16.msra.mxu0 %v1256
    %3076 = vmatprep.subr.bf16.mxu0 %v1249
    %3077 = vmatpush2.bf16.msra.mxu0 %v1248
    %3078 = vmatprep.subr.bf16.mxu0 %v1241
    %3079 = vmatpush2.bf16.msra.mxu0 %v1240
    %3080 = vmatprep.subr.bf16.mxu0 %v1233
    %3081 = vmatpush2.bf16.msra.mxu0 %v1232
    %3082 = vmatprep.subr.bf16.mxu0 %v1225
    %3083 = vmatpush2.bf16.msra.mxu0 %v1224
    %3084 = vmatprep.subr.bf16.mxu0 %v1217
    %3085 = vmatpush2.bf16.msra.mxu0 %v1216
    %3086 = vmatprep.mubr.bf16.mxu0 %v2971
    %3087 = vmatmul.mubr.bf16.gmra.mxu0 %v2970
    %v3088 = vpop.f32.mrf.mxu0
    %v3089 = vadd.f32 0.0, %v3088
    %v3090 = vpop.f32.mrf.mxu0
    %v3091 = vadd.f32 0.0, %v3090
    %v3092 = vpop.f32.mrf.mxu0
    %v3093 = vpop.f32.mrf.mxu0
    %3094 = vdwg.mxu0
    %3095 = vmatprep.subr.bf16.mxu0 %v1211
    %3096 = vmatpush1.bf16.msra.mxu0 %v1210
    %3097 = vmatprep.subr.bf16.mxu0 %v1203
    %3098 = vmatpush1.bf16.msra.mxu0 %v1202
    %3099 = vmatprep.subr.bf16.mxu0 %v1195
    %3100 = vmatpush1.bf16.msra.mxu0 %v1194
    %3101 = vmatprep.subr.bf16.mxu0 %v1187
    %3102 = vmatpush1.bf16.msra.mxu0 %v1186
    %3103 = vmatprep.subr.bf16.mxu0 %v1179
    %3104 = vmatpush1.bf16.msra.mxu0 %v1178
    %3105 = vmatprep.subr.bf16.mxu0 %v1171
    %3106 = vmatpush1.bf16.msra.mxu0 %v1170
    %3107 = vmatprep.subr.bf16.mxu0 %v1163
    %3108 = vmatpush1.bf16.msra.mxu0 %v1162
    %3109 = vmatprep.subr.bf16.mxu0 %v1155
    %3110 = vmatpush1.bf16.msra.mxu0 %v1154
    %3111 = vmatprep.subr.bf16.mxu0 %v1275
    %3112 = vmatpush2.bf16.msra.mxu0 %v1274
    %3113 = vmatprep.subr.bf16.mxu0 %v1267
    %3114 = vmatpush2.bf16.msra.mxu0 %v1266
    %3115 = vmatprep.subr.bf16.mxu0 %v1259
    %3116 = vmatpush2.bf16.msra.mxu0 %v1258
    %3117 = vmatprep.subr.bf16.mxu0 %v1251
    %3118 = vmatpush2.bf16.msra.mxu0 %v1250
    %3119 = vmatprep.subr.bf16.mxu0 %v1243
    %3120 = vmatpush2.bf16.msra.mxu0 %v1242
    %3121 = vmatprep.subr.bf16.mxu0 %v1235
    %3122 = vmatpush2.bf16.msra.mxu0 %v1234
    %3123 = vmatprep.subr.bf16.mxu0 %v1227
    %3124 = vmatpush2.bf16.msra.mxu0 %v1226
    %3125 = vmatprep.subr.bf16.mxu0 %v1219
    %3126 = vmatpush2.bf16.msra.mxu0 %v1218
    %3127 = vmatprep.mubr.bf16.mxu0 %v2971
    %3128 = vmatmul.mubr.bf16.gmra.mxu0 %v2970
    %v3129 = vpop.f32.mrf.mxu0
    %v3130 = vadd.f32 0.0, %v3129
    %v3131 = vpop.f32.mrf.mxu0
    %v3132 = vadd.f32 0.0, %v3131
    %v3133 = vpop.f32.mrf.mxu0
    %v3134 = vpop.f32.mrf.mxu0
    %3135 = vdwg.mxu0
    %v3136 = vadd.f32 %v413, %v3007
    %v3137 = vadd.f32 %v415, %v3009
    %v3138 = vadd.f32 %v486, %v3048
    %v3139 = vadd.f32 %v488, %v3050
    %v3140 = vadd.f32 %v559, %v3089
    %v3141 = vadd.f32 %v561, %v3091
    %v3142 = vadd.f32 %v632, %v3130
    %v3143 = vadd.f32 %v634, %v3132
    %v3144 = vxor.u32 %v3136, 2147483648
    %v3145 = vxor.u32 %v3137, 2147483648
    %v3146 = vmul.f32 %v3144, 1.442695
    %v3147 = vpow.pop %v3146
    %v3148 = vmul.f32 %v3145, 1.442695
    %v3149 = vpow.pop %v3148
    %v3150 = vadd.f32 %v3147, 1.0
    %v3151 = vadd.f32 %v3149, 1.0
    %v3152 = vrcp.pop %v3150
    %v3153 = vmul.f32 1.0, %v3152
    %v3154 = vrcp.pop %v3151
    %v3155 = vmul.f32 1.0, %v3154
    %v3156 = vxor.u32 %v3138, 2147483648
    %v3157 = vxor.u32 %v3139, 2147483648
    %v3158 = vmul.f32 %v3156, 1.442695
    %v3159 = vpow.pop %v3158
    %v3160 = vmul.f32 %v3157, 1.442695
    %v3161 = vpow.pop %v3160
    %v3162 = vadd.f32 %v3159, 1.0
    %v3163 = vadd.f32 %v3161, 1.0
    %v3164 = vrcp.pop %v3162
    %v3165 = vmul.f32 1.0, %v3164
    %v3166 = vrcp.pop %v3163
    %v3167 = vmul.f32 1.0, %v3166
    %v3168 = vtanh.pop %v3140
    %v3169 = vtanh.pop %v3141
    %v3170 = vxor.u32 %v3142, 2147483648
    %v3171 = vxor.u32 %v3143, 2147483648
    %v3172 = vmul.f32 %v3170, 1.442695
    %v3173 = vpow.pop %v3172
    %v3174 = vmul.f32 %v3171, 1.442695
    %v3175 = vpow.pop %v3174
    %v3176 = vadd.f32 %v3173, 1.0
    %v3177 = vadd.f32 %v3175, 1.0
    %v3178 = vrcp.pop %v3176
    %v3179 = vmul.f32 1.0, %v3178
    %v3180 = vrcp.pop %v3177
    %v3181 = vmul.f32 1.0, %v3180
    %v3182 = vmul.f32 %v3165, %v2962
    %v3183 = vmul.f32 %v3167, %v2963
    %v3184 = vmul.f32 %v3153, %v3168
    %v3185 = vmul.f32 %v3155, %v3169
    %v3186 = vadd.f32 %v3182, %v3184
    %v3187 = vadd.f32 %v3183, %v3185
    %v3188 = vtanh.pop %v3186
    %v3189 = vtanh.pop %v3187
    %v3190 = vmul.f32 %v3179, %v3188
    %v3191 = vmul.f32 %v3181, %v3189
    %3192 = vst [vmem:[#allocation2 + $0x70] sm:$0x3] %v3190
    %3193 = vst [vmem:[#allocation2 + $0x78] sm:$0x3] %v3191
    %v3194 = vld [vmem:[#allocation2] sm:$0xff]
    %v3195 = vld [vmem:[#allocation2 + $0x8] sm:$0xff]
    %v3196 = vld [vmem:[#allocation2 + $0x10] sm:$0xff]
    %v3197 = vld [vmem:[#allocation2 + $0x18] sm:$0xff]
    %v3198 = vld [vmem:[#allocation2 + $0x20] sm:$0xff]
    %v3199 = vld [vmem:[#allocation2 + $0x28] sm:$0xff]
    %v3200 = vld [vmem:[#allocation2 + $0x30] sm:$0xff]
    %v3201 = vld [vmem:[#allocation2 + $0x38] sm:$0xff]
    %v3202 = vld [vmem:[#allocation2 + $0x40] sm:$0xff]
    %v3203 = vld [vmem:[#allocation2 + $0x48] sm:$0xff]
    %v3204 = vld [vmem:[#allocation2 + $0x50] sm:$0xff]
    %v3205 = vld [vmem:[#allocation2 + $0x58] sm:$0xff]
    %v3206 = vld [vmem:[#allocation2 + $0x60] sm:$0xff]
    %v3207 = vld [vmem:[#allocation2 + $0x68] sm:$0xff]
    %v3208 = vld [vmem:[#allocation2 + $0x70] sm:$0xff]
    %v3209 = vld [vmem:[#allocation2 + $0x78] sm:$0xff]
    %v3210 = vpack.c.bf16 %v3196, %v3194
    %v3211 = vpack.c.bf16 %v3197, %v3195
    %v3212 = vpack.c.bf16 %v3200, %v3198
    %v3213 = vpack.c.bf16 %v3201, %v3199
    %v3214 = vpack.c.bf16 %v3204, %v3202
    %v3215 = vpack.c.bf16 %v3205, %v3203
    %v3216 = vpack.c.bf16 %v3208, %v3206
    %v3217 = vpack.c.bf16 %v3209, %v3207
    %v3218 = vld [vmem:[#allocation9] sm:$0xff]
    %v3219 = vld [vmem:[#allocation9 + $0x8] sm:$0xff]
    %v3220 = vld [vmem:[#allocation9 + $0x10] sm:$0xff]
    %v3221 = vld [vmem:[#allocation9 + $0x18] sm:$0xff]
    %v3222 = vld [vmem:[#allocation9 + $0x20] sm:$0xff]
    %v3223 = vld [vmem:[#allocation9 + $0x28] sm:$0xff]
    %v3224 = vld [vmem:[#allocation9 + $0x30] sm:$0xff]
    %v3225 = vld [vmem:[#allocation9 + $0x38] sm:$0xff]
    %v3226 = vld [vmem:[#allocation9 + $0x40] sm:$0xff]
    %v3227 = vld [vmem:[#allocation9 + $0x48] sm:$0xff]
    %v3228 = vld [vmem:[#allocation9 + $0x50] sm:$0xff]
    %v3229 = vld [vmem:[#allocation9 + $0x58] sm:$0xff]
    %v3230 = vld [vmem:[#allocation9 + $0x60] sm:$0xff]
    %v3231 = vld [vmem:[#allocation9 + $0x68] sm:$0xff]
    %v3232 = vld [vmem:[#allocation9 + $0x70] sm:$0xff]
    %v3233 = vld [vmem:[#allocation9 + $0x78] sm:$0xff]
    %v3234 = vld [vmem:[#allocation9 + $0x80] sm:$0xff]
    %v3235 = vld [vmem:[#allocation9 + $0x88] sm:$0xff]
    %v3236 = vld [vmem:[#allocation9 + $0x90] sm:$0xff]
    %v3237 = vld [vmem:[#allocation9 + $0x98] sm:$0xff]
    %v3238 = vld [vmem:[#allocation9 + $0xa0] sm:$0xff]
    %v3239 = vld [vmem:[#allocation9 + $0xa8] sm:$0xff]
    %v3240 = vld [vmem:[#allocation9 + $0xb0] sm:$0xff]
    %v3241 = vld [vmem:[#allocation9 + $0xb8] sm:$0xff]
    %v3242 = vld [vmem:[#allocation9 + $0xc0] sm:$0xff]
    %v3243 = vld [vmem:[#allocation9 + $0xc8] sm:$0xff]
    %v3244 = vld [vmem:[#allocation9 + $0xd0] sm:$0xff]
    %v3245 = vld [vmem:[#allocation9 + $0xd8] sm:$0xff]
    %v3246 = vld [vmem:[#allocation9 + $0xe0] sm:$0xff]
    %v3247 = vld [vmem:[#allocation9 + $0xe8] sm:$0xff]
    %v3248 = vld [vmem:[#allocation9 + $0xf0] sm:$0xff]
    %v3249 = vld [vmem:[#allocation9 + $0xf8] sm:$0xff]
    %v3250 = vld [vmem:[#allocation9 + $0x100] sm:$0xff]
    %v3251 = vld [vmem:[#allocation9 + $0x108] sm:$0xff]
    %v3252 = vld [vmem:[#allocation9 + $0x110] sm:$0xff]
    %v3253 = vld [vmem:[#allocation9 + $0x118] sm:$0xff]
    %v3254 = vld [vmem:[#allocation9 + $0x120] sm:$0xff]
    %v3255 = vld [vmem:[#allocation9 + $0x128] sm:$0xff]
    %v3256 = vld [vmem:[#allocation9 + $0x130] sm:$0xff]
    %v3257 = vld [vmem:[#allocation9 + $0x138] sm:$0xff]
    %v3258 = vld [vmem:[#allocation9 + $0x140] sm:$0xff]
    %v3259 = vld [vmem:[#allocation9 + $0x148] sm:$0xff]
    %v3260 = vld [vmem:[#allocation9 + $0x150] sm:$0xff]
    %v3261 = vld [vmem:[#allocation9 + $0x158] sm:$0xff]
    %v3262 = vld [vmem:[#allocation9 + $0x160] sm:$0xff]
    %v3263 = vld [vmem:[#allocation9 + $0x168] sm:$0xff]
    %v3264 = vld [vmem:[#allocation9 + $0x170] sm:$0xff]
    %v3265 = vld [vmem:[#allocation9 + $0x178] sm:$0xff]
    %v3266 = vld [vmem:[#allocation9 + $0x180] sm:$0xff]
    %v3267 = vld [vmem:[#allocation9 + $0x188] sm:$0xff]
    %v3268 = vld [vmem:[#allocation9 + $0x190] sm:$0xff]
    %v3269 = vld [vmem:[#allocation9 + $0x198] sm:$0xff]
    %v3270 = vld [vmem:[#allocation9 + $0x1a0] sm:$0xff]
    %v3271 = vld [vmem:[#allocation9 + $0x1a8] sm:$0xff]
    %v3272 = vld [vmem:[#allocation9 + $0x1b0] sm:$0xff]
    %v3273 = vld [vmem:[#allocation9 + $0x1b8] sm:$0xff]
    %v3274 = vld [vmem:[#allocation9 + $0x1c0] sm:$0xff]
    %v3275 = vld [vmem:[#allocation9 + $0x1c8] sm:$0xff]
    %v3276 = vld [vmem:[#allocation9 + $0x1d0] sm:$0xff]
    %v3277 = vld [vmem:[#allocation9 + $0x1d8] sm:$0xff]
    %v3278 = vld [vmem:[#allocation9 + $0x1e0] sm:$0xff]
    %v3279 = vld [vmem:[#allocation9 + $0x1e8] sm:$0xff]
    %v3280 = vld [vmem:[#allocation9 + $0x1f0] sm:$0xff]
    %v3281 = vld [vmem:[#allocation9 + $0x1f8] sm:$0xff]
    %v3282 = vld [vmem:[#allocation9 + $0x200] sm:$0xff]
    %v3283 = vld [vmem:[#allocation9 + $0x208] sm:$0xff]
    %v3284 = vld [vmem:[#allocation9 + $0x210] sm:$0xff]
    %v3285 = vld [vmem:[#allocation9 + $0x218] sm:$0xff]
    %v3286 = vld [vmem:[#allocation9 + $0x220] sm:$0xff]
    %v3287 = vld [vmem:[#allocation9 + $0x228] sm:$0xff]
    %v3288 = vld [vmem:[#allocation9 + $0x230] sm:$0xff]
    %v3289 = vld [vmem:[#allocation9 + $0x238] sm:$0xff]
    %v3290 = vld [vmem:[#allocation9 + $0x240] sm:$0xff]
    %v3291 = vld [vmem:[#allocation9 + $0x248] sm:$0xff]
    %v3292 = vld [vmem:[#allocation9 + $0x250] sm:$0xff]
    %v3293 = vld [vmem:[#allocation9 + $0x258] sm:$0xff]
    %v3294 = vld [vmem:[#allocation9 + $0x260] sm:$0xff]
    %v3295 = vld [vmem:[#allocation9 + $0x268] sm:$0xff]
    %v3296 = vld [vmem:[#allocation9 + $0x270] sm:$0xff]
    %v3297 = vld [vmem:[#allocation9 + $0x278] sm:$0xff]
    %v3298 = vld [vmem:[#allocation9 + $0x280] sm:$0xff]
    %v3299 = vld [vmem:[#allocation9 + $0x288] sm:$0xff]
    %v3300 = vld [vmem:[#allocation9 + $0x290] sm:$0xff]
    %v3301 = vld [vmem:[#allocation9 + $0x298] sm:$0xff]
    %v3302 = vld [vmem:[#allocation9 + $0x2a0] sm:$0xff]
    %v3303 = vld [vmem:[#allocation9 + $0x2a8] sm:$0xff]
    %v3304 = vld [vmem:[#allocation9 + $0x2b0] sm:$0xff]
    %v3305 = vld [vmem:[#allocation9 + $0x2b8] sm:$0xff]
    %v3306 = vld [vmem:[#allocation9 + $0x2c0] sm:$0xff]
    %v3307 = vld [vmem:[#allocation9 + $0x2c8] sm:$0xff]
    %v3308 = vld [vmem:[#allocation9 + $0x2d0] sm:$0xff]
    %v3309 = vld [vmem:[#allocation9 + $0x2d8] sm:$0xff]
    %v3310 = vld [vmem:[#allocation9 + $0x2e0] sm:$0xff]
    %v3311 = vld [vmem:[#allocation9 + $0x2e8] sm:$0xff]
    %v3312 = vld [vmem:[#allocation9 + $0x2f0] sm:$0xff]
    %v3313 = vld [vmem:[#allocation9 + $0x2f8] sm:$0xff]
    %v3314 = vld [vmem:[#allocation9 + $0x300] sm:$0xff]
    %v3315 = vld [vmem:[#allocation9 + $0x308] sm:$0xff]
    %v3316 = vld [vmem:[#allocation9 + $0x310] sm:$0xff]
    %v3317 = vld [vmem:[#allocation9 + $0x318] sm:$0xff]
    %v3318 = vld [vmem:[#allocation9 + $0x320] sm:$0xff]
    %v3319 = vld [vmem:[#allocation9 + $0x328] sm:$0xff]
    %v3320 = vld [vmem:[#allocation9 + $0x330] sm:$0xff]
    %v3321 = vld [vmem:[#allocation9 + $0x338] sm:$0xff]
    %v3322 = vld [vmem:[#allocation9 + $0x340] sm:$0xff]
    %v3323 = vld [vmem:[#allocation9 + $0x348] sm:$0xff]
    %v3324 = vld [vmem:[#allocation9 + $0x350] sm:$0xff]
    %v3325 = vld [vmem:[#allocation9 + $0x358] sm:$0xff]
    %v3326 = vld [vmem:[#allocation9 + $0x360] sm:$0xff]
    %v3327 = vld [vmem:[#allocation9 + $0x368] sm:$0xff]
    %v3328 = vld [vmem:[#allocation9 + $0x370] sm:$0xff]
    %v3329 = vld [vmem:[#allocation9 + $0x378] sm:$0xff]
    %v3330 = vld [vmem:[#allocation9 + $0x380] sm:$0xff]
    %v3331 = vld [vmem:[#allocation9 + $0x388] sm:$0xff]
    %v3332 = vld [vmem:[#allocation9 + $0x390] sm:$0xff]
    %v3333 = vld [vmem:[#allocation9 + $0x398] sm:$0xff]
    %v3334 = vld [vmem:[#allocation9 + $0x3a0] sm:$0xff]
    %v3335 = vld [vmem:[#allocation9 + $0x3a8] sm:$0xff]
    %v3336 = vld [vmem:[#allocation9 + $0x3b0] sm:$0xff]
    %v3337 = vld [vmem:[#allocation9 + $0x3b8] sm:$0xff]
    %v3338 = vld [vmem:[#allocation9 + $0x3c0] sm:$0xff]
    %v3339 = vld [vmem:[#allocation9 + $0x3c8] sm:$0xff]
    %v3340 = vld [vmem:[#allocation9 + $0x3d0] sm:$0xff]
    %v3341 = vld [vmem:[#allocation9 + $0x3d8] sm:$0xff]
    %v3342 = vld [vmem:[#allocation9 + $0x3e0] sm:$0xff]
    %v3343 = vld [vmem:[#allocation9 + $0x3e8] sm:$0xff]
    %v3344 = vld [vmem:[#allocation9 + $0x3f0] sm:$0xff]
    %v3345 = vld [vmem:[#allocation9 + $0x3f8] sm:$0xff]
    %v3346 = vld [vmem:[#allocation11] sm:$0xff]
    %v3348 = vlaneseq
    %v3349 = vshrl.u32 %v3348, 7
    %v3350 = vsub.s32 0, %v3349
    %v3351 = vrot.slane %v3346, %v3350
    %v3352 = vlaneseq
    %v3353 = vshrl.u32 %v3352, 7
    %v3354 = vsub.s32 1, %v3353
    %v3355 = vrot.slane %v3346, %v3354
    %v3356 = vlaneseq
    %v3357 = vshrl.u32 %v3356, 7
    %v3358 = vsub.s32 2, %v3357
    %v3359 = vrot.slane %v3346, %v3358
    %v3360 = vlaneseq
    %v3361 = vshrl.u32 %v3360, 7
    %v3362 = vsub.s32 3, %v3361
    %v3363 = vrot.slane %v3346, %v3362
    %v3364 = vlaneseq
    %v3365 = vshrl.u32 %v3364, 7
    %v3366 = vsub.s32 4, %v3365
    %v3367 = vrot.slane %v3346, %v3366
    %v3368 = vlaneseq
    %v3369 = vshrl.u32 %v3368, 7
    %v3370 = vsub.s32 5, %v3369
    %v3371 = vrot.slane %v3346, %v3370
    %v3372 = vlaneseq
    %v3373 = vshrl.u32 %v3372, 7
    %v3374 = vsub.s32 6, %v3373
    %v3375 = vrot.slane %v3346, %v3374
    %v3376 = vlaneseq
    %v3377 = vshrl.u32 %v3376, 7
    %v3378 = vsub.s32 7, %v3377
    %v3379 = vrot.slane %v3346, %v3378
    %v3516 = vunpack.c.l.b16 %v3218
    %v3517 = vunpack.c.h.b16 %v3218
    %v3518 = vunpack.c.l.b16 %v3219
    %v3519 = vunpack.c.h.b16 %v3219
    %v3520 = vunpack.c.l.b16 %v3220
    %v3521 = vunpack.c.h.b16 %v3220
    %v3522 = vunpack.c.l.b16 %v3221
    %v3523 = vunpack.c.h.b16 %v3221
    %v3524 = vunpack.c.l.b16 %v3222
    %v3525 = vunpack.c.h.b16 %v3222
    %v3526 = vunpack.c.l.b16 %v3223
    %v3527 = vunpack.c.h.b16 %v3223
    %v3528 = vunpack.c.l.b16 %v3224
    %v3529 = vunpack.c.h.b16 %v3224
    %v3530 = vunpack.c.l.b16 %v3225
    %v3531 = vunpack.c.h.b16 %v3225
    %v3532 = vunpack.c.l.b16 %v3226
    %v3533 = vunpack.c.h.b16 %v3226
    %v3534 = vunpack.c.l.b16 %v3227
    %v3535 = vunpack.c.h.b16 %v3227
    %v3536 = vunpack.c.l.b16 %v3228
    %v3537 = vunpack.c.h.b16 %v3228
    %v3538 = vunpack.c.l.b16 %v3229
    %v3539 = vunpack.c.h.b16 %v3229
    %v3540 = vunpack.c.l.b16 %v3230
    %v3541 = vunpack.c.h.b16 %v3230
    %v3542 = vunpack.c.l.b16 %v3231
    %v3543 = vunpack.c.h.b16 %v3231
    %v3544 = vunpack.c.l.b16 %v3232
    %v3545 = vunpack.c.h.b16 %v3232
    %v3546 = vunpack.c.l.b16 %v3233
    %v3547 = vunpack.c.h.b16 %v3233
    %v3548 = vunpack.c.l.b16 %v3234
    %v3549 = vunpack.c.h.b16 %v3234
    %v3550 = vunpack.c.l.b16 %v3235
    %v3551 = vunpack.c.h.b16 %v3235
    %v3552 = vunpack.c.l.b16 %v3236
    %v3553 = vunpack.c.h.b16 %v3236
    %v3554 = vunpack.c.l.b16 %v3237
    %v3555 = vunpack.c.h.b16 %v3237
    %v3556 = vunpack.c.l.b16 %v3238
    %v3557 = vunpack.c.h.b16 %v3238
    %v3558 = vunpack.c.l.b16 %v3239
    %v3559 = vunpack.c.h.b16 %v3239
    %v3560 = vunpack.c.l.b16 %v3240
    %v3561 = vunpack.c.h.b16 %v3240
    %v3562 = vunpack.c.l.b16 %v3241
    %v3563 = vunpack.c.h.b16 %v3241
    %v3564 = vunpack.c.l.b16 %v3242
    %v3565 = vunpack.c.h.b16 %v3242
    %v3566 = vunpack.c.l.b16 %v3243
    %v3567 = vunpack.c.h.b16 %v3243
    %v3568 = vunpack.c.l.b16 %v3244
    %v3569 = vunpack.c.h.b16 %v3244
    %v3570 = vunpack.c.l.b16 %v3245
    %v3571 = vunpack.c.h.b16 %v3245
    %v3572 = vunpack.c.l.b16 %v3246
    %v3573 = vunpack.c.h.b16 %v3246
    %v3574 = vunpack.c.l.b16 %v3247
    %v3575 = vunpack.c.h.b16 %v3247
    %v3576 = vunpack.c.l.b16 %v3248
    %v3577 = vunpack.c.h.b16 %v3248
    %v3578 = vunpack.c.l.b16 %v3249
    %v3579 = vunpack.c.h.b16 %v3249
    %v3580 = vunpack.c.l.b16 %v3250
    %v3581 = vunpack.c.h.b16 %v3250
    %v3582 = vunpack.c.l.b16 %v3251
    %v3583 = vunpack.c.h.b16 %v3251
    %v3584 = vunpack.c.l.b16 %v3252
    %v3585 = vunpack.c.h.b16 %v3252
    %v3586 = vunpack.c.l.b16 %v3253
    %v3587 = vunpack.c.h.b16 %v3253
    %v3588 = vunpack.c.l.b16 %v3254
    %v3589 = vunpack.c.h.b16 %v3254
    %v3590 = vunpack.c.l.b16 %v3255
    %v3591 = vunpack.c.h.b16 %v3255
    %v3592 = vunpack.c.l.b16 %v3256
    %v3593 = vunpack.c.h.b16 %v3256
    %v3594 = vunpack.c.l.b16 %v3257
    %v3595 = vunpack.c.h.b16 %v3257
    %v3596 = vunpack.c.l.b16 %v3258
    %v3597 = vunpack.c.h.b16 %v3258
    %v3598 = vunpack.c.l.b16 %v3259
    %v3599 = vunpack.c.h.b16 %v3259
    %v3600 = vunpack.c.l.b16 %v3260
    %v3601 = vunpack.c.h.b16 %v3260
    %v3602 = vunpack.c.l.b16 %v3261
    %v3603 = vunpack.c.h.b16 %v3261
    %v3604 = vunpack.c.l.b16 %v3262
    %v3605 = vunpack.c.h.b16 %v3262
    %v3606 = vunpack.c.l.b16 %v3263
    %v3607 = vunpack.c.h.b16 %v3263
    %v3608 = vunpack.c.l.b16 %v3264
    %v3609 = vunpack.c.h.b16 %v3264
    %v3610 = vunpack.c.l.b16 %v3265
    %v3611 = vunpack.c.h.b16 %v3265
    %v3612 = vunpack.c.l.b16 %v3266
    %v3613 = vunpack.c.h.b16 %v3266
    %v3614 = vunpack.c.l.b16 %v3267
    %v3615 = vunpack.c.h.b16 %v3267
    %v3616 = vunpack.c.l.b16 %v3268
    %v3617 = vunpack.c.h.b16 %v3268
    %v3618 = vunpack.c.l.b16 %v3269
    %v3619 = vunpack.c.h.b16 %v3269
    %v3620 = vunpack.c.l.b16 %v3270
    %v3621 = vunpack.c.h.b16 %v3270
    %v3622 = vunpack.c.l.b16 %v3271
    %v3623 = vunpack.c.h.b16 %v3271
    %v3624 = vunpack.c.l.b16 %v3272
    %v3625 = vunpack.c.h.b16 %v3272
    %v3626 = vunpack.c.l.b16 %v3273
    %v3627 = vunpack.c.h.b16 %v3273
    %v3628 = vunpack.c.l.b16 %v3274
    %v3629 = vunpack.c.h.b16 %v3274
    %v3630 = vunpack.c.l.b16 %v3275
    %v3631 = vunpack.c.h.b16 %v3275
    %v3632 = vunpack.c.l.b16 %v3276
    %v3633 = vunpack.c.h.b16 %v3276
    %v3634 = vunpack.c.l.b16 %v3277
    %v3635 = vunpack.c.h.b16 %v3277
    %v3636 = vunpack.c.l.b16 %v3278
    %v3637 = vunpack.c.h.b16 %v3278
    %v3638 = vunpack.c.l.b16 %v3279
    %v3639 = vunpack.c.h.b16 %v3279
    %v3640 = vunpack.c.l.b16 %v3280
    %v3641 = vunpack.c.h.b16 %v3280
    %v3642 = vunpack.c.l.b16 %v3281
    %v3643 = vunpack.c.h.b16 %v3281
    %v3644 = vunpack.c.l.b16 %v3282
    %v3645 = vunpack.c.h.b16 %v3282
    %v3646 = vunpack.c.l.b16 %v3283
    %v3647 = vunpack.c.h.b16 %v3283
    %v3648 = vunpack.c.l.b16 %v3284
    %v3649 = vunpack.c.h.b16 %v3284
    %v3650 = vunpack.c.l.b16 %v3285
    %v3651 = vunpack.c.h.b16 %v3285
    %v3652 = vunpack.c.l.b16 %v3286
    %v3653 = vunpack.c.h.b16 %v3286
    %v3654 = vunpack.c.l.b16 %v3287
    %v3655 = vunpack.c.h.b16 %v3287
    %v3656 = vunpack.c.l.b16 %v3288
    %v3657 = vunpack.c.h.b16 %v3288
    %v3658 = vunpack.c.l.b16 %v3289
    %v3659 = vunpack.c.h.b16 %v3289
    %v3660 = vunpack.c.l.b16 %v3290
    %v3661 = vunpack.c.h.b16 %v3290
    %v3662 = vunpack.c.l.b16 %v3291
    %v3663 = vunpack.c.h.b16 %v3291
    %v3664 = vunpack.c.l.b16 %v3292
    %v3665 = vunpack.c.h.b16 %v3292
    %v3666 = vunpack.c.l.b16 %v3293
    %v3667 = vunpack.c.h.b16 %v3293
    %v3668 = vunpack.c.l.b16 %v3294
    %v3669 = vunpack.c.h.b16 %v3294
    %v3670 = vunpack.c.l.b16 %v3295
    %v3671 = vunpack.c.h.b16 %v3295
    %v3672 = vunpack.c.l.b16 %v3296
    %v3673 = vunpack.c.h.b16 %v3296
    %v3674 = vunpack.c.l.b16 %v3297
    %v3675 = vunpack.c.h.b16 %v3297
    %v3676 = vunpack.c.l.b16 %v3298
    %v3677 = vunpack.c.h.b16 %v3298
    %v3678 = vunpack.c.l.b16 %v3299
    %v3679 = vunpack.c.h.b16 %v3299
    %v3680 = vunpack.c.l.b16 %v3300
    %v3681 = vunpack.c.h.b16 %v3300
    %v3682 = vunpack.c.l.b16 %v3301
    %v3683 = vunpack.c.h.b16 %v3301
    %v3684 = vunpack.c.l.b16 %v3302
    %v3685 = vunpack.c.h.b16 %v3302
    %v3686 = vunpack.c.l.b16 %v3303
    %v3687 = vunpack.c.h.b16 %v3303
    %v3688 = vunpack.c.l.b16 %v3304
    %v3689 = vunpack.c.h.b16 %v3304
    %v3690 = vunpack.c.l.b16 %v3305
    %v3691 = vunpack.c.h.b16 %v3305
    %v3692 = vunpack.c.l.b16 %v3306
    %v3693 = vunpack.c.h.b16 %v3306
    %v3694 = vunpack.c.l.b16 %v3307
    %v3695 = vunpack.c.h.b16 %v3307
    %v3696 = vunpack.c.l.b16 %v3308
    %v3697 = vunpack.c.h.b16 %v3308
    %v3698 = vunpack.c.l.b16 %v3309
    %v3699 = vunpack.c.h.b16 %v3309
    %v3700 = vunpack.c.l.b16 %v3310
    %v3701 = vunpack.c.h.b16 %v3310
    %v3702 = vunpack.c.l.b16 %v3311
    %v3703 = vunpack.c.h.b16 %v3311
    %v3704 = vunpack.c.l.b16 %v3312
    %v3705 = vunpack.c.h.b16 %v3312
    %v3706 = vunpack.c.l.b16 %v3313
    %v3707 = vunpack.c.h.b16 %v3313
    %v3708 = vunpack.c.l.b16 %v3314
    %v3709 = vunpack.c.h.b16 %v3314
    %v3710 = vunpack.c.l.b16 %v3315
    %v3711 = vunpack.c.h.b16 %v3315
    %v3712 = vunpack.c.l.b16 %v3316
    %v3713 = vunpack.c.h.b16 %v3316
    %v3714 = vunpack.c.l.b16 %v3317
    %v3715 = vunpack.c.h.b16 %v3317
    %v3716 = vunpack.c.l.b16 %v3318
    %v3717 = vunpack.c.h.b16 %v3318
    %v3718 = vunpack.c.l.b16 %v3319
    %v3719 = vunpack.c.h.b16 %v3319
    %v3720 = vunpack.c.l.b16 %v3320
    %v3721 = vunpack.c.h.b16 %v3320
    %v3722 = vunpack.c.l.b16 %v3321
    %v3723 = vunpack.c.h.b16 %v3321
    %v3724 = vunpack.c.l.b16 %v3322
    %v3725 = vunpack.c.h.b16 %v3322
    %v3726 = vunpack.c.l.b16 %v3323
    %v3727 = vunpack.c.h.b16 %v3323
    %v3728 = vunpack.c.l.b16 %v3324
    %v3729 = vunpack.c.h.b16 %v3324
    %v3730 = vunpack.c.l.b16 %v3325
    %v3731 = vunpack.c.h.b16 %v3325
    %v3732 = vunpack.c.l.b16 %v3326
    %v3733 = vunpack.c.h.b16 %v3326
    %v3734 = vunpack.c.l.b16 %v3327
    %v3735 = vunpack.c.h.b16 %v3327
    %v3736 = vunpack.c.l.b16 %v3328
    %v3737 = vunpack.c.h.b16 %v3328
    %v3738 = vunpack.c.l.b16 %v3329
    %v3739 = vunpack.c.h.b16 %v3329
    %v3740 = vunpack.c.l.b16 %v3330
    %v3741 = vunpack.c.h.b16 %v3330
    %v3742 = vunpack.c.l.b16 %v3331
    %v3743 = vunpack.c.h.b16 %v3331
    %v3744 = vunpack.c.l.b16 %v3332
    %v3745 = vunpack.c.h.b16 %v3332
    %v3746 = vunpack.c.l.b16 %v3333
    %v3747 = vunpack.c.h.b16 %v3333
    %v3748 = vunpack.c.l.b16 %v3334
    %v3749 = vunpack.c.h.b16 %v3334
    %v3750 = vunpack.c.l.b16 %v3335
    %v3751 = vunpack.c.h.b16 %v3335
    %v3752 = vunpack.c.l.b16 %v3336
    %v3753 = vunpack.c.h.b16 %v3336
    %v3754 = vunpack.c.l.b16 %v3337
    %v3755 = vunpack.c.h.b16 %v3337
    %v3756 = vunpack.c.l.b16 %v3338
    %v3757 = vunpack.c.h.b16 %v3338
    %v3758 = vunpack.c.l.b16 %v3339
    %v3759 = vunpack.c.h.b16 %v3339
    %v3760 = vunpack.c.l.b16 %v3340
    %v3761 = vunpack.c.h.b16 %v3340
    %v3762 = vunpack.c.l.b16 %v3341
    %v3763 = vunpack.c.h.b16 %v3341
    %v3764 = vunpack.c.l.b16 %v3342
    %v3765 = vunpack.c.h.b16 %v3342
    %v3766 = vunpack.c.l.b16 %v3343
    %v3767 = vunpack.c.h.b16 %v3343
    %v3768 = vunpack.c.l.b16 %v3344
    %v3769 = vunpack.c.h.b16 %v3344
    %v3770 = vunpack.c.l.b16 %v3345
    %v3771 = vunpack.c.h.b16 %v3345
    %v3772 = vpack.c.b16 %v3524, %v3516
    %v3773 = vpack.c.b16 %v3525, %v3517
    %v3774 = vpack.c.b16 %v3526, %v3518
    %v3775 = vpack.c.b16 %v3527, %v3519
    %v3776 = vpack.c.b16 %v3528, %v3520
    %v3777 = vpack.c.b16 %v3529, %v3521
    %v3778 = vpack.c.b16 %v3530, %v3522
    %v3779 = vpack.c.b16 %v3531, %v3523
    %v3780 = vpack.c.b16 %v3540, %v3532
    %v3781 = vpack.c.b16 %v3541, %v3533
    %v3782 = vpack.c.b16 %v3542, %v3534
    %v3783 = vpack.c.b16 %v3543, %v3535
    %v3784 = vpack.c.b16 %v3544, %v3536
    %v3785 = vpack.c.b16 %v3545, %v3537
    %v3786 = vpack.c.b16 %v3546, %v3538
    %v3787 = vpack.c.b16 %v3547, %v3539
    %v3788 = vpack.c.b16 %v3556, %v3548
    %v3789 = vpack.c.b16 %v3557, %v3549
    %v3790 = vpack.c.b16 %v3558, %v3550
    %v3791 = vpack.c.b16 %v3559, %v3551
    %v3792 = vpack.c.b16 %v3560, %v3552
    %v3793 = vpack.c.b16 %v3561, %v3553
    %v3794 = vpack.c.b16 %v3562, %v3554
    %v3795 = vpack.c.b16 %v3563, %v3555
    %v3796 = vpack.c.b16 %v3572, %v3564
    %v3797 = vpack.c.b16 %v3573, %v3565
    %v3798 = vpack.c.b16 %v3574, %v3566
    %v3799 = vpack.c.b16 %v3575, %v3567
    %v3800 = vpack.c.b16 %v3576, %v3568
    %v3801 = vpack.c.b16 %v3577, %v3569
    %v3802 = vpack.c.b16 %v3578, %v3570
    %v3803 = vpack.c.b16 %v3579, %v3571
    %v3804 = vpack.c.b16 %v3588, %v3580
    %v3805 = vpack.c.b16 %v3589, %v3581
    %v3806 = vpack.c.b16 %v3590, %v3582
    %v3807 = vpack.c.b16 %v3591, %v3583
    %v3808 = vpack.c.b16 %v3592, %v3584
    %v3809 = vpack.c.b16 %v3593, %v3585
    %v3810 = vpack.c.b16 %v3594, %v3586
    %v3811 = vpack.c.b16 %v3595, %v3587
    %v3812 = vpack.c.b16 %v3604, %v3596
    %v3813 = vpack.c.b16 %v3605, %v3597
    %v3814 = vpack.c.b16 %v3606, %v3598
    %v3815 = vpack.c.b16 %v3607, %v3599
    %v3816 = vpack.c.b16 %v3608, %v3600
    %v3817 = vpack.c.b16 %v3609, %v3601
    %v3818 = vpack.c.b16 %v3610, %v3602
    %v3819 = vpack.c.b16 %v3611, %v3603
    %v3820 = vpack.c.b16 %v3620, %v3612
    %v3821 = vpack.c.b16 %v3621, %v3613
    %v3822 = vpack.c.b16 %v3622, %v3614
    %v3823 = vpack.c.b16 %v3623, %v3615
    %v3824 = vpack.c.b16 %v3624, %v3616
    %v3825 = vpack.c.b16 %v3625, %v3617
    %v3826 = vpack.c.b16 %v3626, %v3618
    %v3827 = vpack.c.b16 %v3627, %v3619
    %v3828 = vpack.c.b16 %v3636, %v3628
    %v3829 = vpack.c.b16 %v3637, %v3629
    %v3830 = vpack.c.b16 %v3638, %v3630
    %v3831 = vpack.c.b16 %v3639, %v3631
    %v3832 = vpack.c.b16 %v3640, %v3632
    %v3833 = vpack.c.b16 %v3641, %v3633
    %v3834 = vpack.c.b16 %v3642, %v3634
    %v3835 = vpack.c.b16 %v3643, %v3635
    %v3836 = vpack.c.b16 %v3652, %v3644
    %v3837 = vpack.c.b16 %v3653, %v3645
    %v3838 = vpack.c.b16 %v3654, %v3646
    %v3839 = vpack.c.b16 %v3655, %v3647
    %v3840 = vpack.c.b16 %v3656, %v3648
    %v3841 = vpack.c.b16 %v3657, %v3649
    %v3842 = vpack.c.b16 %v3658, %v3650
    %v3843 = vpack.c.b16 %v3659, %v3651
    %v3844 = vpack.c.b16 %v3668, %v3660
    %v3845 = vpack.c.b16 %v3669, %v3661
    %v3846 = vpack.c.b16 %v3670, %v3662
    %v3847 = vpack.c.b16 %v3671, %v3663
    %v3848 = vpack.c.b16 %v3672, %v3664
    %v3849 = vpack.c.b16 %v3673, %v3665
    %v3850 = vpack.c.b16 %v3674, %v3666
    %v3851 = vpack.c.b16 %v3675, %v3667
    %v3852 = vpack.c.b16 %v3684, %v3676
    %v3853 = vpack.c.b16 %v3685, %v3677
    %v3854 = vpack.c.b16 %v3686, %v3678
    %v3855 = vpack.c.b16 %v3687, %v3679
    %v3856 = vpack.c.b16 %v3688, %v3680
    %v3857 = vpack.c.b16 %v3689, %v3681
    %v3858 = vpack.c.b16 %v3690, %v3682
    %v3859 = vpack.c.b16 %v3691, %v3683
    %v3860 = vpack.c.b16 %v3700, %v3692
    %v3861 = vpack.c.b16 %v3701, %v3693
    %v3862 = vpack.c.b16 %v3702, %v3694
    %v3863 = vpack.c.b16 %v3703, %v3695
    %v3864 = vpack.c.b16 %v3704, %v3696
    %v3865 = vpack.c.b16 %v3705, %v3697
    %v3866 = vpack.c.b16 %v3706, %v3698
    %v3867 = vpack.c.b16 %v3707, %v3699
    %v3868 = vpack.c.b16 %v3716, %v3708
    %v3869 = vpack.c.b16 %v3717, %v3709
    %v3870 = vpack.c.b16 %v3718, %v3710
    %v3871 = vpack.c.b16 %v3719, %v3711
    %v3872 = vpack.c.b16 %v3720, %v3712
    %v3873 = vpack.c.b16 %v3721, %v3713
    %v3874 = vpack.c.b16 %v3722, %v3714
    %v3875 = vpack.c.b16 %v3723, %v3715
    %v3876 = vpack.c.b16 %v3732, %v3724
    %v3877 = vpack.c.b16 %v3733, %v3725
    %v3878 = vpack.c.b16 %v3734, %v3726
    %v3879 = vpack.c.b16 %v3735, %v3727
    %v3880 = vpack.c.b16 %v3736, %v3728
    %v3881 = vpack.c.b16 %v3737, %v3729
    %v3882 = vpack.c.b16 %v3738, %v3730
    %v3883 = vpack.c.b16 %v3739, %v3731
    %v3884 = vpack.c.b16 %v3748, %v3740
    %v3885 = vpack.c.b16 %v3749, %v3741
    %v3886 = vpack.c.b16 %v3750, %v3742
    %v3887 = vpack.c.b16 %v3751, %v3743
    %v3888 = vpack.c.b16 %v3752, %v3744
    %v3889 = vpack.c.b16 %v3753, %v3745
    %v3890 = vpack.c.b16 %v3754, %v3746
    %v3891 = vpack.c.b16 %v3755, %v3747
    %v3892 = vpack.c.b16 %v3764, %v3756
    %v3893 = vpack.c.b16 %v3765, %v3757
    %v3894 = vpack.c.b16 %v3766, %v3758
    %v3895 = vpack.c.b16 %v3767, %v3759
    %v3896 = vpack.c.b16 %v3768, %v3760
    %v3897 = vpack.c.b16 %v3769, %v3761
    %v3898 = vpack.c.b16 %v3770, %v3762
    %v3899 = vpack.c.b16 %v3771, %v3763
    %4028 = vmatprep.subr.bf16.mxu0 %v3829
    %4029 = vmatpush1.bf16.msra.mxu0 %v3828
    %4030 = vmatprep.subr.bf16.mxu0 %v3821
    %4031 = vmatpush1.bf16.msra.mxu0 %v3820
    %4032 = vmatprep.subr.bf16.mxu0 %v3813
    %4033 = vmatpush1.bf16.msra.mxu0 %v3812
    %4034 = vmatprep.subr.bf16.mxu0 %v3805
    %4035 = vmatpush1.bf16.msra.mxu0 %v3804
    %4036 = vmatprep.subr.bf16.mxu0 %v3797
    %4037 = vmatpush1.bf16.msra.mxu0 %v3796
    %4038 = vmatprep.subr.bf16.mxu0 %v3789
    %4039 = vmatpush1.bf16.msra.mxu0 %v3788
    %4040 = vmatprep.subr.bf16.mxu0 %v3781
    %4041 = vmatpush1.bf16.msra.mxu0 %v3780
    %4042 = vmatprep.subr.bf16.mxu0 %v3773
    %4043 = vmatpush1.bf16.msra.mxu0 %v3772
    %4044 = vmatprep.subr.bf16.mxu0 %v3893
    %4045 = vmatpush2.bf16.msra.mxu0 %v3892
    %4046 = vmatprep.subr.bf16.mxu0 %v3885
    %4047 = vmatpush2.bf16.msra.mxu0 %v3884
    %4048 = vmatprep.subr.bf16.mxu0 %v3877
    %4049 = vmatpush2.bf16.msra.mxu0 %v3876
    %4050 = vmatprep.subr.bf16.mxu0 %v3869
    %4051 = vmatpush2.bf16.msra.mxu0 %v3868
    %4052 = vmatprep.subr.bf16.mxu0 %v3861
    %4053 = vmatpush2.bf16.msra.mxu0 %v3860
    %4054 = vmatprep.subr.bf16.mxu0 %v3853
    %4055 = vmatpush2.bf16.msra.mxu0 %v3852
    %4056 = vmatprep.subr.bf16.mxu0 %v3845
    %4057 = vmatpush2.bf16.msra.mxu0 %v3844
    %4058 = vmatprep.subr.bf16.mxu0 %v3837
    %4059 = vmatpush2.bf16.msra.mxu0 %v3836
    %4060 = vmatprep.mubr.bf16.mxu0 %v3211
    %4061 = vmatmul.mubr.bf16.gmra.mxu0 %v3210
    %v4062 = vpop.f32.mrf.mxu0
    %v4063 = vadd.f32 %v3351, %v4062
    %v4064 = vpop.f32.mrf.mxu0
    %v4065 = vadd.f32 %v3355, %v4064
    %v4066 = vpop.f32.mrf.mxu0
    %v4067 = vadd.f32 %v3351, %v4066
    %v4068 = vpop.f32.mrf.mxu0
    %v4069 = vadd.f32 %v3355, %v4068
    %4070 = vmatprep.mubr.bf16.mxu0 %v3213
    %4071 = vmatmul.mubr.bf16.gmra.mxu0 %v3212
    %v4072 = vpop.f32.mrf.mxu0
    %v4073 = vadd.f32 %v3351, %v4072
    %v4074 = vpop.f32.mrf.mxu0
    %v4075 = vadd.f32 %v3355, %v4074
    %v4076 = vpop.f32.mrf.mxu0
    %v4077 = vadd.f32 %v3351, %v4076
    %v4078 = vpop.f32.mrf.mxu0
    %v4079 = vadd.f32 %v3355, %v4078
    %4080 = vmatprep.mubr.bf16.mxu0 %v3215
    %4081 = vmatmul.mubr.bf16.gmra.mxu0 %v3214
    %v4082 = vpop.f32.mrf.mxu0
    %v4083 = vadd.f32 %v3351, %v4082
    %v4084 = vpop.f32.mrf.mxu0
    %v4085 = vadd.f32 %v3355, %v4084
    %v4086 = vpop.f32.mrf.mxu0
    %v4087 = vadd.f32 %v3351, %v4086
    %v4088 = vpop.f32.mrf.mxu0
    %v4089 = vadd.f32 %v3355, %v4088
    %4090 = vmatprep.mubr.bf16.mxu0 %v3217
    %4091 = vmatmul.mubr.bf16.gmra.mxu0 %v3216
    %v4092 = vpop.f32.mrf.mxu0
    %v4093 = vadd.f32 %v3351, %v4092
    %v4094 = vpop.f32.mrf.mxu0
    %v4095 = vadd.f32 %v3355, %v4094
    %v4096 = vpop.f32.mrf.mxu0
    %v4097 = vadd.f32 %v3351, %v4096
    %v4098 = vpop.f32.mrf.mxu0
    %v4099 = vadd.f32 %v3355, %v4098
    %4100 = vdwg.mxu0
    %4101 = vmatprep.subr.bf16.mxu0 %v3831
    %4102 = vmatpush1.bf16.msra.mxu0 %v3830
    %4103 = vmatprep.subr.bf16.mxu0 %v3823
    %4104 = vmatpush1.bf16.msra.mxu0 %v3822
    %4105 = vmatprep.subr.bf16.mxu0 %v3815
    %4106 = vmatpush1.bf16.msra.mxu0 %v3814
    %4107 = vmatprep.subr.bf16.mxu0 %v3807
    %4108 = vmatpush1.bf16.msra.mxu0 %v3806
    %4109 = vmatprep.subr.bf16.mxu0 %v3799
    %4110 = vmatpush1.bf16.msra.mxu0 %v3798
    %4111 = vmatprep.subr.bf16.mxu0 %v3791
    %4112 = vmatpush1.bf16.msra.mxu0 %v3790
    %4113 = vmatprep.subr.bf16.mxu0 %v3783
    %4114 = vmatpush1.bf16.msra.mxu0 %v3782
    %4115 = vmatprep.subr.bf16.mxu0 %v3775
    %4116 = vmatpush1.bf16.msra.mxu0 %v3774
    %4117 = vmatprep.subr.bf16.mxu0 %v3895
    %4118 = vmatpush2.bf16.msra.mxu0 %v3894
    %4119 = vmatprep.subr.bf16.mxu0 %v3887
    %4120 = vmatpush2.bf16.msra.mxu0 %v3886
    %4121 = vmatprep.subr.bf16.mxu0 %v3879
    %4122 = vmatpush2.bf16.msra.mxu0 %v3878
    %4123 = vmatprep.subr.bf16.mxu0 %v3871
    %4124 = vmatpush2.bf16.msra.mxu0 %v3870
    %4125 = vmatprep.subr.bf16.mxu0 %v3863
    %4126 = vmatpush2.bf16.msra.mxu0 %v3862
    %4127 = vmatprep.subr.bf16.mxu0 %v3855
    %4128 = vmatpush2.bf16.msra.mxu0 %v3854
    %4129 = vmatprep.subr.bf16.mxu0 %v3847
    %4130 = vmatpush2.bf16.msra.mxu0 %v3846
    %4131 = vmatprep.subr.bf16.mxu0 %v3839
    %4132 = vmatpush2.bf16.msra.mxu0 %v3838
    %4133 = vmatprep.mubr.bf16.mxu0 %v3211
    %4134 = vmatmul.mubr.bf16.gmra.mxu0 %v3210
    %v4135 = vpop.f32.mrf.mxu0
    %v4136 = vadd.f32 %v3359, %v4135
    %v4137 = vpop.f32.mrf.mxu0
    %v4138 = vadd.f32 %v3363, %v4137
    %v4139 = vpop.f32.mrf.mxu0
    %v4140 = vadd.f32 %v3359, %v4139
    %v4141 = vpop.f32.mrf.mxu0
    %v4142 = vadd.f32 %v3363, %v4141
    %4143 = vmatprep.mubr.bf16.mxu0 %v3213
    %4144 = vmatmul.mubr.bf16.gmra.mxu0 %v3212
    %v4145 = vpop.f32.mrf.mxu0
    %v4146 = vadd.f32 %v3359, %v4145
    %v4147 = vpop.f32.mrf.mxu0
    %v4148 = vadd.f32 %v3363, %v4147
    %v4149 = vpop.f32.mrf.mxu0
    %v4150 = vadd.f32 %v3359, %v4149
    %v4151 = vpop.f32.mrf.mxu0
    %v4152 = vadd.f32 %v3363, %v4151
    %4153 = vmatprep.mubr.bf16.mxu0 %v3215
    %4154 = vmatmul.mubr.bf16.gmra.mxu0 %v3214
    %v4155 = vpop.f32.mrf.mxu0
    %v4156 = vadd.f32 %v3359, %v4155
    %v4157 = vpop.f32.mrf.mxu0
    %v4158 = vadd.f32 %v3363, %v4157
    %v4159 = vpop.f32.mrf.mxu0
    %v4160 = vadd.f32 %v3359, %v4159
    %v4161 = vpop.f32.mrf.mxu0
    %v4162 = vadd.f32 %v3363, %v4161
    %4163 = vmatprep.mubr.bf16.mxu0 %v3217
    %4164 = vmatmul.mubr.bf16.gmra.mxu0 %v3216
    %v4165 = vpop.f32.mrf.mxu0
    %v4166 = vadd.f32 %v3359, %v4165
    %v4167 = vpop.f32.mrf.mxu0
    %v4168 = vadd.f32 %v3363, %v4167
    %v4169 = vpop.f32.mrf.mxu0
    %v4170 = vadd.f32 %v3359, %v4169
    %v4171 = vpop.f32.mrf.mxu0
    %v4172 = vadd.f32 %v3363, %v4171
    %4173 = vdwg.mxu0
    %4174 = vmatprep.subr.bf16.mxu0 %v3833
    %4175 = vmatpush1.bf16.msra.mxu0 %v3832
    %4176 = vmatprep.subr.bf16.mxu0 %v3825
    %4177 = vmatpush1.bf16.msra.mxu0 %v3824
    %4178 = vmatprep.subr.bf16.mxu0 %v3817
    %4179 = vmatpush1.bf16.msra.mxu0 %v3816
    %4180 = vmatprep.subr.bf16.mxu0 %v3809
    %4181 = vmatpush1.bf16.msra.mxu0 %v3808
    %4182 = vmatprep.subr.bf16.mxu0 %v3801
    %4183 = vmatpush1.bf16.msra.mxu0 %v3800
    %4184 = vmatprep.subr.bf16.mxu0 %v3793
    %4185 = vmatpush1.bf16.msra.mxu0 %v3792
    %4186 = vmatprep.subr.bf16.mxu0 %v3785
    %4187 = vmatpush1.bf16.msra.mxu0 %v3784
    %4188 = vmatprep.subr.bf16.mxu0 %v3777
    %4189 = vmatpush1.bf16.msra.mxu0 %v3776
    %4190 = vmatprep.subr.bf16.mxu0 %v3897
    %4191 = vmatpush2.bf16.msra.mxu0 %v3896
    %4192 = vmatprep.subr.bf16.mxu0 %v3889
    %4193 = vmatpush2.bf16.msra.mxu0 %v3888
    %4194 = vmatprep.subr.bf16.mxu0 %v3881
    %4195 = vmatpush2.bf16.msra.mxu0 %v3880
    %4196 = vmatprep.subr.bf16.mxu0 %v3873
    %4197 = vmatpush2.bf16.msra.mxu0 %v3872
    %4198 = vmatprep.subr.bf16.mxu0 %v3865
    %4199 = vmatpush2.bf16.msra.mxu0 %v3864
    %4200 = vmatprep.subr.bf16.mxu0 %v3857
    %4201 = vmatpush2.bf16.msra.mxu0 %v3856
    %4202 = vmatprep.subr.bf16.mxu0 %v3849
    %4203 = vmatpush2.bf16.msra.mxu0 %v3848
    %4204 = vmatprep.subr.bf16.mxu0 %v3841
    %4205 = vmatpush2.bf16.msra.mxu0 %v3840
    %4206 = vmatprep.mubr.bf16.mxu0 %v3211
    %4207 = vmatmul.mubr.bf16.gmra.mxu0 %v3210
    %v4208 = vpop.f32.mrf.mxu0
    %v4209 = vadd.f32 %v3367, %v4208
    %v4210 = vpop.f32.mrf.mxu0
    %v4211 = vadd.f32 %v3371, %v4210
    %v4212 = vpop.f32.mrf.mxu0
    %v4213 = vadd.f32 %v3367, %v4212
    %v4214 = vpop.f32.mrf.mxu0
    %v4215 = vadd.f32 %v3371, %v4214
    %4216 = vmatprep.mubr.bf16.mxu0 %v3213
    %4217 = vmatmul.mubr.bf16.gmra.mxu0 %v3212
    %v4218 = vpop.f32.mrf.mxu0
    %v4219 = vadd.f32 %v3367, %v4218
    %v4220 = vpop.f32.mrf.mxu0
    %v4221 = vadd.f32 %v3371, %v4220
    %v4222 = vpop.f32.mrf.mxu0
    %v4223 = vadd.f32 %v3367, %v4222
    %v4224 = vpop.f32.mrf.mxu0
    %v4225 = vadd.f32 %v3371, %v4224
    %4226 = vmatprep.mubr.bf16.mxu0 %v3215
    %4227 = vmatmul.mubr.bf16.gmra.mxu0 %v3214
    %v4228 = vpop.f32.mrf.mxu0
    %v4229 = vadd.f32 %v3367, %v4228
    %v4230 = vpop.f32.mrf.mxu0
    %v4231 = vadd.f32 %v3371, %v4230
    %v4232 = vpop.f32.mrf.mxu0
    %v4233 = vadd.f32 %v3367, %v4232
    %v4234 = vpop.f32.mrf.mxu0
    %v4235 = vadd.f32 %v3371, %v4234
    %4236 = vmatprep.mubr.bf16.mxu0 %v3217
    %4237 = vmatmul.mubr.bf16.gmra.mxu0 %v3216
    %v4238 = vpop.f32.mrf.mxu0
    %v4239 = vadd.f32 %v3367, %v4238
    %v4240 = vpop.f32.mrf.mxu0
    %v4241 = vadd.f32 %v3371, %v4240
    %v4242 = vpop.f32.mrf.mxu0
    %v4243 = vadd.f32 %v3367, %v4242
    %v4244 = vpop.f32.mrf.mxu0
    %v4245 = vadd.f32 %v3371, %v4244
    %4246 = vdwg.mxu0
    %4247 = vmatprep.subr.bf16.mxu0 %v3835
    %4248 = vmatpush1.bf16.msra.mxu0 %v3834
    %4249 = vmatprep.subr.bf16.mxu0 %v3827
    %4250 = vmatpush1.bf16.msra.mxu0 %v3826
    %4251 = vmatprep.subr.bf16.mxu0 %v3819
    %4252 = vmatpush1.bf16.msra.mxu0 %v3818
    %4253 = vmatprep.subr.bf16.mxu0 %v3811
    %4254 = vmatpush1.bf16.msra.mxu0 %v3810
    %4255 = vmatprep.subr.bf16.mxu0 %v3803
    %4256 = vmatpush1.bf16.msra.mxu0 %v3802
    %4257 = vmatprep.subr.bf16.mxu0 %v3795
    %4258 = vmatpush1.bf16.msra.mxu0 %v3794
    %4259 = vmatprep.subr.bf16.mxu0 %v3787
    %4260 = vmatpush1.bf16.msra.mxu0 %v3786
    %4261 = vmatprep.subr.bf16.mxu0 %v3779
    %4262 = vmatpush1.bf16.msra.mxu0 %v3778
    %4263 = vmatprep.subr.bf16.mxu0 %v3899
    %4264 = vmatpush2.bf16.msra.mxu0 %v3898
    %4265 = vmatprep.subr.bf16.mxu0 %v3891
    %4266 = vmatpush2.bf16.msra.mxu0 %v3890
    %4267 = vmatprep.subr.bf16.mxu0 %v3883
    %4268 = vmatpush2.bf16.msra.mxu0 %v3882
    %4269 = vmatprep.subr.bf16.mxu0 %v3875
    %4270 = vmatpush2.bf16.msra.mxu0 %v3874
    %4271 = vmatprep.subr.bf16.mxu0 %v3867
    %4272 = vmatpush2.bf16.msra.mxu0 %v3866
    %4273 = vmatprep.subr.bf16.mxu0 %v3859
    %4274 = vmatpush2.bf16.msra.mxu0 %v3858
    %4275 = vmatprep.subr.bf16.mxu0 %v3851
    %4276 = vmatpush2.bf16.msra.mxu0 %v3850
    %4277 = vmatprep.subr.bf16.mxu0 %v3843
    %4278 = vmatpush2.bf16.msra.mxu0 %v3842
    %4279 = vmatprep.mubr.bf16.mxu0 %v3211
    %4280 = vmatmul.mubr.bf16.gmra.mxu0 %v3210
    %v4281 = vpop.f32.mrf.mxu0
    %v4282 = vadd.f32 %v3375, %v4281
    %v4283 = vpop.f32.mrf.mxu0
    %v4284 = vadd.f32 %v3379, %v4283
    %v4285 = vpop.f32.mrf.mxu0
    %v4286 = vadd.f32 %v3375, %v4285
    %v4287 = vpop.f32.mrf.mxu0
    %v4288 = vadd.f32 %v3379, %v4287
    %4289 = vmatprep.mubr.bf16.mxu0 %v3213
    %4290 = vmatmul.mubr.bf16.gmra.mxu0 %v3212
    %v4291 = vpop.f32.mrf.mxu0
    %v4292 = vadd.f32 %v3375, %v4291
    %v4293 = vpop.f32.mrf.mxu0
    %v4294 = vadd.f32 %v3379, %v4293
    %v4295 = vpop.f32.mrf.mxu0
    %v4296 = vadd.f32 %v3375, %v4295
    %v4297 = vpop.f32.mrf.mxu0
    %v4298 = vadd.f32 %v3379, %v4297
    %4299 = vmatprep.mubr.bf16.mxu0 %v3215
    %4300 = vmatmul.mubr.bf16.gmra.mxu0 %v3214
    %v4301 = vpop.f32.mrf.mxu0
    %v4302 = vadd.f32 %v3375, %v4301
    %v4303 = vpop.f32.mrf.mxu0
    %v4304 = vadd.f32 %v3379, %v4303
    %v4305 = vpop.f32.mrf.mxu0
    %v4306 = vadd.f32 %v3375, %v4305
    %v4307 = vpop.f32.mrf.mxu0
    %v4308 = vadd.f32 %v3379, %v4307
    %4309 = vmatprep.mubr.bf16.mxu0 %v3217
    %4310 = vmatmul.mubr.bf16.gmra.mxu0 %v3216
    %v4311 = vpop.f32.mrf.mxu0
    %v4312 = vadd.f32 %v3375, %v4311
    %v4313 = vpop.f32.mrf.mxu0
    %v4314 = vadd.f32 %v3379, %v4313
    %v4315 = vpop.f32.mrf.mxu0
    %v4316 = vadd.f32 %v3375, %v4315
    %v4317 = vpop.f32.mrf.mxu0
    %v4318 = vadd.f32 %v3379, %v4317
    %4319 = vdwg.mxu0
    %v4320 = vld [vmem:[#allocation12] sm:$0xff]
    %v4321 = vld [vmem:[#allocation12 + $0x8] sm:$0xff]
    %v4322 = vld [vmem:[#allocation12 + $0x10] sm:$0xff]
    %v4323 = vld [vmem:[#allocation12 + $0x18] sm:$0xff]
    %v4324 = vld [vmem:[#allocation12 + $0x20] sm:$0xff]
    %v4325 = vld [vmem:[#allocation12 + $0x28] sm:$0xff]
    %v4326 = vld [vmem:[#allocation12 + $0x30] sm:$0xff]
    %v4327 = vld [vmem:[#allocation12 + $0x38] sm:$0xff]
    %v4328 = vld [vmem:[#allocation12 + $0x40] sm:$0xff]
    %v4329 = vld [vmem:[#allocation12 + $0x48] sm:$0xff]
    %v4330 = vld [vmem:[#allocation12 + $0x50] sm:$0xff]
    %v4331 = vld [vmem:[#allocation12 + $0x58] sm:$0xff]
    %v4332 = vld [vmem:[#allocation12 + $0x60] sm:$0xff]
    %v4333 = vld [vmem:[#allocation12 + $0x68] sm:$0xff]
    %v4334 = vld [vmem:[#allocation12 + $0x70] sm:$0xff]
    %v4335 = vld [vmem:[#allocation12 + $0x78] sm:$0xff]
    %v4336 = vld [vmem:[#allocation12 + $0x80] sm:$0xff]
    %v4337 = vld [vmem:[#allocation12 + $0x88] sm:$0xff]
    %v4338 = vld [vmem:[#allocation12 + $0x90] sm:$0xff]
    %v4339 = vld [vmem:[#allocation12 + $0x98] sm:$0xff]
    %v4340 = vld [vmem:[#allocation12 + $0xa0] sm:$0xff]
    %v4341 = vld [vmem:[#allocation12 + $0xa8] sm:$0xff]
    %v4342 = vld [vmem:[#allocation12 + $0xb0] sm:$0xff]
    %v4343 = vld [vmem:[#allocation12 + $0xb8] sm:$0xff]
    %v4344 = vld [vmem:[#allocation12 + $0xc0] sm:$0xff]
    %v4345 = vld [vmem:[#allocation12 + $0xc8] sm:$0xff]
    %v4346 = vld [vmem:[#allocation12 + $0xd0] sm:$0xff]
    %v4347 = vld [vmem:[#allocation12 + $0xd8] sm:$0xff]
    %v4348 = vld [vmem:[#allocation12 + $0xe0] sm:$0xff]
    %v4349 = vld [vmem:[#allocation12 + $0xe8] sm:$0xff]
    %v4350 = vld [vmem:[#allocation12 + $0xf0] sm:$0xff]
    %v4351 = vld [vmem:[#allocation12 + $0xf8] sm:$0xff]
    %v4352 = vld [vmem:[#allocation12 + $0x100] sm:$0xff]
    %v4353 = vld [vmem:[#allocation12 + $0x108] sm:$0xff]
    %v4354 = vld [vmem:[#allocation12 + $0x110] sm:$0xff]
    %v4355 = vld [vmem:[#allocation12 + $0x118] sm:$0xff]
    %v4356 = vld [vmem:[#allocation12 + $0x120] sm:$0xff]
    %v4357 = vld [vmem:[#allocation12 + $0x128] sm:$0xff]
    %v4358 = vld [vmem:[#allocation12 + $0x130] sm:$0xff]
    %v4359 = vld [vmem:[#allocation12 + $0x138] sm:$0xff]
    %v4360 = vld [vmem:[#allocation12 + $0x140] sm:$0xff]
    %v4361 = vld [vmem:[#allocation12 + $0x148] sm:$0xff]
    %v4362 = vld [vmem:[#allocation12 + $0x150] sm:$0xff]
    %v4363 = vld [vmem:[#allocation12 + $0x158] sm:$0xff]
    %v4364 = vld [vmem:[#allocation12 + $0x160] sm:$0xff]
    %v4365 = vld [vmem:[#allocation12 + $0x168] sm:$0xff]
    %v4366 = vld [vmem:[#allocation12 + $0x170] sm:$0xff]
    %v4367 = vld [vmem:[#allocation12 + $0x178] sm:$0xff]
    %v4368 = vld [vmem:[#allocation12 + $0x180] sm:$0xff]
    %v4369 = vld [vmem:[#allocation12 + $0x188] sm:$0xff]
    %v4370 = vld [vmem:[#allocation12 + $0x190] sm:$0xff]
    %v4371 = vld [vmem:[#allocation12 + $0x198] sm:$0xff]
    %v4372 = vld [vmem:[#allocation12 + $0x1a0] sm:$0xff]
    %v4373 = vld [vmem:[#allocation12 + $0x1a8] sm:$0xff]
    %v4374 = vld [vmem:[#allocation12 + $0x1b0] sm:$0xff]
    %v4375 = vld [vmem:[#allocation12 + $0x1b8] sm:$0xff]
    %v4376 = vld [vmem:[#allocation12 + $0x1c0] sm:$0xff]
    %v4377 = vld [vmem:[#allocation12 + $0x1c8] sm:$0xff]
    %v4378 = vld [vmem:[#allocation12 + $0x1d0] sm:$0xff]
    %v4379 = vld [vmem:[#allocation12 + $0x1d8] sm:$0xff]
    %v4380 = vld [vmem:[#allocation12 + $0x1e0] sm:$0xff]
    %v4381 = vld [vmem:[#allocation12 + $0x1e8] sm:$0xff]
    %v4382 = vld [vmem:[#allocation12 + $0x1f0] sm:$0xff]
    %v4383 = vld [vmem:[#allocation12 + $0x1f8] sm:$0xff]
    %v4384 = vld [vmem:[#allocation12 + $0x200] sm:$0xff]
    %v4385 = vld [vmem:[#allocation12 + $0x208] sm:$0xff]
    %v4386 = vld [vmem:[#allocation12 + $0x210] sm:$0xff]
    %v4387 = vld [vmem:[#allocation12 + $0x218] sm:$0xff]
    %v4388 = vld [vmem:[#allocation12 + $0x220] sm:$0xff]
    %v4389 = vld [vmem:[#allocation12 + $0x228] sm:$0xff]
    %v4390 = vld [vmem:[#allocation12 + $0x230] sm:$0xff]
    %v4391 = vld [vmem:[#allocation12 + $0x238] sm:$0xff]
    %v4392 = vld [vmem:[#allocation12 + $0x240] sm:$0xff]
    %v4393 = vld [vmem:[#allocation12 + $0x248] sm:$0xff]
    %v4394 = vld [vmem:[#allocation12 + $0x250] sm:$0xff]
    %v4395 = vld [vmem:[#allocation12 + $0x258] sm:$0xff]
    %v4396 = vld [vmem:[#allocation12 + $0x260] sm:$0xff]
    %v4397 = vld [vmem:[#allocation12 + $0x268] sm:$0xff]
    %v4398 = vld [vmem:[#allocation12 + $0x270] sm:$0xff]
    %v4399 = vld [vmem:[#allocation12 + $0x278] sm:$0xff]
    %v4400 = vld [vmem:[#allocation12 + $0x280] sm:$0xff]
    %v4401 = vld [vmem:[#allocation12 + $0x288] sm:$0xff]
    %v4402 = vld [vmem:[#allocation12 + $0x290] sm:$0xff]
    %v4403 = vld [vmem:[#allocation12 + $0x298] sm:$0xff]
    %v4404 = vld [vmem:[#allocation12 + $0x2a0] sm:$0xff]
    %v4405 = vld [vmem:[#allocation12 + $0x2a8] sm:$0xff]
    %v4406 = vld [vmem:[#allocation12 + $0x2b0] sm:$0xff]
    %v4407 = vld [vmem:[#allocation12 + $0x2b8] sm:$0xff]
    %v4408 = vld [vmem:[#allocation12 + $0x2c0] sm:$0xff]
    %v4409 = vld [vmem:[#allocation12 + $0x2c8] sm:$0xff]
    %v4410 = vld [vmem:[#allocation12 + $0x2d0] sm:$0xff]
    %v4411 = vld [vmem:[#allocation12 + $0x2d8] sm:$0xff]
    %v4412 = vld [vmem:[#allocation12 + $0x2e0] sm:$0xff]
    %v4413 = vld [vmem:[#allocation12 + $0x2e8] sm:$0xff]
    %v4414 = vld [vmem:[#allocation12 + $0x2f0] sm:$0xff]
    %v4415 = vld [vmem:[#allocation12 + $0x2f8] sm:$0xff]
    %v4416 = vld [vmem:[#allocation12 + $0x300] sm:$0xff]
    %v4417 = vld [vmem:[#allocation12 + $0x308] sm:$0xff]
    %v4418 = vld [vmem:[#allocation12 + $0x310] sm:$0xff]
    %v4419 = vld [vmem:[#allocation12 + $0x318] sm:$0xff]
    %v4420 = vld [vmem:[#allocation12 + $0x320] sm:$0xff]
    %v4421 = vld [vmem:[#allocation12 + $0x328] sm:$0xff]
    %v4422 = vld [vmem:[#allocation12 + $0x330] sm:$0xff]
    %v4423 = vld [vmem:[#allocation12 + $0x338] sm:$0xff]
    %v4424 = vld [vmem:[#allocation12 + $0x340] sm:$0xff]
    %v4425 = vld [vmem:[#allocation12 + $0x348] sm:$0xff]
    %v4426 = vld [vmem:[#allocation12 + $0x350] sm:$0xff]
    %v4427 = vld [vmem:[#allocation12 + $0x358] sm:$0xff]
    %v4428 = vld [vmem:[#allocation12 + $0x360] sm:$0xff]
    %v4429 = vld [vmem:[#allocation12 + $0x368] sm:$0xff]
    %v4430 = vld [vmem:[#allocation12 + $0x370] sm:$0xff]
    %v4431 = vld [vmem:[#allocation12 + $0x378] sm:$0xff]
    %v4432 = vld [vmem:[#allocation12 + $0x380] sm:$0xff]
    %v4433 = vld [vmem:[#allocation12 + $0x388] sm:$0xff]
    %v4434 = vld [vmem:[#allocation12 + $0x390] sm:$0xff]
    %v4435 = vld [vmem:[#allocation12 + $0x398] sm:$0xff]
    %v4436 = vld [vmem:[#allocation12 + $0x3a0] sm:$0xff]
    %v4437 = vld [vmem:[#allocation12 + $0x3a8] sm:$0xff]
    %v4438 = vld [vmem:[#allocation12 + $0x3b0] sm:$0xff]
    %v4439 = vld [vmem:[#allocation12 + $0x3b8] sm:$0xff]
    %v4440 = vld [vmem:[#allocation12 + $0x3c0] sm:$0xff]
    %v4441 = vld [vmem:[#allocation12 + $0x3c8] sm:$0xff]
    %v4442 = vld [vmem:[#allocation12 + $0x3d0] sm:$0xff]
    %v4443 = vld [vmem:[#allocation12 + $0x3d8] sm:$0xff]
    %v4444 = vld [vmem:[#allocation12 + $0x3e0] sm:$0xff]
    %v4445 = vld [vmem:[#allocation12 + $0x3e8] sm:$0xff]
    %v4446 = vld [vmem:[#allocation12 + $0x3f0] sm:$0xff]
    %v4447 = vld [vmem:[#allocation12 + $0x3f8] sm:$0xff]
    %v4576 = vunpack.c.l.b16 %v4320
    %v4577 = vunpack.c.h.b16 %v4320
    %v4578 = vunpack.c.l.b16 %v4321
    %v4579 = vunpack.c.h.b16 %v4321
    %v4580 = vunpack.c.l.b16 %v4322
    %v4581 = vunpack.c.h.b16 %v4322
    %v4582 = vunpack.c.l.b16 %v4323
    %v4583 = vunpack.c.h.b16 %v4323
    %v4584 = vunpack.c.l.b16 %v4324
    %v4585 = vunpack.c.h.b16 %v4324
    %v4586 = vunpack.c.l.b16 %v4325
    %v4587 = vunpack.c.h.b16 %v4325
    %v4588 = vunpack.c.l.b16 %v4326
    %v4589 = vunpack.c.h.b16 %v4326
    %v4590 = vunpack.c.l.b16 %v4327
    %v4591 = vunpack.c.h.b16 %v4327
    %v4592 = vunpack.c.l.b16 %v4328
    %v4593 = vunpack.c.h.b16 %v4328
    %v4594 = vunpack.c.l.b16 %v4329
    %v4595 = vunpack.c.h.b16 %v4329
    %v4596 = vunpack.c.l.b16 %v4330
    %v4597 = vunpack.c.h.b16 %v4330
    %v4598 = vunpack.c.l.b16 %v4331
    %v4599 = vunpack.c.h.b16 %v4331
    %v4600 = vunpack.c.l.b16 %v4332
    %v4601 = vunpack.c.h.b16 %v4332
    %v4602 = vunpack.c.l.b16 %v4333
    %v4603 = vunpack.c.h.b16 %v4333
    %v4604 = vunpack.c.l.b16 %v4334
    %v4605 = vunpack.c.h.b16 %v4334
    %v4606 = vunpack.c.l.b16 %v4335
    %v4607 = vunpack.c.h.b16 %v4335
    %v4608 = vunpack.c.l.b16 %v4336
    %v4609 = vunpack.c.h.b16 %v4336
    %v4610 = vunpack.c.l.b16 %v4337
    %v4611 = vunpack.c.h.b16 %v4337
    %v4612 = vunpack.c.l.b16 %v4338
    %v4613 = vunpack.c.h.b16 %v4338
    %v4614 = vunpack.c.l.b16 %v4339
    %v4615 = vunpack.c.h.b16 %v4339
    %v4616 = vunpack.c.l.b16 %v4340
    %v4617 = vunpack.c.h.b16 %v4340
    %v4618 = vunpack.c.l.b16 %v4341
    %v4619 = vunpack.c.h.b16 %v4341
    %v4620 = vunpack.c.l.b16 %v4342
    %v4621 = vunpack.c.h.b16 %v4342
    %v4622 = vunpack.c.l.b16 %v4343
    %v4623 = vunpack.c.h.b16 %v4343
    %v4624 = vunpack.c.l.b16 %v4344
    %v4625 = vunpack.c.h.b16 %v4344
    %v4626 = vunpack.c.l.b16 %v4345
    %v4627 = vunpack.c.h.b16 %v4345
    %v4628 = vunpack.c.l.b16 %v4346
    %v4629 = vunpack.c.h.b16 %v4346
    %v4630 = vunpack.c.l.b16 %v4347
    %v4631 = vunpack.c.h.b16 %v4347
    %v4632 = vunpack.c.l.b16 %v4348
    %v4633 = vunpack.c.h.b16 %v4348
    %v4634 = vunpack.c.l.b16 %v4349
    %v4635 = vunpack.c.h.b16 %v4349
    %v4636 = vunpack.c.l.b16 %v4350
    %v4637 = vunpack.c.h.b16 %v4350
    %v4638 = vunpack.c.l.b16 %v4351
    %v4639 = vunpack.c.h.b16 %v4351
    %v4640 = vunpack.c.l.b16 %v4352
    %v4641 = vunpack.c.h.b16 %v4352
    %v4642 = vunpack.c.l.b16 %v4353
    %v4643 = vunpack.c.h.b16 %v4353
    %v4644 = vunpack.c.l.b16 %v4354
    %v4645 = vunpack.c.h.b16 %v4354
    %v4646 = vunpack.c.l.b16 %v4355
    %v4647 = vunpack.c.h.b16 %v4355
    %v4648 = vunpack.c.l.b16 %v4356
    %v4649 = vunpack.c.h.b16 %v4356
    %v4650 = vunpack.c.l.b16 %v4357
    %v4651 = vunpack.c.h.b16 %v4357
    %v4652 = vunpack.c.l.b16 %v4358
    %v4653 = vunpack.c.h.b16 %v4358
    %v4654 = vunpack.c.l.b16 %v4359
    %v4655 = vunpack.c.h.b16 %v4359
    %v4656 = vunpack.c.l.b16 %v4360
    %v4657 = vunpack.c.h.b16 %v4360
    %v4658 = vunpack.c.l.b16 %v4361
    %v4659 = vunpack.c.h.b16 %v4361
    %v4660 = vunpack.c.l.b16 %v4362
    %v4661 = vunpack.c.h.b16 %v4362
    %v4662 = vunpack.c.l.b16 %v4363
    %v4663 = vunpack.c.h.b16 %v4363
    %v4664 = vunpack.c.l.b16 %v4364
    %v4665 = vunpack.c.h.b16 %v4364
    %v4666 = vunpack.c.l.b16 %v4365
    %v4667 = vunpack.c.h.b16 %v4365
    %v4668 = vunpack.c.l.b16 %v4366
    %v4669 = vunpack.c.h.b16 %v4366
    %v4670 = vunpack.c.l.b16 %v4367
    %v4671 = vunpack.c.h.b16 %v4367
    %v4672 = vunpack.c.l.b16 %v4368
    %v4673 = vunpack.c.h.b16 %v4368
    %v4674 = vunpack.c.l.b16 %v4369
    %v4675 = vunpack.c.h.b16 %v4369
    %v4676 = vunpack.c.l.b16 %v4370
    %v4677 = vunpack.c.h.b16 %v4370
    %v4678 = vunpack.c.l.b16 %v4371
    %v4679 = vunpack.c.h.b16 %v4371
    %v4680 = vunpack.c.l.b16 %v4372
    %v4681 = vunpack.c.h.b16 %v4372
    %v4682 = vunpack.c.l.b16 %v4373
    %v4683 = vunpack.c.h.b16 %v4373
    %v4684 = vunpack.c.l.b16 %v4374
    %v4685 = vunpack.c.h.b16 %v4374
    %v4686 = vunpack.c.l.b16 %v4375
    %v4687 = vunpack.c.h.b16 %v4375
    %v4688 = vunpack.c.l.b16 %v4376
    %v4689 = vunpack.c.h.b16 %v4376
    %v4690 = vunpack.c.l.b16 %v4377
    %v4691 = vunpack.c.h.b16 %v4377
    %v4692 = vunpack.c.l.b16 %v4378
    %v4693 = vunpack.c.h.b16 %v4378
    %v4694 = vunpack.c.l.b16 %v4379
    %v4695 = vunpack.c.h.b16 %v4379
    %v4696 = vunpack.c.l.b16 %v4380
    %v4697 = vunpack.c.h.b16 %v4380
    %v4698 = vunpack.c.l.b16 %v4381
    %v4699 = vunpack.c.h.b16 %v4381
    %v4700 = vunpack.c.l.b16 %v4382
    %v4701 = vunpack.c.h.b16 %v4382
    %v4702 = vunpack.c.l.b16 %v4383
    %v4703 = vunpack.c.h.b16 %v4383
    %v4704 = vunpack.c.l.b16 %v4384
    %v4705 = vunpack.c.h.b16 %v4384
    %v4706 = vunpack.c.l.b16 %v4385
    %v4707 = vunpack.c.h.b16 %v4385
    %v4708 = vunpack.c.l.b16 %v4386
    %v4709 = vunpack.c.h.b16 %v4386
    %v4710 = vunpack.c.l.b16 %v4387
    %v4711 = vunpack.c.h.b16 %v4387
    %v4712 = vunpack.c.l.b16 %v4388
    %v4713 = vunpack.c.h.b16 %v4388
    %v4714 = vunpack.c.l.b16 %v4389
    %v4715 = vunpack.c.h.b16 %v4389
    %v4716 = vunpack.c.l.b16 %v4390
    %v4717 = vunpack.c.h.b16 %v4390
    %v4718 = vunpack.c.l.b16 %v4391
    %v4719 = vunpack.c.h.b16 %v4391
    %v4720 = vunpack.c.l.b16 %v4392
    %v4721 = vunpack.c.h.b16 %v4392
    %v4722 = vunpack.c.l.b16 %v4393
    %v4723 = vunpack.c.h.b16 %v4393
    %v4724 = vunpack.c.l.b16 %v4394
    %v4725 = vunpack.c.h.b16 %v4394
    %v4726 = vunpack.c.l.b16 %v4395
    %v4727 = vunpack.c.h.b16 %v4395
    %v4728 = vunpack.c.l.b16 %v4396
    %v4729 = vunpack.c.h.b16 %v4396
    %v4730 = vunpack.c.l.b16 %v4397
    %v4731 = vunpack.c.h.b16 %v4397
    %v4732 = vunpack.c.l.b16 %v4398
    %v4733 = vunpack.c.h.b16 %v4398
    %v4734 = vunpack.c.l.b16 %v4399
    %v4735 = vunpack.c.h.b16 %v4399
    %v4736 = vunpack.c.l.b16 %v4400
    %v4737 = vunpack.c.h.b16 %v4400
    %v4738 = vunpack.c.l.b16 %v4401
    %v4739 = vunpack.c.h.b16 %v4401
    %v4740 = vunpack.c.l.b16 %v4402
    %v4741 = vunpack.c.h.b16 %v4402
    %v4742 = vunpack.c.l.b16 %v4403
    %v4743 = vunpack.c.h.b16 %v4403
    %v4744 = vunpack.c.l.b16 %v4404
    %v4745 = vunpack.c.h.b16 %v4404
    %v4746 = vunpack.c.l.b16 %v4405
    %v4747 = vunpack.c.h.b16 %v4405
    %v4748 = vunpack.c.l.b16 %v4406
    %v4749 = vunpack.c.h.b16 %v4406
    %v4750 = vunpack.c.l.b16 %v4407
    %v4751 = vunpack.c.h.b16 %v4407
    %v4752 = vunpack.c.l.b16 %v4408
    %v4753 = vunpack.c.h.b16 %v4408
    %v4754 = vunpack.c.l.b16 %v4409
    %v4755 = vunpack.c.h.b16 %v4409
    %v4756 = vunpack.c.l.b16 %v4410
    %v4757 = vunpack.c.h.b16 %v4410
    %v4758 = vunpack.c.l.b16 %v4411
    %v4759 = vunpack.c.h.b16 %v4411
    %v4760 = vunpack.c.l.b16 %v4412
    %v4761 = vunpack.c.h.b16 %v4412
    %v4762 = vunpack.c.l.b16 %v4413
    %v4763 = vunpack.c.h.b16 %v4413
    %v4764 = vunpack.c.l.b16 %v4414
    %v4765 = vunpack.c.h.b16 %v4414
    %v4766 = vunpack.c.l.b16 %v4415
    %v4767 = vunpack.c.h.b16 %v4415
    %v4768 = vunpack.c.l.b16 %v4416
    %v4769 = vunpack.c.h.b16 %v4416
    %v4770 = vunpack.c.l.b16 %v4417
    %v4771 = vunpack.c.h.b16 %v4417
    %v4772 = vunpack.c.l.b16 %v4418
    %v4773 = vunpack.c.h.b16 %v4418
    %v4774 = vunpack.c.l.b16 %v4419
    %v4775 = vunpack.c.h.b16 %v4419
    %v4776 = vunpack.c.l.b16 %v4420
    %v4777 = vunpack.c.h.b16 %v4420
    %v4778 = vunpack.c.l.b16 %v4421
    %v4779 = vunpack.c.h.b16 %v4421
    %v4780 = vunpack.c.l.b16 %v4422
    %v4781 = vunpack.c.h.b16 %v4422
    %v4782 = vunpack.c.l.b16 %v4423
    %v4783 = vunpack.c.h.b16 %v4423
    %v4784 = vunpack.c.l.b16 %v4424
    %v4785 = vunpack.c.h.b16 %v4424
    %v4786 = vunpack.c.l.b16 %v4425
    %v4787 = vunpack.c.h.b16 %v4425
    %v4788 = vunpack.c.l.b16 %v4426
    %v4789 = vunpack.c.h.b16 %v4426
    %v4790 = vunpack.c.l.b16 %v4427
    %v4791 = vunpack.c.h.b16 %v4427
    %v4792 = vunpack.c.l.b16 %v4428
    %v4793 = vunpack.c.h.b16 %v4428
    %v4794 = vunpack.c.l.b16 %v4429
    %v4795 = vunpack.c.h.b16 %v4429
    %v4796 = vunpack.c.l.b16 %v4430
    %v4797 = vunpack.c.h.b16 %v4430
    %v4798 = vunpack.c.l.b16 %v4431
    %v4799 = vunpack.c.h.b16 %v4431
    %v4800 = vunpack.c.l.b16 %v4432
    %v4801 = vunpack.c.h.b16 %v4432
    %v4802 = vunpack.c.l.b16 %v4433
    %v4803 = vunpack.c.h.b16 %v4433
    %v4804 = vunpack.c.l.b16 %v4434
    %v4805 = vunpack.c.h.b16 %v4434
    %v4806 = vunpack.c.l.b16 %v4435
    %v4807 = vunpack.c.h.b16 %v4435
    %v4808 = vunpack.c.l.b16 %v4436
    %v4809 = vunpack.c.h.b16 %v4436
    %v4810 = vunpack.c.l.b16 %v4437
    %v4811 = vunpack.c.h.b16 %v4437
    %v4812 = vunpack.c.l.b16 %v4438
    %v4813 = vunpack.c.h.b16 %v4438
    %v4814 = vunpack.c.l.b16 %v4439
    %v4815 = vunpack.c.h.b16 %v4439
    %v4816 = vunpack.c.l.b16 %v4440
    %v4817 = vunpack.c.h.b16 %v4440
    %v4818 = vunpack.c.l.b16 %v4441
    %v4819 = vunpack.c.h.b16 %v4441
    %v4820 = vunpack.c.l.b16 %v4442
    %v4821 = vunpack.c.h.b16 %v4442
    %v4822 = vunpack.c.l.b16 %v4443
    %v4823 = vunpack.c.h.b16 %v4443
    %v4824 = vunpack.c.l.b16 %v4444
    %v4825 = vunpack.c.h.b16 %v4444
    %v4826 = vunpack.c.l.b16 %v4445
    %v4827 = vunpack.c.h.b16 %v4445
    %v4828 = vunpack.c.l.b16 %v4446
    %v4829 = vunpack.c.h.b16 %v4446
    %v4830 = vunpack.c.l.b16 %v4447
    %v4831 = vunpack.c.h.b16 %v4447
    %v4832 = vpack.c.b16 %v4584, %v4576
    %v4833 = vpack.c.b16 %v4585, %v4577
    %v4834 = vpack.c.b16 %v4586, %v4578
    %v4835 = vpack.c.b16 %v4587, %v4579
    %v4836 = vpack.c.b16 %v4588, %v4580
    %v4837 = vpack.c.b16 %v4589, %v4581
    %v4838 = vpack.c.b16 %v4590, %v4582
    %v4839 = vpack.c.b16 %v4591, %v4583
    %v4840 = vpack.c.b16 %v4600, %v4592
    %v4841 = vpack.c.b16 %v4601, %v4593
    %v4842 = vpack.c.b16 %v4602, %v4594
    %v4843 = vpack.c.b16 %v4603, %v4595
    %v4844 = vpack.c.b16 %v4604, %v4596
    %v4845 = vpack.c.b16 %v4605, %v4597
    %v4846 = vpack.c.b16 %v4606, %v4598
    %v4847 = vpack.c.b16 %v4607, %v4599
    %v4848 = vpack.c.b16 %v4616, %v4608
    %v4849 = vpack.c.b16 %v4617, %v4609
    %v4850 = vpack.c.b16 %v4618, %v4610
    %v4851 = vpack.c.b16 %v4619, %v4611
    %v4852 = vpack.c.b16 %v4620, %v4612
    %v4853 = vpack.c.b16 %v4621, %v4613
    %v4854 = vpack.c.b16 %v4622, %v4614
    %v4855 = vpack.c.b16 %v4623, %v4615
    %v4856 = vpack.c.b16 %v4632, %v4624
    %v4857 = vpack.c.b16 %v4633, %v4625
    %v4858 = vpack.c.b16 %v4634, %v4626
    %v4859 = vpack.c.b16 %v4635, %v4627
    %v4860 = vpack.c.b16 %v4636, %v4628
    %v4861 = vpack.c.b16 %v4637, %v4629
    %v4862 = vpack.c.b16 %v4638, %v4630
    %v4863 = vpack.c.b16 %v4639, %v4631
    %v4864 = vpack.c.b16 %v4648, %v4640
    %v4865 = vpack.c.b16 %v4649, %v4641
    %v4866 = vpack.c.b16 %v4650, %v4642
    %v4867 = vpack.c.b16 %v4651, %v4643
    %v4868 = vpack.c.b16 %v4652, %v4644
    %v4869 = vpack.c.b16 %v4653, %v4645
    %v4870 = vpack.c.b16 %v4654, %v4646
    %v4871 = vpack.c.b16 %v4655, %v4647
    %v4872 = vpack.c.b16 %v4664, %v4656
    %v4873 = vpack.c.b16 %v4665, %v4657
    %v4874 = vpack.c.b16 %v4666, %v4658
    %v4875 = vpack.c.b16 %v4667, %v4659
    %v4876 = vpack.c.b16 %v4668, %v4660
    %v4877 = vpack.c.b16 %v4669, %v4661
    %v4878 = vpack.c.b16 %v4670, %v4662
    %v4879 = vpack.c.b16 %v4671, %v4663
    %v4880 = vpack.c.b16 %v4680, %v4672
    %v4881 = vpack.c.b16 %v4681, %v4673
    %v4882 = vpack.c.b16 %v4682, %v4674
    %v4883 = vpack.c.b16 %v4683, %v4675
    %v4884 = vpack.c.b16 %v4684, %v4676
    %v4885 = vpack.c.b16 %v4685, %v4677
    %v4886 = vpack.c.b16 %v4686, %v4678
    %v4887 = vpack.c.b16 %v4687, %v4679
    %v4888 = vpack.c.b16 %v4696, %v4688
    %v4889 = vpack.c.b16 %v4697, %v4689
    %v4890 = vpack.c.b16 %v4698, %v4690
    %v4891 = vpack.c.b16 %v4699, %v4691
    %v4892 = vpack.c.b16 %v4700, %v4692
    %v4893 = vpack.c.b16 %v4701, %v4693
    %v4894 = vpack.c.b16 %v4702, %v4694
    %v4895 = vpack.c.b16 %v4703, %v4695
    %v4896 = vpack.c.b16 %v4712, %v4704
    %v4897 = vpack.c.b16 %v4713, %v4705
    %v4898 = vpack.c.b16 %v4714, %v4706
    %v4899 = vpack.c.b16 %v4715, %v4707
    %v4900 = vpack.c.b16 %v4716, %v4708
    %v4901 = vpack.c.b16 %v4717, %v4709
    %v4902 = vpack.c.b16 %v4718, %v4710
    %v4903 = vpack.c.b16 %v4719, %v4711
    %v4904 = vpack.c.b16 %v4728, %v4720
    %v4905 = vpack.c.b16 %v4729, %v4721
    %v4906 = vpack.c.b16 %v4730, %v4722
    %v4907 = vpack.c.b16 %v4731, %v4723
    %v4908 = vpack.c.b16 %v4732, %v4724
    %v4909 = vpack.c.b16 %v4733, %v4725
    %v4910 = vpack.c.b16 %v4734, %v4726
    %v4911 = vpack.c.b16 %v4735, %v4727
    %v4912 = vpack.c.b16 %v4744, %v4736
    %v4913 = vpack.c.b16 %v4745, %v4737
    %v4914 = vpack.c.b16 %v4746, %v4738
    %v4915 = vpack.c.b16 %v4747, %v4739
    %v4916 = vpack.c.b16 %v4748, %v4740
    %v4917 = vpack.c.b16 %v4749, %v4741
    %v4918 = vpack.c.b16 %v4750, %v4742
    %v4919 = vpack.c.b16 %v4751, %v4743
    %v4920 = vpack.c.b16 %v4760, %v4752
    %v4921 = vpack.c.b16 %v4761, %v4753
    %v4922 = vpack.c.b16 %v4762, %v4754
    %v4923 = vpack.c.b16 %v4763, %v4755
    %v4924 = vpack.c.b16 %v4764, %v4756
    %v4925 = vpack.c.b16 %v4765, %v4757
    %v4926 = vpack.c.b16 %v4766, %v4758
    %v4927 = vpack.c.b16 %v4767, %v4759
    %v4928 = vpack.c.b16 %v4776, %v4768
    %v4929 = vpack.c.b16 %v4777, %v4769
    %v4930 = vpack.c.b16 %v4778, %v4770
    %v4931 = vpack.c.b16 %v4779, %v4771
    %v4932 = vpack.c.b16 %v4780, %v4772
    %v4933 = vpack.c.b16 %v4781, %v4773
    %v4934 = vpack.c.b16 %v4782, %v4774
    %v4935 = vpack.c.b16 %v4783, %v4775
    %v4936 = vpack.c.b16 %v4792, %v4784
    %v4937 = vpack.c.b16 %v4793, %v4785
    %v4938 = vpack.c.b16 %v4794, %v4786
    %v4939 = vpack.c.b16 %v4795, %v4787
    %v4940 = vpack.c.b16 %v4796, %v4788
    %v4941 = vpack.c.b16 %v4797, %v4789
    %v4942 = vpack.c.b16 %v4798, %v4790
    %v4943 = vpack.c.b16 %v4799, %v4791
    %v4944 = vpack.c.b16 %v4808, %v4800
    %v4945 = vpack.c.b16 %v4809, %v4801
    %v4946 = vpack.c.b16 %v4810, %v4802
    %v4947 = vpack.c.b16 %v4811, %v4803
    %v4948 = vpack.c.b16 %v4812, %v4804
    %v4949 = vpack.c.b16 %v4813, %v4805
    %v4950 = vpack.c.b16 %v4814, %v4806
    %v4951 = vpack.c.b16 %v4815, %v4807
    %v4952 = vpack.c.b16 %v4824, %v4816
    %v4953 = vpack.c.b16 %v4825, %v4817
    %v4954 = vpack.c.b16 %v4826, %v4818
    %v4955 = vpack.c.b16 %v4827, %v4819
    %v4956 = vpack.c.b16 %v4828, %v4820
    %v4957 = vpack.c.b16 %v4829, %v4821
    %v4958 = vpack.c.b16 %v4830, %v4822
    %v4959 = vpack.c.b16 %v4831, %v4823
    %5088 = vmatprep.subr.bf16.mxu0 %v4889
    %5089 = vmatpush1.bf16.msra.mxu0 %v4888
    %5090 = vmatprep.subr.bf16.mxu0 %v4881
    %5091 = vmatpush1.bf16.msra.mxu0 %v4880
    %5092 = vmatprep.subr.bf16.mxu0 %v4873
    %5093 = vmatpush1.bf16.msra.mxu0 %v4872
    %5094 = vmatprep.subr.bf16.mxu0 %v4865
    %5095 = vmatpush1.bf16.msra.mxu0 %v4864
    %5096 = vmatprep.subr.bf16.mxu0 %v4857
    %5097 = vmatpush1.bf16.msra.mxu0 %v4856
    %5098 = vmatprep.subr.bf16.mxu0 %v4849
    %5099 = vmatpush1.bf16.msra.mxu0 %v4848
    %5100 = vmatprep.subr.bf16.mxu0 %v4841
    %5101 = vmatpush1.bf16.msra.mxu0 %v4840
    %5102 = vmatprep.subr.bf16.mxu0 %v4833
    %5103 = vmatpush1.bf16.msra.mxu0 %v4832
    %5104 = vmatprep.subr.bf16.mxu0 %v4953
    %5105 = vmatpush2.bf16.msra.mxu0 %v4952
    %5106 = vmatprep.subr.bf16.mxu0 %v4945
    %5107 = vmatpush2.bf16.msra.mxu0 %v4944
    %5108 = vmatprep.subr.bf16.mxu0 %v4937
    %5109 = vmatpush2.bf16.msra.mxu0 %v4936
    %5110 = vmatprep.subr.bf16.mxu0 %v4929
    %5111 = vmatpush2.bf16.msra.mxu0 %v4928
    %5112 = vmatprep.subr.bf16.mxu0 %v4921
    %5113 = vmatpush2.bf16.msra.mxu0 %v4920
    %5114 = vmatprep.subr.bf16.mxu0 %v4913
    %5115 = vmatpush2.bf16.msra.mxu0 %v4912
    %5116 = vmatprep.subr.bf16.mxu0 %v4905
    %5117 = vmatpush2.bf16.msra.mxu0 %v4904
    %5118 = vmatprep.subr.bf16.mxu0 %v4897
    %5119 = vmatpush2.bf16.msra.mxu0 %v4896
    %5120 = vmatprep.mubr.bf16.mxu0 0
    %5121 = vmatmul.mubr.bf16.gmra.mxu0 0
    %v5122 = vpop.f32.mrf.mxu0
    %v5123 = vadd.f32 0.0, %v5122
    %v5124 = vpop.f32.mrf.mxu0
    %v5125 = vadd.f32 0.0, %v5124
    %v5126 = vpop.f32.mrf.mxu0
    %v5127 = vpop.f32.mrf.mxu0
    %5128 = vdwg.mxu0
    %5129 = vmatprep.subr.bf16.mxu0 %v4891
    %5130 = vmatpush1.bf16.msra.mxu0 %v4890
    %5131 = vmatprep.subr.bf16.mxu0 %v4883
    %5132 = vmatpush1.bf16.msra.mxu0 %v4882
    %5133 = vmatprep.subr.bf16.mxu0 %v4875
    %5134 = vmatpush1.bf16.msra.mxu0 %v4874
    %5135 = vmatprep.subr.bf16.mxu0 %v4867
    %5136 = vmatpush1.bf16.msra.mxu0 %v4866
    %5137 = vmatprep.subr.bf16.mxu0 %v4859
    %5138 = vmatpush1.bf16.msra.mxu0 %v4858
    %5139 = vmatprep.subr.bf16.mxu0 %v4851
    %5140 = vmatpush1.bf16.msra.mxu0 %v4850
    %5141 = vmatprep.subr.bf16.mxu0 %v4843
    %5142 = vmatpush1.bf16.msra.mxu0 %v4842
    %5143 = vmatprep.subr.bf16.mxu0 %v4835
    %5144 = vmatpush1.bf16.msra.mxu0 %v4834
    %5145 = vmatprep.subr.bf16.mxu0 %v4955
    %5146 = vmatpush2.bf16.msra.mxu0 %v4954
    %5147 = vmatprep.subr.bf16.mxu0 %v4947
    %5148 = vmatpush2.bf16.msra.mxu0 %v4946
    %5149 = vmatprep.subr.bf16.mxu0 %v4939
    %5150 = vmatpush2.bf16.msra.mxu0 %v4938
    %5151 = vmatprep.subr.bf16.mxu0 %v4931
    %5152 = vmatpush2.bf16.msra.mxu0 %v4930
    %5153 = vmatprep.subr.bf16.mxu0 %v4923
    %5154 = vmatpush2.bf16.msra.mxu0 %v4922
    %5155 = vmatprep.subr.bf16.mxu0 %v4915
    %5156 = vmatpush2.bf16.msra.mxu0 %v4914
    %5157 = vmatprep.subr.bf16.mxu0 %v4907
    %5158 = vmatpush2.bf16.msra.mxu0 %v4906
    %5159 = vmatprep.subr.bf16.mxu0 %v4899
    %5160 = vmatpush2.bf16.msra.mxu0 %v4898
    %5161 = vmatprep.mubr.bf16.mxu0 0
    %5162 = vmatmul.mubr.bf16.gmra.mxu0 0
    %v5163 = vpop.f32.mrf.mxu0
    %v5164 = vadd.f32 0.0, %v5163
    %v5165 = vpop.f32.mrf.mxu0
    %v5166 = vadd.f32 0.0, %v5165
    %v5167 = vpop.f32.mrf.mxu0
    %v5168 = vpop.f32.mrf.mxu0
    %5169 = vdwg.mxu0
    %5170 = vmatprep.subr.bf16.mxu0 %v4893
    %5171 = vmatpush1.bf16.msra.mxu0 %v4892
    %5172 = vmatprep.subr.bf16.mxu0 %v4885
    %5173 = vmatpush1.bf16.msra.mxu0 %v4884
    %5174 = vmatprep.subr.bf16.mxu0 %v4877
    %5175 = vmatpush1.bf16.msra.mxu0 %v4876
    %5176 = vmatprep.subr.bf16.mxu0 %v4869
    %5177 = vmatpush1.bf16.msra.mxu0 %v4868
    %5178 = vmatprep.subr.bf16.mxu0 %v4861
    %5179 = vmatpush1.bf16.msra.mxu0 %v4860
    %5180 = vmatprep.subr.bf16.mxu0 %v4853
    %5181 = vmatpush1.bf16.msra.mxu0 %v4852
    %5182 = vmatprep.subr.bf16.mxu0 %v4845
    %5183 = vmatpush1.bf16.msra.mxu0 %v4844
    %5184 = vmatprep.subr.bf16.mxu0 %v4837
    %5185 = vmatpush1.bf16.msra.mxu0 %v4836
    %5186 = vmatprep.subr.bf16.mxu0 %v4957
    %5187 = vmatpush2.bf16.msra.mxu0 %v4956
    %5188 = vmatprep.subr.bf16.mxu0 %v4949
    %5189 = vmatpush2.bf16.msra.mxu0 %v4948
    %5190 = vmatprep.subr.bf16.mxu0 %v4941
    %5191 = vmatpush2.bf16.msra.mxu0 %v4940
    %5192 = vmatprep.subr.bf16.mxu0 %v4933
    %5193 = vmatpush2.bf16.msra.mxu0 %v4932
    %5194 = vmatprep.subr.bf16.mxu0 %v4925
    %5195 = vmatpush2.bf16.msra.mxu0 %v4924
    %5196 = vmatprep.subr.bf16.mxu0 %v4917
    %5197 = vmatpush2.bf16.msra.mxu0 %v4916
    %5198 = vmatprep.subr.bf16.mxu0 %v4909
    %5199 = vmatpush2.bf16.msra.mxu0 %v4908
    %5200 = vmatprep.subr.bf16.mxu0 %v4901
    %5201 = vmatpush2.bf16.msra.mxu0 %v4900
    %5202 = vmatprep.mubr.bf16.mxu0 0
    %5203 = vmatmul.mubr.bf16.gmra.mxu0 0
    %v5204 = vpop.f32.mrf.mxu0
    %v5205 = vadd.f32 0.0, %v5204
    %v5206 = vpop.f32.mrf.mxu0
    %v5207 = vadd.f32 0.0, %v5206
    %v5208 = vpop.f32.mrf.mxu0
    %v5209 = vpop.f32.mrf.mxu0
    %5210 = vdwg.mxu0
    %5211 = vmatprep.subr.bf16.mxu0 %v4895
    %5212 = vmatpush1.bf16.msra.mxu0 %v4894
    %5213 = vmatprep.subr.bf16.mxu0 %v4887
    %5214 = vmatpush1.bf16.msra.mxu0 %v4886
    %5215 = vmatprep.subr.bf16.mxu0 %v4879
    %5216 = vmatpush1.bf16.msra.mxu0 %v4878
    %5217 = vmatprep.subr.bf16.mxu0 %v4871
    %5218 = vmatpush1.bf16.msra.mxu0 %v4870
    %5219 = vmatprep.subr.bf16.mxu0 %v4863
    %5220 = vmatpush1.bf16.msra.mxu0 %v4862
    %5221 = vmatprep.subr.bf16.mxu0 %v4855
    %5222 = vmatpush1.bf16.msra.mxu0 %v4854
    %5223 = vmatprep.subr.bf16.mxu0 %v4847
    %5224 = vmatpush1.bf16.msra.mxu0 %v4846
    %5225 = vmatprep.subr.bf16.mxu0 %v4839
    %5226 = vmatpush1.bf16.msra.mxu0 %v4838
    %5227 = vmatprep.subr.bf16.mxu0 %v4959
    %5228 = vmatpush2.bf16.msra.mxu0 %v4958
    %5229 = vmatprep.subr.bf16.mxu0 %v4951
    %5230 = vmatpush2.bf16.msra.mxu0 %v4950
    %5231 = vmatprep.subr.bf16.mxu0 %v4943
    %5232 = vmatpush2.bf16.msra.mxu0 %v4942
    %5233 = vmatprep.subr.bf16.mxu0 %v4935
    %5234 = vmatpush2.bf16.msra.mxu0 %v4934
    %5235 = vmatprep.subr.bf16.mxu0 %v4927
    %5236 = vmatpush2.bf16.msra.mxu0 %v4926
    %5237 = vmatprep.subr.bf16.mxu0 %v4919
    %5238 = vmatpush2.bf16.msra.mxu0 %v4918
    %5239 = vmatprep.subr.bf16.mxu0 %v4911
    %5240 = vmatpush2.bf16.msra.mxu0 %v4910
    %5241 = vmatprep.subr.bf16.mxu0 %v4903
    %5242 = vmatpush2.bf16.msra.mxu0 %v4902
    %5243 = vmatprep.mubr.bf16.mxu0 0
    %5244 = vmatmul.mubr.bf16.gmra.mxu0 0
    %v5245 = vpop.f32.mrf.mxu0
    %v5246 = vadd.f32 0.0, %v5245
    %v5247 = vpop.f32.mrf.mxu0
    %v5248 = vadd.f32 0.0, %v5247
    %v5249 = vpop.f32.mrf.mxu0
    %v5250 = vpop.f32.mrf.mxu0
    %5251 = vdwg.mxu0
    %v5252 = vadd.f32 %v4063, %v5123
    %v5253 = vadd.f32 %v4065, %v5125
    %v5254 = vadd.f32 %v4136, %v5164
    %v5255 = vadd.f32 %v4138, %v5166
    %v5256 = vadd.f32 %v4209, %v5205
    %v5257 = vadd.f32 %v4211, %v5207
    %v5258 = vadd.f32 %v4282, %v5246
    %v5259 = vadd.f32 %v4284, %v5248
    %v5260 = vxor.u32 %v5252, 2147483648
    %v5261 = vxor.u32 %v5253, 2147483648
    %v5262 = vmul.f32 %v5260, 1.442695
    %v5263 = vpow.pop %v5262
    %v5264 = vmul.f32 %v5261, 1.442695
    %v5265 = vpow.pop %v5264
    %v5266 = vadd.f32 %v5263, 1.0
    %v5267 = vadd.f32 %v5265, 1.0
    %v5268 = vrcp.pop %v5266
    %v5269 = vmul.f32 1.0, %v5268
    %v5270 = vrcp.pop %v5267
    %v5271 = vmul.f32 1.0, %v5270
    %v5272 = vxor.u32 %v5254, 2147483648
    %v5273 = vxor.u32 %v5255, 2147483648
    %v5274 = vmul.f32 %v5272, 1.442695
    %v5275 = vpow.pop %v5274
    %v5276 = vmul.f32 %v5273, 1.442695
    %v5277 = vpow.pop %v5276
    %v5278 = vadd.f32 %v5275, 1.0
    %v5279 = vadd.f32 %v5277, 1.0
    %v5280 = vrcp.pop %v5278
    %v5281 = vmul.f32 1.0, %v5280
    %v5282 = vrcp.pop %v5279
    %v5283 = vmul.f32 1.0, %v5282
    %v5284 = vtanh.pop %v5256
    %v5285 = vtanh.pop %v5257
    %v5286 = vxor.u32 %v5258, 2147483648
    %v5287 = vxor.u32 %v5259, 2147483648
    %v5288 = vmul.f32 %v5286, 1.442695
    %v5289 = vpow.pop %v5288
    %v5290 = vmul.f32 %v5287, 1.442695
    %v5291 = vpow.pop %v5290
    %v5292 = vadd.f32 %v5289, 1.0
    %v5293 = vadd.f32 %v5291, 1.0
    %v5294 = vrcp.pop %v5292
    %v5295 = vmul.f32 1.0, %v5294
    %v5296 = vrcp.pop %v5293
    %v5297 = vmul.f32 1.0, %v5296
    %v5298 = vmul.f32 %v5281, 0.0
    %v5299 = vmul.f32 %v5283, 0.0
    %v5300 = vmul.f32 %v5269, %v5284
    %v5301 = vmul.f32 %v5271, %v5285
    %v5302 = vadd.f32 %v5298, %v5300
    %v5303 = vadd.f32 %v5299, %v5301
    %v5304 = vtanh.pop %v5302
    %v5305 = vtanh.pop %v5303
    %v5306 = vmul.f32 %v5295, %v5304
    %v5307 = vmul.f32 %v5297, %v5305
    %v5308 = vpack.c.bf16 %v5306, %v5306
    %v5309 = vpack.c.bf16 %v5307, %v5307
    %5310 = vmatprep.subr.bf16.mxu0 %v4889
    %5311 = vmatpush1.bf16.msra.mxu0 %v4888
    %5312 = vmatprep.subr.bf16.mxu0 %v4881
    %5313 = vmatpush1.bf16.msra.mxu0 %v4880
    %5314 = vmatprep.subr.bf16.mxu0 %v4873
    %5315 = vmatpush1.bf16.msra.mxu0 %v4872
    %5316 = vmatprep.subr.bf16.mxu0 %v4865
    %5317 = vmatpush1.bf16.msra.mxu0 %v4864
    %5318 = vmatprep.subr.bf16.mxu0 %v4857
    %5319 = vmatpush1.bf16.msra.mxu0 %v4856
    %5320 = vmatprep.subr.bf16.mxu0 %v4849
    %5321 = vmatpush1.bf16.msra.mxu0 %v4848
    %5322 = vmatprep.subr.bf16.mxu0 %v4841
    %5323 = vmatpush1.bf16.msra.mxu0 %v4840
    %5324 = vmatprep.subr.bf16.mxu0 %v4833
    %5325 = vmatpush1.bf16.msra.mxu0 %v4832
    %5326 = vmatprep.subr.bf16.mxu0 %v4953
    %5327 = vmatpush2.bf16.msra.mxu0 %v4952
    %5328 = vmatprep.subr.bf16.mxu0 %v4945
    %5329 = vmatpush2.bf16.msra.mxu0 %v4944
    %5330 = vmatprep.subr.bf16.mxu0 %v4937
    %5331 = vmatpush2.bf16.msra.mxu0 %v4936
    %5332 = vmatprep.subr.bf16.mxu0 %v4929
    %5333 = vmatpush2.bf16.msra.mxu0 %v4928
    %5334 = vmatprep.subr.bf16.mxu0 %v4921
    %5335 = vmatpush2.bf16.msra.mxu0 %v4920
    %5336 = vmatprep.subr.bf16.mxu0 %v4913
    %5337 = vmatpush2.bf16.msra.mxu0 %v4912
    %5338 = vmatprep.subr.bf16.mxu0 %v4905
    %5339 = vmatpush2.bf16.msra.mxu0 %v4904
    %5340 = vmatprep.subr.bf16.mxu0 %v4897
    %5341 = vmatpush2.bf16.msra.mxu0 %v4896
    %5342 = vmatprep.mubr.bf16.mxu0 %v5309
    %5343 = vmatmul.mubr.bf16.gmra.mxu0 %v5308
    %v5344 = vpop.f32.mrf.mxu0
    %v5345 = vadd.f32 0.0, %v5344
    %v5346 = vpop.f32.mrf.mxu0
    %v5347 = vadd.f32 0.0, %v5346
    %v5348 = vpop.f32.mrf.mxu0
    %v5349 = vpop.f32.mrf.mxu0
    %5350 = vdwg.mxu0
    %5351 = vmatprep.subr.bf16.mxu0 %v4891
    %5352 = vmatpush1.bf16.msra.mxu0 %v4890
    %5353 = vmatprep.subr.bf16.mxu0 %v4883
    %5354 = vmatpush1.bf16.msra.mxu0 %v4882
    %5355 = vmatprep.subr.bf16.mxu0 %v4875
    %5356 = vmatpush1.bf16.msra.mxu0 %v4874
    %5357 = vmatprep.subr.bf16.mxu0 %v4867
    %5358 = vmatpush1.bf16.msra.mxu0 %v4866
    %5359 = vmatprep.subr.bf16.mxu0 %v4859
    %5360 = vmatpush1.bf16.msra.mxu0 %v4858
    %5361 = vmatprep.subr.bf16.mxu0 %v4851
    %5362 = vmatpush1.bf16.msra.mxu0 %v4850
    %5363 = vmatprep.subr.bf16.mxu0 %v4843
    %5364 = vmatpush1.bf16.msra.mxu0 %v4842
    %5365 = vmatprep.subr.bf16.mxu0 %v4835
    %5366 = vmatpush1.bf16.msra.mxu0 %v4834
    %5367 = vmatprep.subr.bf16.mxu0 %v4955
    %5368 = vmatpush2.bf16.msra.mxu0 %v4954
    %5369 = vmatprep.subr.bf16.mxu0 %v4947
    %5370 = vmatpush2.bf16.msra.mxu0 %v4946
    %5371 = vmatprep.subr.bf16.mxu0 %v4939
    %5372 = vmatpush2.bf16.msra.mxu0 %v4938
    %5373 = vmatprep.subr.bf16.mxu0 %v4931
    %5374 = vmatpush2.bf16.msra.mxu0 %v4930
    %5375 = vmatprep.subr.bf16.mxu0 %v4923
    %5376 = vmatpush2.bf16.msra.mxu0 %v4922
    %5377 = vmatprep.subr.bf16.mxu0 %v4915
    %5378 = vmatpush2.bf16.msra.mxu0 %v4914
    %5379 = vmatprep.subr.bf16.mxu0 %v4907
    %5380 = vmatpush2.bf16.msra.mxu0 %v4906
    %5381 = vmatprep.subr.bf16.mxu0 %v4899
    %5382 = vmatpush2.bf16.msra.mxu0 %v4898
    %5383 = vmatprep.mubr.bf16.mxu0 %v5309
    %5384 = vmatmul.mubr.bf16.gmra.mxu0 %v5308
    %v5385 = vpop.f32.mrf.mxu0
    %v5386 = vadd.f32 0.0, %v5385
    %v5387 = vpop.f32.mrf.mxu0
    %v5388 = vadd.f32 0.0, %v5387
    %v5389 = vpop.f32.mrf.mxu0
    %v5390 = vpop.f32.mrf.mxu0
    %5391 = vdwg.mxu0
    %5392 = vmatprep.subr.bf16.mxu0 %v4893
    %5393 = vmatpush1.bf16.msra.mxu0 %v4892
    %5394 = vmatprep.subr.bf16.mxu0 %v4885
    %5395 = vmatpush1.bf16.msra.mxu0 %v4884
    %5396 = vmatprep.subr.bf16.mxu0 %v4877
    %5397 = vmatpush1.bf16.msra.mxu0 %v4876
    %5398 = vmatprep.subr.bf16.mxu0 %v4869
    %5399 = vmatpush1.bf16.msra.mxu0 %v4868
    %5400 = vmatprep.subr.bf16.mxu0 %v4861
    %5401 = vmatpush1.bf16.msra.mxu0 %v4860
    %5402 = vmatprep.subr.bf16.mxu0 %v4853
    %5403 = vmatpush1.bf16.msra.mxu0 %v4852
    %5404 = vmatprep.subr.bf16.mxu0 %v4845
    %5405 = vmatpush1.bf16.msra.mxu0 %v4844
    %5406 = vmatprep.subr.bf16.mxu0 %v4837
    %5407 = vmatpush1.bf16.msra.mxu0 %v4836
    %5408 = vmatprep.subr.bf16.mxu0 %v4957
    %5409 = vmatpush2.bf16.msra.mxu0 %v4956
    %5410 = vmatprep.subr.bf16.mxu0 %v4949
    %5411 = vmatpush2.bf16.msra.mxu0 %v4948
    %5412 = vmatprep.subr.bf16.mxu0 %v4941
    %5413 = vmatpush2.bf16.msra.mxu0 %v4940
    %5414 = vmatprep.subr.bf16.mxu0 %v4933
    %5415 = vmatpush2.bf16.msra.mxu0 %v4932
    %5416 = vmatprep.subr.bf16.mxu0 %v4925
    %5417 = vmatpush2.bf16.msra.mxu0 %v4924
    %5418 = vmatprep.subr.bf16.mxu0 %v4917
    %5419 = vmatpush2.bf16.msra.mxu0 %v4916
    %5420 = vmatprep.subr.bf16.mxu0 %v4909
    %5421 = vmatpush2.bf16.msra.mxu0 %v4908
    %5422 = vmatprep.subr.bf16.mxu0 %v4901
    %5423 = vmatpush2.bf16.msra.mxu0 %v4900
    %5424 = vmatprep.mubr.bf16.mxu0 %v5309
    %5425 = vmatmul.mubr.bf16.gmra.mxu0 %v5308
    %v5426 = vpop.f32.mrf.mxu0
    %v5427 = vadd.f32 0.0, %v5426
    %v5428 = vpop.f32.mrf.mxu0
    %v5429 = vadd.f32 0.0, %v5428
    %v5430 = vpop.f32.mrf.mxu0
    %v5431 = vpop.f32.mrf.mxu0
    %5432 = vdwg.mxu0
    %5433 = vmatprep.subr.bf16.mxu0 %v4895
    %5434 = vmatpush1.bf16.msra.mxu0 %v4894
    %5435 = vmatprep.subr.bf16.mxu0 %v4887
    %5436 = vmatpush1.bf16.msra.mxu0 %v4886
    %5437 = vmatprep.subr.bf16.mxu0 %v4879
    %5438 = vmatpush1.bf16.msra.mxu0 %v4878
    %5439 = vmatprep.subr.bf16.mxu0 %v4871
    %5440 = vmatpush1.bf16.msra.mxu0 %v4870
    %5441 = vmatprep.subr.bf16.mxu0 %v4863
    %5442 = vmatpush1.bf16.msra.mxu0 %v4862
    %5443 = vmatprep.subr.bf16.mxu0 %v4855
    %5444 = vmatpush1.bf16.msra.mxu0 %v4854
    %5445 = vmatprep.subr.bf16.mxu0 %v4847
    %5446 = vmatpush1.bf16.msra.mxu0 %v4846
    %5447 = vmatprep.subr.bf16.mxu0 %v4839
    %5448 = vmatpush1.bf16.msra.mxu0 %v4838
    %5449 = vmatprep.subr.bf16.mxu0 %v4959
    %5450 = vmatpush2.bf16.msra.mxu0 %v4958
    %5451 = vmatprep.subr.bf16.mxu0 %v4951
    %5452 = vmatpush2.bf16.msra.mxu0 %v4950
    %5453 = vmatprep.subr.bf16.mxu0 %v4943
    %5454 = vmatpush2.bf16.msra.mxu0 %v4942
    %5455 = vmatprep.subr.bf16.mxu0 %v4935
    %5456 = vmatpush2.bf16.msra.mxu0 %v4934
    %5457 = vmatprep.subr.bf16.mxu0 %v4927
    %5458 = vmatpush2.bf16.msra.mxu0 %v4926
    %5459 = vmatprep.subr.bf16.mxu0 %v4919
    %5460 = vmatpush2.bf16.msra.mxu0 %v4918
    %5461 = vmatprep.subr.bf16.mxu0 %v4911
    %5462 = vmatpush2.bf16.msra.mxu0 %v4910
    %5463 = vmatprep.subr.bf16.mxu0 %v4903
    %5464 = vmatpush2.bf16.msra.mxu0 %v4902
    %5465 = vmatprep.mubr.bf16.mxu0 %v5309
    %5466 = vmatmul.mubr.bf16.gmra.mxu0 %v5308
    %v5467 = vpop.f32.mrf.mxu0
    %v5468 = vadd.f32 0.0, %v5467
    %v5469 = vpop.f32.mrf.mxu0
    %v5470 = vadd.f32 0.0, %v5469
    %v5471 = vpop.f32.mrf.mxu0
    %v5472 = vpop.f32.mrf.mxu0
    %5473 = vdwg.mxu0
    %v5474 = vadd.f32 %v4067, %v5345
    %v5475 = vadd.f32 %v4069, %v5347
    %v5476 = vadd.f32 %v4140, %v5386
    %v5477 = vadd.f32 %v4142, %v5388
    %v5478 = vadd.f32 %v4213, %v5427
    %v5479 = vadd.f32 %v4215, %v5429
    %v5480 = vadd.f32 %v4286, %v5468
    %v5481 = vadd.f32 %v4288, %v5470
    %v5482 = vxor.u32 %v5474, 2147483648
    %v5483 = vxor.u32 %v5475, 2147483648
    %v5484 = vmul.f32 %v5482, 1.442695
    %v5485 = vpow.pop %v5484
    %v5486 = vmul.f32 %v5483, 1.442695
    %v5487 = vpow.pop %v5486
    %v5488 = vadd.f32 %v5485, 1.0
    %v5489 = vadd.f32 %v5487, 1.0
    %v5490 = vrcp.pop %v5488
    %v5491 = vmul.f32 1.0, %v5490
    %v5492 = vrcp.pop %v5489
    %v5493 = vmul.f32 1.0, %v5492
    %v5494 = vxor.u32 %v5476, 2147483648
    %v5495 = vxor.u32 %v5477, 2147483648
    %v5496 = vmul.f32 %v5494, 1.442695
    %v5497 = vpow.pop %v5496
    %v5498 = vmul.f32 %v5495, 1.442695
    %v5499 = vpow.pop %v5498
    %v5500 = vadd.f32 %v5497, 1.0
    %v5501 = vadd.f32 %v5499, 1.0
    %v5502 = vrcp.pop %v5500
    %v5503 = vmul.f32 1.0, %v5502
    %v5504 = vrcp.pop %v5501
    %v5505 = vmul.f32 1.0, %v5504
    %v5506 = vtanh.pop %v5478
    %v5507 = vtanh.pop %v5479
    %v5508 = vxor.u32 %v5480, 2147483648
    %v5509 = vxor.u32 %v5481, 2147483648
    %v5510 = vmul.f32 %v5508, 1.442695
    %v5511 = vpow.pop %v5510
    %v5512 = vmul.f32 %v5509, 1.442695
    %v5513 = vpow.pop %v5512
    %v5514 = vadd.f32 %v5511, 1.0
    %v5515 = vadd.f32 %v5513, 1.0
    %v5516 = vrcp.pop %v5514
    %v5517 = vmul.f32 1.0, %v5516
    %v5518 = vrcp.pop %v5515
    %v5519 = vmul.f32 1.0, %v5518
    %v5520 = vmul.f32 %v5503, %v5302
    %v5521 = vmul.f32 %v5505, %v5303
    %v5522 = vmul.f32 %v5491, %v5506
    %v5523 = vmul.f32 %v5493, %v5507
    %v5524 = vadd.f32 %v5520, %v5522
    %v5525 = vadd.f32 %v5521, %v5523
    %v5526 = vtanh.pop %v5524
    %v5527 = vtanh.pop %v5525
    %v5528 = vmul.f32 %v5517, %v5526
    %v5529 = vmul.f32 %v5519, %v5527
    %v5530 = vpack.c.bf16 %v5528, %v5528
    %v5531 = vpack.c.bf16 %v5529, %v5529
    %5532 = vmatprep.subr.bf16.mxu0 %v4889
    %5533 = vmatpush1.bf16.msra.mxu0 %v4888
    %5534 = vmatprep.subr.bf16.mxu0 %v4881
    %5535 = vmatpush1.bf16.msra.mxu0 %v4880
    %5536 = vmatprep.subr.bf16.mxu0 %v4873
    %5537 = vmatpush1.bf16.msra.mxu0 %v4872
    %5538 = vmatprep.subr.bf16.mxu0 %v4865
    %5539 = vmatpush1.bf16.msra.mxu0 %v4864
    %5540 = vmatprep.subr.bf16.mxu0 %v4857
    %5541 = vmatpush1.bf16.msra.mxu0 %v4856
    %5542 = vmatprep.subr.bf16.mxu0 %v4849
    %5543 = vmatpush1.bf16.msra.mxu0 %v4848
    %5544 = vmatprep.subr.bf16.mxu0 %v4841
    %5545 = vmatpush1.bf16.msra.mxu0 %v4840
    %5546 = vmatprep.subr.bf16.mxu0 %v4833
    %5547 = vmatpush1.bf16.msra.mxu0 %v4832
    %5548 = vmatprep.subr.bf16.mxu0 %v4953
    %5549 = vmatpush2.bf16.msra.mxu0 %v4952
    %5550 = vmatprep.subr.bf16.mxu0 %v4945
    %5551 = vmatpush2.bf16.msra.mxu0 %v4944
    %5552 = vmatprep.subr.bf16.mxu0 %v4937
    %5553 = vmatpush2.bf16.msra.mxu0 %v4936
    %5554 = vmatprep.subr.bf16.mxu0 %v4929
    %5555 = vmatpush2.bf16.msra.mxu0 %v4928
    %5556 = vmatprep.subr.bf16.mxu0 %v4921
    %5557 = vmatpush2.bf16.msra.mxu0 %v4920
    %5558 = vmatprep.subr.bf16.mxu0 %v4913
    %5559 = vmatpush2.bf16.msra.mxu0 %v4912
    %5560 = vmatprep.subr.bf16.mxu0 %v4905
    %5561 = vmatpush2.bf16.msra.mxu0 %v4904
    %5562 = vmatprep.subr.bf16.mxu0 %v4897
    %5563 = vmatpush2.bf16.msra.mxu0 %v4896
    %5564 = vmatprep.mubr.bf16.mxu0 %v5531
    %5565 = vmatmul.mubr.bf16.gmra.mxu0 %v5530
    %v5566 = vpop.f32.mrf.mxu0
    %v5567 = vadd.f32 0.0, %v5566
    %v5568 = vpop.f32.mrf.mxu0
    %v5569 = vadd.f32 0.0, %v5568
    %v5570 = vpop.f32.mrf.mxu0
    %v5571 = vpop.f32.mrf.mxu0
    %5572 = vdwg.mxu0
    %5573 = vmatprep.subr.bf16.mxu0 %v4891
    %5574 = vmatpush1.bf16.msra.mxu0 %v4890
    %5575 = vmatprep.subr.bf16.mxu0 %v4883
    %5576 = vmatpush1.bf16.msra.mxu0 %v4882
    %5577 = vmatprep.subr.bf16.mxu0 %v4875
    %5578 = vmatpush1.bf16.msra.mxu0 %v4874
    %5579 = vmatprep.subr.bf16.mxu0 %v4867
    %5580 = vmatpush1.bf16.msra.mxu0 %v4866
    %5581 = vmatprep.subr.bf16.mxu0 %v4859
    %5582 = vmatpush1.bf16.msra.mxu0 %v4858
    %5583 = vmatprep.subr.bf16.mxu0 %v4851
    %5584 = vmatpush1.bf16.msra.mxu0 %v4850
    %5585 = vmatprep.subr.bf16.mxu0 %v4843
    %5586 = vmatpush1.bf16.msra.mxu0 %v4842
    %5587 = vmatprep.subr.bf16.mxu0 %v4835
    %5588 = vmatpush1.bf16.msra.mxu0 %v4834
    %5589 = vmatprep.subr.bf16.mxu0 %v4955
    %5590 = vmatpush2.bf16.msra.mxu0 %v4954
    %5591 = vmatprep.subr.bf16.mxu0 %v4947
    %5592 = vmatpush2.bf16.msra.mxu0 %v4946
    %5593 = vmatprep.subr.bf16.mxu0 %v4939
    %5594 = vmatpush2.bf16.msra.mxu0 %v4938
    %5595 = vmatprep.subr.bf16.mxu0 %v4931
    %5596 = vmatpush2.bf16.msra.mxu0 %v4930
    %5597 = vmatprep.subr.bf16.mxu0 %v4923
    %5598 = vmatpush2.bf16.msra.mxu0 %v4922
    %5599 = vmatprep.subr.bf16.mxu0 %v4915
    %5600 = vmatpush2.bf16.msra.mxu0 %v4914
    %5601 = vmatprep.subr.bf16.mxu0 %v4907
    %5602 = vmatpush2.bf16.msra.mxu0 %v4906
    %5603 = vmatprep.subr.bf16.mxu0 %v4899
    %5604 = vmatpush2.bf16.msra.mxu0 %v4898
    %5605 = vmatprep.mubr.bf16.mxu0 %v5531
    %5606 = vmatmul.mubr.bf16.gmra.mxu0 %v5530
    %v5607 = vpop.f32.mrf.mxu0
    %v5608 = vadd.f32 0.0, %v5607
    %v5609 = vpop.f32.mrf.mxu0
    %v5610 = vadd.f32 0.0, %v5609
    %v5611 = vpop.f32.mrf.mxu0
    %v5612 = vpop.f32.mrf.mxu0
    %5613 = vdwg.mxu0
    %5614 = vmatprep.subr.bf16.mxu0 %v4893
    %5615 = vmatpush1.bf16.msra.mxu0 %v4892
    %5616 = vmatprep.subr.bf16.mxu0 %v4885
    %5617 = vmatpush1.bf16.msra.mxu0 %v4884
    %5618 = vmatprep.subr.bf16.mxu0 %v4877
    %5619 = vmatpush1.bf16.msra.mxu0 %v4876
    %5620 = vmatprep.subr.bf16.mxu0 %v4869
    %5621 = vmatpush1.bf16.msra.mxu0 %v4868
    %5622 = vmatprep.subr.bf16.mxu0 %v4861
    %5623 = vmatpush1.bf16.msra.mxu0 %v4860
    %5624 = vmatprep.subr.bf16.mxu0 %v4853
    %5625 = vmatpush1.bf16.msra.mxu0 %v4852
    %5626 = vmatprep.subr.bf16.mxu0 %v4845
    %5627 = vmatpush1.bf16.msra.mxu0 %v4844
    %5628 = vmatprep.subr.bf16.mxu0 %v4837
    %5629 = vmatpush1.bf16.msra.mxu0 %v4836
    %5630 = vmatprep.subr.bf16.mxu0 %v4957
    %5631 = vmatpush2.bf16.msra.mxu0 %v4956
    %5632 = vmatprep.subr.bf16.mxu0 %v4949
    %5633 = vmatpush2.bf16.msra.mxu0 %v4948
    %5634 = vmatprep.subr.bf16.mxu0 %v4941
    %5635 = vmatpush2.bf16.msra.mxu0 %v4940
    %5636 = vmatprep.subr.bf16.mxu0 %v4933
    %5637 = vmatpush2.bf16.msra.mxu0 %v4932
    %5638 = vmatprep.subr.bf16.mxu0 %v4925
    %5639 = vmatpush2.bf16.msra.mxu0 %v4924
    %5640 = vmatprep.subr.bf16.mxu0 %v4917
    %5641 = vmatpush2.bf16.msra.mxu0 %v4916
    %5642 = vmatprep.subr.bf16.mxu0 %v4909
    %5643 = vmatpush2.bf16.msra.mxu0 %v4908
    %5644 = vmatprep.subr.bf16.mxu0 %v4901
    %5645 = vmatpush2.bf16.msra.mxu0 %v4900
    %5646 = vmatprep.mubr.bf16.mxu0 %v5531
    %5647 = vmatmul.mubr.bf16.gmra.mxu0 %v5530
    %v5648 = vpop.f32.mrf.mxu0
    %v5649 = vadd.f32 0.0, %v5648
    %v5650 = vpop.f32.mrf.mxu0
    %v5651 = vadd.f32 0.0, %v5650
    %v5652 = vpop.f32.mrf.mxu0
    %v5653 = vpop.f32.mrf.mxu0
    %5654 = vdwg.mxu0
    %5655 = vmatprep.subr.bf16.mxu0 %v4895
    %5656 = vmatpush1.bf16.msra.mxu0 %v4894
    %5657 = vmatprep.subr.bf16.mxu0 %v4887
    %5658 = vmatpush1.bf16.msra.mxu0 %v4886
    %5659 = vmatprep.subr.bf16.mxu0 %v4879
    %5660 = vmatpush1.bf16.msra.mxu0 %v4878
    %5661 = vmatprep.subr.bf16.mxu0 %v4871
    %5662 = vmatpush1.bf16.msra.mxu0 %v4870
    %5663 = vmatprep.subr.bf16.mxu0 %v4863
    %5664 = vmatpush1.bf16.msra.mxu0 %v4862
    %5665 = vmatprep.subr.bf16.mxu0 %v4855
    %5666 = vmatpush1.bf16.msra.mxu0 %v4854
    %5667 = vmatprep.subr.bf16.mxu0 %v4847
    %5668 = vmatpush1.bf16.msra.mxu0 %v4846
    %5669 = vmatprep.subr.bf16.mxu0 %v4839
    %5670 = vmatpush1.bf16.msra.mxu0 %v4838
    %5671 = vmatprep.subr.bf16.mxu0 %v4959
    %5672 = vmatpush2.bf16.msra.mxu0 %v4958
    %5673 = vmatprep.subr.bf16.mxu0 %v4951
    %5674 = vmatpush2.bf16.msra.mxu0 %v4950
    %5675 = vmatprep.subr.bf16.mxu0 %v4943
    %5676 = vmatpush2.bf16.msra.mxu0 %v4942
    %5677 = vmatprep.subr.bf16.mxu0 %v4935
    %5678 = vmatpush2.bf16.msra.mxu0 %v4934
    %5679 = vmatprep.subr.bf16.mxu0 %v4927
    %5680 = vmatpush2.bf16.msra.mxu0 %v4926
    %5681 = vmatprep.subr.bf16.mxu0 %v4919
    %5682 = vmatpush2.bf16.msra.mxu0 %v4918
    %5683 = vmatprep.subr.bf16.mxu0 %v4911
    %5684 = vmatpush2.bf16.msra.mxu0 %v4910
    %5685 = vmatprep.subr.bf16.mxu0 %v4903
    %5686 = vmatpush2.bf16.msra.mxu0 %v4902
    %5687 = vmatprep.mubr.bf16.mxu0 %v5531
    %5688 = vmatmul.mubr.bf16.gmra.mxu0 %v5530
    %v5689 = vpop.f32.mrf.mxu0
    %v5690 = vadd.f32 0.0, %v5689
    %v5691 = vpop.f32.mrf.mxu0
    %v5692 = vadd.f32 0.0, %v5691
    %v5693 = vpop.f32.mrf.mxu0
    %v5694 = vpop.f32.mrf.mxu0
    %5695 = vdwg.mxu0
    %v5696 = vadd.f32 %v4073, %v5567
    %v5697 = vadd.f32 %v4075, %v5569
    %v5698 = vadd.f32 %v4146, %v5608
    %v5699 = vadd.f32 %v4148, %v5610
    %v5700 = vadd.f32 %v4219, %v5649
    %v5701 = vadd.f32 %v4221, %v5651
    %v5702 = vadd.f32 %v4292, %v5690
    %v5703 = vadd.f32 %v4294, %v5692
    %v5704 = vxor.u32 %v5696, 2147483648
    %v5705 = vxor.u32 %v5697, 2147483648
    %v5706 = vmul.f32 %v5704, 1.442695
    %v5707 = vpow.pop %v5706
    %v5708 = vmul.f32 %v5705, 1.442695
    %v5709 = vpow.pop %v5708
    %v5710 = vadd.f32 %v5707, 1.0
    %v5711 = vadd.f32 %v5709, 1.0
    %v5712 = vrcp.pop %v5710
    %v5713 = vmul.f32 1.0, %v5712
    %v5714 = vrcp.pop %v5711
    %v5715 = vmul.f32 1.0, %v5714
    %v5716 = vxor.u32 %v5698, 2147483648
    %v5717 = vxor.u32 %v5699, 2147483648
    %v5718 = vmul.f32 %v5716, 1.442695
    %v5719 = vpow.pop %v5718
    %v5720 = vmul.f32 %v5717, 1.442695
    %v5721 = vpow.pop %v5720
    %v5722 = vadd.f32 %v5719, 1.0
    %v5723 = vadd.f32 %v5721, 1.0
    %v5724 = vrcp.pop %v5722
    %v5725 = vmul.f32 1.0, %v5724
    %v5726 = vrcp.pop %v5723
    %v5727 = vmul.f32 1.0, %v5726
    %v5728 = vtanh.pop %v5700
    %v5729 = vtanh.pop %v5701
    %v5730 = vxor.u32 %v5702, 2147483648
    %v5731 = vxor.u32 %v5703, 2147483648
    %v5732 = vmul.f32 %v5730, 1.442695
    %v5733 = vpow.pop %v5732
    %v5734 = vmul.f32 %v5731, 1.442695
    %v5735 = vpow.pop %v5734
    %v5736 = vadd.f32 %v5733, 1.0
    %v5737 = vadd.f32 %v5735, 1.0
    %v5738 = vrcp.pop %v5736
    %v5739 = vmul.f32 1.0, %v5738
    %v5740 = vrcp.pop %v5737
    %v5741 = vmul.f32 1.0, %v5740
    %v5742 = vmul.f32 %v5725, %v5524
    %v5743 = vmul.f32 %v5727, %v5525
    %v5744 = vmul.f32 %v5713, %v5728
    %v5745 = vmul.f32 %v5715, %v5729
    %v5746 = vadd.f32 %v5742, %v5744
    %v5747 = vadd.f32 %v5743, %v5745
    %v5748 = vtanh.pop %v5746
    %v5749 = vtanh.pop %v5747
    %v5750 = vmul.f32 %v5739, %v5748
    %v5751 = vmul.f32 %v5741, %v5749
    %v5752 = vpack.c.bf16 %v5750, %v5750
    %v5753 = vpack.c.bf16 %v5751, %v5751
    %5754 = vmatprep.subr.bf16.mxu0 %v4889
    %5755 = vmatpush1.bf16.msra.mxu0 %v4888
    %5756 = vmatprep.subr.bf16.mxu0 %v4881
    %5757 = vmatpush1.bf16.msra.mxu0 %v4880
    %5758 = vmatprep.subr.bf16.mxu0 %v4873
    %5759 = vmatpush1.bf16.msra.mxu0 %v4872
    %5760 = vmatprep.subr.bf16.mxu0 %v4865
    %5761 = vmatpush1.bf16.msra.mxu0 %v4864
    %5762 = vmatprep.subr.bf16.mxu0 %v4857
    %5763 = vmatpush1.bf16.msra.mxu0 %v4856
    %5764 = vmatprep.subr.bf16.mxu0 %v4849
    %5765 = vmatpush1.bf16.msra.mxu0 %v4848
    %5766 = vmatprep.subr.bf16.mxu0 %v4841
    %5767 = vmatpush1.bf16.msra.mxu0 %v4840
    %5768 = vmatprep.subr.bf16.mxu0 %v4833
    %5769 = vmatpush1.bf16.msra.mxu0 %v4832
    %5770 = vmatprep.subr.bf16.mxu0 %v4953
    %5771 = vmatpush2.bf16.msra.mxu0 %v4952
    %5772 = vmatprep.subr.bf16.mxu0 %v4945
    %5773 = vmatpush2.bf16.msra.mxu0 %v4944
    %5774 = vmatprep.subr.bf16.mxu0 %v4937
    %5775 = vmatpush2.bf16.msra.mxu0 %v4936
    %5776 = vmatprep.subr.bf16.mxu0 %v4929
    %5777 = vmatpush2.bf16.msra.mxu0 %v4928
    %5778 = vmatprep.subr.bf16.mxu0 %v4921
    %5779 = vmatpush2.bf16.msra.mxu0 %v4920
    %5780 = vmatprep.subr.bf16.mxu0 %v4913
    %5781 = vmatpush2.bf16.msra.mxu0 %v4912
    %5782 = vmatprep.subr.bf16.mxu0 %v4905
    %5783 = vmatpush2.bf16.msra.mxu0 %v4904
    %5784 = vmatprep.subr.bf16.mxu0 %v4897
    %5785 = vmatpush2.bf16.msra.mxu0 %v4896
    %5786 = vmatprep.mubr.bf16.mxu0 %v5753
    %5787 = vmatmul.mubr.bf16.gmra.mxu0 %v5752
    %v5788 = vpop.f32.mrf.mxu0
    %v5789 = vadd.f32 0.0, %v5788
    %v5790 = vpop.f32.mrf.mxu0
    %v5791 = vadd.f32 0.0, %v5790
    %v5792 = vpop.f32.mrf.mxu0
    %v5793 = vpop.f32.mrf.mxu0
    %5794 = vdwg.mxu0
    %5795 = vmatprep.subr.bf16.mxu0 %v4891
    %5796 = vmatpush1.bf16.msra.mxu0 %v4890
    %5797 = vmatprep.subr.bf16.mxu0 %v4883
    %5798 = vmatpush1.bf16.msra.mxu0 %v4882
    %5799 = vmatprep.subr.bf16.mxu0 %v4875
    %5800 = vmatpush1.bf16.msra.mxu0 %v4874
    %5801 = vmatprep.subr.bf16.mxu0 %v4867
    %5802 = vmatpush1.bf16.msra.mxu0 %v4866
    %5803 = vmatprep.subr.bf16.mxu0 %v4859
    %5804 = vmatpush1.bf16.msra.mxu0 %v4858
    %5805 = vmatprep.subr.bf16.mxu0 %v4851
    %5806 = vmatpush1.bf16.msra.mxu0 %v4850
    %5807 = vmatprep.subr.bf16.mxu0 %v4843
    %5808 = vmatpush1.bf16.msra.mxu0 %v4842
    %5809 = vmatprep.subr.bf16.mxu0 %v4835
    %5810 = vmatpush1.bf16.msra.mxu0 %v4834
    %5811 = vmatprep.subr.bf16.mxu0 %v4955
    %5812 = vmatpush2.bf16.msra.mxu0 %v4954
    %5813 = vmatprep.subr.bf16.mxu0 %v4947
    %5814 = vmatpush2.bf16.msra.mxu0 %v4946
    %5815 = vmatprep.subr.bf16.mxu0 %v4939
    %5816 = vmatpush2.bf16.msra.mxu0 %v4938
    %5817 = vmatprep.subr.bf16.mxu0 %v4931
    %5818 = vmatpush2.bf16.msra.mxu0 %v4930
    %5819 = vmatprep.subr.bf16.mxu0 %v4923
    %5820 = vmatpush2.bf16.msra.mxu0 %v4922
    %5821 = vmatprep.subr.bf16.mxu0 %v4915
    %5822 = vmatpush2.bf16.msra.mxu0 %v4914
    %5823 = vmatprep.subr.bf16.mxu0 %v4907
    %5824 = vmatpush2.bf16.msra.mxu0 %v4906
    %5825 = vmatprep.subr.bf16.mxu0 %v4899
    %5826 = vmatpush2.bf16.msra.mxu0 %v4898
    %5827 = vmatprep.mubr.bf16.mxu0 %v5753
    %5828 = vmatmul.mubr.bf16.gmra.mxu0 %v5752
    %v5829 = vpop.f32.mrf.mxu0
    %v5830 = vadd.f32 0.0, %v5829
    %v5831 = vpop.f32.mrf.mxu0
    %v5832 = vadd.f32 0.0, %v5831
    %v5833 = vpop.f32.mrf.mxu0
    %v5834 = vpop.f32.mrf.mxu0
    %5835 = vdwg.mxu0
    %5836 = vmatprep.subr.bf16.mxu0 %v4893
    %5837 = vmatpush1.bf16.msra.mxu0 %v4892
    %5838 = vmatprep.subr.bf16.mxu0 %v4885
    %5839 = vmatpush1.bf16.msra.mxu0 %v4884
    %5840 = vmatprep.subr.bf16.mxu0 %v4877
    %5841 = vmatpush1.bf16.msra.mxu0 %v4876
    %5842 = vmatprep.subr.bf16.mxu0 %v4869
    %5843 = vmatpush1.bf16.msra.mxu0 %v4868
    %5844 = vmatprep.subr.bf16.mxu0 %v4861
    %5845 = vmatpush1.bf16.msra.mxu0 %v4860
    %5846 = vmatprep.subr.bf16.mxu0 %v4853
    %5847 = vmatpush1.bf16.msra.mxu0 %v4852
    %5848 = vmatprep.subr.bf16.mxu0 %v4845
    %5849 = vmatpush1.bf16.msra.mxu0 %v4844
    %5850 = vmatprep.subr.bf16.mxu0 %v4837
    %5851 = vmatpush1.bf16.msra.mxu0 %v4836
    %5852 = vmatprep.subr.bf16.mxu0 %v4957
    %5853 = vmatpush2.bf16.msra.mxu0 %v4956
    %5854 = vmatprep.subr.bf16.mxu0 %v4949
    %5855 = vmatpush2.bf16.msra.mxu0 %v4948
    %5856 = vmatprep.subr.bf16.mxu0 %v4941
    %5857 = vmatpush2.bf16.msra.mxu0 %v4940
    %5858 = vmatprep.subr.bf16.mxu0 %v4933
    %5859 = vmatpush2.bf16.msra.mxu0 %v4932
    %5860 = vmatprep.subr.bf16.mxu0 %v4925
    %5861 = vmatpush2.bf16.msra.mxu0 %v4924
    %5862 = vmatprep.subr.bf16.mxu0 %v4917
    %5863 = vmatpush2.bf16.msra.mxu0 %v4916
    %5864 = vmatprep.subr.bf16.mxu0 %v4909
    %5865 = vmatpush2.bf16.msra.mxu0 %v4908
    %5866 = vmatprep.subr.bf16.mxu0 %v4901
    %5867 = vmatpush2.bf16.msra.mxu0 %v4900
    %5868 = vmatprep.mubr.bf16.mxu0 %v5753
    %5869 = vmatmul.mubr.bf16.gmra.mxu0 %v5752
    %v5870 = vpop.f32.mrf.mxu0
    %v5871 = vadd.f32 0.0, %v5870
    %v5872 = vpop.f32.mrf.mxu0
    %v5873 = vadd.f32 0.0, %v5872
    %v5874 = vpop.f32.mrf.mxu0
    %v5875 = vpop.f32.mrf.mxu0
    %5876 = vdwg.mxu0
    %5877 = vmatprep.subr.bf16.mxu0 %v4895
    %5878 = vmatpush1.bf16.msra.mxu0 %v4894
    %5879 = vmatprep.subr.bf16.mxu0 %v4887
    %5880 = vmatpush1.bf16.msra.mxu0 %v4886
    %5881 = vmatprep.subr.bf16.mxu0 %v4879
    %5882 = vmatpush1.bf16.msra.mxu0 %v4878
    %5883 = vmatprep.subr.bf16.mxu0 %v4871
    %5884 = vmatpush1.bf16.msra.mxu0 %v4870
    %5885 = vmatprep.subr.bf16.mxu0 %v4863
    %5886 = vmatpush1.bf16.msra.mxu0 %v4862
    %5887 = vmatprep.subr.bf16.mxu0 %v4855
    %5888 = vmatpush1.bf16.msra.mxu0 %v4854
    %5889 = vmatprep.subr.bf16.mxu0 %v4847
    %5890 = vmatpush1.bf16.msra.mxu0 %v4846
    %5891 = vmatprep.subr.bf16.mxu0 %v4839
    %5892 = vmatpush1.bf16.msra.mxu0 %v4838
    %5893 = vmatprep.subr.bf16.mxu0 %v4959
    %5894 = vmatpush2.bf16.msra.mxu0 %v4958
    %5895 = vmatprep.subr.bf16.mxu0 %v4951
    %5896 = vmatpush2.bf16.msra.mxu0 %v4950
    %5897 = vmatprep.subr.bf16.mxu0 %v4943
    %5898 = vmatpush2.bf16.msra.mxu0 %v4942
    %5899 = vmatprep.subr.bf16.mxu0 %v4935
    %5900 = vmatpush2.bf16.msra.mxu0 %v4934
    %5901 = vmatprep.subr.bf16.mxu0 %v4927
    %5902 = vmatpush2.bf16.msra.mxu0 %v4926
    %5903 = vmatprep.subr.bf16.mxu0 %v4919
    %5904 = vmatpush2.bf16.msra.mxu0 %v4918
    %5905 = vmatprep.subr.bf16.mxu0 %v4911
    %5906 = vmatpush2.bf16.msra.mxu0 %v4910
    %5907 = vmatprep.subr.bf16.mxu0 %v4903
    %5908 = vmatpush2.bf16.msra.mxu0 %v4902
    %5909 = vmatprep.mubr.bf16.mxu0 %v5753
    %5910 = vmatmul.mubr.bf16.gmra.mxu0 %v5752
    %v5911 = vpop.f32.mrf.mxu0
    %v5912 = vadd.f32 0.0, %v5911
    %v5913 = vpop.f32.mrf.mxu0
    %v5914 = vadd.f32 0.0, %v5913
    %v5915 = vpop.f32.mrf.mxu0
    %v5916 = vpop.f32.mrf.mxu0
    %5917 = vdwg.mxu0
    %v5918 = vadd.f32 %v4077, %v5789
    %v5919 = vadd.f32 %v4079, %v5791
    %v5920 = vadd.f32 %v4150, %v5830
    %v5921 = vadd.f32 %v4152, %v5832
    %v5922 = vadd.f32 %v4223, %v5871
    %v5923 = vadd.f32 %v4225, %v5873
    %v5924 = vadd.f32 %v4296, %v5912
    %v5925 = vadd.f32 %v4298, %v5914
    %v5926 = vxor.u32 %v5918, 2147483648
    %v5927 = vxor.u32 %v5919, 2147483648
    %v5928 = vmul.f32 %v5926, 1.442695
    %v5929 = vpow.pop %v5928
    %v5930 = vmul.f32 %v5927, 1.442695
    %v5931 = vpow.pop %v5930
    %v5932 = vadd.f32 %v5929, 1.0
    %v5933 = vadd.f32 %v5931, 1.0
    %v5934 = vrcp.pop %v5932
    %v5935 = vmul.f32 1.0, %v5934
    %v5936 = vrcp.pop %v5933
    %v5937 = vmul.f32 1.0, %v5936
    %v5938 = vxor.u32 %v5920, 2147483648
    %v5939 = vxor.u32 %v5921, 2147483648
    %v5940 = vmul.f32 %v5938, 1.442695
    %v5941 = vpow.pop %v5940
    %v5942 = vmul.f32 %v5939, 1.442695
    %v5943 = vpow.pop %v5942
    %v5944 = vadd.f32 %v5941, 1.0
    %v5945 = vadd.f32 %v5943, 1.0
    %v5946 = vrcp.pop %v5944
    %v5947 = vmul.f32 1.0, %v5946
    %v5948 = vrcp.pop %v5945
    %v5949 = vmul.f32 1.0, %v5948
    %v5950 = vtanh.pop %v5922
    %v5951 = vtanh.pop %v5923
    %v5952 = vxor.u32 %v5924, 2147483648
    %v5953 = vxor.u32 %v5925, 2147483648
    %v5954 = vmul.f32 %v5952, 1.442695
    %v5955 = vpow.pop %v5954
    %v5956 = vmul.f32 %v5953, 1.442695
    %v5957 = vpow.pop %v5956
    %v5958 = vadd.f32 %v5955, 1.0
    %v5959 = vadd.f32 %v5957, 1.0
    %v5960 = vrcp.pop %v5958
    %v5961 = vmul.f32 1.0, %v5960
    %v5962 = vrcp.pop %v5959
    %v5963 = vmul.f32 1.0, %v5962
    %v5964 = vmul.f32 %v5947, %v5746
    %v5965 = vmul.f32 %v5949, %v5747
    %v5966 = vmul.f32 %v5935, %v5950
    %v5967 = vmul.f32 %v5937, %v5951
    %v5968 = vadd.f32 %v5964, %v5966
    %v5969 = vadd.f32 %v5965, %v5967
    %v5970 = vtanh.pop %v5968
    %v5971 = vtanh.pop %v5969
    %v5972 = vmul.f32 %v5961, %v5970
    %v5973 = vmul.f32 %v5963, %v5971
    %v5974 = vpack.c.bf16 %v5972, %v5972
    %v5975 = vpack.c.bf16 %v5973, %v5973
    %5976 = vmatprep.subr.bf16.mxu0 %v4889
    %5977 = vmatpush1.bf16.msra.mxu0 %v4888
    %5978 = vmatprep.subr.bf16.mxu0 %v4881
    %5979 = vmatpush1.bf16.msra.mxu0 %v4880
    %5980 = vmatprep.subr.bf16.mxu0 %v4873
    %5981 = vmatpush1.bf16.msra.mxu0 %v4872
    %5982 = vmatprep.subr.bf16.mxu0 %v4865
    %5983 = vmatpush1.bf16.msra.mxu0 %v4864
    %5984 = vmatprep.subr.bf16.mxu0 %v4857
    %5985 = vmatpush1.bf16.msra.mxu0 %v4856
    %5986 = vmatprep.subr.bf16.mxu0 %v4849
    %5987 = vmatpush1.bf16.msra.mxu0 %v4848
    %5988 = vmatprep.subr.bf16.mxu0 %v4841
    %5989 = vmatpush1.bf16.msra.mxu0 %v4840
    %5990 = vmatprep.subr.bf16.mxu0 %v4833
    %5991 = vmatpush1.bf16.msra.mxu0 %v4832
    %5992 = vmatprep.subr.bf16.mxu0 %v4953
    %5993 = vmatpush2.bf16.msra.mxu0 %v4952
    %5994 = vmatprep.subr.bf16.mxu0 %v4945
    %5995 = vmatpush2.bf16.msra.mxu0 %v4944
    %5996 = vmatprep.subr.bf16.mxu0 %v4937
    %5997 = vmatpush2.bf16.msra.mxu0 %v4936
    %5998 = vmatprep.subr.bf16.mxu0 %v4929
    %5999 = vmatpush2.bf16.msra.mxu0 %v4928
    %6000 = vmatprep.subr.bf16.mxu0 %v4921
    %6001 = vmatpush2.bf16.msra.mxu0 %v4920
    %6002 = vmatprep.subr.bf16.mxu0 %v4913
    %6003 = vmatpush2.bf16.msra.mxu0 %v4912
    %6004 = vmatprep.subr.bf16.mxu0 %v4905
    %6005 = vmatpush2.bf16.msra.mxu0 %v4904
    %6006 = vmatprep.subr.bf16.mxu0 %v4897
    %6007 = vmatpush2.bf16.msra.mxu0 %v4896
    %6008 = vmatprep.mubr.bf16.mxu0 %v5975
    %6009 = vmatmul.mubr.bf16.gmra.mxu0 %v5974
    %v6010 = vpop.f32.mrf.mxu0
    %v6011 = vadd.f32 0.0, %v6010
    %v6012 = vpop.f32.mrf.mxu0
    %v6013 = vadd.f32 0.0, %v6012
    %v6014 = vpop.f32.mrf.mxu0
    %v6015 = vpop.f32.mrf.mxu0
    %6016 = vdwg.mxu0
    %6017 = vmatprep.subr.bf16.mxu0 %v4891
    %6018 = vmatpush1.bf16.msra.mxu0 %v4890
    %6019 = vmatprep.subr.bf16.mxu0 %v4883
    %6020 = vmatpush1.bf16.msra.mxu0 %v4882
    %6021 = vmatprep.subr.bf16.mxu0 %v4875
    %6022 = vmatpush1.bf16.msra.mxu0 %v4874
    %6023 = vmatprep.subr.bf16.mxu0 %v4867
    %6024 = vmatpush1.bf16.msra.mxu0 %v4866
    %6025 = vmatprep.subr.bf16.mxu0 %v4859
    %6026 = vmatpush1.bf16.msra.mxu0 %v4858
    %6027 = vmatprep.subr.bf16.mxu0 %v4851
    %6028 = vmatpush1.bf16.msra.mxu0 %v4850
    %6029 = vmatprep.subr.bf16.mxu0 %v4843
    %6030 = vmatpush1.bf16.msra.mxu0 %v4842
    %6031 = vmatprep.subr.bf16.mxu0 %v4835
    %6032 = vmatpush1.bf16.msra.mxu0 %v4834
    %6033 = vmatprep.subr.bf16.mxu0 %v4955
    %6034 = vmatpush2.bf16.msra.mxu0 %v4954
    %6035 = vmatprep.subr.bf16.mxu0 %v4947
    %6036 = vmatpush2.bf16.msra.mxu0 %v4946
    %6037 = vmatprep.subr.bf16.mxu0 %v4939
    %6038 = vmatpush2.bf16.msra.mxu0 %v4938
    %6039 = vmatprep.subr.bf16.mxu0 %v4931
    %6040 = vmatpush2.bf16.msra.mxu0 %v4930
    %6041 = vmatprep.subr.bf16.mxu0 %v4923
    %6042 = vmatpush2.bf16.msra.mxu0 %v4922
    %6043 = vmatprep.subr.bf16.mxu0 %v4915
    %6044 = vmatpush2.bf16.msra.mxu0 %v4914
    %6045 = vmatprep.subr.bf16.mxu0 %v4907
    %6046 = vmatpush2.bf16.msra.mxu0 %v4906
    %6047 = vmatprep.subr.bf16.mxu0 %v4899
    %6048 = vmatpush2.bf16.msra.mxu0 %v4898
    %6049 = vmatprep.mubr.bf16.mxu0 %v5975
    %6050 = vmatmul.mubr.bf16.gmra.mxu0 %v5974
    %v6051 = vpop.f32.mrf.mxu0
    %v6052 = vadd.f32 0.0, %v6051
    %v6053 = vpop.f32.mrf.mxu0
    %v6054 = vadd.f32 0.0, %v6053
    %v6055 = vpop.f32.mrf.mxu0
    %v6056 = vpop.f32.mrf.mxu0
    %6057 = vdwg.mxu0
    %6058 = vmatprep.subr.bf16.mxu0 %v4893
    %6059 = vmatpush1.bf16.msra.mxu0 %v4892
    %6060 = vmatprep.subr.bf16.mxu0 %v4885
    %6061 = vmatpush1.bf16.msra.mxu0 %v4884
    %6062 = vmatprep.subr.bf16.mxu0 %v4877
    %6063 = vmatpush1.bf16.msra.mxu0 %v4876
    %6064 = vmatprep.subr.bf16.mxu0 %v4869
    %6065 = vmatpush1.bf16.msra.mxu0 %v4868
    %6066 = vmatprep.subr.bf16.mxu0 %v4861
    %6067 = vmatpush1.bf16.msra.mxu0 %v4860
    %6068 = vmatprep.subr.bf16.mxu0 %v4853
    %6069 = vmatpush1.bf16.msra.mxu0 %v4852
    %6070 = vmatprep.subr.bf16.mxu0 %v4845
    %6071 = vmatpush1.bf16.msra.mxu0 %v4844
    %6072 = vmatprep.subr.bf16.mxu0 %v4837
    %6073 = vmatpush1.bf16.msra.mxu0 %v4836
    %6074 = vmatprep.subr.bf16.mxu0 %v4957
    %6075 = vmatpush2.bf16.msra.mxu0 %v4956
    %6076 = vmatprep.subr.bf16.mxu0 %v4949
    %6077 = vmatpush2.bf16.msra.mxu0 %v4948
    %6078 = vmatprep.subr.bf16.mxu0 %v4941
    %6079 = vmatpush2.bf16.msra.mxu0 %v4940
    %6080 = vmatprep.subr.bf16.mxu0 %v4933
    %6081 = vmatpush2.bf16.msra.mxu0 %v4932
    %6082 = vmatprep.subr.bf16.mxu0 %v4925
    %6083 = vmatpush2.bf16.msra.mxu0 %v4924
    %6084 = vmatprep.subr.bf16.mxu0 %v4917
    %6085 = vmatpush2.bf16.msra.mxu0 %v4916
    %6086 = vmatprep.subr.bf16.mxu0 %v4909
    %6087 = vmatpush2.bf16.msra.mxu0 %v4908
    %6088 = vmatprep.subr.bf16.mxu0 %v4901
    %6089 = vmatpush2.bf16.msra.mxu0 %v4900
    %6090 = vmatprep.mubr.bf16.mxu0 %v5975
    %6091 = vmatmul.mubr.bf16.gmra.mxu0 %v5974
    %v6092 = vpop.f32.mrf.mxu0
    %v6093 = vadd.f32 0.0, %v6092
    %v6094 = vpop.f32.mrf.mxu0
    %v6095 = vadd.f32 0.0, %v6094
    %v6096 = vpop.f32.mrf.mxu0
    %v6097 = vpop.f32.mrf.mxu0
    %6098 = vdwg.mxu0
    %6099 = vmatprep.subr.bf16.mxu0 %v4895
    %6100 = vmatpush1.bf16.msra.mxu0 %v4894
    %6101 = vmatprep.subr.bf16.mxu0 %v4887
    %6102 = vmatpush1.bf16.msra.mxu0 %v4886
    %6103 = vmatprep.subr.bf16.mxu0 %v4879
    %6104 = vmatpush1.bf16.msra.mxu0 %v4878
    %6105 = vmatprep.subr.bf16.mxu0 %v4871
    %6106 = vmatpush1.bf16.msra.mxu0 %v4870
    %6107 = vmatprep.subr.bf16.mxu0 %v4863
    %6108 = vmatpush1.bf16.msra.mxu0 %v4862
    %6109 = vmatprep.subr.bf16.mxu0 %v4855
    %6110 = vmatpush1.bf16.msra.mxu0 %v4854
    %6111 = vmatprep.subr.bf16.mxu0 %v4847
    %6112 = vmatpush1.bf16.msra.mxu0 %v4846
    %6113 = vmatprep.subr.bf16.mxu0 %v4839
    %6114 = vmatpush1.bf16.msra.mxu0 %v4838
    %6115 = vmatprep.subr.bf16.mxu0 %v4959
    %6116 = vmatpush2.bf16.msra.mxu0 %v4958
    %6117 = vmatprep.subr.bf16.mxu0 %v4951
    %6118 = vmatpush2.bf16.msra.mxu0 %v4950
    %6119 = vmatprep.subr.bf16.mxu0 %v4943
    %6120 = vmatpush2.bf16.msra.mxu0 %v4942
    %6121 = vmatprep.subr.bf16.mxu0 %v4935
    %6122 = vmatpush2.bf16.msra.mxu0 %v4934
    %6123 = vmatprep.subr.bf16.mxu0 %v4927
    %6124 = vmatpush2.bf16.msra.mxu0 %v4926
    %6125 = vmatprep.subr.bf16.mxu0 %v4919
    %6126 = vmatpush2.bf16.msra.mxu0 %v4918
    %6127 = vmatprep.subr.bf16.mxu0 %v4911
    %6128 = vmatpush2.bf16.msra.mxu0 %v4910
    %6129 = vmatprep.subr.bf16.mxu0 %v4903
    %6130 = vmatpush2.bf16.msra.mxu0 %v4902
    %6131 = vmatprep.mubr.bf16.mxu0 %v5975
    %6132 = vmatmul.mubr.bf16.gmra.mxu0 %v5974
    %v6133 = vpop.f32.mrf.mxu0
    %v6134 = vadd.f32 0.0, %v6133
    %v6135 = vpop.f32.mrf.mxu0
    %v6136 = vadd.f32 0.0, %v6135
    %v6137 = vpop.f32.mrf.mxu0
    %v6138 = vpop.f32.mrf.mxu0
    %6139 = vdwg.mxu0
    %v6140 = vadd.f32 %v4083, %v6011
    %v6141 = vadd.f32 %v4085, %v6013
    %v6142 = vadd.f32 %v4156, %v6052
    %v6143 = vadd.f32 %v4158, %v6054
    %v6144 = vadd.f32 %v4229, %v6093
    %v6145 = vadd.f32 %v4231, %v6095
    %v6146 = vadd.f32 %v4302, %v6134
    %v6147 = vadd.f32 %v4304, %v6136
    %v6148 = vxor.u32 %v6140, 2147483648
    %v6149 = vxor.u32 %v6141, 2147483648
    %v6150 = vmul.f32 %v6148, 1.442695
    %v6151 = vpow.pop %v6150
    %v6152 = vmul.f32 %v6149, 1.442695
    %v6153 = vpow.pop %v6152
    %v6154 = vadd.f32 %v6151, 1.0
    %v6155 = vadd.f32 %v6153, 1.0
    %v6156 = vrcp.pop %v6154
    %v6157 = vmul.f32 1.0, %v6156
    %v6158 = vrcp.pop %v6155
    %v6159 = vmul.f32 1.0, %v6158
    %v6160 = vxor.u32 %v6142, 2147483648
    %v6161 = vxor.u32 %v6143, 2147483648
    %v6162 = vmul.f32 %v6160, 1.442695
    %v6163 = vpow.pop %v6162
    %v6164 = vmul.f32 %v6161, 1.442695
    %v6165 = vpow.pop %v6164
    %v6166 = vadd.f32 %v6163, 1.0
    %v6167 = vadd.f32 %v6165, 1.0
    %v6168 = vrcp.pop %v6166
    %v6169 = vmul.f32 1.0, %v6168
    %v6170 = vrcp.pop %v6167
    %v6171 = vmul.f32 1.0, %v6170
    %v6172 = vtanh.pop %v6144
    %v6173 = vtanh.pop %v6145
    %v6174 = vxor.u32 %v6146, 2147483648
    %v6175 = vxor.u32 %v6147, 2147483648
    %v6176 = vmul.f32 %v6174, 1.442695
    %v6177 = vpow.pop %v6176
    %v6178 = vmul.f32 %v6175, 1.442695
    %v6179 = vpow.pop %v6178
    %v6180 = vadd.f32 %v6177, 1.0
    %v6181 = vadd.f32 %v6179, 1.0
    %v6182 = vrcp.pop %v6180
    %v6183 = vmul.f32 1.0, %v6182
    %v6184 = vrcp.pop %v6181
    %v6185 = vmul.f32 1.0, %v6184
    %v6186 = vmul.f32 %v6169, %v5968
    %v6187 = vmul.f32 %v6171, %v5969
    %v6188 = vmul.f32 %v6157, %v6172
    %v6189 = vmul.f32 %v6159, %v6173
    %v6190 = vadd.f32 %v6186, %v6188
    %v6191 = vadd.f32 %v6187, %v6189
    %v6192 = vtanh.pop %v6190
    %v6193 = vtanh.pop %v6191
    %v6194 = vmul.f32 %v6183, %v6192
    %v6195 = vmul.f32 %v6185, %v6193
    %v6196 = vpack.c.bf16 %v6194, %v6194
    %v6197 = vpack.c.bf16 %v6195, %v6195
    %6198 = vmatprep.subr.bf16.mxu0 %v4889
    %6199 = vmatpush1.bf16.msra.mxu0 %v4888
    %6200 = vmatprep.subr.bf16.mxu0 %v4881
    %6201 = vmatpush1.bf16.msra.mxu0 %v4880
    %6202 = vmatprep.subr.bf16.mxu0 %v4873
    %6203 = vmatpush1.bf16.msra.mxu0 %v4872
    %6204 = vmatprep.subr.bf16.mxu0 %v4865
    %6205 = vmatpush1.bf16.msra.mxu0 %v4864
    %6206 = vmatprep.subr.bf16.mxu0 %v4857
    %6207 = vmatpush1.bf16.msra.mxu0 %v4856
    %6208 = vmatprep.subr.bf16.mxu0 %v4849
    %6209 = vmatpush1.bf16.msra.mxu0 %v4848
    %6210 = vmatprep.subr.bf16.mxu0 %v4841
    %6211 = vmatpush1.bf16.msra.mxu0 %v4840
    %6212 = vmatprep.subr.bf16.mxu0 %v4833
    %6213 = vmatpush1.bf16.msra.mxu0 %v4832
    %6214 = vmatprep.subr.bf16.mxu0 %v4953
    %6215 = vmatpush2.bf16.msra.mxu0 %v4952
    %6216 = vmatprep.subr.bf16.mxu0 %v4945
    %6217 = vmatpush2.bf16.msra.mxu0 %v4944
    %6218 = vmatprep.subr.bf16.mxu0 %v4937
    %6219 = vmatpush2.bf16.msra.mxu0 %v4936
    %6220 = vmatprep.subr.bf16.mxu0 %v4929
    %6221 = vmatpush2.bf16.msra.mxu0 %v4928
    %6222 = vmatprep.subr.bf16.mxu0 %v4921
    %6223 = vmatpush2.bf16.msra.mxu0 %v4920
    %6224 = vmatprep.subr.bf16.mxu0 %v4913
    %6225 = vmatpush2.bf16.msra.mxu0 %v4912
    %6226 = vmatprep.subr.bf16.mxu0 %v4905
    %6227 = vmatpush2.bf16.msra.mxu0 %v4904
    %6228 = vmatprep.subr.bf16.mxu0 %v4897
    %6229 = vmatpush2.bf16.msra.mxu0 %v4896
    %6230 = vmatprep.mubr.bf16.mxu0 %v6197
    %6231 = vmatmul.mubr.bf16.gmra.mxu0 %v6196
    %v6232 = vpop.f32.mrf.mxu0
    %v6233 = vadd.f32 0.0, %v6232
    %v6234 = vpop.f32.mrf.mxu0
    %v6235 = vadd.f32 0.0, %v6234
    %v6236 = vpop.f32.mrf.mxu0
    %v6237 = vpop.f32.mrf.mxu0
    %6238 = vdwg.mxu0
    %6239 = vmatprep.subr.bf16.mxu0 %v4891
    %6240 = vmatpush1.bf16.msra.mxu0 %v4890
    %6241 = vmatprep.subr.bf16.mxu0 %v4883
    %6242 = vmatpush1.bf16.msra.mxu0 %v4882
    %6243 = vmatprep.subr.bf16.mxu0 %v4875
    %6244 = vmatpush1.bf16.msra.mxu0 %v4874
    %6245 = vmatprep.subr.bf16.mxu0 %v4867
    %6246 = vmatpush1.bf16.msra.mxu0 %v4866
    %6247 = vmatprep.subr.bf16.mxu0 %v4859
    %6248 = vmatpush1.bf16.msra.mxu0 %v4858
    %6249 = vmatprep.subr.bf16.mxu0 %v4851
    %6250 = vmatpush1.bf16.msra.mxu0 %v4850
    %6251 = vmatprep.subr.bf16.mxu0 %v4843
    %6252 = vmatpush1.bf16.msra.mxu0 %v4842
    %6253 = vmatprep.subr.bf16.mxu0 %v4835
    %6254 = vmatpush1.bf16.msra.mxu0 %v4834
    %6255 = vmatprep.subr.bf16.mxu0 %v4955
    %6256 = vmatpush2.bf16.msra.mxu0 %v4954
    %6257 = vmatprep.subr.bf16.mxu0 %v4947
    %6258 = vmatpush2.bf16.msra.mxu0 %v4946
    %6259 = vmatprep.subr.bf16.mxu0 %v4939
    %6260 = vmatpush2.bf16.msra.mxu0 %v4938
    %6261 = vmatprep.subr.bf16.mxu0 %v4931
    %6262 = vmatpush2.bf16.msra.mxu0 %v4930
    %6263 = vmatprep.subr.bf16.mxu0 %v4923
    %6264 = vmatpush2.bf16.msra.mxu0 %v4922
    %6265 = vmatprep.subr.bf16.mxu0 %v4915
    %6266 = vmatpush2.bf16.msra.mxu0 %v4914
    %6267 = vmatprep.subr.bf16.mxu0 %v4907
    %6268 = vmatpush2.bf16.msra.mxu0 %v4906
    %6269 = vmatprep.subr.bf16.mxu0 %v4899
    %6270 = vmatpush2.bf16.msra.mxu0 %v4898
    %6271 = vmatprep.mubr.bf16.mxu0 %v6197
    %6272 = vmatmul.mubr.bf16.gmra.mxu0 %v6196
    %v6273 = vpop.f32.mrf.mxu0
    %v6274 = vadd.f32 0.0, %v6273
    %v6275 = vpop.f32.mrf.mxu0
    %v6276 = vadd.f32 0.0, %v6275
    %v6277 = vpop.f32.mrf.mxu0
    %v6278 = vpop.f32.mrf.mxu0
    %6279 = vdwg.mxu0
    %6280 = vmatprep.subr.bf16.mxu0 %v4893
    %6281 = vmatpush1.bf16.msra.mxu0 %v4892
    %6282 = vmatprep.subr.bf16.mxu0 %v4885
    %6283 = vmatpush1.bf16.msra.mxu0 %v4884
    %6284 = vmatprep.subr.bf16.mxu0 %v4877
    %6285 = vmatpush1.bf16.msra.mxu0 %v4876
    %6286 = vmatprep.subr.bf16.mxu0 %v4869
    %6287 = vmatpush1.bf16.msra.mxu0 %v4868
    %6288 = vmatprep.subr.bf16.mxu0 %v4861
    %6289 = vmatpush1.bf16.msra.mxu0 %v4860
    %6290 = vmatprep.subr.bf16.mxu0 %v4853
    %6291 = vmatpush1.bf16.msra.mxu0 %v4852
    %6292 = vmatprep.subr.bf16.mxu0 %v4845
    %6293 = vmatpush1.bf16.msra.mxu0 %v4844
    %6294 = vmatprep.subr.bf16.mxu0 %v4837
    %6295 = vmatpush1.bf16.msra.mxu0 %v4836
    %6296 = vmatprep.subr.bf16.mxu0 %v4957
    %6297 = vmatpush2.bf16.msra.mxu0 %v4956
    %6298 = vmatprep.subr.bf16.mxu0 %v4949
    %6299 = vmatpush2.bf16.msra.mxu0 %v4948
    %6300 = vmatprep.subr.bf16.mxu0 %v4941
    %6301 = vmatpush2.bf16.msra.mxu0 %v4940
    %6302 = vmatprep.subr.bf16.mxu0 %v4933
    %6303 = vmatpush2.bf16.msra.mxu0 %v4932
    %6304 = vmatprep.subr.bf16.mxu0 %v4925
    %6305 = vmatpush2.bf16.msra.mxu0 %v4924
    %6306 = vmatprep.subr.bf16.mxu0 %v4917
    %6307 = vmatpush2.bf16.msra.mxu0 %v4916
    %6308 = vmatprep.subr.bf16.mxu0 %v4909
    %6309 = vmatpush2.bf16.msra.mxu0 %v4908
    %6310 = vmatprep.subr.bf16.mxu0 %v4901
    %6311 = vmatpush2.bf16.msra.mxu0 %v4900
    %6312 = vmatprep.mubr.bf16.mxu0 %v6197
    %6313 = vmatmul.mubr.bf16.gmra.mxu0 %v6196
    %v6314 = vpop.f32.mrf.mxu0
    %v6315 = vadd.f32 0.0, %v6314
    %v6316 = vpop.f32.mrf.mxu0
    %v6317 = vadd.f32 0.0, %v6316
    %v6318 = vpop.f32.mrf.mxu0
    %v6319 = vpop.f32.mrf.mxu0
    %6320 = vdwg.mxu0
    %6321 = vmatprep.subr.bf16.mxu0 %v4895
    %6322 = vmatpush1.bf16.msra.mxu0 %v4894
    %6323 = vmatprep.subr.bf16.mxu0 %v4887
    %6324 = vmatpush1.bf16.msra.mxu0 %v4886
    %6325 = vmatprep.subr.bf16.mxu0 %v4879
    %6326 = vmatpush1.bf16.msra.mxu0 %v4878
    %6327 = vmatprep.subr.bf16.mxu0 %v4871
    %6328 = vmatpush1.bf16.msra.mxu0 %v4870
    %6329 = vmatprep.subr.bf16.mxu0 %v4863
    %6330 = vmatpush1.bf16.msra.mxu0 %v4862
    %6331 = vmatprep.subr.bf16.mxu0 %v4855
    %6332 = vmatpush1.bf16.msra.mxu0 %v4854
    %6333 = vmatprep.subr.bf16.mxu0 %v4847
    %6334 = vmatpush1.bf16.msra.mxu0 %v4846
    %6335 = vmatprep.subr.bf16.mxu0 %v4839
    %6336 = vmatpush1.bf16.msra.mxu0 %v4838
    %6337 = vmatprep.subr.bf16.mxu0 %v4959
    %6338 = vmatpush2.bf16.msra.mxu0 %v4958
    %6339 = vmatprep.subr.bf16.mxu0 %v4951
    %6340 = vmatpush2.bf16.msra.mxu0 %v4950
    %6341 = vmatprep.subr.bf16.mxu0 %v4943
    %6342 = vmatpush2.bf16.msra.mxu0 %v4942
    %6343 = vmatprep.subr.bf16.mxu0 %v4935
    %6344 = vmatpush2.bf16.msra.mxu0 %v4934
    %6345 = vmatprep.subr.bf16.mxu0 %v4927
    %6346 = vmatpush2.bf16.msra.mxu0 %v4926
    %6347 = vmatprep.subr.bf16.mxu0 %v4919
    %6348 = vmatpush2.bf16.msra.mxu0 %v4918
    %6349 = vmatprep.subr.bf16.mxu0 %v4911
    %6350 = vmatpush2.bf16.msra.mxu0 %v4910
    %6351 = vmatprep.subr.bf16.mxu0 %v4903
    %6352 = vmatpush2.bf16.msra.mxu0 %v4902
    %6353 = vmatprep.mubr.bf16.mxu0 %v6197
    %6354 = vmatmul.mubr.bf16.gmra.mxu0 %v6196
    %v6355 = vpop.f32.mrf.mxu0
    %v6356 = vadd.f32 0.0, %v6355
    %v6357 = vpop.f32.mrf.mxu0
    %v6358 = vadd.f32 0.0, %v6357
    %v6359 = vpop.f32.mrf.mxu0
    %v6360 = vpop.f32.mrf.mxu0
    %6361 = vdwg.mxu0
    %v6362 = vadd.f32 %v4087, %v6233
    %v6363 = vadd.f32 %v4089, %v6235
    %v6364 = vadd.f32 %v4160, %v6274
    %v6365 = vadd.f32 %v4162, %v6276
    %v6366 = vadd.f32 %v4233, %v6315
    %v6367 = vadd.f32 %v4235, %v6317
    %v6368 = vadd.f32 %v4306, %v6356
    %v6369 = vadd.f32 %v4308, %v6358
    %v6370 = vxor.u32 %v6362, 2147483648
    %v6371 = vxor.u32 %v6363, 2147483648
    %v6372 = vmul.f32 %v6370, 1.442695
    %v6373 = vpow.pop %v6372
    %v6374 = vmul.f32 %v6371, 1.442695
    %v6375 = vpow.pop %v6374
    %v6376 = vadd.f32 %v6373, 1.0
    %v6377 = vadd.f32 %v6375, 1.0
    %v6378 = vrcp.pop %v6376
    %v6379 = vmul.f32 1.0, %v6378
    %v6380 = vrcp.pop %v6377
    %v6381 = vmul.f32 1.0, %v6380
    %v6382 = vxor.u32 %v6364, 2147483648
    %v6383 = vxor.u32 %v6365, 2147483648
    %v6384 = vmul.f32 %v6382, 1.442695
    %v6385 = vpow.pop %v6384
    %v6386 = vmul.f32 %v6383, 1.442695
    %v6387 = vpow.pop %v6386
    %v6388 = vadd.f32 %v6385, 1.0
    %v6389 = vadd.f32 %v6387, 1.0
    %v6390 = vrcp.pop %v6388
    %v6391 = vmul.f32 1.0, %v6390
    %v6392 = vrcp.pop %v6389
    %v6393 = vmul.f32 1.0, %v6392
    %v6394 = vtanh.pop %v6366
    %v6395 = vtanh.pop %v6367
    %v6396 = vxor.u32 %v6368, 2147483648
    %v6397 = vxor.u32 %v6369, 2147483648
    %v6398 = vmul.f32 %v6396, 1.442695
    %v6399 = vpow.pop %v6398
    %v6400 = vmul.f32 %v6397, 1.442695
    %v6401 = vpow.pop %v6400
    %v6402 = vadd.f32 %v6399, 1.0
    %v6403 = vadd.f32 %v6401, 1.0
    %v6404 = vrcp.pop %v6402
    %v6405 = vmul.f32 1.0, %v6404
    %v6406 = vrcp.pop %v6403
    %v6407 = vmul.f32 1.0, %v6406
    %v6408 = vmul.f32 %v6391, %v6190
    %v6409 = vmul.f32 %v6393, %v6191
    %v6410 = vmul.f32 %v6379, %v6394
    %v6411 = vmul.f32 %v6381, %v6395
    %v6412 = vadd.f32 %v6408, %v6410
    %v6413 = vadd.f32 %v6409, %v6411
    %v6414 = vtanh.pop %v6412
    %v6415 = vtanh.pop %v6413
    %v6416 = vmul.f32 %v6405, %v6414
    %v6417 = vmul.f32 %v6407, %v6415
    %v6418 = vpack.c.bf16 %v6416, %v6416
    %v6419 = vpack.c.bf16 %v6417, %v6417
    %6420 = vmatprep.subr.bf16.mxu0 %v4889
    %6421 = vmatpush1.bf16.msra.mxu0 %v4888
    %6422 = vmatprep.subr.bf16.mxu0 %v4881
    %6423 = vmatpush1.bf16.msra.mxu0 %v4880
    %6424 = vmatprep.subr.bf16.mxu0 %v4873
    %6425 = vmatpush1.bf16.msra.mxu0 %v4872
    %6426 = vmatprep.subr.bf16.mxu0 %v4865
    %6427 = vmatpush1.bf16.msra.mxu0 %v4864
    %6428 = vmatprep.subr.bf16.mxu0 %v4857
    %6429 = vmatpush1.bf16.msra.mxu0 %v4856
    %6430 = vmatprep.subr.bf16.mxu0 %v4849
    %6431 = vmatpush1.bf16.msra.mxu0 %v4848
    %6432 = vmatprep.subr.bf16.mxu0 %v4841
    %6433 = vmatpush1.bf16.msra.mxu0 %v4840
    %6434 = vmatprep.subr.bf16.mxu0 %v4833
    %6435 = vmatpush1.bf16.msra.mxu0 %v4832
    %6436 = vmatprep.subr.bf16.mxu0 %v4953
    %6437 = vmatpush2.bf16.msra.mxu0 %v4952
    %6438 = vmatprep.subr.bf16.mxu0 %v4945
    %6439 = vmatpush2.bf16.msra.mxu0 %v4944
    %6440 = vmatprep.subr.bf16.mxu0 %v4937
    %6441 = vmatpush2.bf16.msra.mxu0 %v4936
    %6442 = vmatprep.subr.bf16.mxu0 %v4929
    %6443 = vmatpush2.bf16.msra.mxu0 %v4928
    %6444 = vmatprep.subr.bf16.mxu0 %v4921
    %6445 = vmatpush2.bf16.msra.mxu0 %v4920
    %6446 = vmatprep.subr.bf16.mxu0 %v4913
    %6447 = vmatpush2.bf16.msra.mxu0 %v4912
    %6448 = vmatprep.subr.bf16.mxu0 %v4905
    %6449 = vmatpush2.bf16.msra.mxu0 %v4904
    %6450 = vmatprep.subr.bf16.mxu0 %v4897
    %6451 = vmatpush2.bf16.msra.mxu0 %v4896
    %6452 = vmatprep.mubr.bf16.mxu0 %v6419
    %6453 = vmatmul.mubr.bf16.gmra.mxu0 %v6418
    %v6454 = vpop.f32.mrf.mxu0
    %v6455 = vadd.f32 0.0, %v6454
    %v6456 = vpop.f32.mrf.mxu0
    %v6457 = vadd.f32 0.0, %v6456
    %v6458 = vpop.f32.mrf.mxu0
    %v6459 = vpop.f32.mrf.mxu0
    %6460 = vdwg.mxu0
    %6461 = vmatprep.subr.bf16.mxu0 %v4891
    %6462 = vmatpush1.bf16.msra.mxu0 %v4890
    %6463 = vmatprep.subr.bf16.mxu0 %v4883
    %6464 = vmatpush1.bf16.msra.mxu0 %v4882
    %6465 = vmatprep.subr.bf16.mxu0 %v4875
    %6466 = vmatpush1.bf16.msra.mxu0 %v4874
    %6467 = vmatprep.subr.bf16.mxu0 %v4867
    %6468 = vmatpush1.bf16.msra.mxu0 %v4866
    %6469 = vmatprep.subr.bf16.mxu0 %v4859
    %6470 = vmatpush1.bf16.msra.mxu0 %v4858
    %6471 = vmatprep.subr.bf16.mxu0 %v4851
    %6472 = vmatpush1.bf16.msra.mxu0 %v4850
    %6473 = vmatprep.subr.bf16.mxu0 %v4843
    %6474 = vmatpush1.bf16.msra.mxu0 %v4842
    %6475 = vmatprep.subr.bf16.mxu0 %v4835
    %6476 = vmatpush1.bf16.msra.mxu0 %v4834
    %6477 = vmatprep.subr.bf16.mxu0 %v4955
    %6478 = vmatpush2.bf16.msra.mxu0 %v4954
    %6479 = vmatprep.subr.bf16.mxu0 %v4947
    %6480 = vmatpush2.bf16.msra.mxu0 %v4946
    %6481 = vmatprep.subr.bf16.mxu0 %v4939
    %6482 = vmatpush2.bf16.msra.mxu0 %v4938
    %6483 = vmatprep.subr.bf16.mxu0 %v4931
    %6484 = vmatpush2.bf16.msra.mxu0 %v4930
    %6485 = vmatprep.subr.bf16.mxu0 %v4923
    %6486 = vmatpush2.bf16.msra.mxu0 %v4922
    %6487 = vmatprep.subr.bf16.mxu0 %v4915
    %6488 = vmatpush2.bf16.msra.mxu0 %v4914
    %6489 = vmatprep.subr.bf16.mxu0 %v4907
    %6490 = vmatpush2.bf16.msra.mxu0 %v4906
    %6491 = vmatprep.subr.bf16.mxu0 %v4899
    %6492 = vmatpush2.bf16.msra.mxu0 %v4898
    %6493 = vmatprep.mubr.bf16.mxu0 %v6419
    %6494 = vmatmul.mubr.bf16.gmra.mxu0 %v6418
    %v6495 = vpop.f32.mrf.mxu0
    %v6496 = vadd.f32 0.0, %v6495
    %v6497 = vpop.f32.mrf.mxu0
    %v6498 = vadd.f32 0.0, %v6497
    %v6499 = vpop.f32.mrf.mxu0
    %v6500 = vpop.f32.mrf.mxu0
    %6501 = vdwg.mxu0
    %6502 = vmatprep.subr.bf16.mxu0 %v4893
    %6503 = vmatpush1.bf16.msra.mxu0 %v4892
    %6504 = vmatprep.subr.bf16.mxu0 %v4885
    %6505 = vmatpush1.bf16.msra.mxu0 %v4884
    %6506 = vmatprep.subr.bf16.mxu0 %v4877
    %6507 = vmatpush1.bf16.msra.mxu0 %v4876
    %6508 = vmatprep.subr.bf16.mxu0 %v4869
    %6509 = vmatpush1.bf16.msra.mxu0 %v4868
    %6510 = vmatprep.subr.bf16.mxu0 %v4861
    %6511 = vmatpush1.bf16.msra.mxu0 %v4860
    %6512 = vmatprep.subr.bf16.mxu0 %v4853
    %6513 = vmatpush1.bf16.msra.mxu0 %v4852
    %6514 = vmatprep.subr.bf16.mxu0 %v4845
    %6515 = vmatpush1.bf16.msra.mxu0 %v4844
    %6516 = vmatprep.subr.bf16.mxu0 %v4837
    %6517 = vmatpush1.bf16.msra.mxu0 %v4836
    %6518 = vmatprep.subr.bf16.mxu0 %v4957
    %6519 = vmatpush2.bf16.msra.mxu0 %v4956
    %6520 = vmatprep.subr.bf16.mxu0 %v4949
    %6521 = vmatpush2.bf16.msra.mxu0 %v4948
    %6522 = vmatprep.subr.bf16.mxu0 %v4941
    %6523 = vmatpush2.bf16.msra.mxu0 %v4940
    %6524 = vmatprep.subr.bf16.mxu0 %v4933
    %6525 = vmatpush2.bf16.msra.mxu0 %v4932
    %6526 = vmatprep.subr.bf16.mxu0 %v4925
    %6527 = vmatpush2.bf16.msra.mxu0 %v4924
    %6528 = vmatprep.subr.bf16.mxu0 %v4917
    %6529 = vmatpush2.bf16.msra.mxu0 %v4916
    %6530 = vmatprep.subr.bf16.mxu0 %v4909
    %6531 = vmatpush2.bf16.msra.mxu0 %v4908
    %6532 = vmatprep.subr.bf16.mxu0 %v4901
    %6533 = vmatpush2.bf16.msra.mxu0 %v4900
    %6534 = vmatprep.mubr.bf16.mxu0 %v6419
    %6535 = vmatmul.mubr.bf16.gmra.mxu0 %v6418
    %v6536 = vpop.f32.mrf.mxu0
    %v6537 = vadd.f32 0.0, %v6536
    %v6538 = vpop.f32.mrf.mxu0
    %v6539 = vadd.f32 0.0, %v6538
    %v6540 = vpop.f32.mrf.mxu0
    %v6541 = vpop.f32.mrf.mxu0
    %6542 = vdwg.mxu0
    %6543 = vmatprep.subr.bf16.mxu0 %v4895
    %6544 = vmatpush1.bf16.msra.mxu0 %v4894
    %6545 = vmatprep.subr.bf16.mxu0 %v4887
    %6546 = vmatpush1.bf16.msra.mxu0 %v4886
    %6547 = vmatprep.subr.bf16.mxu0 %v4879
    %6548 = vmatpush1.bf16.msra.mxu0 %v4878
    %6549 = vmatprep.subr.bf16.mxu0 %v4871
    %6550 = vmatpush1.bf16.msra.mxu0 %v4870
    %6551 = vmatprep.subr.bf16.mxu0 %v4863
    %6552 = vmatpush1.bf16.msra.mxu0 %v4862
    %6553 = vmatprep.subr.bf16.mxu0 %v4855
    %6554 = vmatpush1.bf16.msra.mxu0 %v4854
    %6555 = vmatprep.subr.bf16.mxu0 %v4847
    %6556 = vmatpush1.bf16.msra.mxu0 %v4846
    %6557 = vmatprep.subr.bf16.mxu0 %v4839
    %6558 = vmatpush1.bf16.msra.mxu0 %v4838
    %6559 = vmatprep.subr.bf16.mxu0 %v4959
    %6560 = vmatpush2.bf16.msra.mxu0 %v4958
    %6561 = vmatprep.subr.bf16.mxu0 %v4951
    %6562 = vmatpush2.bf16.msra.mxu0 %v4950
    %6563 = vmatprep.subr.bf16.mxu0 %v4943
    %6564 = vmatpush2.bf16.msra.mxu0 %v4942
    %6565 = vmatprep.subr.bf16.mxu0 %v4935
    %6566 = vmatpush2.bf16.msra.mxu0 %v4934
    %6567 = vmatprep.subr.bf16.mxu0 %v4927
    %6568 = vmatpush2.bf16.msra.mxu0 %v4926
    %6569 = vmatprep.subr.bf16.mxu0 %v4919
    %6570 = vmatpush2.bf16.msra.mxu0 %v4918
    %6571 = vmatprep.subr.bf16.mxu0 %v4911
    %6572 = vmatpush2.bf16.msra.mxu0 %v4910
    %6573 = vmatprep.subr.bf16.mxu0 %v4903
    %6574 = vmatpush2.bf16.msra.mxu0 %v4902
    %6575 = vmatprep.mubr.bf16.mxu0 %v6419
    %6576 = vmatmul.mubr.bf16.gmra.mxu0 %v6418
    %v6577 = vpop.f32.mrf.mxu0
    %v6578 = vadd.f32 0.0, %v6577
    %v6579 = vpop.f32.mrf.mxu0
    %v6580 = vadd.f32 0.0, %v6579
    %v6581 = vpop.f32.mrf.mxu0
    %v6582 = vpop.f32.mrf.mxu0
    %6583 = vdwg.mxu0
    %v6584 = vadd.f32 %v4093, %v6455
    %v6585 = vadd.f32 %v4095, %v6457
    %v6586 = vadd.f32 %v4166, %v6496
    %v6587 = vadd.f32 %v4168, %v6498
    %v6588 = vadd.f32 %v4239, %v6537
    %v6589 = vadd.f32 %v4241, %v6539
    %v6590 = vadd.f32 %v4312, %v6578
    %v6591 = vadd.f32 %v4314, %v6580
    %v6592 = vxor.u32 %v6584, 2147483648
    %v6593 = vxor.u32 %v6585, 2147483648
    %v6594 = vmul.f32 %v6592, 1.442695
    %v6595 = vpow.pop %v6594
    %v6596 = vmul.f32 %v6593, 1.442695
    %v6597 = vpow.pop %v6596
    %v6598 = vadd.f32 %v6595, 1.0
    %v6599 = vadd.f32 %v6597, 1.0
    %v6600 = vrcp.pop %v6598
    %v6601 = vmul.f32 1.0, %v6600
    %v6602 = vrcp.pop %v6599
    %v6603 = vmul.f32 1.0, %v6602
    %v6604 = vxor.u32 %v6586, 2147483648
    %v6605 = vxor.u32 %v6587, 2147483648
    %v6606 = vmul.f32 %v6604, 1.442695
    %v6607 = vpow.pop %v6606
    %v6608 = vmul.f32 %v6605, 1.442695
    %v6609 = vpow.pop %v6608
    %v6610 = vadd.f32 %v6607, 1.0
    %v6611 = vadd.f32 %v6609, 1.0
    %v6612 = vrcp.pop %v6610
    %v6613 = vmul.f32 1.0, %v6612
    %v6614 = vrcp.pop %v6611
    %v6615 = vmul.f32 1.0, %v6614
    %v6616 = vtanh.pop %v6588
    %v6617 = vtanh.pop %v6589
    %v6618 = vxor.u32 %v6590, 2147483648
    %v6619 = vxor.u32 %v6591, 2147483648
    %v6620 = vmul.f32 %v6618, 1.442695
    %v6621 = vpow.pop %v6620
    %v6622 = vmul.f32 %v6619, 1.442695
    %v6623 = vpow.pop %v6622
    %v6624 = vadd.f32 %v6621, 1.0
    %v6625 = vadd.f32 %v6623, 1.0
    %v6626 = vrcp.pop %v6624
    %v6627 = vmul.f32 1.0, %v6626
    %v6628 = vrcp.pop %v6625
    %v6629 = vmul.f32 1.0, %v6628
    %v6630 = vmul.f32 %v6613, %v6412
    %v6631 = vmul.f32 %v6615, %v6413
    %v6632 = vmul.f32 %v6601, %v6616
    %v6633 = vmul.f32 %v6603, %v6617
    %v6634 = vadd.f32 %v6630, %v6632
    %v6635 = vadd.f32 %v6631, %v6633
    %v6636 = vtanh.pop %v6634
    %v6637 = vtanh.pop %v6635
    %v6638 = vmul.f32 %v6627, %v6636
    %v6639 = vmul.f32 %v6629, %v6637
    %v6640 = vpack.c.bf16 %v6638, %v6638
    %v6641 = vpack.c.bf16 %v6639, %v6639
    %6642 = vmatprep.subr.bf16.mxu0 %v4889
    %6643 = vmatpush1.bf16.msra.mxu0 %v4888
    %6644 = vmatprep.subr.bf16.mxu0 %v4881
    %6645 = vmatpush1.bf16.msra.mxu0 %v4880
    %6646 = vmatprep.subr.bf16.mxu0 %v4873
    %6647 = vmatpush1.bf16.msra.mxu0 %v4872
    %6648 = vmatprep.subr.bf16.mxu0 %v4865
    %6649 = vmatpush1.bf16.msra.mxu0 %v4864
    %6650 = vmatprep.subr.bf16.mxu0 %v4857
    %6651 = vmatpush1.bf16.msra.mxu0 %v4856
    %6652 = vmatprep.subr.bf16.mxu0 %v4849
    %6653 = vmatpush1.bf16.msra.mxu0 %v4848
    %6654 = vmatprep.subr.bf16.mxu0 %v4841
    %6655 = vmatpush1.bf16.msra.mxu0 %v4840
    %6656 = vmatprep.subr.bf16.mxu0 %v4833
    %6657 = vmatpush1.bf16.msra.mxu0 %v4832
    %6658 = vmatprep.subr.bf16.mxu0 %v4953
    %6659 = vmatpush2.bf16.msra.mxu0 %v4952
    %6660 = vmatprep.subr.bf16.mxu0 %v4945
    %6661 = vmatpush2.bf16.msra.mxu0 %v4944
    %6662 = vmatprep.subr.bf16.mxu0 %v4937
    %6663 = vmatpush2.bf16.msra.mxu0 %v4936
    %6664 = vmatprep.subr.bf16.mxu0 %v4929
    %6665 = vmatpush2.bf16.msra.mxu0 %v4928
    %6666 = vmatprep.subr.bf16.mxu0 %v4921
    %6667 = vmatpush2.bf16.msra.mxu0 %v4920
    %6668 = vmatprep.subr.bf16.mxu0 %v4913
    %6669 = vmatpush2.bf16.msra.mxu0 %v4912
    %6670 = vmatprep.subr.bf16.mxu0 %v4905
    %6671 = vmatpush2.bf16.msra.mxu0 %v4904
    %6672 = vmatprep.subr.bf16.mxu0 %v4897
    %6673 = vmatpush2.bf16.msra.mxu0 %v4896
    %6674 = vmatprep.mubr.bf16.mxu0 %v6641
    %6675 = vmatmul.mubr.bf16.gmra.mxu0 %v6640
    %v6676 = vpop.f32.mrf.mxu0
    %v6677 = vadd.f32 0.0, %v6676
    %v6678 = vpop.f32.mrf.mxu0
    %v6679 = vadd.f32 0.0, %v6678
    %v6680 = vpop.f32.mrf.mxu0
    %v6681 = vpop.f32.mrf.mxu0
    %6682 = vdwg.mxu0
    %6683 = vmatprep.subr.bf16.mxu0 %v4891
    %6684 = vmatpush1.bf16.msra.mxu0 %v4890
    %6685 = vmatprep.subr.bf16.mxu0 %v4883
    %6686 = vmatpush1.bf16.msra.mxu0 %v4882
    %6687 = vmatprep.subr.bf16.mxu0 %v4875
    %6688 = vmatpush1.bf16.msra.mxu0 %v4874
    %6689 = vmatprep.subr.bf16.mxu0 %v4867
    %6690 = vmatpush1.bf16.msra.mxu0 %v4866
    %6691 = vmatprep.subr.bf16.mxu0 %v4859
    %6692 = vmatpush1.bf16.msra.mxu0 %v4858
    %6693 = vmatprep.subr.bf16.mxu0 %v4851
    %6694 = vmatpush1.bf16.msra.mxu0 %v4850
    %6695 = vmatprep.subr.bf16.mxu0 %v4843
    %6696 = vmatpush1.bf16.msra.mxu0 %v4842
    %6697 = vmatprep.subr.bf16.mxu0 %v4835
    %6698 = vmatpush1.bf16.msra.mxu0 %v4834
    %6699 = vmatprep.subr.bf16.mxu0 %v4955
    %6700 = vmatpush2.bf16.msra.mxu0 %v4954
    %6701 = vmatprep.subr.bf16.mxu0 %v4947
    %6702 = vmatpush2.bf16.msra.mxu0 %v4946
    %6703 = vmatprep.subr.bf16.mxu0 %v4939
    %6704 = vmatpush2.bf16.msra.mxu0 %v4938
    %6705 = vmatprep.subr.bf16.mxu0 %v4931
    %6706 = vmatpush2.bf16.msra.mxu0 %v4930
    %6707 = vmatprep.subr.bf16.mxu0 %v4923
    %6708 = vmatpush2.bf16.msra.mxu0 %v4922
    %6709 = vmatprep.subr.bf16.mxu0 %v4915
    %6710 = vmatpush2.bf16.msra.mxu0 %v4914
    %6711 = vmatprep.subr.bf16.mxu0 %v4907
    %6712 = vmatpush2.bf16.msra.mxu0 %v4906
    %6713 = vmatprep.subr.bf16.mxu0 %v4899
    %6714 = vmatpush2.bf16.msra.mxu0 %v4898
    %6715 = vmatprep.mubr.bf16.mxu0 %v6641
    %6716 = vmatmul.mubr.bf16.gmra.mxu0 %v6640
    %v6717 = vpop.f32.mrf.mxu0
    %v6718 = vadd.f32 0.0, %v6717
    %v6719 = vpop.f32.mrf.mxu0
    %v6720 = vadd.f32 0.0, %v6719
    %v6721 = vpop.f32.mrf.mxu0
    %v6722 = vpop.f32.mrf.mxu0
    %6723 = vdwg.mxu0
    %6724 = vmatprep.subr.bf16.mxu0 %v4893
    %6725 = vmatpush1.bf16.msra.mxu0 %v4892
    %6726 = vmatprep.subr.bf16.mxu0 %v4885
    %6727 = vmatpush1.bf16.msra.mxu0 %v4884
    %6728 = vmatprep.subr.bf16.mxu0 %v4877
    %6729 = vmatpush1.bf16.msra.mxu0 %v4876
    %6730 = vmatprep.subr.bf16.mxu0 %v4869
    %6731 = vmatpush1.bf16.msra.mxu0 %v4868
    %6732 = vmatprep.subr.bf16.mxu0 %v4861
    %6733 = vmatpush1.bf16.msra.mxu0 %v4860
    %6734 = vmatprep.subr.bf16.mxu0 %v4853
    %6735 = vmatpush1.bf16.msra.mxu0 %v4852
    %6736 = vmatprep.subr.bf16.mxu0 %v4845
    %6737 = vmatpush1.bf16.msra.mxu0 %v4844
    %6738 = vmatprep.subr.bf16.mxu0 %v4837
    %6739 = vmatpush1.bf16.msra.mxu0 %v4836
    %6740 = vmatprep.subr.bf16.mxu0 %v4957
    %6741 = vmatpush2.bf16.msra.mxu0 %v4956
    %6742 = vmatprep.subr.bf16.mxu0 %v4949
    %6743 = vmatpush2.bf16.msra.mxu0 %v4948
    %6744 = vmatprep.subr.bf16.mxu0 %v4941
    %6745 = vmatpush2.bf16.msra.mxu0 %v4940
    %6746 = vmatprep.subr.bf16.mxu0 %v4933
    %6747 = vmatpush2.bf16.msra.mxu0 %v4932
    %6748 = vmatprep.subr.bf16.mxu0 %v4925
    %6749 = vmatpush2.bf16.msra.mxu0 %v4924
    %6750 = vmatprep.subr.bf16.mxu0 %v4917
    %6751 = vmatpush2.bf16.msra.mxu0 %v4916
    %6752 = vmatprep.subr.bf16.mxu0 %v4909
    %6753 = vmatpush2.bf16.msra.mxu0 %v4908
    %6754 = vmatprep.subr.bf16.mxu0 %v4901
    %6755 = vmatpush2.bf16.msra.mxu0 %v4900
    %6756 = vmatprep.mubr.bf16.mxu0 %v6641
    %6757 = vmatmul.mubr.bf16.gmra.mxu0 %v6640
    %v6758 = vpop.f32.mrf.mxu0
    %v6759 = vadd.f32 0.0, %v6758
    %v6760 = vpop.f32.mrf.mxu0
    %v6761 = vadd.f32 0.0, %v6760
    %v6762 = vpop.f32.mrf.mxu0
    %v6763 = vpop.f32.mrf.mxu0
    %6764 = vdwg.mxu0
    %6765 = vmatprep.subr.bf16.mxu0 %v4895
    %6766 = vmatpush1.bf16.msra.mxu0 %v4894
    %6767 = vmatprep.subr.bf16.mxu0 %v4887
    %6768 = vmatpush1.bf16.msra.mxu0 %v4886
    %6769 = vmatprep.subr.bf16.mxu0 %v4879
    %6770 = vmatpush1.bf16.msra.mxu0 %v4878
    %6771 = vmatprep.subr.bf16.mxu0 %v4871
    %6772 = vmatpush1.bf16.msra.mxu0 %v4870
    %6773 = vmatprep.subr.bf16.mxu0 %v4863
    %6774 = vmatpush1.bf16.msra.mxu0 %v4862
    %6775 = vmatprep.subr.bf16.mxu0 %v4855
    %6776 = vmatpush1.bf16.msra.mxu0 %v4854
    %6777 = vmatprep.subr.bf16.mxu0 %v4847
    %6778 = vmatpush1.bf16.msra.mxu0 %v4846
    %6779 = vmatprep.subr.bf16.mxu0 %v4839
    %6780 = vmatpush1.bf16.msra.mxu0 %v4838
    %6781 = vmatprep.subr.bf16.mxu0 %v4959
    %6782 = vmatpush2.bf16.msra.mxu0 %v4958
    %6783 = vmatprep.subr.bf16.mxu0 %v4951
    %6784 = vmatpush2.bf16.msra.mxu0 %v4950
    %6785 = vmatprep.subr.bf16.mxu0 %v4943
    %6786 = vmatpush2.bf16.msra.mxu0 %v4942
    %6787 = vmatprep.subr.bf16.mxu0 %v4935
    %6788 = vmatpush2.bf16.msra.mxu0 %v4934
    %6789 = vmatprep.subr.bf16.mxu0 %v4927
    %6790 = vmatpush2.bf16.msra.mxu0 %v4926
    %6791 = vmatprep.subr.bf16.mxu0 %v4919
    %6792 = vmatpush2.bf16.msra.mxu0 %v4918
    %6793 = vmatprep.subr.bf16.mxu0 %v4911
    %6794 = vmatpush2.bf16.msra.mxu0 %v4910
    %6795 = vmatprep.subr.bf16.mxu0 %v4903
    %6796 = vmatpush2.bf16.msra.mxu0 %v4902
    %6797 = vmatprep.mubr.bf16.mxu0 %v6641
    %6798 = vmatmul.mubr.bf16.gmra.mxu0 %v6640
    %v6799 = vpop.f32.mrf.mxu0
    %v6800 = vadd.f32 0.0, %v6799
    %v6801 = vpop.f32.mrf.mxu0
    %v6802 = vadd.f32 0.0, %v6801
    %v6803 = vpop.f32.mrf.mxu0
    %v6804 = vpop.f32.mrf.mxu0
    %6805 = vdwg.mxu0
    %v6806 = vadd.f32 %v4097, %v6677
    %v6807 = vadd.f32 %v4099, %v6679
    %v6808 = vadd.f32 %v4170, %v6718
    %v6809 = vadd.f32 %v4172, %v6720
    %v6810 = vadd.f32 %v4243, %v6759
    %v6811 = vadd.f32 %v4245, %v6761
    %v6812 = vadd.f32 %v4316, %v6800
    %v6813 = vadd.f32 %v4318, %v6802
    %v6814 = vxor.u32 %v6806, 2147483648
    %v6815 = vxor.u32 %v6807, 2147483648
    %v6816 = vmul.f32 %v6814, 1.442695
    %v6817 = vpow.pop %v6816
    %v6818 = vmul.f32 %v6815, 1.442695
    %v6819 = vpow.pop %v6818
    %v6820 = vadd.f32 %v6817, 1.0
    %v6821 = vadd.f32 %v6819, 1.0
    %v6822 = vrcp.pop %v6820
    %v6823 = vmul.f32 1.0, %v6822
    %v6824 = vrcp.pop %v6821
    %v6825 = vmul.f32 1.0, %v6824
    %v6826 = vxor.u32 %v6808, 2147483648
    %v6827 = vxor.u32 %v6809, 2147483648
    %v6828 = vmul.f32 %v6826, 1.442695
    %v6829 = vpow.pop %v6828
    %v6830 = vmul.f32 %v6827, 1.442695
    %v6831 = vpow.pop %v6830
    %v6832 = vadd.f32 %v6829, 1.0
    %v6833 = vadd.f32 %v6831, 1.0
    %v6834 = vrcp.pop %v6832
    %v6835 = vmul.f32 1.0, %v6834
    %v6836 = vrcp.pop %v6833
    %v6837 = vmul.f32 1.0, %v6836
    %v6838 = vtanh.pop %v6810
    %v6839 = vtanh.pop %v6811
    %v6840 = vxor.u32 %v6812, 2147483648
    %v6841 = vxor.u32 %v6813, 2147483648
    %v6842 = vmul.f32 %v6840, 1.442695
    %v6843 = vpow.pop %v6842
    %v6844 = vmul.f32 %v6841, 1.442695
    %v6845 = vpow.pop %v6844
    %v6846 = vadd.f32 %v6843, 1.0
    %v6847 = vadd.f32 %v6845, 1.0
    %v6848 = vrcp.pop %v6846
    %v6849 = vmul.f32 1.0, %v6848
    %v6850 = vrcp.pop %v6847
    %v6851 = vmul.f32 1.0, %v6850
    %v6852 = vmul.f32 %v6835, %v6634
    %v6853 = vmul.f32 %v6837, %v6635
    %v6854 = vmul.f32 %v6823, %v6838
    %v6855 = vmul.f32 %v6825, %v6839
    %v6856 = vadd.f32 %v6852, %v6854
    %v6857 = vadd.f32 %v6853, %v6855
    %v6858 = vtanh.pop %v6856
    %v6859 = vtanh.pop %v6857
    %v6860 = vmul.f32 %v6849, %v6858
    %v6861 = vmul.f32 %v6851, %v6859
    %v6862 = vld [vmem:[#allocation14] sm:$0xff]
    %v6863 = vld [vmem:[#allocation14 + $0x10] sm:$0xff]
    %v6864 = vld [vmem:[#allocation14 + $0x18] sm:$0xff]
    %v6865 = vld [vmem:[#allocation14 + $0x20] sm:$0xff]
    %v6866 = vld [vmem:[#allocation14 + $0x30] sm:$0xff]
    %v6867 = vld [vmem:[#allocation14 + $0x38] sm:$0xff]
    %v6868 = vld [vmem:[#allocation14 + $0x40] sm:$0xff]
    %v6869 = vld [vmem:[#allocation14 + $0x50] sm:$0xff]
    %v6870 = vld [vmem:[#allocation14 + $0x58] sm:$0xff]
    %v6871 = vld [vmem:[#allocation14 + $0x60] sm:$0xff]
    %v6872 = vld [vmem:[#allocation14 + $0x70] sm:$0xff]
    %v6873 = vld [vmem:[#allocation14 + $0x78] sm:$0xff]
    %v6874 = vld [vmem:[#allocation14 + $0x80] sm:$0xff]
    %v6875 = vld [vmem:[#allocation14 + $0x90] sm:$0xff]
    %v6876 = vld [vmem:[#allocation14 + $0x98] sm:$0xff]
    %v6877 = vld [vmem:[#allocation14 + $0xa0] sm:$0xff]
    %v6878 = vld [vmem:[#allocation14 + $0xb0] sm:$0xff]
    %v6879 = vld [vmem:[#allocation14 + $0xb8] sm:$0xff]
    %v6880 = vld [vmem:[#allocation14 + $0xc0] sm:$0xff]
    %v6881 = vld [vmem:[#allocation14 + $0xd0] sm:$0xff]
    %v6882 = vld [vmem:[#allocation14 + $0xd8] sm:$0xff]
    %v6883 = vld [vmem:[#allocation14 + $0xe0] sm:$0xff]
    %v6884 = vld [vmem:[#allocation14 + $0xf0] sm:$0xff]
    %v6885 = vld [vmem:[#allocation14 + $0xf8] sm:$0xff]
    %v6886 = vld [vmem:[#allocation14 + $0x100] sm:$0xff]
    %v6887 = vld [vmem:[#allocation14 + $0x110] sm:$0xff]
    %v6888 = vld [vmem:[#allocation14 + $0x118] sm:$0xff]
    %v6889 = vld [vmem:[#allocation14 + $0x120] sm:$0xff]
    %v6890 = vld [vmem:[#allocation14 + $0x130] sm:$0xff]
    %v6891 = vld [vmem:[#allocation14 + $0x138] sm:$0xff]
    %v6892 = vld [vmem:[#allocation14 + $0x140] sm:$0xff]
    %v6893 = vld [vmem:[#allocation14 + $0x150] sm:$0xff]
    %v6894 = vld [vmem:[#allocation14 + $0x158] sm:$0xff]
    %v6895 = vld [vmem:[#allocation14 + $0x160] sm:$0xff]
    %v6896 = vld [vmem:[#allocation14 + $0x170] sm:$0xff]
    %v6897 = vld [vmem:[#allocation14 + $0x178] sm:$0xff]
    %v6898 = vld [vmem:[#allocation14 + $0x180] sm:$0xff]
    %v6899 = vld [vmem:[#allocation14 + $0x190] sm:$0xff]
    %v6900 = vld [vmem:[#allocation14 + $0x198] sm:$0xff]
    %v6901 = vld [vmem:[#allocation14 + $0x1a0] sm:$0xff]
    %v6902 = vld [vmem:[#allocation14 + $0x1b0] sm:$0xff]
    %v6903 = vld [vmem:[#allocation14 + $0x1b8] sm:$0xff]
    %v6904 = vld [vmem:[#allocation14 + $0x1c0] sm:$0xff]
    %v6905 = vld [vmem:[#allocation14 + $0x1d0] sm:$0xff]
    %v6906 = vld [vmem:[#allocation14 + $0x1d8] sm:$0xff]
    %v6907 = vld [vmem:[#allocation14 + $0x1e0] sm:$0xff]
    %v6908 = vld [vmem:[#allocation14 + $0x1f0] sm:$0xff]
    %v6909 = vld [vmem:[#allocation14 + $0x1f8] sm:$0xff]
    %v6910 = vld [vmem:[#allocation14 + $0x200] sm:$0xff]
    %v6911 = vld [vmem:[#allocation14 + $0x210] sm:$0xff]
    %v6912 = vld [vmem:[#allocation14 + $0x218] sm:$0xff]
    %v6913 = vld [vmem:[#allocation14 + $0x220] sm:$0xff]
    %v6914 = vld [vmem:[#allocation14 + $0x230] sm:$0xff]
    %v6915 = vld [vmem:[#allocation14 + $0x238] sm:$0xff]
    %v6916 = vld [vmem:[#allocation14 + $0x240] sm:$0xff]
    %v6917 = vld [vmem:[#allocation14 + $0x250] sm:$0xff]
    %v6918 = vld [vmem:[#allocation14 + $0x258] sm:$0xff]
    %v6919 = vld [vmem:[#allocation14 + $0x260] sm:$0xff]
    %v6920 = vld [vmem:[#allocation14 + $0x270] sm:$0xff]
    %v6921 = vld [vmem:[#allocation14 + $0x278] sm:$0xff]
    %v6922 = vld [vmem:[#allocation14 + $0x280] sm:$0xff]
    %v6923 = vld [vmem:[#allocation14 + $0x290] sm:$0xff]
    %v6924 = vld [vmem:[#allocation14 + $0x298] sm:$0xff]
    %v6925 = vld [vmem:[#allocation14 + $0x2a0] sm:$0xff]
    %v6926 = vld [vmem:[#allocation14 + $0x2b0] sm:$0xff]
    %v6927 = vld [vmem:[#allocation14 + $0x2b8] sm:$0xff]
    %v6928 = vld [vmem:[#allocation14 + $0x2c0] sm:$0xff]
    %v6929 = vld [vmem:[#allocation14 + $0x2d0] sm:$0xff]
    %v6930 = vld [vmem:[#allocation14 + $0x2d8] sm:$0xff]
    %v6931 = vld [vmem:[#allocation14 + $0x2e0] sm:$0xff]
    %v6932 = vld [vmem:[#allocation14 + $0x2f0] sm:$0xff]
    %v6933 = vld [vmem:[#allocation14 + $0x2f8] sm:$0xff]
    %v6934 = vld [vmem:[#allocation14 + $0x300] sm:$0xff]
    %v6935 = vld [vmem:[#allocation14 + $0x310] sm:$0xff]
    %v6936 = vld [vmem:[#allocation14 + $0x318] sm:$0xff]
    %v6937 = vld [vmem:[#allocation14 + $0x320] sm:$0xff]
    %v6938 = vld [vmem:[#allocation14 + $0x330] sm:$0xff]
    %v6939 = vld [vmem:[#allocation14 + $0x338] sm:$0xff]
    %v6940 = vld [vmem:[#allocation14 + $0x340] sm:$0xff]
    %v6941 = vld [vmem:[#allocation14 + $0x350] sm:$0xff]
    %v6942 = vld [vmem:[#allocation14 + $0x358] sm:$0xff]
    %v6943 = vld [vmem:[#allocation14 + $0x360] sm:$0xff]
    %v6944 = vld [vmem:[#allocation14 + $0x370] sm:$0xff]
    %v6945 = vld [vmem:[#allocation14 + $0x378] sm:$0xff]
    %v6946 = vld [vmem:[#allocation14 + $0x380] sm:$0xff]
    %v6947 = vld [vmem:[#allocation14 + $0x390] sm:$0xff]
    %v6948 = vld [vmem:[#allocation14 + $0x398] sm:$0xff]
    %v6949 = vld [vmem:[#allocation14 + $0x3a0] sm:$0xff]
    %v6950 = vld [vmem:[#allocation14 + $0x3b0] sm:$0xff]
    %v6951 = vld [vmem:[#allocation14 + $0x3b8] sm:$0xff]
    %v6952 = vld [vmem:[#allocation14 + $0x3c0] sm:$0xff]
    %v6953 = vld [vmem:[#allocation14 + $0x3d0] sm:$0xff]
    %v6954 = vld [vmem:[#allocation14 + $0x3d8] sm:$0xff]
    %v6955 = vld [vmem:[#allocation14 + $0x3e0] sm:$0xff]
    %v6956 = vld [vmem:[#allocation14 + $0x3f0] sm:$0xff]
    %v6957 = vld [vmem:[#allocation14 + $0x3f8] sm:$0xff]
    %v6958 = vld [vmem:[#allocation14 + $0x400] sm:$0xff]
    %v6959 = vld [vmem:[#allocation14 + $0x410] sm:$0xff]
    %v6960 = vld [vmem:[#allocation14 + $0x418] sm:$0xff]
    %v6961 = vld [vmem:[#allocation14 + $0x420] sm:$0xff]
    %v6962 = vld [vmem:[#allocation14 + $0x430] sm:$0xff]
    %v6963 = vld [vmem:[#allocation14 + $0x438] sm:$0xff]
    %v6964 = vld [vmem:[#allocation14 + $0x440] sm:$0xff]
    %v6965 = vld [vmem:[#allocation14 + $0x450] sm:$0xff]
    %v6966 = vld [vmem:[#allocation14 + $0x458] sm:$0xff]
    %v6967 = vld [vmem:[#allocation14 + $0x460] sm:$0xff]
    %v6968 = vld [vmem:[#allocation14 + $0x470] sm:$0xff]
    %v6969 = vld [vmem:[#allocation14 + $0x478] sm:$0xff]
    %v6970 = vld [vmem:[#allocation14 + $0x480] sm:$0xff]
    %v6971 = vld [vmem:[#allocation14 + $0x490] sm:$0xff]
    %v6972 = vld [vmem:[#allocation14 + $0x498] sm:$0xff]
    %v6973 = vld [vmem:[#allocation14 + $0x4a0] sm:$0xff]
    %v6974 = vld [vmem:[#allocation14 + $0x4b0] sm:$0xff]
    %v6975 = vld [vmem:[#allocation14 + $0x4b8] sm:$0xff]
    %v6976 = vld [vmem:[#allocation14 + $0x4c0] sm:$0xff]
    %v6977 = vld [vmem:[#allocation14 + $0x4d0] sm:$0xff]
    %v6978 = vld [vmem:[#allocation14 + $0x4d8] sm:$0xff]
    %v6979 = vld [vmem:[#allocation14 + $0x4e0] sm:$0xff]
    %v6980 = vld [vmem:[#allocation14 + $0x4f0] sm:$0xff]
    %v6981 = vld [vmem:[#allocation14 + $0x4f8] sm:$0xff]
    %v6982 = vld [vmem:[#allocation14 + $0x500] sm:$0xff]
    %v6983 = vld [vmem:[#allocation14 + $0x510] sm:$0xff]
    %v6984 = vld [vmem:[#allocation14 + $0x518] sm:$0xff]
    %v6985 = vld [vmem:[#allocation14 + $0x520] sm:$0xff]
    %v6986 = vld [vmem:[#allocation14 + $0x530] sm:$0xff]
    %v6987 = vld [vmem:[#allocation14 + $0x538] sm:$0xff]
    %v6988 = vld [vmem:[#allocation14 + $0x540] sm:$0xff]
    %v6989 = vld [vmem:[#allocation14 + $0x550] sm:$0xff]
    %v6990 = vld [vmem:[#allocation14 + $0x558] sm:$0xff]
    %v6991 = vld [vmem:[#allocation14 + $0x560] sm:$0xff]
    %v6992 = vld [vmem:[#allocation14 + $0x570] sm:$0xff]
    %v6993 = vld [vmem:[#allocation14 + $0x578] sm:$0xff]
    %v6994 = vld [vmem:[#allocation14 + $0x580] sm:$0xff]
    %v6995 = vld [vmem:[#allocation14 + $0x590] sm:$0xff]
    %v6996 = vld [vmem:[#allocation14 + $0x598] sm:$0xff]
    %v6997 = vld [vmem:[#allocation14 + $0x5a0] sm:$0xff]
    %v6998 = vld [vmem:[#allocation14 + $0x5b0] sm:$0xff]
    %v6999 = vld [vmem:[#allocation14 + $0x5b8] sm:$0xff]
    %v7000 = vld [vmem:[#allocation14 + $0x5c0] sm:$0xff]
    %v7001 = vld [vmem:[#allocation14 + $0x5d0] sm:$0xff]
    %v7002 = vld [vmem:[#allocation14 + $0x5d8] sm:$0xff]
    %v7003 = vld [vmem:[#allocation14 + $0x5e0] sm:$0xff]
    %v7004 = vld [vmem:[#allocation14 + $0x5f0] sm:$0xff]
    %v7005 = vld [vmem:[#allocation14 + $0x5f8] sm:$0xff]
    %v7006 = vld [vmem:[#allocation14 + $0x600] sm:$0xff]
    %v7007 = vld [vmem:[#allocation14 + $0x610] sm:$0xff]
    %v7008 = vld [vmem:[#allocation14 + $0x618] sm:$0xff]
    %v7009 = vld [vmem:[#allocation14 + $0x620] sm:$0xff]
    %v7010 = vld [vmem:[#allocation14 + $0x630] sm:$0xff]
    %v7011 = vld [vmem:[#allocation14 + $0x638] sm:$0xff]
    %v7012 = vld [vmem:[#allocation14 + $0x640] sm:$0xff]
    %v7013 = vld [vmem:[#allocation14 + $0x650] sm:$0xff]
    %v7014 = vld [vmem:[#allocation14 + $0x658] sm:$0xff]
    %v7015 = vld [vmem:[#allocation14 + $0x660] sm:$0xff]
    %v7016 = vld [vmem:[#allocation14 + $0x670] sm:$0xff]
    %v7017 = vld [vmem:[#allocation14 + $0x678] sm:$0xff]
    %v7018 = vld [vmem:[#allocation14 + $0x680] sm:$0xff]
    %v7019 = vld [vmem:[#allocation14 + $0x690] sm:$0xff]
    %v7020 = vld [vmem:[#allocation14 + $0x698] sm:$0xff]
    %v7021 = vld [vmem:[#allocation14 + $0x6a0] sm:$0xff]
    %v7022 = vld [vmem:[#allocation14 + $0x6b0] sm:$0xff]
    %v7023 = vld [vmem:[#allocation14 + $0x6b8] sm:$0xff]
    %v7024 = vld [vmem:[#allocation14 + $0x6c0] sm:$0xff]
    %v7025 = vld [vmem:[#allocation14 + $0x6d0] sm:$0xff]
    %v7026 = vld [vmem:[#allocation14 + $0x6d8] sm:$0xff]
    %v7027 = vld [vmem:[#allocation14 + $0x6e0] sm:$0xff]
    %v7028 = vld [vmem:[#allocation14 + $0x6f0] sm:$0xff]
    %v7029 = vld [vmem:[#allocation14 + $0x6f8] sm:$0xff]
    %v7030 = vld [vmem:[#allocation14 + $0x700] sm:$0xff]
    %v7031 = vld [vmem:[#allocation14 + $0x710] sm:$0xff]
    %v7032 = vld [vmem:[#allocation14 + $0x718] sm:$0xff]
    %v7033 = vld [vmem:[#allocation14 + $0x720] sm:$0xff]
    %v7034 = vld [vmem:[#allocation14 + $0x730] sm:$0xff]
    %v7035 = vld [vmem:[#allocation14 + $0x738] sm:$0xff]
    %v7036 = vld [vmem:[#allocation14 + $0x740] sm:$0xff]
    %v7037 = vld [vmem:[#allocation14 + $0x750] sm:$0xff]
    %v7038 = vld [vmem:[#allocation14 + $0x758] sm:$0xff]
    %v7039 = vld [vmem:[#allocation14 + $0x760] sm:$0xff]
    %v7040 = vld [vmem:[#allocation14 + $0x770] sm:$0xff]
    %v7041 = vld [vmem:[#allocation14 + $0x778] sm:$0xff]
    %v7042 = vld [vmem:[#allocation14 + $0x780] sm:$0xff]
    %v7043 = vld [vmem:[#allocation14 + $0x790] sm:$0xff]
    %v7044 = vld [vmem:[#allocation14 + $0x798] sm:$0xff]
    %v7045 = vld [vmem:[#allocation14 + $0x7a0] sm:$0xff]
    %v7046 = vld [vmem:[#allocation14 + $0x7b0] sm:$0xff]
    %v7047 = vld [vmem:[#allocation14 + $0x7b8] sm:$0xff]
    %v7048 = vld [vmem:[#allocation14 + $0x7c0] sm:$0xff]
    %v7049 = vld [vmem:[#allocation14 + $0x7d0] sm:$0xff]
    %v7050 = vld [vmem:[#allocation14 + $0x7d8] sm:$0xff]
    %v7051 = vld [vmem:[#allocation14 + $0x7e0] sm:$0xff]
    %v7052 = vld [vmem:[#allocation14 + $0x7f0] sm:$0xff]
    %v7053 = vld [vmem:[#allocation14 + $0x7f8] sm:$0xff]
    %v7054 = vpack.c.bf16 %v3190, %v3190
    %v7055 = vpack.c.bf16 %v3191, %v3191
    %v7056 = vpack.c.bf16 %v6860, %v6860
    %v7057 = vpack.c.bf16 %v6861, %v6861
    %v7154 = vunpack.c.l.b16 %v6958
    %v7155 = vunpack.c.h.b16 %v6958
    %v7156 = vunpack.c.l.b16 %v6959
    %v7157 = vunpack.c.h.b16 %v6959
    %v7158 = vunpack.c.l.b16 %v6960
    %v7159 = vunpack.c.h.b16 %v6960
    %v7160 = vunpack.c.l.b16 %v6961
    %v7161 = vunpack.c.h.b16 %v6961
    %v7162 = vunpack.c.l.b16 %v6962
    %v7163 = vunpack.c.h.b16 %v6962
    %v7164 = vunpack.c.l.b16 %v6963
    %v7165 = vunpack.c.h.b16 %v6963
    %v7166 = vunpack.c.l.b16 %v6964
    %v7167 = vunpack.c.h.b16 %v6964
    %v7168 = vunpack.c.l.b16 %v6965
    %v7169 = vunpack.c.h.b16 %v6965
    %v7170 = vunpack.c.l.b16 %v6966
    %v7171 = vunpack.c.h.b16 %v6966
    %v7172 = vunpack.c.l.b16 %v6967
    %v7173 = vunpack.c.h.b16 %v6967
    %v7174 = vunpack.c.l.b16 %v6968
    %v7175 = vunpack.c.h.b16 %v6968
    %v7176 = vunpack.c.l.b16 %v6969
    %v7177 = vunpack.c.h.b16 %v6969
    %v7178 = vunpack.c.l.b16 %v6970
    %v7179 = vunpack.c.h.b16 %v6970
    %v7180 = vunpack.c.l.b16 %v6971
    %v7181 = vunpack.c.h.b16 %v6971
    %v7182 = vunpack.c.l.b16 %v6972
    %v7183 = vunpack.c.h.b16 %v6972
    %v7184 = vunpack.c.l.b16 %v6973
    %v7185 = vunpack.c.h.b16 %v6973
    %v7186 = vunpack.c.l.b16 %v6974
    %v7187 = vunpack.c.h.b16 %v6974
    %v7188 = vunpack.c.l.b16 %v6975
    %v7189 = vunpack.c.h.b16 %v6975
    %v7190 = vunpack.c.l.b16 %v6976
    %v7191 = vunpack.c.h.b16 %v6976
    %v7192 = vunpack.c.l.b16 %v6977
    %v7193 = vunpack.c.h.b16 %v6977
    %v7194 = vunpack.c.l.b16 %v6978
    %v7195 = vunpack.c.h.b16 %v6978
    %v7196 = vunpack.c.l.b16 %v6979
    %v7197 = vunpack.c.h.b16 %v6979
    %v7198 = vunpack.c.l.b16 %v6980
    %v7199 = vunpack.c.h.b16 %v6980
    %v7200 = vunpack.c.l.b16 %v6981
    %v7201 = vunpack.c.h.b16 %v6981
    %v7202 = vunpack.c.l.b16 %v6982
    %v7203 = vunpack.c.h.b16 %v6982
    %v7204 = vunpack.c.l.b16 %v6983
    %v7205 = vunpack.c.h.b16 %v6983
    %v7206 = vunpack.c.l.b16 %v6984
    %v7207 = vunpack.c.h.b16 %v6984
    %v7208 = vunpack.c.l.b16 %v6985
    %v7209 = vunpack.c.h.b16 %v6985
    %v7210 = vunpack.c.l.b16 %v6986
    %v7211 = vunpack.c.h.b16 %v6986
    %v7212 = vunpack.c.l.b16 %v6987
    %v7213 = vunpack.c.h.b16 %v6987
    %v7214 = vunpack.c.l.b16 %v6988
    %v7215 = vunpack.c.h.b16 %v6988
    %v7216 = vunpack.c.l.b16 %v6989
    %v7217 = vunpack.c.h.b16 %v6989
    %v7218 = vunpack.c.l.b16 %v6990
    %v7219 = vunpack.c.h.b16 %v6990
    %v7220 = vunpack.c.l.b16 %v6991
    %v7221 = vunpack.c.h.b16 %v6991
    %v7222 = vunpack.c.l.b16 %v6992
    %v7223 = vunpack.c.h.b16 %v6992
    %v7224 = vunpack.c.l.b16 %v6993
    %v7225 = vunpack.c.h.b16 %v6993
    %v7226 = vunpack.c.l.b16 %v6994
    %v7227 = vunpack.c.h.b16 %v6994
    %v7228 = vunpack.c.l.b16 %v6995
    %v7229 = vunpack.c.h.b16 %v6995
    %v7230 = vunpack.c.l.b16 %v6996
    %v7231 = vunpack.c.h.b16 %v6996
    %v7232 = vunpack.c.l.b16 %v6997
    %v7233 = vunpack.c.h.b16 %v6997
    %v7234 = vunpack.c.l.b16 %v6998
    %v7235 = vunpack.c.h.b16 %v6998
    %v7236 = vunpack.c.l.b16 %v6999
    %v7237 = vunpack.c.h.b16 %v6999
    %v7238 = vunpack.c.l.b16 %v7000
    %v7239 = vunpack.c.h.b16 %v7000
    %v7240 = vunpack.c.l.b16 %v7001
    %v7241 = vunpack.c.h.b16 %v7001
    %v7242 = vunpack.c.l.b16 %v7002
    %v7243 = vunpack.c.h.b16 %v7002
    %v7244 = vunpack.c.l.b16 %v7003
    %v7245 = vunpack.c.h.b16 %v7003
    %v7246 = vunpack.c.l.b16 %v7004
    %v7247 = vunpack.c.h.b16 %v7004
    %v7248 = vunpack.c.l.b16 %v7005
    %v7249 = vunpack.c.h.b16 %v7005
    %v7250 = vunpack.c.l.b16 %v7006
    %v7251 = vunpack.c.h.b16 %v7006
    %v7252 = vunpack.c.l.b16 %v7007
    %v7253 = vunpack.c.h.b16 %v7007
    %v7254 = vunpack.c.l.b16 %v7008
    %v7255 = vunpack.c.h.b16 %v7008
    %v7256 = vunpack.c.l.b16 %v7009
    %v7257 = vunpack.c.h.b16 %v7009
    %v7258 = vunpack.c.l.b16 %v7010
    %v7259 = vunpack.c.h.b16 %v7010
    %v7260 = vunpack.c.l.b16 %v7011
    %v7261 = vunpack.c.h.b16 %v7011
    %v7262 = vunpack.c.l.b16 %v7012
    %v7263 = vunpack.c.h.b16 %v7012
    %v7264 = vunpack.c.l.b16 %v7013
    %v7265 = vunpack.c.h.b16 %v7013
    %v7266 = vunpack.c.l.b16 %v7014
    %v7267 = vunpack.c.h.b16 %v7014
    %v7268 = vunpack.c.l.b16 %v7015
    %v7269 = vunpack.c.h.b16 %v7015
    %v7270 = vunpack.c.l.b16 %v7016
    %v7271 = vunpack.c.h.b16 %v7016
    %v7272 = vunpack.c.l.b16 %v7017
    %v7273 = vunpack.c.h.b16 %v7017
    %v7274 = vunpack.c.l.b16 %v7018
    %v7275 = vunpack.c.h.b16 %v7018
    %v7276 = vunpack.c.l.b16 %v7019
    %v7277 = vunpack.c.h.b16 %v7019
    %v7278 = vunpack.c.l.b16 %v7020
    %v7279 = vunpack.c.h.b16 %v7020
    %v7280 = vunpack.c.l.b16 %v7021
    %v7281 = vunpack.c.h.b16 %v7021
    %v7282 = vunpack.c.l.b16 %v7022
    %v7283 = vunpack.c.h.b16 %v7022
    %v7284 = vunpack.c.l.b16 %v7023
    %v7285 = vunpack.c.h.b16 %v7023
    %v7286 = vunpack.c.l.b16 %v7024
    %v7287 = vunpack.c.h.b16 %v7024
    %v7288 = vunpack.c.l.b16 %v7025
    %v7289 = vunpack.c.h.b16 %v7025
    %v7290 = vunpack.c.l.b16 %v7026
    %v7291 = vunpack.c.h.b16 %v7026
    %v7292 = vunpack.c.l.b16 %v7027
    %v7293 = vunpack.c.h.b16 %v7027
    %v7294 = vunpack.c.l.b16 %v7028
    %v7295 = vunpack.c.h.b16 %v7028
    %v7296 = vunpack.c.l.b16 %v7029
    %v7297 = vunpack.c.h.b16 %v7029
    %v7298 = vunpack.c.l.b16 %v7030
    %v7299 = vunpack.c.h.b16 %v7030
    %v7300 = vunpack.c.l.b16 %v7031
    %v7301 = vunpack.c.h.b16 %v7031
    %v7302 = vunpack.c.l.b16 %v7032
    %v7303 = vunpack.c.h.b16 %v7032
    %v7304 = vunpack.c.l.b16 %v7033
    %v7305 = vunpack.c.h.b16 %v7033
    %v7306 = vunpack.c.l.b16 %v7034
    %v7307 = vunpack.c.h.b16 %v7034
    %v7308 = vunpack.c.l.b16 %v7035
    %v7309 = vunpack.c.h.b16 %v7035
    %v7310 = vunpack.c.l.b16 %v7036
    %v7311 = vunpack.c.h.b16 %v7036
    %v7312 = vunpack.c.l.b16 %v7037
    %v7313 = vunpack.c.h.b16 %v7037
    %v7314 = vunpack.c.l.b16 %v7038
    %v7315 = vunpack.c.h.b16 %v7038
    %v7316 = vunpack.c.l.b16 %v7039
    %v7317 = vunpack.c.h.b16 %v7039
    %v7318 = vunpack.c.l.b16 %v7040
    %v7319 = vunpack.c.h.b16 %v7040
    %v7320 = vunpack.c.l.b16 %v7041
    %v7321 = vunpack.c.h.b16 %v7041
    %v7322 = vunpack.c.l.b16 %v7042
    %v7323 = vunpack.c.h.b16 %v7042
    %v7324 = vunpack.c.l.b16 %v7043
    %v7325 = vunpack.c.h.b16 %v7043
    %v7326 = vunpack.c.l.b16 %v7044
    %v7327 = vunpack.c.h.b16 %v7044
    %v7328 = vunpack.c.l.b16 %v7045
    %v7329 = vunpack.c.h.b16 %v7045
    %v7330 = vunpack.c.l.b16 %v7046
    %v7331 = vunpack.c.h.b16 %v7046
    %v7332 = vunpack.c.l.b16 %v7047
    %v7333 = vunpack.c.h.b16 %v7047
    %v7334 = vunpack.c.l.b16 %v7048
    %v7335 = vunpack.c.h.b16 %v7048
    %v7336 = vunpack.c.l.b16 %v7049
    %v7337 = vunpack.c.h.b16 %v7049
    %v7338 = vunpack.c.l.b16 %v7050
    %v7339 = vunpack.c.h.b16 %v7050
    %v7340 = vunpack.c.l.b16 %v7051
    %v7341 = vunpack.c.h.b16 %v7051
    %v7342 = vunpack.c.l.b16 %v7052
    %v7343 = vunpack.c.h.b16 %v7052
    %v7344 = vunpack.c.l.b16 %v7053
    %v7345 = vunpack.c.h.b16 %v7053
    %v7346 = vpack.c.b16 %v7160, %v7154
    %v7347 = vpack.c.b16 %v7161, %v7155
    %v7348 = vpack.c.b16 %v7162, %v7156
    %v7349 = vpack.c.b16 %v7163, %v7157
    %v7350 = vpack.c.b16 %v7164, %v7158
    %v7351 = vpack.c.b16 %v7165, %v7159
    %v7352 = vpack.c.b16 %v7172, %v7166
    %v7353 = vpack.c.b16 %v7173, %v7167
    %v7354 = vpack.c.b16 %v7174, %v7168
    %v7355 = vpack.c.b16 %v7175, %v7169
    %v7356 = vpack.c.b16 %v7176, %v7170
    %v7357 = vpack.c.b16 %v7177, %v7171
    %v7358 = vpack.c.b16 %v7184, %v7178
    %v7359 = vpack.c.b16 %v7185, %v7179
    %v7360 = vpack.c.b16 %v7186, %v7180
    %v7361 = vpack.c.b16 %v7187, %v7181
    %v7362 = vpack.c.b16 %v7188, %v7182
    %v7363 = vpack.c.b16 %v7189, %v7183
    %v7364 = vpack.c.b16 %v7196, %v7190
    %v7365 = vpack.c.b16 %v7197, %v7191
    %v7366 = vpack.c.b16 %v7198, %v7192
    %v7367 = vpack.c.b16 %v7199, %v7193
    %v7368 = vpack.c.b16 %v7200, %v7194
    %v7369 = vpack.c.b16 %v7201, %v7195
    %v7370 = vpack.c.b16 %v7208, %v7202
    %v7371 = vpack.c.b16 %v7209, %v7203
    %v7372 = vpack.c.b16 %v7210, %v7204
    %v7373 = vpack.c.b16 %v7211, %v7205
    %v7374 = vpack.c.b16 %v7212, %v7206
    %v7375 = vpack.c.b16 %v7213, %v7207
    %v7376 = vpack.c.b16 %v7220, %v7214
    %v7377 = vpack.c.b16 %v7221, %v7215
    %v7378 = vpack.c.b16 %v7222, %v7216
    %v7379 = vpack.c.b16 %v7223, %v7217
    %v7380 = vpack.c.b16 %v7224, %v7218
    %v7381 = vpack.c.b16 %v7225, %v7219
    %v7382 = vpack.c.b16 %v7232, %v7226
    %v7383 = vpack.c.b16 %v7233, %v7227
    %v7384 = vpack.c.b16 %v7234, %v7228
    %v7385 = vpack.c.b16 %v7235, %v7229
    %v7386 = vpack.c.b16 %v7236, %v7230
    %v7387 = vpack.c.b16 %v7237, %v7231
    %v7388 = vpack.c.b16 %v7244, %v7238
    %v7389 = vpack.c.b16 %v7245, %v7239
    %v7390 = vpack.c.b16 %v7246, %v7240
    %v7391 = vpack.c.b16 %v7247, %v7241
    %v7392 = vpack.c.b16 %v7248, %v7242
    %v7393 = vpack.c.b16 %v7249, %v7243
    %v7394 = vpack.c.b16 %v7256, %v7250
    %v7395 = vpack.c.b16 %v7257, %v7251
    %v7396 = vpack.c.b16 %v7258, %v7252
    %v7397 = vpack.c.b16 %v7259, %v7253
    %v7398 = vpack.c.b16 %v7260, %v7254
    %v7399 = vpack.c.b16 %v7261, %v7255
    %v7400 = vpack.c.b16 %v7268, %v7262
    %v7401 = vpack.c.b16 %v7269, %v7263
    %v7402 = vpack.c.b16 %v7270, %v7264
    %v7403 = vpack.c.b16 %v7271, %v7265
    %v7404 = vpack.c.b16 %v7272, %v7266
    %v7405 = vpack.c.b16 %v7273, %v7267
    %v7406 = vpack.c.b16 %v7280, %v7274
    %v7407 = vpack.c.b16 %v7281, %v7275
    %v7408 = vpack.c.b16 %v7282, %v7276
    %v7409 = vpack.c.b16 %v7283, %v7277
    %v7410 = vpack.c.b16 %v7284, %v7278
    %v7411 = vpack.c.b16 %v7285, %v7279
    %v7412 = vpack.c.b16 %v7292, %v7286
    %v7413 = vpack.c.b16 %v7293, %v7287
    %v7414 = vpack.c.b16 %v7294, %v7288
    %v7415 = vpack.c.b16 %v7295, %v7289
    %v7416 = vpack.c.b16 %v7296, %v7290
    %v7417 = vpack.c.b16 %v7297, %v7291
    %v7418 = vpack.c.b16 %v7304, %v7298
    %v7419 = vpack.c.b16 %v7305, %v7299
    %v7420 = vpack.c.b16 %v7306, %v7300
    %v7421 = vpack.c.b16 %v7307, %v7301
    %v7422 = vpack.c.b16 %v7308, %v7302
    %v7423 = vpack.c.b16 %v7309, %v7303
    %v7424 = vpack.c.b16 %v7316, %v7310
    %v7425 = vpack.c.b16 %v7317, %v7311
    %v7426 = vpack.c.b16 %v7318, %v7312
    %v7427 = vpack.c.b16 %v7319, %v7313
    %v7428 = vpack.c.b16 %v7320, %v7314
    %v7429 = vpack.c.b16 %v7321, %v7315
    %v7430 = vpack.c.b16 %v7328, %v7322
    %v7431 = vpack.c.b16 %v7329, %v7323
    %v7432 = vpack.c.b16 %v7330, %v7324
    %v7433 = vpack.c.b16 %v7331, %v7325
    %v7434 = vpack.c.b16 %v7332, %v7326
    %v7435 = vpack.c.b16 %v7333, %v7327
    %v7436 = vpack.c.b16 %v7340, %v7334
    %v7437 = vpack.c.b16 %v7341, %v7335
    %v7438 = vpack.c.b16 %v7342, %v7336
    %v7439 = vpack.c.b16 %v7343, %v7337
    %v7440 = vpack.c.b16 %v7344, %v7338
    %v7441 = vpack.c.b16 %v7345, %v7339
    %7538 = vmatprep.subr.bf16.mxu0 %v7389
    %7539 = vmatpush1.bf16.msra.mxu0 %v7388
    %7540 = vmatprep.subr.bf16.mxu0 %v7383
    %7541 = vmatpush1.bf16.msra.mxu0 %v7382
    %7542 = vmatprep.subr.bf16.mxu0 %v7377
    %7543 = vmatpush1.bf16.msra.mxu0 %v7376
    %7544 = vmatprep.subr.bf16.mxu0 %v7371
    %7545 = vmatpush1.bf16.msra.mxu0 %v7370
    %7546 = vmatprep.subr.bf16.mxu0 %v7365
    %7547 = vmatpush1.bf16.msra.mxu0 %v7364
    %7548 = vmatprep.subr.bf16.mxu0 %v7359
    %7549 = vmatpush1.bf16.msra.mxu0 %v7358
    %7550 = vmatprep.subr.bf16.mxu0 %v7353
    %7551 = vmatpush1.bf16.msra.mxu0 %v7352
    %7552 = vmatprep.subr.bf16.mxu0 %v7347
    %7553 = vmatpush1.bf16.msra.mxu0 %v7346
    %7554 = vmatprep.subr.bf16.mxu0 %v7437
    %7555 = vmatpush2.bf16.msra.mxu0 %v7436
    %7556 = vmatprep.subr.bf16.mxu0 %v7431
    %7557 = vmatpush2.bf16.msra.mxu0 %v7430
    %7558 = vmatprep.subr.bf16.mxu0 %v7425
    %7559 = vmatpush2.bf16.msra.mxu0 %v7424
    %7560 = vmatprep.subr.bf16.mxu0 %v7419
    %7561 = vmatpush2.bf16.msra.mxu0 %v7418
    %7562 = vmatprep.subr.bf16.mxu0 %v7413
    %7563 = vmatpush2.bf16.msra.mxu0 %v7412
    %7564 = vmatprep.subr.bf16.mxu0 %v7407
    %7565 = vmatpush2.bf16.msra.mxu0 %v7406
    %7566 = vmatprep.subr.bf16.mxu0 %v7401
    %7567 = vmatpush2.bf16.msra.mxu0 %v7400
    %7568 = vmatprep.subr.bf16.mxu0 %v7395
    %7569 = vmatpush2.bf16.msra.mxu0 %v7394
    %7570 = vmatprep.mubr.bf16.mxu0 %v7057
    %7571 = vmatmul.mubr.bf16.gmra.mxu0 %v7056
    %v7572 = vpop.f32.mrf.mxu0
    %v7573 = vadd.f32 0.0, %v7572
    %v7574 = vpop.f32.mrf.mxu0
    %v7575 = vadd.f32 0.0, %v7574
    %v7576 = vpop.f32.mrf.mxu0
    %v7577 = vpop.f32.mrf.mxu0
    %7578 = vdwg.mxu0
    %7579 = vmatprep.subr.bf16.mxu0 %v7391
    %7580 = vmatpush1.bf16.msra.mxu0 %v7390
    %7581 = vmatprep.subr.bf16.mxu0 %v7385
    %7582 = vmatpush1.bf16.msra.mxu0 %v7384
    %7583 = vmatprep.subr.bf16.mxu0 %v7379
    %7584 = vmatpush1.bf16.msra.mxu0 %v7378
    %7585 = vmatprep.subr.bf16.mxu0 %v7373
    %7586 = vmatpush1.bf16.msra.mxu0 %v7372
    %7587 = vmatprep.subr.bf16.mxu0 %v7367
    %7588 = vmatpush1.bf16.msra.mxu0 %v7366
    %7589 = vmatprep.subr.bf16.mxu0 %v7361
    %7590 = vmatpush1.bf16.msra.mxu0 %v7360
    %7591 = vmatprep.subr.bf16.mxu0 %v7355
    %7592 = vmatpush1.bf16.msra.mxu0 %v7354
    %7593 = vmatprep.subr.bf16.mxu0 %v7349
    %7594 = vmatpush1.bf16.msra.mxu0 %v7348
    %7595 = vmatprep.subr.bf16.mxu0 %v7439
    %7596 = vmatpush2.bf16.msra.mxu0 %v7438
    %7597 = vmatprep.subr.bf16.mxu0 %v7433
    %7598 = vmatpush2.bf16.msra.mxu0 %v7432
    %7599 = vmatprep.subr.bf16.mxu0 %v7427
    %7600 = vmatpush2.bf16.msra.mxu0 %v7426
    %7601 = vmatprep.subr.bf16.mxu0 %v7421
    %7602 = vmatpush2.bf16.msra.mxu0 %v7420
    %7603 = vmatprep.subr.bf16.mxu0 %v7415
    %7604 = vmatpush2.bf16.msra.mxu0 %v7414
    %7605 = vmatprep.subr.bf16.mxu0 %v7409
    %7606 = vmatpush2.bf16.msra.mxu0 %v7408
    %7607 = vmatprep.subr.bf16.mxu0 %v7403
    %7608 = vmatpush2.bf16.msra.mxu0 %v7402
    %7609 = vmatprep.subr.bf16.mxu0 %v7397
    %7610 = vmatpush2.bf16.msra.mxu0 %v7396
    %7611 = vmatprep.mubr.bf16.mxu0 %v7057
    %7612 = vmatmul.mubr.bf16.gmra.mxu0 %v7056
    %v7613 = vpop.f32.mrf.mxu0
    %v7614 = vadd.f32 0.0, %v7613
    %v7615 = vpop.f32.mrf.mxu0
    %v7616 = vadd.f32 0.0, %v7615
    %v7617 = vpop.f32.mrf.mxu0
    %v7618 = vpop.f32.mrf.mxu0
    %7619 = vdwg.mxu0
    %7620 = vmatprep.subr.bf16.mxu0 %v7393
    %7621 = vmatpush1.bf16.msra.mxu0 %v7392
    %7622 = vmatprep.subr.bf16.mxu0 %v7387
    %7623 = vmatpush1.bf16.msra.mxu0 %v7386
    %7624 = vmatprep.subr.bf16.mxu0 %v7381
    %7625 = vmatpush1.bf16.msra.mxu0 %v7380
    %7626 = vmatprep.subr.bf16.mxu0 %v7375
    %7627 = vmatpush1.bf16.msra.mxu0 %v7374
    %7628 = vmatprep.subr.bf16.mxu0 %v7369
    %7629 = vmatpush1.bf16.msra.mxu0 %v7368
    %7630 = vmatprep.subr.bf16.mxu0 %v7363
    %7631 = vmatpush1.bf16.msra.mxu0 %v7362
    %7632 = vmatprep.subr.bf16.mxu0 %v7357
    %7633 = vmatpush1.bf16.msra.mxu0 %v7356
    %7634 = vmatprep.subr.bf16.mxu0 %v7351
    %7635 = vmatpush1.bf16.msra.mxu0 %v7350
    %7636 = vmatprep.subr.bf16.mxu0 %v7441
    %7637 = vmatpush2.bf16.msra.mxu0 %v7440
    %7638 = vmatprep.subr.bf16.mxu0 %v7435
    %7639 = vmatpush2.bf16.msra.mxu0 %v7434
    %7640 = vmatprep.subr.bf16.mxu0 %v7429
    %7641 = vmatpush2.bf16.msra.mxu0 %v7428
    %7642 = vmatprep.subr.bf16.mxu0 %v7423
    %7643 = vmatpush2.bf16.msra.mxu0 %v7422
    %7644 = vmatprep.subr.bf16.mxu0 %v7417
    %7645 = vmatpush2.bf16.msra.mxu0 %v7416
    %7646 = vmatprep.subr.bf16.mxu0 %v7411
    %7647 = vmatpush2.bf16.msra.mxu0 %v7410
    %7648 = vmatprep.subr.bf16.mxu0 %v7405
    %7649 = vmatpush2.bf16.msra.mxu0 %v7404
    %7650 = vmatprep.subr.bf16.mxu0 %v7399
    %7651 = vmatpush2.bf16.msra.mxu0 %v7398
    %7652 = vmatprep.mubr.bf16.mxu0 %v7057
    %7653 = vmatmul.mubr.bf16.gmra.mxu0 %v7056
    %v7654 = vpop.f32.mrf.mxu0
    %v7655 = vadd.f32 0.0, %v7654
    %v7656 = vpop.f32.mrf.mxu0
    %v7657 = vadd.f32 0.0, %v7656
    %v7658 = vpop.f32.mrf.mxu0
    %v7659 = vpop.f32.mrf.mxu0
    %7660 = vdwg.mxu0
    %v7757 = vunpack.c.l.b16 %v6862
    %v7758 = vunpack.c.h.b16 %v6862
    %v7759 = vunpack.c.l.b16 %v6863
    %v7760 = vunpack.c.h.b16 %v6863
    %v7761 = vunpack.c.l.b16 %v6864
    %v7762 = vunpack.c.h.b16 %v6864
    %v7763 = vunpack.c.l.b16 %v6865
    %v7764 = vunpack.c.h.b16 %v6865
    %v7765 = vunpack.c.l.b16 %v6866
    %v7766 = vunpack.c.h.b16 %v6866
    %v7767 = vunpack.c.l.b16 %v6867
    %v7768 = vunpack.c.h.b16 %v6867
    %v7769 = vunpack.c.l.b16 %v6868
    %v7770 = vunpack.c.h.b16 %v6868
    %v7771 = vunpack.c.l.b16 %v6869
    %v7772 = vunpack.c.h.b16 %v6869
    %v7773 = vunpack.c.l.b16 %v6870
    %v7774 = vunpack.c.h.b16 %v6870
    %v7775 = vunpack.c.l.b16 %v6871
    %v7776 = vunpack.c.h.b16 %v6871
    %v7777 = vunpack.c.l.b16 %v6872
    %v7778 = vunpack.c.h.b16 %v6872
    %v7779 = vunpack.c.l.b16 %v6873
    %v7780 = vunpack.c.h.b16 %v6873
    %v7781 = vunpack.c.l.b16 %v6874
    %v7782 = vunpack.c.h.b16 %v6874
    %v7783 = vunpack.c.l.b16 %v6875
    %v7784 = vunpack.c.h.b16 %v6875
    %v7785 = vunpack.c.l.b16 %v6876
    %v7786 = vunpack.c.h.b16 %v6876
    %v7787 = vunpack.c.l.b16 %v6877
    %v7788 = vunpack.c.h.b16 %v6877
    %v7789 = vunpack.c.l.b16 %v6878
    %v7790 = vunpack.c.h.b16 %v6878
    %v7791 = vunpack.c.l.b16 %v6879
    %v7792 = vunpack.c.h.b16 %v6879
    %v7793 = vunpack.c.l.b16 %v6880
    %v7794 = vunpack.c.h.b16 %v6880
    %v7795 = vunpack.c.l.b16 %v6881
    %v7796 = vunpack.c.h.b16 %v6881
    %v7797 = vunpack.c.l.b16 %v6882
    %v7798 = vunpack.c.h.b16 %v6882
    %v7799 = vunpack.c.l.b16 %v6883
    %v7800 = vunpack.c.h.b16 %v6883
    %v7801 = vunpack.c.l.b16 %v6884
    %v7802 = vunpack.c.h.b16 %v6884
    %v7803 = vunpack.c.l.b16 %v6885
    %v7804 = vunpack.c.h.b16 %v6885
    %v7805 = vunpack.c.l.b16 %v6886
    %v7806 = vunpack.c.h.b16 %v6886
    %v7807 = vunpack.c.l.b16 %v6887
    %v7808 = vunpack.c.h.b16 %v6887
    %v7809 = vunpack.c.l.b16 %v6888
    %v7810 = vunpack.c.h.b16 %v6888
    %v7811 = vunpack.c.l.b16 %v6889
    %v7812 = vunpack.c.h.b16 %v6889
    %v7813 = vunpack.c.l.b16 %v6890
    %v7814 = vunpack.c.h.b16 %v6890
    %v7815 = vunpack.c.l.b16 %v6891
    %v7816 = vunpack.c.h.b16 %v6891
    %v7817 = vunpack.c.l.b16 %v6892
    %v7818 = vunpack.c.h.b16 %v6892
    %v7819 = vunpack.c.l.b16 %v6893
    %v7820 = vunpack.c.h.b16 %v6893
    %v7821 = vunpack.c.l.b16 %v6894
    %v7822 = vunpack.c.h.b16 %v6894
    %v7823 = vunpack.c.l.b16 %v6895
    %v7824 = vunpack.c.h.b16 %v6895
    %v7825 = vunpack.c.l.b16 %v6896
    %v7826 = vunpack.c.h.b16 %v6896
    %v7827 = vunpack.c.l.b16 %v6897
    %v7828 = vunpack.c.h.b16 %v6897
    %v7829 = vunpack.c.l.b16 %v6898
    %v7830 = vunpack.c.h.b16 %v6898
    %v7831 = vunpack.c.l.b16 %v6899
    %v7832 = vunpack.c.h.b16 %v6899
    %v7833 = vunpack.c.l.b16 %v6900
    %v7834 = vunpack.c.h.b16 %v6900
    %v7835 = vunpack.c.l.b16 %v6901
    %v7836 = vunpack.c.h.b16 %v6901
    %v7837 = vunpack.c.l.b16 %v6902
    %v7838 = vunpack.c.h.b16 %v6902
    %v7839 = vunpack.c.l.b16 %v6903
    %v7840 = vunpack.c.h.b16 %v6903
    %v7841 = vunpack.c.l.b16 %v6904
    %v7842 = vunpack.c.h.b16 %v6904
    %v7843 = vunpack.c.l.b16 %v6905
    %v7844 = vunpack.c.h.b16 %v6905
    %v7845 = vunpack.c.l.b16 %v6906
    %v7846 = vunpack.c.h.b16 %v6906
    %v7847 = vunpack.c.l.b16 %v6907
    %v7848 = vunpack.c.h.b16 %v6907
    %v7849 = vunpack.c.l.b16 %v6908
    %v7850 = vunpack.c.h.b16 %v6908
    %v7851 = vunpack.c.l.b16 %v6909
    %v7852 = vunpack.c.h.b16 %v6909
    %v7853 = vunpack.c.l.b16 %v6910
    %v7854 = vunpack.c.h.b16 %v6910
    %v7855 = vunpack.c.l.b16 %v6911
    %v7856 = vunpack.c.h.b16 %v6911
    %v7857 = vunpack.c.l.b16 %v6912
    %v7858 = vunpack.c.h.b16 %v6912
    %v7859 = vunpack.c.l.b16 %v6913
    %v7860 = vunpack.c.h.b16 %v6913
    %v7861 = vunpack.c.l.b16 %v6914
    %v7862 = vunpack.c.h.b16 %v6914
    %v7863 = vunpack.c.l.b16 %v6915
    %v7864 = vunpack.c.h.b16 %v6915
    %v7865 = vunpack.c.l.b16 %v6916
    %v7866 = vunpack.c.h.b16 %v6916
    %v7867 = vunpack.c.l.b16 %v6917
    %v7868 = vunpack.c.h.b16 %v6917
    %v7869 = vunpack.c.l.b16 %v6918
    %v7870 = vunpack.c.h.b16 %v6918
    %v7871 = vunpack.c.l.b16 %v6919
    %v7872 = vunpack.c.h.b16 %v6919
    %v7873 = vunpack.c.l.b16 %v6920
    %v7874 = vunpack.c.h.b16 %v6920
    %v7875 = vunpack.c.l.b16 %v6921
    %v7876 = vunpack.c.h.b16 %v6921
    %v7877 = vunpack.c.l.b16 %v6922
    %v7878 = vunpack.c.h.b16 %v6922
    %v7879 = vunpack.c.l.b16 %v6923
    %v7880 = vunpack.c.h.b16 %v6923
    %v7881 = vunpack.c.l.b16 %v6924
    %v7882 = vunpack.c.h.b16 %v6924
    %v7883 = vunpack.c.l.b16 %v6925
    %v7884 = vunpack.c.h.b16 %v6925
    %v7885 = vunpack.c.l.b16 %v6926
    %v7886 = vunpack.c.h.b16 %v6926
    %v7887 = vunpack.c.l.b16 %v6927
    %v7888 = vunpack.c.h.b16 %v6927
    %v7889 = vunpack.c.l.b16 %v6928
    %v7890 = vunpack.c.h.b16 %v6928
    %v7891 = vunpack.c.l.b16 %v6929
    %v7892 = vunpack.c.h.b16 %v6929
    %v7893 = vunpack.c.l.b16 %v6930
    %v7894 = vunpack.c.h.b16 %v6930
    %v7895 = vunpack.c.l.b16 %v6931
    %v7896 = vunpack.c.h.b16 %v6931
    %v7897 = vunpack.c.l.b16 %v6932
    %v7898 = vunpack.c.h.b16 %v6932
    %v7899 = vunpack.c.l.b16 %v6933
    %v7900 = vunpack.c.h.b16 %v6933
    %v7901 = vunpack.c.l.b16 %v6934
    %v7902 = vunpack.c.h.b16 %v6934
    %v7903 = vunpack.c.l.b16 %v6935
    %v7904 = vunpack.c.h.b16 %v6935
    %v7905 = vunpack.c.l.b16 %v6936
    %v7906 = vunpack.c.h.b16 %v6936
    %v7907 = vunpack.c.l.b16 %v6937
    %v7908 = vunpack.c.h.b16 %v6937
    %v7909 = vunpack.c.l.b16 %v6938
    %v7910 = vunpack.c.h.b16 %v6938
    %v7911 = vunpack.c.l.b16 %v6939
    %v7912 = vunpack.c.h.b16 %v6939
    %v7913 = vunpack.c.l.b16 %v6940
    %v7914 = vunpack.c.h.b16 %v6940
    %v7915 = vunpack.c.l.b16 %v6941
    %v7916 = vunpack.c.h.b16 %v6941
    %v7917 = vunpack.c.l.b16 %v6942
    %v7918 = vunpack.c.h.b16 %v6942
    %v7919 = vunpack.c.l.b16 %v6943
    %v7920 = vunpack.c.h.b16 %v6943
    %v7921 = vunpack.c.l.b16 %v6944
    %v7922 = vunpack.c.h.b16 %v6944
    %v7923 = vunpack.c.l.b16 %v6945
    %v7924 = vunpack.c.h.b16 %v6945
    %v7925 = vunpack.c.l.b16 %v6946
    %v7926 = vunpack.c.h.b16 %v6946
    %v7927 = vunpack.c.l.b16 %v6947
    %v7928 = vunpack.c.h.b16 %v6947
    %v7929 = vunpack.c.l.b16 %v6948
    %v7930 = vunpack.c.h.b16 %v6948
    %v7931 = vunpack.c.l.b16 %v6949
    %v7932 = vunpack.c.h.b16 %v6949
    %v7933 = vunpack.c.l.b16 %v6950
    %v7934 = vunpack.c.h.b16 %v6950
    %v7935 = vunpack.c.l.b16 %v6951
    %v7936 = vunpack.c.h.b16 %v6951
    %v7937 = vunpack.c.l.b16 %v6952
    %v7938 = vunpack.c.h.b16 %v6952
    %v7939 = vunpack.c.l.b16 %v6953
    %v7940 = vunpack.c.h.b16 %v6953
    %v7941 = vunpack.c.l.b16 %v6954
    %v7942 = vunpack.c.h.b16 %v6954
    %v7943 = vunpack.c.l.b16 %v6955
    %v7944 = vunpack.c.h.b16 %v6955
    %v7945 = vunpack.c.l.b16 %v6956
    %v7946 = vunpack.c.h.b16 %v6956
    %v7947 = vunpack.c.l.b16 %v6957
    %v7948 = vunpack.c.h.b16 %v6957
    %v7949 = vpack.c.b16 %v7763, %v7757
    %v7950 = vpack.c.b16 %v7764, %v7758
    %v7951 = vpack.c.b16 %v7765, %v7759
    %v7952 = vpack.c.b16 %v7766, %v7760
    %v7953 = vpack.c.b16 %v7767, %v7761
    %v7954 = vpack.c.b16 %v7768, %v7762
    %v7955 = vpack.c.b16 %v7775, %v7769
    %v7956 = vpack.c.b16 %v7776, %v7770
    %v7957 = vpack.c.b16 %v7777, %v7771
    %v7958 = vpack.c.b16 %v7778, %v7772
    %v7959 = vpack.c.b16 %v7779, %v7773
    %v7960 = vpack.c.b16 %v7780, %v7774
    %v7961 = vpack.c.b16 %v7787, %v7781
    %v7962 = vpack.c.b16 %v7788, %v7782
    %v7963 = vpack.c.b16 %v7789, %v7783
    %v7964 = vpack.c.b16 %v7790, %v7784
    %v7965 = vpack.c.b16 %v7791, %v7785
    %v7966 = vpack.c.b16 %v7792, %v7786
    %v7967 = vpack.c.b16 %v7799, %v7793
    %v7968 = vpack.c.b16 %v7800, %v7794
    %v7969 = vpack.c.b16 %v7801, %v7795
    %v7970 = vpack.c.b16 %v7802, %v7796
    %v7971 = vpack.c.b16 %v7803, %v7797
    %v7972 = vpack.c.b16 %v7804, %v7798
    %v7973 = vpack.c.b16 %v7811, %v7805
    %v7974 = vpack.c.b16 %v7812, %v7806
    %v7975 = vpack.c.b16 %v7813, %v7807
    %v7976 = vpack.c.b16 %v7814, %v7808
    %v7977 = vpack.c.b16 %v7815, %v7809
    %v7978 = vpack.c.b16 %v7816, %v7810
    %v7979 = vpack.c.b16 %v7823, %v7817
    %v7980 = vpack.c.b16 %v7824, %v7818
    %v7981 = vpack.c.b16 %v7825, %v7819
    %v7982 = vpack.c.b16 %v7826, %v7820
    %v7983 = vpack.c.b16 %v7827, %v7821
    %v7984 = vpack.c.b16 %v7828, %v7822
    %v7985 = vpack.c.b16 %v7835, %v7829
    %v7986 = vpack.c.b16 %v7836, %v7830
    %v7987 = vpack.c.b16 %v7837, %v7831
    %v7988 = vpack.c.b16 %v7838, %v7832
    %v7989 = vpack.c.b16 %v7839, %v7833
    %v7990 = vpack.c.b16 %v7840, %v7834
    %v7991 = vpack.c.b16 %v7847, %v7841
    %v7992 = vpack.c.b16 %v7848, %v7842
    %v7993 = vpack.c.b16 %v7849, %v7843
    %v7994 = vpack.c.b16 %v7850, %v7844
    %v7995 = vpack.c.b16 %v7851, %v7845
    %v7996 = vpack.c.b16 %v7852, %v7846
    %v7997 = vpack.c.b16 %v7859, %v7853
    %v7998 = vpack.c.b16 %v7860, %v7854
    %v7999 = vpack.c.b16 %v7861, %v7855
    %v8000 = vpack.c.b16 %v7862, %v7856
    %v8001 = vpack.c.b16 %v7863, %v7857
    %v8002 = vpack.c.b16 %v7864, %v7858
    %v8003 = vpack.c.b16 %v7871, %v7865
    %v8004 = vpack.c.b16 %v7872, %v7866
    %v8005 = vpack.c.b16 %v7873, %v7867
    %v8006 = vpack.c.b16 %v7874, %v7868
    %v8007 = vpack.c.b16 %v7875, %v7869
    %v8008 = vpack.c.b16 %v7876, %v7870
    %v8009 = vpack.c.b16 %v7883, %v7877
    %v8010 = vpack.c.b16 %v7884, %v7878
    %v8011 = vpack.c.b16 %v7885, %v7879
    %v8012 = vpack.c.b16 %v7886, %v7880
    %v8013 = vpack.c.b16 %v7887, %v7881
    %v8014 = vpack.c.b16 %v7888, %v7882
    %v8015 = vpack.c.b16 %v7895, %v7889
    %v8016 = vpack.c.b16 %v7896, %v7890
    %v8017 = vpack.c.b16 %v7897, %v7891
    %v8018 = vpack.c.b16 %v7898, %v7892
    %v8019 = vpack.c.b16 %v7899, %v7893
    %v8020 = vpack.c.b16 %v7900, %v7894
    %v8021 = vpack.c.b16 %v7907, %v7901
    %v8022 = vpack.c.b16 %v7908, %v7902
    %v8023 = vpack.c.b16 %v7909, %v7903
    %v8024 = vpack.c.b16 %v7910, %v7904
    %v8025 = vpack.c.b16 %v7911, %v7905
    %v8026 = vpack.c.b16 %v7912, %v7906
    %v8027 = vpack.c.b16 %v7919, %v7913
    %v8028 = vpack.c.b16 %v7920, %v7914
    %v8029 = vpack.c.b16 %v7921, %v7915
    %v8030 = vpack.c.b16 %v7922, %v7916
    %v8031 = vpack.c.b16 %v7923, %v7917
    %v8032 = vpack.c.b16 %v7924, %v7918
    %v8033 = vpack.c.b16 %v7931, %v7925
    %v8034 = vpack.c.b16 %v7932, %v7926
    %v8035 = vpack.c.b16 %v7933, %v7927
    %v8036 = vpack.c.b16 %v7934, %v7928
    %v8037 = vpack.c.b16 %v7935, %v7929
    %v8038 = vpack.c.b16 %v7936, %v7930
    %v8039 = vpack.c.b16 %v7943, %v7937
    %v8040 = vpack.c.b16 %v7944, %v7938
    %v8041 = vpack.c.b16 %v7945, %v7939
    %v8042 = vpack.c.b16 %v7946, %v7940
    %v8043 = vpack.c.b16 %v7947, %v7941
    %v8044 = vpack.c.b16 %v7948, %v7942
    %8141 = vmatprep.subr.bf16.mxu0 %v7992
    %8142 = vmatpush1.bf16.msra.mxu0 %v7991
    %8143 = vmatprep.subr.bf16.mxu0 %v7986
    %8144 = vmatpush1.bf16.msra.mxu0 %v7985
    %8145 = vmatprep.subr.bf16.mxu0 %v7980
    %8146 = vmatpush1.bf16.msra.mxu0 %v7979
    %8147 = vmatprep.subr.bf16.mxu0 %v7974
    %8148 = vmatpush1.bf16.msra.mxu0 %v7973
    %8149 = vmatprep.subr.bf16.mxu0 %v7968
    %8150 = vmatpush1.bf16.msra.mxu0 %v7967
    %8151 = vmatprep.subr.bf16.mxu0 %v7962
    %8152 = vmatpush1.bf16.msra.mxu0 %v7961
    %8153 = vmatprep.subr.bf16.mxu0 %v7956
    %8154 = vmatpush1.bf16.msra.mxu0 %v7955
    %8155 = vmatprep.subr.bf16.mxu0 %v7950
    %8156 = vmatpush1.bf16.msra.mxu0 %v7949
    %8157 = vmatprep.subr.bf16.mxu0 %v8040
    %8158 = vmatpush2.bf16.msra.mxu0 %v8039
    %8159 = vmatprep.subr.bf16.mxu0 %v8034
    %8160 = vmatpush2.bf16.msra.mxu0 %v8033
    %8161 = vmatprep.subr.bf16.mxu0 %v8028
    %8162 = vmatpush2.bf16.msra.mxu0 %v8027
    %8163 = vmatprep.subr.bf16.mxu0 %v8022
    %8164 = vmatpush2.bf16.msra.mxu0 %v8021
    %8165 = vmatprep.subr.bf16.mxu0 %v8016
    %8166 = vmatpush2.bf16.msra.mxu0 %v8015
    %8167 = vmatprep.subr.bf16.mxu0 %v8010
    %8168 = vmatpush2.bf16.msra.mxu0 %v8009
    %8169 = vmatprep.subr.bf16.mxu0 %v8004
    %8170 = vmatpush2.bf16.msra.mxu0 %v8003
    %8171 = vmatprep.subr.bf16.mxu0 %v7998
    %8172 = vmatpush2.bf16.msra.mxu0 %v7997
    %8173 = vmatprep.mubr.bf16.mxu0 %v7055
    %8174 = vmatmul.mubr.bf16.gmra.mxu0 %v7054
    %v8175 = vpop.f32.mrf.mxu0
    %v8176 = vadd.f32 %v7573, %v8175
    %v8177 = vpop.f32.mrf.mxu0
    %v8178 = vadd.f32 %v7575, %v8177
    %v8179 = vpop.f32.mrf.mxu0
    %v8180 = vpop.f32.mrf.mxu0
    %8181 = vdwg.mxu0
    %8182 = vmatprep.subr.bf16.mxu0 %v7994
    %8183 = vmatpush1.bf16.msra.mxu0 %v7993
    %8184 = vmatprep.subr.bf16.mxu0 %v7988
    %8185 = vmatpush1.bf16.msra.mxu0 %v7987
    %8186 = vmatprep.subr.bf16.mxu0 %v7982
    %8187 = vmatpush1.bf16.msra.mxu0 %v7981
    %8188 = vmatprep.subr.bf16.mxu0 %v7976
    %8189 = vmatpush1.bf16.msra.mxu0 %v7975
    %8190 = vmatprep.subr.bf16.mxu0 %v7970
    %8191 = vmatpush1.bf16.msra.mxu0 %v7969
    %8192 = vmatprep.subr.bf16.mxu0 %v7964
    %8193 = vmatpush1.bf16.msra.mxu0 %v7963
    %8194 = vmatprep.subr.bf16.mxu0 %v7958
    %8195 = vmatpush1.bf16.msra.mxu0 %v7957
    %8196 = vmatprep.subr.bf16.mxu0 %v7952
    %8197 = vmatpush1.bf16.msra.mxu0 %v7951
    %8198 = vmatprep.subr.bf16.mxu0 %v8042
    %8199 = vmatpush2.bf16.msra.mxu0 %v8041
    %8200 = vmatprep.subr.bf16.mxu0 %v8036
    %8201 = vmatpush2.bf16.msra.mxu0 %v8035
    %8202 = vmatprep.subr.bf16.mxu0 %v8030
    %8203 = vmatpush2.bf16.msra.mxu0 %v8029
    %8204 = vmatprep.subr.bf16.mxu0 %v8024
    %8205 = vmatpush2.bf16.msra.mxu0 %v8023
    %8206 = vmatprep.subr.bf16.mxu0 %v8018
    %8207 = vmatpush2.bf16.msra.mxu0 %v8017
    %8208 = vmatprep.subr.bf16.mxu0 %v8012
    %8209 = vmatpush2.bf16.msra.mxu0 %v8011
    %8210 = vmatprep.subr.bf16.mxu0 %v8006
    %8211 = vmatpush2.bf16.msra.mxu0 %v8005
    %8212 = vmatprep.subr.bf16.mxu0 %v8000
    %8213 = vmatpush2.bf16.msra.mxu0 %v7999
    %8214 = vmatprep.mubr.bf16.mxu0 %v7055
    %8215 = vmatmul.mubr.bf16.gmra.mxu0 %v7054
    %v8216 = vpop.f32.mrf.mxu0
    %v8217 = vadd.f32 %v7614, %v8216
    %v8218 = vpop.f32.mrf.mxu0
    %v8219 = vadd.f32 %v7616, %v8218
    %v8220 = vpop.f32.mrf.mxu0
    %v8221 = vpop.f32.mrf.mxu0
    %8222 = vdwg.mxu0
    %8223 = vmatprep.subr.bf16.mxu0 %v7996
    %8224 = vmatpush1.bf16.msra.mxu0 %v7995
    %8225 = vmatprep.subr.bf16.mxu0 %v7990
    %8226 = vmatpush1.bf16.msra.mxu0 %v7989
    %8227 = vmatprep.subr.bf16.mxu0 %v7984
    %8228 = vmatpush1.bf16.msra.mxu0 %v7983
    %8229 = vmatprep.subr.bf16.mxu0 %v7978
    %8230 = vmatpush1.bf16.msra.mxu0 %v7977
    %8231 = vmatprep.subr.bf16.mxu0 %v7972
    %8232 = vmatpush1.bf16.msra.mxu0 %v7971
    %8233 = vmatprep.subr.bf16.mxu0 %v7966
    %8234 = vmatpush1.bf16.msra.mxu0 %v7965
    %8235 = vmatprep.subr.bf16.mxu0 %v7960
    %8236 = vmatpush1.bf16.msra.mxu0 %v7959
    %8237 = vmatprep.subr.bf16.mxu0 %v7954
    %8238 = vmatpush1.bf16.msra.mxu0 %v7953
    %8239 = vmatprep.subr.bf16.mxu0 %v8044
    %8240 = vmatpush2.bf16.msra.mxu0 %v8043
    %8241 = vmatprep.subr.bf16.mxu0 %v8038
    %8242 = vmatpush2.bf16.msra.mxu0 %v8037
    %8243 = vmatprep.subr.bf16.mxu0 %v8032
    %8244 = vmatpush2.bf16.msra.mxu0 %v8031
    %8245 = vmatprep.subr.bf16.mxu0 %v8026
    %8246 = vmatpush2.bf16.msra.mxu0 %v8025
    %8247 = vmatprep.subr.bf16.mxu0 %v8020
    %8248 = vmatpush2.bf16.msra.mxu0 %v8019
    %8249 = vmatprep.subr.bf16.mxu0 %v8014
    %8250 = vmatpush2.bf16.msra.mxu0 %v8013
    %8251 = vmatprep.subr.bf16.mxu0 %v8008
    %8252 = vmatpush2.bf16.msra.mxu0 %v8007
    %8253 = vmatprep.subr.bf16.mxu0 %v8002
    %8254 = vmatpush2.bf16.msra.mxu0 %v8001
    %8255 = vmatprep.mubr.bf16.mxu0 %v7055
    %8256 = vmatmul.mubr.bf16.gmra.mxu0 %v7054
    %v8257 = vpop.f32.mrf.mxu0
    %v8258 = vadd.f32 %v7655, %v8257
    %v8259 = vpop.f32.mrf.mxu0
    %v8260 = vadd.f32 %v7657, %v8259
    %v8261 = vpop.f32.mrf.mxu0
    %v8262 = vpop.f32.mrf.mxu0
    %8263 = vdwg.mxu0
    %v8264 = vld [vmem:[#allocation15] sm:$0xff]
    %v8266 = vlaneseq
    %v8267 = vshrl.u32 %v8266, 7
    %v8268 = vsub.s32 0, %v8267
    %v8269 = vrot.slane %v8264, %v8268
    %v8270 = vlaneseq
    %v8271 = vshrl.u32 %v8270, 7
    %v8272 = vsub.s32 1, %v8271
    %v8273 = vrot.slane %v8264, %v8272
    %v8274 = vlaneseq
    %v8275 = vshrl.u32 %v8274, 7
    %v8276 = vsub.s32 4, %v8275
    %v8277 = vrot.slane %v8264, %v8276
    %v8278 = vlaneseq
    %v8279 = vshrl.u32 %v8278, 7
    %v8280 = vsub.s32 5, %v8279
    %v8281 = vrot.slane %v8264, %v8280
    %v8282 = vlaneseq
    %v8283 = vshrl.u32 %v8282, 7
    %v8284 = vsub.s32 6, %v8283
    %v8285 = vrot.slane %v8264, %v8284
    %v8286 = vlaneseq
    %v8287 = vshrl.u32 %v8286, 7
    %v8288 = vsub.s32 7, %v8287
    %v8289 = vrot.slane %v8264, %v8288
    %v8296 = vadd.f32 %v8176, %v8269
    %v8297 = vadd.f32 %v8178, %v8273
    %v8298 = vadd.f32 %v8217, %v8277
    %v8299 = vadd.f32 %v8219, %v8281
    %v8300 = vadd.f32 %v8258, %v8285
    %v8301 = vadd.f32 %v8260, %v8289
    %v8302 = vxor.u32 %v8296, 2147483648
    %v8303 = vxor.u32 %v8297, 2147483648
    %v8304 = vmul.f32 %v8302, 1.442695
    %v8305 = vpow.pop %v8304
    %v8306 = vmul.f32 %v8303, 1.442695
    %v8307 = vpow.pop %v8306
    %v8308 = vadd.f32 %v8305, 1.0
    %v8309 = vadd.f32 %v8307, 1.0
    %v8310 = vrcp.pop %v8308
    %v8311 = vmul.f32 1.0, %v8310
    %v8312 = vrcp.pop %v8309
    %v8313 = vmul.f32 1.0, %v8312
    %v8314 = vtanh.pop %v8298
    %v8315 = vtanh.pop %v8299
    %v8316 = vxor.u32 %v8300, 2147483648
    %v8317 = vxor.u32 %v8301, 2147483648
    %v8318 = vmul.f32 %v8316, 1.442695
    %v8319 = vpow.pop %v8318
    %v8320 = vmul.f32 %v8317, 1.442695
    %v8321 = vpow.pop %v8320
    %v8322 = vadd.f32 %v8319, 1.0
    %v8323 = vadd.f32 %v8321, 1.0
    %v8324 = vrcp.pop %v8322
    %v8325 = vmul.f32 1.0, %v8324
    %v8326 = vrcp.pop %v8323
    %v8327 = vmul.f32 1.0, %v8326
    %v8328 = vmul.f32 %v8311, %v8314
    %v8329 = vmul.f32 %v8313, %v8315
    %v8330 = vtanh.pop %v8328
    %v8331 = vtanh.pop %v8329
    %v8332 = vmul.f32 %v8325, %v8330
    %v8333 = vmul.f32 %v8327, %v8331
    %v8334 = vpack.c.bf16 %v8332, %v8332
    %v8335 = vpack.c.bf16 %v8333, %v8333
    %v8336 = vld [vmem:[#allocation17] sm:$0xff]
    %v8337 = vld [vmem:[#allocation17 + $0x10] sm:$0xff]
    %v8338 = vld [vmem:[#allocation17 + $0x18] sm:$0xff]
    %v8339 = vld [vmem:[#allocation17 + $0x20] sm:$0xff]
    %v8340 = vld [vmem:[#allocation17 + $0x30] sm:$0xff]
    %v8341 = vld [vmem:[#allocation17 + $0x38] sm:$0xff]
    %v8342 = vld [vmem:[#allocation17 + $0x40] sm:$0xff]
    %v8343 = vld [vmem:[#allocation17 + $0x50] sm:$0xff]
    %v8344 = vld [vmem:[#allocation17 + $0x58] sm:$0xff]
    %v8345 = vld [vmem:[#allocation17 + $0x60] sm:$0xff]
    %v8346 = vld [vmem:[#allocation17 + $0x70] sm:$0xff]
    %v8347 = vld [vmem:[#allocation17 + $0x78] sm:$0xff]
    %v8348 = vld [vmem:[#allocation17 + $0x80] sm:$0xff]
    %v8349 = vld [vmem:[#allocation17 + $0x90] sm:$0xff]
    %v8350 = vld [vmem:[#allocation17 + $0x98] sm:$0xff]
    %v8351 = vld [vmem:[#allocation17 + $0xa0] sm:$0xff]
    %v8352 = vld [vmem:[#allocation17 + $0xb0] sm:$0xff]
    %v8353 = vld [vmem:[#allocation17 + $0xb8] sm:$0xff]
    %v8354 = vld [vmem:[#allocation17 + $0xc0] sm:$0xff]
    %v8355 = vld [vmem:[#allocation17 + $0xd0] sm:$0xff]
    %v8356 = vld [vmem:[#allocation17 + $0xd8] sm:$0xff]
    %v8357 = vld [vmem:[#allocation17 + $0xe0] sm:$0xff]
    %v8358 = vld [vmem:[#allocation17 + $0xf0] sm:$0xff]
    %v8359 = vld [vmem:[#allocation17 + $0xf8] sm:$0xff]
    %v8360 = vld [vmem:[#allocation17 + $0x100] sm:$0xff]
    %v8361 = vld [vmem:[#allocation17 + $0x110] sm:$0xff]
    %v8362 = vld [vmem:[#allocation17 + $0x118] sm:$0xff]
    %v8363 = vld [vmem:[#allocation17 + $0x120] sm:$0xff]
    %v8364 = vld [vmem:[#allocation17 + $0x130] sm:$0xff]
    %v8365 = vld [vmem:[#allocation17 + $0x138] sm:$0xff]
    %v8366 = vld [vmem:[#allocation17 + $0x140] sm:$0xff]
    %v8367 = vld [vmem:[#allocation17 + $0x150] sm:$0xff]
    %v8368 = vld [vmem:[#allocation17 + $0x158] sm:$0xff]
    %v8369 = vld [vmem:[#allocation17 + $0x160] sm:$0xff]
    %v8370 = vld [vmem:[#allocation17 + $0x170] sm:$0xff]
    %v8371 = vld [vmem:[#allocation17 + $0x178] sm:$0xff]
    %v8372 = vld [vmem:[#allocation17 + $0x180] sm:$0xff]
    %v8373 = vld [vmem:[#allocation17 + $0x190] sm:$0xff]
    %v8374 = vld [vmem:[#allocation17 + $0x198] sm:$0xff]
    %v8375 = vld [vmem:[#allocation17 + $0x1a0] sm:$0xff]
    %v8376 = vld [vmem:[#allocation17 + $0x1b0] sm:$0xff]
    %v8377 = vld [vmem:[#allocation17 + $0x1b8] sm:$0xff]
    %v8378 = vld [vmem:[#allocation17 + $0x1c0] sm:$0xff]
    %v8379 = vld [vmem:[#allocation17 + $0x1d0] sm:$0xff]
    %v8380 = vld [vmem:[#allocation17 + $0x1d8] sm:$0xff]
    %v8381 = vld [vmem:[#allocation17 + $0x1e0] sm:$0xff]
    %v8382 = vld [vmem:[#allocation17 + $0x1f0] sm:$0xff]
    %v8383 = vld [vmem:[#allocation17 + $0x1f8] sm:$0xff]
    %v8384 = vld [vmem:[#allocation17 + $0x200] sm:$0xff]
    %v8385 = vld [vmem:[#allocation17 + $0x210] sm:$0xff]
    %v8386 = vld [vmem:[#allocation17 + $0x218] sm:$0xff]
    %v8387 = vld [vmem:[#allocation17 + $0x220] sm:$0xff]
    %v8388 = vld [vmem:[#allocation17 + $0x230] sm:$0xff]
    %v8389 = vld [vmem:[#allocation17 + $0x238] sm:$0xff]
    %v8390 = vld [vmem:[#allocation17 + $0x240] sm:$0xff]
    %v8391 = vld [vmem:[#allocation17 + $0x250] sm:$0xff]
    %v8392 = vld [vmem:[#allocation17 + $0x258] sm:$0xff]
    %v8393 = vld [vmem:[#allocation17 + $0x260] sm:$0xff]
    %v8394 = vld [vmem:[#allocation17 + $0x270] sm:$0xff]
    %v8395 = vld [vmem:[#allocation17 + $0x278] sm:$0xff]
    %v8396 = vld [vmem:[#allocation17 + $0x280] sm:$0xff]
    %v8397 = vld [vmem:[#allocation17 + $0x290] sm:$0xff]
    %v8398 = vld [vmem:[#allocation17 + $0x298] sm:$0xff]
    %v8399 = vld [vmem:[#allocation17 + $0x2a0] sm:$0xff]
    %v8400 = vld [vmem:[#allocation17 + $0x2b0] sm:$0xff]
    %v8401 = vld [vmem:[#allocation17 + $0x2b8] sm:$0xff]
    %v8402 = vld [vmem:[#allocation17 + $0x2c0] sm:$0xff]
    %v8403 = vld [vmem:[#allocation17 + $0x2d0] sm:$0xff]
    %v8404 = vld [vmem:[#allocation17 + $0x2d8] sm:$0xff]
    %v8405 = vld [vmem:[#allocation17 + $0x2e0] sm:$0xff]
    %v8406 = vld [vmem:[#allocation17 + $0x2f0] sm:$0xff]
    %v8407 = vld [vmem:[#allocation17 + $0x2f8] sm:$0xff]
    %v8408 = vld [vmem:[#allocation17 + $0x300] sm:$0xff]
    %v8409 = vld [vmem:[#allocation17 + $0x310] sm:$0xff]
    %v8410 = vld [vmem:[#allocation17 + $0x318] sm:$0xff]
    %v8411 = vld [vmem:[#allocation17 + $0x320] sm:$0xff]
    %v8412 = vld [vmem:[#allocation17 + $0x330] sm:$0xff]
    %v8413 = vld [vmem:[#allocation17 + $0x338] sm:$0xff]
    %v8414 = vld [vmem:[#allocation17 + $0x340] sm:$0xff]
    %v8415 = vld [vmem:[#allocation17 + $0x350] sm:$0xff]
    %v8416 = vld [vmem:[#allocation17 + $0x358] sm:$0xff]
    %v8417 = vld [vmem:[#allocation17 + $0x360] sm:$0xff]
    %v8418 = vld [vmem:[#allocation17 + $0x370] sm:$0xff]
    %v8419 = vld [vmem:[#allocation17 + $0x378] sm:$0xff]
    %v8420 = vld [vmem:[#allocation17 + $0x380] sm:$0xff]
    %v8421 = vld [vmem:[#allocation17 + $0x390] sm:$0xff]
    %v8422 = vld [vmem:[#allocation17 + $0x398] sm:$0xff]
    %v8423 = vld [vmem:[#allocation17 + $0x3a0] sm:$0xff]
    %v8424 = vld [vmem:[#allocation17 + $0x3b0] sm:$0xff]
    %v8425 = vld [vmem:[#allocation17 + $0x3b8] sm:$0xff]
    %v8426 = vld [vmem:[#allocation17 + $0x3c0] sm:$0xff]
    %v8427 = vld [vmem:[#allocation17 + $0x3d0] sm:$0xff]
    %v8428 = vld [vmem:[#allocation17 + $0x3d8] sm:$0xff]
    %v8429 = vld [vmem:[#allocation17 + $0x3e0] sm:$0xff]
    %v8430 = vld [vmem:[#allocation17 + $0x3f0] sm:$0xff]
    %v8431 = vld [vmem:[#allocation17 + $0x3f8] sm:$0xff]
    %v8432 = vld [vmem:[%s10] sm:$0xff]
    %v8434 = vlaneseq
    %v8435 = vshrl.u32 %v8434, 7
    %v8436 = vsub.s32 0, %v8435
    %v8437 = vrot.slane %v8432, %v8436
    %v8438 = vlaneseq
    %v8439 = vshrl.u32 %v8438, 7
    %v8440 = vsub.s32 1, %v8439
    %v8441 = vrot.slane %v8432, %v8440
    %v8442 = vlaneseq
    %v8443 = vshrl.u32 %v8442, 7
    %v8444 = vsub.s32 4, %v8443
    %v8445 = vrot.slane %v8432, %v8444
    %v8446 = vlaneseq
    %v8447 = vshrl.u32 %v8446, 7
    %v8448 = vsub.s32 5, %v8447
    %v8449 = vrot.slane %v8432, %v8448
    %v8450 = vlaneseq
    %v8451 = vshrl.u32 %v8450, 7
    %v8452 = vsub.s32 6, %v8451
    %v8453 = vrot.slane %v8432, %v8452
    %v8454 = vlaneseq
    %v8455 = vshrl.u32 %v8454, 7
    %v8456 = vsub.s32 7, %v8455
    %v8457 = vrot.slane %v8432, %v8456
    %v8560 = vunpack.c.l.b16 %v8336
    %v8561 = vunpack.c.h.b16 %v8336
    %v8562 = vunpack.c.l.b16 %v8337
    %v8563 = vunpack.c.h.b16 %v8337
    %v8564 = vunpack.c.l.b16 %v8338
    %v8565 = vunpack.c.h.b16 %v8338
    %v8566 = vunpack.c.l.b16 %v8339
    %v8567 = vunpack.c.h.b16 %v8339
    %v8568 = vunpack.c.l.b16 %v8340
    %v8569 = vunpack.c.h.b16 %v8340
    %v8570 = vunpack.c.l.b16 %v8341
    %v8571 = vunpack.c.h.b16 %v8341
    %v8572 = vunpack.c.l.b16 %v8342
    %v8573 = vunpack.c.h.b16 %v8342
    %v8574 = vunpack.c.l.b16 %v8343
    %v8575 = vunpack.c.h.b16 %v8343
    %v8576 = vunpack.c.l.b16 %v8344
    %v8577 = vunpack.c.h.b16 %v8344
    %v8578 = vunpack.c.l.b16 %v8345
    %v8579 = vunpack.c.h.b16 %v8345
    %v8580 = vunpack.c.l.b16 %v8346
    %v8581 = vunpack.c.h.b16 %v8346
    %v8582 = vunpack.c.l.b16 %v8347
    %v8583 = vunpack.c.h.b16 %v8347
    %v8584 = vunpack.c.l.b16 %v8348
    %v8585 = vunpack.c.h.b16 %v8348
    %v8586 = vunpack.c.l.b16 %v8349
    %v8587 = vunpack.c.h.b16 %v8349
    %v8588 = vunpack.c.l.b16 %v8350
    %v8589 = vunpack.c.h.b16 %v8350
    %v8590 = vunpack.c.l.b16 %v8351
    %v8591 = vunpack.c.h.b16 %v8351
    %v8592 = vunpack.c.l.b16 %v8352
    %v8593 = vunpack.c.h.b16 %v8352
    %v8594 = vunpack.c.l.b16 %v8353
    %v8595 = vunpack.c.h.b16 %v8353
    %v8596 = vunpack.c.l.b16 %v8354
    %v8597 = vunpack.c.h.b16 %v8354
    %v8598 = vunpack.c.l.b16 %v8355
    %v8599 = vunpack.c.h.b16 %v8355
    %v8600 = vunpack.c.l.b16 %v8356
    %v8601 = vunpack.c.h.b16 %v8356
    %v8602 = vunpack.c.l.b16 %v8357
    %v8603 = vunpack.c.h.b16 %v8357
    %v8604 = vunpack.c.l.b16 %v8358
    %v8605 = vunpack.c.h.b16 %v8358
    %v8606 = vunpack.c.l.b16 %v8359
    %v8607 = vunpack.c.h.b16 %v8359
    %v8608 = vunpack.c.l.b16 %v8360
    %v8609 = vunpack.c.h.b16 %v8360
    %v8610 = vunpack.c.l.b16 %v8361
    %v8611 = vunpack.c.h.b16 %v8361
    %v8612 = vunpack.c.l.b16 %v8362
    %v8613 = vunpack.c.h.b16 %v8362
    %v8614 = vunpack.c.l.b16 %v8363
    %v8615 = vunpack.c.h.b16 %v8363
    %v8616 = vunpack.c.l.b16 %v8364
    %v8617 = vunpack.c.h.b16 %v8364
    %v8618 = vunpack.c.l.b16 %v8365
    %v8619 = vunpack.c.h.b16 %v8365
    %v8620 = vunpack.c.l.b16 %v8366
    %v8621 = vunpack.c.h.b16 %v8366
    %v8622 = vunpack.c.l.b16 %v8367
    %v8623 = vunpack.c.h.b16 %v8367
    %v8624 = vunpack.c.l.b16 %v8368
    %v8625 = vunpack.c.h.b16 %v8368
    %v8626 = vunpack.c.l.b16 %v8369
    %v8627 = vunpack.c.h.b16 %v8369
    %v8628 = vunpack.c.l.b16 %v8370
    %v8629 = vunpack.c.h.b16 %v8370
    %v8630 = vunpack.c.l.b16 %v8371
    %v8631 = vunpack.c.h.b16 %v8371
    %v8632 = vunpack.c.l.b16 %v8372
    %v8633 = vunpack.c.h.b16 %v8372
    %v8634 = vunpack.c.l.b16 %v8373
    %v8635 = vunpack.c.h.b16 %v8373
    %v8636 = vunpack.c.l.b16 %v8374
    %v8637 = vunpack.c.h.b16 %v8374
    %v8638 = vunpack.c.l.b16 %v8375
    %v8639 = vunpack.c.h.b16 %v8375
    %v8640 = vunpack.c.l.b16 %v8376
    %v8641 = vunpack.c.h.b16 %v8376
    %v8642 = vunpack.c.l.b16 %v8377
    %v8643 = vunpack.c.h.b16 %v8377
    %v8644 = vunpack.c.l.b16 %v8378
    %v8645 = vunpack.c.h.b16 %v8378
    %v8646 = vunpack.c.l.b16 %v8379
    %v8647 = vunpack.c.h.b16 %v8379
    %v8648 = vunpack.c.l.b16 %v8380
    %v8649 = vunpack.c.h.b16 %v8380
    %v8650 = vunpack.c.l.b16 %v8381
    %v8651 = vunpack.c.h.b16 %v8381
    %v8652 = vunpack.c.l.b16 %v8382
    %v8653 = vunpack.c.h.b16 %v8382
    %v8654 = vunpack.c.l.b16 %v8383
    %v8655 = vunpack.c.h.b16 %v8383
    %v8656 = vunpack.c.l.b16 %v8384
    %v8657 = vunpack.c.h.b16 %v8384
    %v8658 = vunpack.c.l.b16 %v8385
    %v8659 = vunpack.c.h.b16 %v8385
    %v8660 = vunpack.c.l.b16 %v8386
    %v8661 = vunpack.c.h.b16 %v8386
    %v8662 = vunpack.c.l.b16 %v8387
    %v8663 = vunpack.c.h.b16 %v8387
    %v8664 = vunpack.c.l.b16 %v8388
    %v8665 = vunpack.c.h.b16 %v8388
    %v8666 = vunpack.c.l.b16 %v8389
    %v8667 = vunpack.c.h.b16 %v8389
    %v8668 = vunpack.c.l.b16 %v8390
    %v8669 = vunpack.c.h.b16 %v8390
    %v8670 = vunpack.c.l.b16 %v8391
    %v8671 = vunpack.c.h.b16 %v8391
    %v8672 = vunpack.c.l.b16 %v8392
    %v8673 = vunpack.c.h.b16 %v8392
    %v8674 = vunpack.c.l.b16 %v8393
    %v8675 = vunpack.c.h.b16 %v8393
    %v8676 = vunpack.c.l.b16 %v8394
    %v8677 = vunpack.c.h.b16 %v8394
    %v8678 = vunpack.c.l.b16 %v8395
    %v8679 = vunpack.c.h.b16 %v8395
    %v8680 = vunpack.c.l.b16 %v8396
    %v8681 = vunpack.c.h.b16 %v8396
    %v8682 = vunpack.c.l.b16 %v8397
    %v8683 = vunpack.c.h.b16 %v8397
    %v8684 = vunpack.c.l.b16 %v8398
    %v8685 = vunpack.c.h.b16 %v8398
    %v8686 = vunpack.c.l.b16 %v8399
    %v8687 = vunpack.c.h.b16 %v8399
    %v8688 = vunpack.c.l.b16 %v8400
    %v8689 = vunpack.c.h.b16 %v8400
    %v8690 = vunpack.c.l.b16 %v8401
    %v8691 = vunpack.c.h.b16 %v8401
    %v8692 = vunpack.c.l.b16 %v8402
    %v8693 = vunpack.c.h.b16 %v8402
    %v8694 = vunpack.c.l.b16 %v8403
    %v8695 = vunpack.c.h.b16 %v8403
    %v8696 = vunpack.c.l.b16 %v8404
    %v8697 = vunpack.c.h.b16 %v8404
    %v8698 = vunpack.c.l.b16 %v8405
    %v8699 = vunpack.c.h.b16 %v8405
    %v8700 = vunpack.c.l.b16 %v8406
    %v8701 = vunpack.c.h.b16 %v8406
    %v8702 = vunpack.c.l.b16 %v8407
    %v8703 = vunpack.c.h.b16 %v8407
    %v8704 = vunpack.c.l.b16 %v8408
    %v8705 = vunpack.c.h.b16 %v8408
    %v8706 = vunpack.c.l.b16 %v8409
    %v8707 = vunpack.c.h.b16 %v8409
    %v8708 = vunpack.c.l.b16 %v8410
    %v8709 = vunpack.c.h.b16 %v8410
    %v8710 = vunpack.c.l.b16 %v8411
    %v8711 = vunpack.c.h.b16 %v8411
    %v8712 = vunpack.c.l.b16 %v8412
    %v8713 = vunpack.c.h.b16 %v8412
    %v8714 = vunpack.c.l.b16 %v8413
    %v8715 = vunpack.c.h.b16 %v8413
    %v8716 = vunpack.c.l.b16 %v8414
    %v8717 = vunpack.c.h.b16 %v8414
    %v8718 = vunpack.c.l.b16 %v8415
    %v8719 = vunpack.c.h.b16 %v8415
    %v8720 = vunpack.c.l.b16 %v8416
    %v8721 = vunpack.c.h.b16 %v8416
    %v8722 = vunpack.c.l.b16 %v8417
    %v8723 = vunpack.c.h.b16 %v8417
    %v8724 = vunpack.c.l.b16 %v8418
    %v8725 = vunpack.c.h.b16 %v8418
    %v8726 = vunpack.c.l.b16 %v8419
    %v8727 = vunpack.c.h.b16 %v8419
    %v8728 = vunpack.c.l.b16 %v8420
    %v8729 = vunpack.c.h.b16 %v8420
    %v8730 = vunpack.c.l.b16 %v8421
    %v8731 = vunpack.c.h.b16 %v8421
    %v8732 = vunpack.c.l.b16 %v8422
    %v8733 = vunpack.c.h.b16 %v8422
    %v8734 = vunpack.c.l.b16 %v8423
    %v8735 = vunpack.c.h.b16 %v8423
    %v8736 = vunpack.c.l.b16 %v8424
    %v8737 = vunpack.c.h.b16 %v8424
    %v8738 = vunpack.c.l.b16 %v8425
    %v8739 = vunpack.c.h.b16 %v8425
    %v8740 = vunpack.c.l.b16 %v8426
    %v8741 = vunpack.c.h.b16 %v8426
    %v8742 = vunpack.c.l.b16 %v8427
    %v8743 = vunpack.c.h.b16 %v8427
    %v8744 = vunpack.c.l.b16 %v8428
    %v8745 = vunpack.c.h.b16 %v8428
    %v8746 = vunpack.c.l.b16 %v8429
    %v8747 = vunpack.c.h.b16 %v8429
    %v8748 = vunpack.c.l.b16 %v8430
    %v8749 = vunpack.c.h.b16 %v8430
    %v8750 = vunpack.c.l.b16 %v8431
    %v8751 = vunpack.c.h.b16 %v8431
    %v8752 = vpack.c.b16 %v8566, %v8560
    %v8753 = vpack.c.b16 %v8567, %v8561
    %v8754 = vpack.c.b16 %v8568, %v8562
    %v8755 = vpack.c.b16 %v8569, %v8563
    %v8756 = vpack.c.b16 %v8570, %v8564
    %v8757 = vpack.c.b16 %v8571, %v8565
    %v8758 = vpack.c.b16 %v8578, %v8572
    %v8759 = vpack.c.b16 %v8579, %v8573
    %v8760 = vpack.c.b16 %v8580, %v8574
    %v8761 = vpack.c.b16 %v8581, %v8575
    %v8762 = vpack.c.b16 %v8582, %v8576
    %v8763 = vpack.c.b16 %v8583, %v8577
    %v8764 = vpack.c.b16 %v8590, %v8584
    %v8765 = vpack.c.b16 %v8591, %v8585
    %v8766 = vpack.c.b16 %v8592, %v8586
    %v8767 = vpack.c.b16 %v8593, %v8587
    %v8768 = vpack.c.b16 %v8594, %v8588
    %v8769 = vpack.c.b16 %v8595, %v8589
    %v8770 = vpack.c.b16 %v8602, %v8596
    %v8771 = vpack.c.b16 %v8603, %v8597
    %v8772 = vpack.c.b16 %v8604, %v8598
    %v8773 = vpack.c.b16 %v8605, %v8599
    %v8774 = vpack.c.b16 %v8606, %v8600
    %v8775 = vpack.c.b16 %v8607, %v8601
    %v8776 = vpack.c.b16 %v8614, %v8608
    %v8777 = vpack.c.b16 %v8615, %v8609
    %v8778 = vpack.c.b16 %v8616, %v8610
    %v8779 = vpack.c.b16 %v8617, %v8611
    %v8780 = vpack.c.b16 %v8618, %v8612
    %v8781 = vpack.c.b16 %v8619, %v8613
    %v8782 = vpack.c.b16 %v8626, %v8620
    %v8783 = vpack.c.b16 %v8627, %v8621
    %v8784 = vpack.c.b16 %v8628, %v8622
    %v8785 = vpack.c.b16 %v8629, %v8623
    %v8786 = vpack.c.b16 %v8630, %v8624
    %v8787 = vpack.c.b16 %v8631, %v8625
    %v8788 = vpack.c.b16 %v8638, %v8632
    %v8789 = vpack.c.b16 %v8639, %v8633
    %v8790 = vpack.c.b16 %v8640, %v8634
    %v8791 = vpack.c.b16 %v8641, %v8635
    %v8792 = vpack.c.b16 %v8642, %v8636
    %v8793 = vpack.c.b16 %v8643, %v8637
    %v8794 = vpack.c.b16 %v8650, %v8644
    %v8795 = vpack.c.b16 %v8651, %v8645
    %v8796 = vpack.c.b16 %v8652, %v8646
    %v8797 = vpack.c.b16 %v8653, %v8647
    %v8798 = vpack.c.b16 %v8654, %v8648
    %v8799 = vpack.c.b16 %v8655, %v8649
    %v8800 = vpack.c.b16 %v8662, %v8656
    %v8801 = vpack.c.b16 %v8663, %v8657
    %v8802 = vpack.c.b16 %v8664, %v8658
    %v8803 = vpack.c.b16 %v8665, %v8659
    %v8804 = vpack.c.b16 %v8666, %v8660
    %v8805 = vpack.c.b16 %v8667, %v8661
    %v8806 = vpack.c.b16 %v8674, %v8668
    %v8807 = vpack.c.b16 %v8675, %v8669
    %v8808 = vpack.c.b16 %v8676, %v8670
    %v8809 = vpack.c.b16 %v8677, %v8671
    %v8810 = vpack.c.b16 %v8678, %v8672
    %v8811 = vpack.c.b16 %v8679, %v8673
    %v8812 = vpack.c.b16 %v8686, %v8680
    %v8813 = vpack.c.b16 %v8687, %v8681
    %v8814 = vpack.c.b16 %v8688, %v8682
    %v8815 = vpack.c.b16 %v8689, %v8683
    %v8816 = vpack.c.b16 %v8690, %v8684
    %v8817 = vpack.c.b16 %v8691, %v8685
    %v8818 = vpack.c.b16 %v8698, %v8692
    %v8819 = vpack.c.b16 %v8699, %v8693
    %v8820 = vpack.c.b16 %v8700, %v8694
    %v8821 = vpack.c.b16 %v8701, %v8695
    %v8822 = vpack.c.b16 %v8702, %v8696
    %v8823 = vpack.c.b16 %v8703, %v8697
    %v8824 = vpack.c.b16 %v8710, %v8704
    %v8825 = vpack.c.b16 %v8711, %v8705
    %v8826 = vpack.c.b16 %v8712, %v8706
    %v8827 = vpack.c.b16 %v8713, %v8707
    %v8828 = vpack.c.b16 %v8714, %v8708
    %v8829 = vpack.c.b16 %v8715, %v8709
    %v8830 = vpack.c.b16 %v8722, %v8716
    %v8831 = vpack.c.b16 %v8723, %v8717
    %v8832 = vpack.c.b16 %v8724, %v8718
    %v8833 = vpack.c.b16 %v8725, %v8719
    %v8834 = vpack.c.b16 %v8726, %v8720
    %v8835 = vpack.c.b16 %v8727, %v8721
    %v8836 = vpack.c.b16 %v8734, %v8728
    %v8837 = vpack.c.b16 %v8735, %v8729
    %v8838 = vpack.c.b16 %v8736, %v8730
    %v8839 = vpack.c.b16 %v8737, %v8731
    %v8840 = vpack.c.b16 %v8738, %v8732
    %v8841 = vpack.c.b16 %v8739, %v8733
    %v8842 = vpack.c.b16 %v8746, %v8740
    %v8843 = vpack.c.b16 %v8747, %v8741
    %v8844 = vpack.c.b16 %v8748, %v8742
    %v8845 = vpack.c.b16 %v8749, %v8743
    %v8846 = vpack.c.b16 %v8750, %v8744
    %v8847 = vpack.c.b16 %v8751, %v8745
    %8944 = vmatprep.subr.bf16.mxu0 %v8795
    %8945 = vmatpush1.bf16.msra.mxu0 %v8794
    %8946 = vmatprep.subr.bf16.mxu0 %v8789
    %8947 = vmatpush1.bf16.msra.mxu0 %v8788
    %8948 = vmatprep.subr.bf16.mxu0 %v8783
    %8949 = vmatpush1.bf16.msra.mxu0 %v8782
    %8950 = vmatprep.subr.bf16.mxu0 %v8777
    %8951 = vmatpush1.bf16.msra.mxu0 %v8776
    %8952 = vmatprep.subr.bf16.mxu0 %v8771
    %8953 = vmatpush1.bf16.msra.mxu0 %v8770
    %8954 = vmatprep.subr.bf16.mxu0 %v8765
    %8955 = vmatpush1.bf16.msra.mxu0 %v8764
    %8956 = vmatprep.subr.bf16.mxu0 %v8759
    %8957 = vmatpush1.bf16.msra.mxu0 %v8758
    %8958 = vmatprep.subr.bf16.mxu0 %v8753
    %8959 = vmatpush1.bf16.msra.mxu0 %v8752
    %8960 = vmatprep.subr.bf16.mxu0 %v8843
    %8961 = vmatpush2.bf16.msra.mxu0 %v8842
    %8962 = vmatprep.subr.bf16.mxu0 %v8837
    %8963 = vmatpush2.bf16.msra.mxu0 %v8836
    %8964 = vmatprep.subr.bf16.mxu0 %v8831
    %8965 = vmatpush2.bf16.msra.mxu0 %v8830
    %8966 = vmatprep.subr.bf16.mxu0 %v8825
    %8967 = vmatpush2.bf16.msra.mxu0 %v8824
    %8968 = vmatprep.subr.bf16.mxu0 %v8819
    %8969 = vmatpush2.bf16.msra.mxu0 %v8818
    %8970 = vmatprep.subr.bf16.mxu0 %v8813
    %8971 = vmatpush2.bf16.msra.mxu0 %v8812
    %8972 = vmatprep.subr.bf16.mxu0 %v8807
    %8973 = vmatpush2.bf16.msra.mxu0 %v8806
    %8974 = vmatprep.subr.bf16.mxu0 %v8801
    %8975 = vmatpush2.bf16.msra.mxu0 %v8800
    %8976 = vmatprep.mubr.bf16.mxu0 %v8335
    %8977 = vmatmul.mubr.bf16.gmra.mxu0 %v8334
    %v8978 = vpop.f32.mrf.mxu0
    %v8979 = vadd.f32 %v8437, %v8978
    %v8980 = vpop.f32.mrf.mxu0
    %v8981 = vadd.f32 %v8441, %v8980
    %v8982 = vpop.f32.mrf.mxu0
    %v8983 = vpop.f32.mrf.mxu0
    %8984 = vdwg.mxu0
    %8985 = vmatprep.subr.bf16.mxu0 %v8797
    %8986 = vmatpush1.bf16.msra.mxu0 %v8796
    %8987 = vmatprep.subr.bf16.mxu0 %v8791
    %8988 = vmatpush1.bf16.msra.mxu0 %v8790
    %8989 = vmatprep.subr.bf16.mxu0 %v8785
    %8990 = vmatpush1.bf16.msra.mxu0 %v8784
    %8991 = vmatprep.subr.bf16.mxu0 %v8779
    %8992 = vmatpush1.bf16.msra.mxu0 %v8778
    %8993 = vmatprep.subr.bf16.mxu0 %v8773
    %8994 = vmatpush1.bf16.msra.mxu0 %v8772
    %8995 = vmatprep.subr.bf16.mxu0 %v8767
    %8996 = vmatpush1.bf16.msra.mxu0 %v8766
    %8997 = vmatprep.subr.bf16.mxu0 %v8761
    %8998 = vmatpush1.bf16.msra.mxu0 %v8760
    %8999 = vmatprep.subr.bf16.mxu0 %v8755
    %9000 = vmatpush1.bf16.msra.mxu0 %v8754
    %9001 = vmatprep.subr.bf16.mxu0 %v8845
    %9002 = vmatpush2.bf16.msra.mxu0 %v8844
    %9003 = vmatprep.subr.bf16.mxu0 %v8839
    %9004 = vmatpush2.bf16.msra.mxu0 %v8838
    %9005 = vmatprep.subr.bf16.mxu0 %v8833
    %9006 = vmatpush2.bf16.msra.mxu0 %v8832
    %9007 = vmatprep.subr.bf16.mxu0 %v8827
    %9008 = vmatpush2.bf16.msra.mxu0 %v8826
    %9009 = vmatprep.subr.bf16.mxu0 %v8821
    %9010 = vmatpush2.bf16.msra.mxu0 %v8820
    %9011 = vmatprep.subr.bf16.mxu0 %v8815
    %9012 = vmatpush2.bf16.msra.mxu0 %v8814
    %9013 = vmatprep.subr.bf16.mxu0 %v8809
    %9014 = vmatpush2.bf16.msra.mxu0 %v8808
    %9015 = vmatprep.subr.bf16.mxu0 %v8803
    %9016 = vmatpush2.bf16.msra.mxu0 %v8802
    %9017 = vmatprep.mubr.bf16.mxu0 %v8335
    %9018 = vmatmul.mubr.bf16.gmra.mxu0 %v8334
    %v9019 = vpop.f32.mrf.mxu0
    %v9020 = vadd.f32 %v8445, %v9019
    %v9021 = vpop.f32.mrf.mxu0
    %v9022 = vadd.f32 %v8449, %v9021
    %v9023 = vpop.f32.mrf.mxu0
    %v9024 = vpop.f32.mrf.mxu0
    %9025 = vdwg.mxu0
    %9026 = vmatprep.subr.bf16.mxu0 %v8799
    %9027 = vmatpush1.bf16.msra.mxu0 %v8798
    %9028 = vmatprep.subr.bf16.mxu0 %v8793
    %9029 = vmatpush1.bf16.msra.mxu0 %v8792
    %9030 = vmatprep.subr.bf16.mxu0 %v8787
    %9031 = vmatpush1.bf16.msra.mxu0 %v8786
    %9032 = vmatprep.subr.bf16.mxu0 %v8781
    %9033 = vmatpush1.bf16.msra.mxu0 %v8780
    %9034 = vmatprep.subr.bf16.mxu0 %v8775
    %9035 = vmatpush1.bf16.msra.mxu0 %v8774
    %9036 = vmatprep.subr.bf16.mxu0 %v8769
    %9037 = vmatpush1.bf16.msra.mxu0 %v8768
    %9038 = vmatprep.subr.bf16.mxu0 %v8763
    %9039 = vmatpush1.bf16.msra.mxu0 %v8762
    %9040 = vmatprep.subr.bf16.mxu0 %v8757
    %9041 = vmatpush1.bf16.msra.mxu0 %v8756
    %9042 = vmatprep.subr.bf16.mxu0 %v8847
    %9043 = vmatpush2.bf16.msra.mxu0 %v8846
    %9044 = vmatprep.subr.bf16.mxu0 %v8841
    %9045 = vmatpush2.bf16.msra.mxu0 %v8840
    %9046 = vmatprep.subr.bf16.mxu0 %v8835
    %9047 = vmatpush2.bf16.msra.mxu0 %v8834
    %9048 = vmatprep.subr.bf16.mxu0 %v8829
    %9049 = vmatpush2.bf16.msra.mxu0 %v8828
    %9050 = vmatprep.subr.bf16.mxu0 %v8823
    %9051 = vmatpush2.bf16.msra.mxu0 %v8822
    %9052 = vmatprep.subr.bf16.mxu0 %v8817
    %9053 = vmatpush2.bf16.msra.mxu0 %v8816
    %9054 = vmatprep.subr.bf16.mxu0 %v8811
    %9055 = vmatpush2.bf16.msra.mxu0 %v8810
    %9056 = vmatprep.subr.bf16.mxu0 %v8805
    %9057 = vmatpush2.bf16.msra.mxu0 %v8804
    %9058 = vmatprep.mubr.bf16.mxu0 %v8335
    %9059 = vmatmul.mubr.bf16.gmra.mxu0 %v8334
    %v9060 = vpop.f32.mrf.mxu0
    %v9061 = vadd.f32 %v8453, %v9060
    %v9062 = vpop.f32.mrf.mxu0
    %v9063 = vadd.f32 %v8457, %v9062
    %v9064 = vpop.f32.mrf.mxu0
    %v9065 = vpop.f32.mrf.mxu0
    %9066 = vdwg.mxu0
    %v9067 = vxor.u32 %v8979, 2147483648
    %v9068 = vxor.u32 %v8981, 2147483648
    %v9069 = vmul.f32 %v9067, 1.442695
    %v9070 = vpow.pop %v9069
    %v9071 = vmul.f32 %v9068, 1.442695
    %v9072 = vpow.pop %v9071
    %v9073 = vadd.f32 %v9070, 1.0
    %v9074 = vadd.f32 %v9072, 1.0
    %v9075 = vrcp.pop %v9073
    %v9076 = vmul.f32 1.0, %v9075
    %v9077 = vrcp.pop %v9074
    %v9078 = vmul.f32 1.0, %v9077
    %v9079 = vtanh.pop %v9020
    %v9080 = vtanh.pop %v9022
    %v9081 = vxor.u32 %v9061, 2147483648
    %v9082 = vxor.u32 %v9063, 2147483648
    %v9083 = vmul.f32 %v9081, 1.442695
    %v9084 = vpow.pop %v9083
    %v9085 = vmul.f32 %v9082, 1.442695
    %v9086 = vpow.pop %v9085
    %v9087 = vadd.f32 %v9084, 1.0
    %v9088 = vadd.f32 %v9086, 1.0
    %v9089 = vrcp.pop %v9087
    %v9090 = vmul.f32 1.0, %v9089
    %v9091 = vrcp.pop %v9088
    %v9092 = vmul.f32 1.0, %v9091
    %v9093 = vmul.f32 %v9076, %v9079
    %v9094 = vmul.f32 %v9078, %v9080
    %v9095 = vtanh.pop %v9093
    %v9096 = vtanh.pop %v9094
    %v9097 = vmul.f32 %v9090, %v9095
    %v9098 = vmul.f32 %v9092, %v9096
    %v9099 = vld [vmem:[#allocation18] sm:$0xff]
    %v9100 = vld [vmem:[#allocation18 + $0x8] sm:$0xff]
    %v9101 = vld [vmem:[#allocation18 + $0x10] sm:$0xff]
    %v9102 = vld [vmem:[#allocation18 + $0x18] sm:$0xff]
    %v9103 = vld [vmem:[#allocation18 + $0x20] sm:$0xff]
    %v9104 = vld [vmem:[#allocation18 + $0x28] sm:$0xff]
    %v9105 = vld [vmem:[#allocation18 + $0x30] sm:$0xff]
    %v9106 = vld [vmem:[#allocation18 + $0x38] sm:$0xff]
    %v9107 = vld [vmem:[#allocation18 + $0x40] sm:$0xff]
    %v9108 = vld [vmem:[#allocation18 + $0x48] sm:$0xff]
    %v9109 = vld [vmem:[#allocation18 + $0x50] sm:$0xff]
    %v9110 = vld [vmem:[#allocation18 + $0x58] sm:$0xff]
    %v9111 = vld [vmem:[#allocation18 + $0x60] sm:$0xff]
    %v9112 = vld [vmem:[#allocation18 + $0x68] sm:$0xff]
    %v9113 = vld [vmem:[#allocation18 + $0x70] sm:$0xff]
    %v9114 = vld [vmem:[#allocation18 + $0x78] sm:$0xff]
    %v9115 = vld [vmem:[#allocation18 + $0x80] sm:$0xff]
    %v9116 = vld [vmem:[#allocation18 + $0x88] sm:$0xff]
    %v9117 = vld [vmem:[#allocation18 + $0x90] sm:$0xff]
    %v9118 = vld [vmem:[#allocation18 + $0x98] sm:$0xff]
    %v9119 = vld [vmem:[#allocation18 + $0xa0] sm:$0xff]
    %v9120 = vld [vmem:[#allocation18 + $0xa8] sm:$0xff]
    %v9121 = vld [vmem:[#allocation18 + $0xb0] sm:$0xff]
    %v9122 = vld [vmem:[#allocation18 + $0xb8] sm:$0xff]
    %v9123 = vld [vmem:[#allocation18 + $0xc0] sm:$0xff]
    %v9124 = vld [vmem:[#allocation18 + $0xc8] sm:$0xff]
    %v9125 = vld [vmem:[#allocation18 + $0xd0] sm:$0xff]
    %v9126 = vld [vmem:[#allocation18 + $0xd8] sm:$0xff]
    %v9127 = vld [vmem:[#allocation18 + $0xe0] sm:$0xff]
    %v9128 = vld [vmem:[#allocation18 + $0xe8] sm:$0xff]
    %v9129 = vld [vmem:[#allocation18 + $0xf0] sm:$0xff]
    %v9130 = vld [vmem:[#allocation18 + $0xf8] sm:$0xff]
    %v9131 = vld [vmem:[#allocation18 + $0x100] sm:$0xff]
    %v9132 = vld [vmem:[#allocation18 + $0x108] sm:$0xff]
    %v9133 = vld [vmem:[#allocation18 + $0x110] sm:$0xff]
    %v9134 = vld [vmem:[#allocation18 + $0x118] sm:$0xff]
    %v9135 = vld [vmem:[#allocation18 + $0x120] sm:$0xff]
    %v9136 = vld [vmem:[#allocation18 + $0x128] sm:$0xff]
    %v9137 = vld [vmem:[#allocation18 + $0x130] sm:$0xff]
    %v9138 = vld [vmem:[#allocation18 + $0x138] sm:$0xff]
    %v9139 = vld [vmem:[#allocation18 + $0x140] sm:$0xff]
    %v9140 = vld [vmem:[#allocation18 + $0x148] sm:$0xff]
    %v9141 = vld [vmem:[#allocation18 + $0x150] sm:$0xff]
    %v9142 = vld [vmem:[#allocation18 + $0x158] sm:$0xff]
    %v9143 = vld [vmem:[#allocation18 + $0x160] sm:$0xff]
    %v9144 = vld [vmem:[#allocation18 + $0x168] sm:$0xff]
    %v9145 = vld [vmem:[#allocation18 + $0x170] sm:$0xff]
    %v9146 = vld [vmem:[#allocation18 + $0x178] sm:$0xff]
    %v9147 = vld [vmem:[#allocation18 + $0x180] sm:$0xff]
    %v9148 = vld [vmem:[#allocation18 + $0x188] sm:$0xff]
    %v9149 = vld [vmem:[#allocation18 + $0x190] sm:$0xff]
    %v9150 = vld [vmem:[#allocation18 + $0x198] sm:$0xff]
    %v9151 = vld [vmem:[#allocation18 + $0x1a0] sm:$0xff]
    %v9152 = vld [vmem:[#allocation18 + $0x1a8] sm:$0xff]
    %v9153 = vld [vmem:[#allocation18 + $0x1b0] sm:$0xff]
    %v9154 = vld [vmem:[#allocation18 + $0x1b8] sm:$0xff]
    %v9155 = vld [vmem:[#allocation18 + $0x1c0] sm:$0xff]
    %v9156 = vld [vmem:[#allocation18 + $0x1c8] sm:$0xff]
    %v9157 = vld [vmem:[#allocation18 + $0x1d0] sm:$0xff]
    %v9158 = vld [vmem:[#allocation18 + $0x1d8] sm:$0xff]
    %v9159 = vld [vmem:[#allocation18 + $0x1e0] sm:$0xff]
    %v9160 = vld [vmem:[#allocation18 + $0x1e8] sm:$0xff]
    %v9161 = vld [vmem:[#allocation18 + $0x1f0] sm:$0xff]
    %v9162 = vld [vmem:[#allocation18 + $0x1f8] sm:$0xff]
    %v9163 = vpack.c.bf16 %v9097, %v9097
    %v9164 = vpack.c.bf16 %v9098, %v9098
    %v9197 = vunpack.c.l.b16 %v9131
    %v9198 = vunpack.c.h.b16 %v9131
    %v9199 = vunpack.c.l.b16 %v9132
    %v9200 = vunpack.c.h.b16 %v9132
    %v9201 = vunpack.c.l.b16 %v9133
    %v9202 = vunpack.c.h.b16 %v9133
    %v9203 = vunpack.c.l.b16 %v9134
    %v9204 = vunpack.c.h.b16 %v9134
    %v9205 = vunpack.c.l.b16 %v9135
    %v9206 = vunpack.c.h.b16 %v9135
    %v9207 = vunpack.c.l.b16 %v9136
    %v9208 = vunpack.c.h.b16 %v9136
    %v9209 = vunpack.c.l.b16 %v9137
    %v9210 = vunpack.c.h.b16 %v9137
    %v9211 = vunpack.c.l.b16 %v9138
    %v9212 = vunpack.c.h.b16 %v9138
    %v9213 = vunpack.c.l.b16 %v9139
    %v9214 = vunpack.c.h.b16 %v9139
    %v9215 = vunpack.c.l.b16 %v9140
    %v9216 = vunpack.c.h.b16 %v9140
    %v9217 = vunpack.c.l.b16 %v9141
    %v9218 = vunpack.c.h.b16 %v9141
    %v9219 = vunpack.c.l.b16 %v9142
    %v9220 = vunpack.c.h.b16 %v9142
    %v9221 = vunpack.c.l.b16 %v9143
    %v9222 = vunpack.c.h.b16 %v9143
    %v9223 = vunpack.c.l.b16 %v9144
    %v9224 = vunpack.c.h.b16 %v9144
    %v9225 = vunpack.c.l.b16 %v9145
    %v9226 = vunpack.c.h.b16 %v9145
    %v9227 = vunpack.c.l.b16 %v9146
    %v9228 = vunpack.c.h.b16 %v9146
    %v9229 = vunpack.c.l.b16 %v9147
    %v9230 = vunpack.c.h.b16 %v9147
    %v9231 = vunpack.c.l.b16 %v9148
    %v9232 = vunpack.c.h.b16 %v9148
    %v9233 = vunpack.c.l.b16 %v9149
    %v9234 = vunpack.c.h.b16 %v9149
    %v9235 = vunpack.c.l.b16 %v9150
    %v9236 = vunpack.c.h.b16 %v9150
    %v9237 = vunpack.c.l.b16 %v9151
    %v9238 = vunpack.c.h.b16 %v9151
    %v9239 = vunpack.c.l.b16 %v9152
    %v9240 = vunpack.c.h.b16 %v9152
    %v9241 = vunpack.c.l.b16 %v9153
    %v9242 = vunpack.c.h.b16 %v9153
    %v9243 = vunpack.c.l.b16 %v9154
    %v9244 = vunpack.c.h.b16 %v9154
    %v9245 = vunpack.c.l.b16 %v9155
    %v9246 = vunpack.c.h.b16 %v9155
    %v9247 = vunpack.c.l.b16 %v9156
    %v9248 = vunpack.c.h.b16 %v9156
    %v9249 = vunpack.c.l.b16 %v9157
    %v9250 = vunpack.c.h.b16 %v9157
    %v9251 = vunpack.c.l.b16 %v9158
    %v9252 = vunpack.c.h.b16 %v9158
    %v9253 = vunpack.c.l.b16 %v9159
    %v9254 = vunpack.c.h.b16 %v9159
    %v9255 = vunpack.c.l.b16 %v9160
    %v9256 = vunpack.c.h.b16 %v9160
    %v9257 = vunpack.c.l.b16 %v9161
    %v9258 = vunpack.c.h.b16 %v9161
    %v9259 = vunpack.c.l.b16 %v9162
    %v9260 = vunpack.c.h.b16 %v9162
    %v9261 = vpack.c.b16 %v9199, %v9197
    %v9262 = vpack.c.b16 %v9200, %v9198
    %v9263 = vpack.c.b16 %v9203, %v9201
    %v9264 = vpack.c.b16 %v9204, %v9202
    %v9265 = vpack.c.b16 %v9207, %v9205
    %v9266 = vpack.c.b16 %v9208, %v9206
    %v9267 = vpack.c.b16 %v9211, %v9209
    %v9268 = vpack.c.b16 %v9212, %v9210
    %v9269 = vpack.c.b16 %v9215, %v9213
    %v9270 = vpack.c.b16 %v9216, %v9214
    %v9271 = vpack.c.b16 %v9219, %v9217
    %v9272 = vpack.c.b16 %v9220, %v9218
    %v9273 = vpack.c.b16 %v9223, %v9221
    %v9274 = vpack.c.b16 %v9224, %v9222
    %v9275 = vpack.c.b16 %v9227, %v9225
    %v9276 = vpack.c.b16 %v9228, %v9226
    %v9277 = vpack.c.b16 %v9231, %v9229
    %v9278 = vpack.c.b16 %v9232, %v9230
    %v9279 = vpack.c.b16 %v9235, %v9233
    %v9280 = vpack.c.b16 %v9236, %v9234
    %v9281 = vpack.c.b16 %v9239, %v9237
    %v9282 = vpack.c.b16 %v9240, %v9238
    %v9283 = vpack.c.b16 %v9243, %v9241
    %v9284 = vpack.c.b16 %v9244, %v9242
    %v9285 = vpack.c.b16 %v9247, %v9245
    %v9286 = vpack.c.b16 %v9248, %v9246
    %v9287 = vpack.c.b16 %v9251, %v9249
    %v9288 = vpack.c.b16 %v9252, %v9250
    %v9289 = vpack.c.b16 %v9255, %v9253
    %v9290 = vpack.c.b16 %v9256, %v9254
    %v9291 = vpack.c.b16 %v9259, %v9257
    %v9292 = vpack.c.b16 %v9260, %v9258
    %9325 = vmatprep.subr.bf16.mxu0 %v9276
    %9326 = vmatpush1.bf16.msra.mxu0 %v9275
    %9327 = vmatprep.subr.bf16.mxu0 %v9274
    %9328 = vmatpush1.bf16.msra.mxu0 %v9273
    %9329 = vmatprep.subr.bf16.mxu0 %v9272
    %9330 = vmatpush1.bf16.msra.mxu0 %v9271
    %9331 = vmatprep.subr.bf16.mxu0 %v9270
    %9332 = vmatpush1.bf16.msra.mxu0 %v9269
    %9333 = vmatprep.subr.bf16.mxu0 %v9268
    %9334 = vmatpush1.bf16.msra.mxu0 %v9267
    %9335 = vmatprep.subr.bf16.mxu0 %v9266
    %9336 = vmatpush1.bf16.msra.mxu0 %v9265
    %9337 = vmatprep.subr.bf16.mxu0 %v9264
    %9338 = vmatpush1.bf16.msra.mxu0 %v9263
    %9339 = vmatprep.subr.bf16.mxu0 %v9262
    %9340 = vmatpush1.bf16.msra.mxu0 %v9261
    %9341 = vmatprep.subr.bf16.mxu0 %v9292
    %9342 = vmatpush2.bf16.msra.mxu0 %v9291
    %9343 = vmatprep.subr.bf16.mxu0 %v9290
    %9344 = vmatpush2.bf16.msra.mxu0 %v9289
    %9345 = vmatprep.subr.bf16.mxu0 %v9288
    %9346 = vmatpush2.bf16.msra.mxu0 %v9287
    %9347 = vmatprep.subr.bf16.mxu0 %v9286
    %9348 = vmatpush2.bf16.msra.mxu0 %v9285
    %9349 = vmatprep.subr.bf16.mxu0 %v9284
    %9350 = vmatpush2.bf16.msra.mxu0 %v9283
    %9351 = vmatprep.subr.bf16.mxu0 %v9282
    %9352 = vmatpush2.bf16.msra.mxu0 %v9281
    %9353 = vmatprep.subr.bf16.mxu0 %v9280
    %9354 = vmatpush2.bf16.msra.mxu0 %v9279
    %9355 = vmatprep.subr.bf16.mxu0 %v9278
    %9356 = vmatpush2.bf16.msra.mxu0 %v9277
    %9357 = vmatprep.mubr.bf16.mxu0 %v9164
    %9358 = vmatmul.mubr.bf16.gmra.mxu0 %v9163
    %v9359 = vpop.f32.mrf.mxu0
    %v9360 = vadd.f32 0.0, %v9359
    %v9361 = vpop.f32.mrf.mxu0
    %v9362 = vadd.f32 0.0, %v9361
    %v9363 = vpop.f32.mrf.mxu0
    %v9364 = vpop.f32.mrf.mxu0
    %9365 = vdwg.mxu0
    %v9398 = vunpack.c.l.b16 %v9099
    %v9399 = vunpack.c.h.b16 %v9099
    %v9400 = vunpack.c.l.b16 %v9100
    %v9401 = vunpack.c.h.b16 %v9100
    %v9402 = vunpack.c.l.b16 %v9101
    %v9403 = vunpack.c.h.b16 %v9101
    %v9404 = vunpack.c.l.b16 %v9102
    %v9405 = vunpack.c.h.b16 %v9102
    %v9406 = vunpack.c.l.b16 %v9103
    %v9407 = vunpack.c.h.b16 %v9103
    %v9408 = vunpack.c.l.b16 %v9104
    %v9409 = vunpack.c.h.b16 %v9104
    %v9410 = vunpack.c.l.b16 %v9105
    %v9411 = vunpack.c.h.b16 %v9105
    %v9412 = vunpack.c.l.b16 %v9106
    %v9413 = vunpack.c.h.b16 %v9106
    %v9414 = vunpack.c.l.b16 %v9107
    %v9415 = vunpack.c.h.b16 %v9107
    %v9416 = vunpack.c.l.b16 %v9108
    %v9417 = vunpack.c.h.b16 %v9108
    %v9418 = vunpack.c.l.b16 %v9109
    %v9419 = vunpack.c.h.b16 %v9109
    %v9420 = vunpack.c.l.b16 %v9110
    %v9421 = vunpack.c.h.b16 %v9110
    %v9422 = vunpack.c.l.b16 %v9111
    %v9423 = vunpack.c.h.b16 %v9111
    %v9424 = vunpack.c.l.b16 %v9112
    %v9425 = vunpack.c.h.b16 %v9112
    %v9426 = vunpack.c.l.b16 %v9113
    %v9427 = vunpack.c.h.b16 %v9113
    %v9428 = vunpack.c.l.b16 %v9114
    %v9429 = vunpack.c.h.b16 %v9114
    %v9430 = vunpack.c.l.b16 %v9115
    %v9431 = vunpack.c.h.b16 %v9115
    %v9432 = vunpack.c.l.b16 %v9116
    %v9433 = vunpack.c.h.b16 %v9116
    %v9434 = vunpack.c.l.b16 %v9117
    %v9435 = vunpack.c.h.b16 %v9117
    %v9436 = vunpack.c.l.b16 %v9118
    %v9437 = vunpack.c.h.b16 %v9118
    %v9438 = vunpack.c.l.b16 %v9119
    %v9439 = vunpack.c.h.b16 %v9119
    %v9440 = vunpack.c.l.b16 %v9120
    %v9441 = vunpack.c.h.b16 %v9120
    %v9442 = vunpack.c.l.b16 %v9121
    %v9443 = vunpack.c.h.b16 %v9121
    %v9444 = vunpack.c.l.b16 %v9122
    %v9445 = vunpack.c.h.b16 %v9122
    %v9446 = vunpack.c.l.b16 %v9123
    %v9447 = vunpack.c.h.b16 %v9123
    %v9448 = vunpack.c.l.b16 %v9124
    %v9449 = vunpack.c.h.b16 %v9124
    %v9450 = vunpack.c.l.b16 %v9125
    %v9451 = vunpack.c.h.b16 %v9125
    %v9452 = vunpack.c.l.b16 %v9126
    %v9453 = vunpack.c.h.b16 %v9126
    %v9454 = vunpack.c.l.b16 %v9127
    %v9455 = vunpack.c.h.b16 %v9127
    %v9456 = vunpack.c.l.b16 %v9128
    %v9457 = vunpack.c.h.b16 %v9128
    %v9458 = vunpack.c.l.b16 %v9129
    %v9459 = vunpack.c.h.b16 %v9129
    %v9460 = vunpack.c.l.b16 %v9130
    %v9461 = vunpack.c.h.b16 %v9130
    %v9462 = vpack.c.b16 %v9400, %v9398
    %v9463 = vpack.c.b16 %v9401, %v9399
    %v9464 = vpack.c.b16 %v9404, %v9402
    %v9465 = vpack.c.b16 %v9405, %v9403
    %v9466 = vpack.c.b16 %v9408, %v9406
    %v9467 = vpack.c.b16 %v9409, %v9407
    %v9468 = vpack.c.b16 %v9412, %v9410
    %v9469 = vpack.c.b16 %v9413, %v9411
    %v9470 = vpack.c.b16 %v9416, %v9414
    %v9471 = vpack.c.b16 %v9417, %v9415
    %v9472 = vpack.c.b16 %v9420, %v9418
    %v9473 = vpack.c.b16 %v9421, %v9419
    %v9474 = vpack.c.b16 %v9424, %v9422
    %v9475 = vpack.c.b16 %v9425, %v9423
    %v9476 = vpack.c.b16 %v9428, %v9426
    %v9477 = vpack.c.b16 %v9429, %v9427
    %v9478 = vpack.c.b16 %v9432, %v9430
    %v9479 = vpack.c.b16 %v9433, %v9431
    %v9480 = vpack.c.b16 %v9436, %v9434
    %v9481 = vpack.c.b16 %v9437, %v9435
    %v9482 = vpack.c.b16 %v9440, %v9438
    %v9483 = vpack.c.b16 %v9441, %v9439
    %v9484 = vpack.c.b16 %v9444, %v9442
    %v9485 = vpack.c.b16 %v9445, %v9443
    %v9486 = vpack.c.b16 %v9448, %v9446
    %v9487 = vpack.c.b16 %v9449, %v9447
    %v9488 = vpack.c.b16 %v9452, %v9450
    %v9489 = vpack.c.b16 %v9453, %v9451
    %v9490 = vpack.c.b16 %v9456, %v9454
    %v9491 = vpack.c.b16 %v9457, %v9455
    %v9492 = vpack.c.b16 %v9460, %v9458
    %v9493 = vpack.c.b16 %v9461, %v9459
    %9526 = vmatprep.subr.bf16.mxu0 %v9477
    %9527 = vmatpush1.bf16.msra.mxu0 %v9476
    %9528 = vmatprep.subr.bf16.mxu0 %v9475
    %9529 = vmatpush1.bf16.msra.mxu0 %v9474
    %9530 = vmatprep.subr.bf16.mxu0 %v9473
    %9531 = vmatpush1.bf16.msra.mxu0 %v9472
    %9532 = vmatprep.subr.bf16.mxu0 %v9471
    %9533 = vmatpush1.bf16.msra.mxu0 %v9470
    %9534 = vmatprep.subr.bf16.mxu0 %v9469
    %9535 = vmatpush1.bf16.msra.mxu0 %v9468
    %9536 = vmatprep.subr.bf16.mxu0 %v9467
    %9537 = vmatpush1.bf16.msra.mxu0 %v9466
    %9538 = vmatprep.subr.bf16.mxu0 %v9465
    %9539 = vmatpush1.bf16.msra.mxu0 %v9464
    %9540 = vmatprep.subr.bf16.mxu0 %v9463
    %9541 = vmatpush1.bf16.msra.mxu0 %v9462
    %9542 = vmatprep.subr.bf16.mxu0 %v9493
    %9543 = vmatpush2.bf16.msra.mxu0 %v9492
    %9544 = vmatprep.subr.bf16.mxu0 %v9491
    %9545 = vmatpush2.bf16.msra.mxu0 %v9490
    %9546 = vmatprep.subr.bf16.mxu0 %v9489
    %9547 = vmatpush2.bf16.msra.mxu0 %v9488
    %9548 = vmatprep.subr.bf16.mxu0 %v9487
    %9549 = vmatpush2.bf16.msra.mxu0 %v9486
    %9550 = vmatprep.subr.bf16.mxu0 %v9485
    %9551 = vmatpush2.bf16.msra.mxu0 %v9484
    %9552 = vmatprep.subr.bf16.mxu0 %v9483
    %9553 = vmatpush2.bf16.msra.mxu0 %v9482
    %9554 = vmatprep.subr.bf16.mxu0 %v9481
    %9555 = vmatpush2.bf16.msra.mxu0 %v9480
    %9556 = vmatprep.subr.bf16.mxu0 %v9479
    %9557 = vmatpush2.bf16.msra.mxu0 %v9478
    %9558 = vmatprep.mubr.bf16.mxu0 %v8335
    %9559 = vmatmul.mubr.bf16.gmra.mxu0 %v8334
    %v9560 = vpop.f32.mrf.mxu0
    %v9561 = vadd.f32 %v9360, %v9560
    %v9562 = vpop.f32.mrf.mxu0
    %v9563 = vadd.f32 %v9362, %v9562
    %v9564 = vpop.f32.mrf.mxu0
    %v9565 = vpop.f32.mrf.mxu0
    %9566 = vdwg.mxu0
    %v9567 = vld [vmem:[#allocation20] sm:$0x3]
    %v9569 = vlaneseq
    %v9570 = vshrl.u32 %v9569, 7
    %v9571 = vsub.s32 0, %v9570
    %v9572 = vrot.slane %v9567, %v9571
    %v9573 = vlaneseq
    %v9574 = vshrl.u32 %v9573, 7
    %v9575 = vsub.s32 1, %v9574
    %v9576 = vrot.slane %v9567, %v9575
    %v9579 = vadd.f32 %v9561, %v9572
    %v9580 = vadd.f32 %v9563, %v9576
    %v9581 = vmax.f32 %v9579, 0.0
    %v9582 = vmax.f32 %v9580, 0.0
    %v9583 = vpack.c.bf16 %v9581, %v9581
    %v9584 = vpack.c.bf16 %v9582, %v9582
    %v9585 = vld [vmem:[%s13] sm:$0xf]
    %v9586 = vld [vmem:[%s13 + $0x4] sm:$0xf]
    %v9587 = vld [vmem:[%s13 + $0x8] sm:$0xf]
    %v9588 = vld [vmem:[%s13 + $0xc] sm:$0xf]
    %v9589 = vld [vmem:[%s13 + $0x10] sm:$0xf]
    %v9590 = vld [vmem:[%s13 + $0x14] sm:$0xf]
    %v9591 = vld [vmem:[%s13 + $0x18] sm:$0xf]
    %v9592 = vld [vmem:[%s13 + $0x1c] sm:$0xf]
    %v9593 = vld [vmem:[%s13 + $0x20] sm:$0xf]
    %v9594 = vld [vmem:[%s13 + $0x24] sm:$0xf]
    %v9595 = vld [vmem:[%s13 + $0x28] sm:$0xf]
    %v9596 = vld [vmem:[%s13 + $0x2c] sm:$0xf]
    %v9597 = vld [vmem:[%s13 + $0x30] sm:$0xf]
    %v9598 = vld [vmem:[%s13 + $0x34] sm:$0xf]
    %v9599 = vld [vmem:[%s13 + $0x38] sm:$0xf]
    %v9600 = vld [vmem:[%s13 + $0x3c] sm:$0xf]
    %v9601 = vld [vmem:[%s13 + $0x40] sm:$0xf]
    %v9602 = vld [vmem:[%s13 + $0x44] sm:$0xf]
    %v9603 = vld [vmem:[%s13 + $0x48] sm:$0xf]
    %v9604 = vld [vmem:[%s13 + $0x4c] sm:$0xf]
    %v9605 = vld [vmem:[%s13 + $0x50] sm:$0xf]
    %v9606 = vld [vmem:[%s13 + $0x54] sm:$0xf]
    %v9607 = vld [vmem:[%s13 + $0x58] sm:$0xf]
    %v9608 = vld [vmem:[%s13 + $0x5c] sm:$0xf]
    %v9609 = vld [vmem:[%s13 + $0x60] sm:$0xf]
    %v9610 = vld [vmem:[%s13 + $0x64] sm:$0xf]
    %v9611 = vld [vmem:[%s13 + $0x68] sm:$0xf]
    %v9612 = vld [vmem:[%s13 + $0x6c] sm:$0xf]
    %v9613 = vld [vmem:[%s13 + $0x70] sm:$0xf]
    %v9614 = vld [vmem:[%s13 + $0x74] sm:$0xf]
    %v9615 = vld [vmem:[%s13 + $0x78] sm:$0xf]
    %v9616 = vld [vmem:[%s13 + $0x7c] sm:$0xf]
    %v9617 = vld [vmem:[%s14] sm:$0x1]
    %v9619 = vlaneseq
    %v9620 = vshrl.u32 %v9619, 7
    %v9621 = vsub.s32 0, %v9620
    %v9622 = vrot.slane %v9617, %v9621
    %v9656 = vunpack.c.l.b16 %v9585
    %v9657 = vunpack.c.l.b16 %v9586
    %v9658 = vunpack.c.l.b16 %v9587
    %v9659 = vunpack.c.l.b16 %v9588
    %v9660 = vunpack.c.l.b16 %v9589
    %v9661 = vunpack.c.l.b16 %v9590
    %v9662 = vunpack.c.l.b16 %v9591
    %v9663 = vunpack.c.l.b16 %v9592
    %v9664 = vunpack.c.l.b16 %v9593
    %v9665 = vunpack.c.l.b16 %v9594
    %v9666 = vunpack.c.l.b16 %v9595
    %v9667 = vunpack.c.l.b16 %v9596
    %v9668 = vunpack.c.l.b16 %v9597
    %v9669 = vunpack.c.l.b16 %v9598
    %v9670 = vunpack.c.l.b16 %v9599
    %v9671 = vunpack.c.l.b16 %v9600
    %v9672 = vunpack.c.l.b16 %v9601
    %v9673 = vunpack.c.l.b16 %v9602
    %v9674 = vunpack.c.l.b16 %v9603
    %v9675 = vunpack.c.l.b16 %v9604
    %v9676 = vunpack.c.l.b16 %v9605
    %v9677 = vunpack.c.l.b16 %v9606
    %v9678 = vunpack.c.l.b16 %v9607
    %v9679 = vunpack.c.l.b16 %v9608
    %v9680 = vunpack.c.l.b16 %v9609
    %v9681 = vunpack.c.l.b16 %v9610
    %v9682 = vunpack.c.l.b16 %v9611
    %v9683 = vunpack.c.l.b16 %v9612
    %v9684 = vunpack.c.l.b16 %v9613
    %v9685 = vunpack.c.l.b16 %v9614
    %v9686 = vunpack.c.l.b16 %v9615
    %v9687 = vunpack.c.l.b16 %v9616
    %v9688 = vpack.c.b16 %v9657, %v9656
    %v9689 = vpack.c.b16 %v9659, %v9658
    %v9690 = vpack.c.b16 %v9661, %v9660
    %v9691 = vpack.c.b16 %v9663, %v9662
    %v9692 = vpack.c.b16 %v9665, %v9664
    %v9693 = vpack.c.b16 %v9667, %v9666
    %v9694 = vpack.c.b16 %v9669, %v9668
    %v9695 = vpack.c.b16 %v9671, %v9670
    %v9696 = vpack.c.b16 %v9673, %v9672
    %v9697 = vpack.c.b16 %v9675, %v9674
    %v9698 = vpack.c.b16 %v9677, %v9676
    %v9699 = vpack.c.b16 %v9679, %v9678
    %v9700 = vpack.c.b16 %v9681, %v9680
    %v9701 = vpack.c.b16 %v9683, %v9682
    %v9702 = vpack.c.b16 %v9685, %v9684
    %v9703 = vpack.c.b16 %v9687, %v9686
    %9720 = vmatprep.subr.bf16.mxu0 0
    %9721 = vmatpush1.bf16.msra.mxu0 %v9695
    %9722 = vmatprep.subr.bf16.mxu0 0
    %9723 = vmatpush1.bf16.msra.mxu0 %v9694
    %9724 = vmatprep.subr.bf16.mxu0 0
    %9725 = vmatpush1.bf16.msra.mxu0 %v9693
    %9726 = vmatprep.subr.bf16.mxu0 0
    %9727 = vmatpush1.bf16.msra.mxu0 %v9692
    %9728 = vmatprep.subr.bf16.mxu0 0
    %9729 = vmatpush1.bf16.msra.mxu0 %v9691
    %9730 = vmatprep.subr.bf16.mxu0 0
    %9731 = vmatpush1.bf16.msra.mxu0 %v9690
    %9732 = vmatprep.subr.bf16.mxu0 0
    %9733 = vmatpush1.bf16.msra.mxu0 %v9689
    %9734 = vmatprep.subr.bf16.mxu0 0
    %9735 = vmatpush1.bf16.msra.mxu0 %v9688
    %9736 = vmatprep.subr.bf16.mxu0 0
    %9737 = vmatpush2.bf16.msra.mxu0 %v9703
    %9738 = vmatprep.subr.bf16.mxu0 0
    %9739 = vmatpush2.bf16.msra.mxu0 %v9702
    %9740 = vmatprep.subr.bf16.mxu0 0
    %9741 = vmatpush2.bf16.msra.mxu0 %v9701
    %9742 = vmatprep.subr.bf16.mxu0 0
    %9743 = vmatpush2.bf16.msra.mxu0 %v9700
    %9744 = vmatprep.subr.bf16.mxu0 0
    %9745 = vmatpush2.bf16.msra.mxu0 %v9699
    %9746 = vmatprep.subr.bf16.mxu0 0
    %9747 = vmatpush2.bf16.msra.mxu0 %v9698
    %9748 = vmatprep.subr.bf16.mxu0 0
    %9749 = vmatpush2.bf16.msra.mxu0 %v9697
    %9750 = vmatprep.subr.bf16.mxu0 0
    %9751 = vmatpush2.bf16.msra.mxu0 %v9696
    %9752 = vmatprep.mubr.bf16.mxu0 %v9584
    %9753 = vmatmul.mubr.bf16.gmra.mxu0 %v9583
    %v9754 = vpop.f32.mrf.mxu0
    %v9755 = vadd.f32 %v9622, %v9754
    %v9756 = vpop.f32.mrf.mxu0
    %v9757 = vpop.f32.mrf.mxu0
    %v9758 = vpop.f32.mrf.mxu0
    %9759 = vdwg.mxu0
    %v9760 = vmax.f32 %v9755, 0.0
    %v9761 = vpack.c.bf16 %v9760, %v9760
    %v9762 = vld [vmem:[#allocation21] sm:$0xf]
    %v9763 = vld [vmem:[#allocation21 + $0x4] sm:$0xf]
    %v9764 = vld [vmem:[#allocation21 + $0x8] sm:$0xf]
    %v9765 = vld [vmem:[#allocation21 + $0xc] sm:$0xf]
    %v9766 = vld [vmem:[#allocation21 + $0x10] sm:$0xf]
    %v9767 = vld [vmem:[#allocation21 + $0x14] sm:$0xf]
    %v9768 = vld [vmem:[#allocation21 + $0x18] sm:$0xf]
    %v9769 = vld [vmem:[#allocation21 + $0x1c] sm:$0xf]
    %v9770 = vld [vmem:[#allocation21 + $0x20] sm:$0xf]
    %v9771 = vld [vmem:[#allocation21 + $0x24] sm:$0xf]
    %v9772 = vld [vmem:[#allocation21 + $0x28] sm:$0xf]
    %v9773 = vld [vmem:[#allocation21 + $0x2c] sm:$0xf]
    %v9774 = vld [vmem:[#allocation21 + $0x30] sm:$0xf]
    %v9775 = vld [vmem:[#allocation21 + $0x34] sm:$0xf]
    %v9776 = vld [vmem:[#allocation21 + $0x38] sm:$0xf]
    %v9777 = vld [vmem:[#allocation21 + $0x3c] sm:$0xf]
    %v9778 = vld [vmem:[%s16] sm:$0x1]
    %v9780 = vlaneseq
    %v9781 = vshrl.u32 %v9780, 7
    %v9782 = vsub.s32 0, %v9781
    %v9783 = vrot.slane %v9778, %v9782
    %v9801 = vunpack.c.l.b16 %v9762
    %v9802 = vunpack.c.l.b16 %v9763
    %v9803 = vunpack.c.l.b16 %v9764
    %v9804 = vunpack.c.l.b16 %v9765
    %v9805 = vunpack.c.l.b16 %v9766
    %v9806 = vunpack.c.l.b16 %v9767
    %v9807 = vunpack.c.l.b16 %v9768
    %v9808 = vunpack.c.l.b16 %v9769
    %v9809 = vunpack.c.l.b16 %v9770
    %v9810 = vunpack.c.l.b16 %v9771
    %v9811 = vunpack.c.l.b16 %v9772
    %v9812 = vunpack.c.l.b16 %v9773
    %v9813 = vunpack.c.l.b16 %v9774
    %v9814 = vunpack.c.l.b16 %v9775
    %v9815 = vunpack.c.l.b16 %v9776
    %v9816 = vunpack.c.l.b16 %v9777
    %v9817 = vpack.c.b16 %v9802, %v9801
    %v9818 = vpack.c.b16 %v9804, %v9803
    %v9819 = vpack.c.b16 %v9806, %v9805
    %v9820 = vpack.c.b16 %v9808, %v9807
    %v9821 = vpack.c.b16 %v9810, %v9809
    %v9822 = vpack.c.b16 %v9812, %v9811
    %v9823 = vpack.c.b16 %v9814, %v9813
    %v9824 = vpack.c.b16 %v9816, %v9815
    %9833 = vmatprep.subr.bf16.mxu0 0
    %9834 = vmatpush1.bf16.msra.mxu0 %v9824
    %9835 = vmatprep.subr.bf16.mxu0 0
    %9836 = vmatpush1.bf16.msra.mxu0 %v9823
    %9837 = vmatprep.subr.bf16.mxu0 0
    %9838 = vmatpush1.bf16.msra.mxu0 %v9822
    %9839 = vmatprep.subr.bf16.mxu0 0
    %9840 = vmatpush1.bf16.msra.mxu0 %v9821
    %9841 = vmatprep.subr.bf16.mxu0 0
    %9842 = vmatpush1.bf16.msra.mxu0 %v9820
    %9843 = vmatprep.subr.bf16.mxu0 0
    %9844 = vmatpush1.bf16.msra.mxu0 %v9819
    %9845 = vmatprep.subr.bf16.mxu0 0
    %9846 = vmatpush1.bf16.msra.mxu0 %v9818
    %9847 = vmatprep.subr.bf16.mxu0 0
    %9848 = vmatpush1.bf16.msra.mxu0 %v9817
    %9849 = vmatprep.subr.bf16.mxu0 0
    %9850 = vmatpush2.bf16.msra.mxu0 0
    %9851 = vmatprep.subr.bf16.mxu0 0
    %9852 = vmatpush2.bf16.msra.mxu0 0
    %9853 = vmatprep.subr.bf16.mxu0 0
    %9854 = vmatpush2.bf16.msra.mxu0 0
    %9855 = vmatprep.subr.bf16.mxu0 0
    %9856 = vmatpush2.bf16.msra.mxu0 0
    %9857 = vmatprep.subr.bf16.mxu0 0
    %9858 = vmatpush2.bf16.msra.mxu0 0
    %9859 = vmatprep.subr.bf16.mxu0 0
    %9860 = vmatpush2.bf16.msra.mxu0 0
    %9861 = vmatprep.subr.bf16.mxu0 0
    %9862 = vmatpush2.bf16.msra.mxu0 0
    %9863 = vmatprep.subr.bf16.mxu0 0
    %9864 = vmatpush2.bf16.msra.mxu0 0
    %9865 = vmatprep.mubr.bf16.mxu0 0
    %9866 = vmatmul.mubr.bf16.gmra.mxu0 %v9761
    %v9867 = vpop.f32.mrf.mxu0
    %v9868 = vadd.f32 %v9783, %v9867
    %v9869 = vpop.f32.mrf.mxu0
    %v9870 = vpop.f32.mrf.mxu0
    %v9871 = vpop.f32.mrf.mxu0
    %9872 = vdwg.mxu0
    %vm9873 = vcmask 25600
    %9874 = vst.msk [vmem:[#allocation23] sm:$0x3] %vm9873, %v9868
    // Predicated region
    $region118: #{lstm_model_forward.1} parent=1 // pred_check
      _
    $region119: #{lstm_model_forward.1} parent=1 // pred_check_branch
      %9876 = sbr.rel (0) target = $region121
    $region120: #{lstm_model_forward.1} parent=1 // pred_region
      %s9878 = ssub.s32 32, 32
      %9879 = vsyncadd [#allocation5], %s9878
      %s9881 = sshll.u32 [#allocation23], 4
      %s9882 = int_to_ptr.vmem [resolvable:$true] %s9881
      %9884 = dma.vmem_to_hbm [thread:$0]  %s9882, 32, %s17, [#allocation5]
    $region121: #{lstm_model_forward.1} parent=1 // pred_fallthru
      _
    // Predicated region
    $region122: #{lstm_model_forward.1} parent=1 // pred_check
      _
    $region123: #{lstm_model_forward.1} parent=1 // pred_check_branch
      %9886 = sbr.rel (0) target = $region125
    $region124: #{lstm_model_forward.1} parent=1 // pred_region
      %9887 = dma.done [#allocation5], 32
    $region125: #{lstm_model_forward.1} parent=1 // pred_fallthru
      _
    %9888 = vsyncpa [#allocation4], 1
    %9889 = vsyncpa [#allocation7], 1
    %9890 = vsyncpa [#allocation10], 1
    %9891 = vsyncpa [#allocation13], 1
    %9892 = vsyncpa [#allocation16], 1
    %9893 = vsyncpa [#allocation19], 1
    %9894 = vsyncpa [#allocation22], 1
    %9895 = vsyncpa [#allocation5], 1

</llo_original>
